<compile_context>
chip_gen: v5e
topology: v5e:2x2
jax: 0.10.0
libtpu: 0.0.40
codegen_flags: <defaults>
</compile_context>

<pallas_src>
import functools

import jax
import jax.numpy as jnp
import numpy as np
from jax import lax
from jax.experimental import pallas as pl
from jax.experimental.pallas import tpu as pltpu


def _round_up(v, m):
    return (v + m - 1) // m * m


def _abs_pos_embed_kernel_mxu(x_ref, w_ref, o_ref):
    """One row tile: angle = x_aug @ W_aug on the MXU, out = sin(angle)."""
    # HIGHEST precision is mandatory: the default MXU path truncates f32 operands toward
    # bf16, injecting O(0.1 rad) error into angles of magnitude ~64.
    angle = jnp.dot(x_ref[...], w_ref[...],
                    preferred_element_type=jnp.float32,
                    precision=lax.Precision.HIGHEST)
    o_ref[...] = jnp.sin(angle).astype(o_ref.dtype)


def _abs_pos_embed_kernel_vpu(x_ref, w_ref, o_ref, *, k_used):
    """VPU fallback: unrolled broadcast multiply-adds (includes the ones*phase row)."""
    x = x_ref[...]                          # (TN, K_pad) f32
    w = w_ref[...]                          # (K_pad, C_pad) f32, VMEM-resident
    acc = x[:, 0:1] * w[0:1, :]
    for d in range(1, k_used):
        acc = acc + x[:, d:d + 1] * w[d:d + 1, :]
    o_ref[...] = jnp.sin(acc).astype(o_ref.dtype)


def absolute_position_embedder(x, *, channels, in_channels=3, tile_n=None,
                               out_dtype=jnp.float32, use_mxu=True,
                               slice_to_channels=True):
    """JAX/Pallas equivalent of AbsolutePositionEmbedder.forward.

    Args:
      x: (N, in_channels) float array of spatial positions.
      channels: output embedding width.
      tile_n: rows per grid step (auto-sized for the VMEM budget if None).
      out_dtype: output dtype.  f32 matches the PyTorch module; jnp.bfloat16 halves HBM
        write traffic (the dominant cost) when downstream tolerates it.  Compute stays f32.
      use_mxu: run the x@W+phase on the MXU (recommended); False uses the VPU MAC loop.
      slice_to_channels: if channels is not a multiple of 128, slice the lane padding off
        (extra XLA copy).  Set False to return the padded (N, C_pad) array and fuse the
        slice into the consumer.
    Returns:
      (N, channels) array of positional embeddings (or (N, C_pad) if slice_to_channels=False).
    """
    N, D = x.shape
    assert D == in_channels, "Input dimension must match number of input channels"
    freq_dim = channels // in_channels // 2

    # ---- host-side constant "parameters" (lane-dense, phase folded into last used row) ----
    freqs = (1.0 / (10000.0 ** (np.arange(freq_dim, dtype=np.float32)
                                / np.float32(freq_dim)))).astype(np.float32)
    c_pad = _round_up(channels, 128)            # full-lane-width, unmasked stores
    k_used = in_channels + 1                    # D coordinate rows + 1 phase ("ones") row
    k_pad = _round_up(k_used, 8)                # sublane-aligned contraction dim for the MXU
    w_host = np.zeros((k_pad, c_pad), np.float32)
    half_pi = np.float32(np.pi / 2.0)
    for d in range(in_channels):
        base = d * 2 * freq_dim
        w_host[d, base:base + freq_dim] = freqs                        # sin columns
        w_host[d, base + freq_dim:base + 2 * freq_dim] = freqs         # cos columns
        w_host[in_channels, base + freq_dim:base + 2 * freq_dim] = half_pi
    w_aug = jnp.asarray(w_host)

    # x_aug = [x | 1 | 0...]: tiny (N, k_pad) f32, negligible vs the (N, c_pad) output.
    parts = [x.astype(jnp.float32), jnp.ones((N, 1), jnp.float32)]
    if k_pad > k_used:
        parts.append(jnp.zeros((N, k_pad - k_used), jnp.float32))
    x_aug = jnp.concatenate(parts, axis=1)

    # ---- row-tile size: HBM-write-bound kernel -> big row tiles ----
    out_bytes = np.dtype(out_dtype).itemsize
    if tile_n is None:
        # ~4 MiB output block (8 MiB double-buffered), rows capped at 4096: amortizes the
        # ~0.35 us per-grid-step overhead and still fits v7x's 64 MiB VMEM with headroom.
        rows = (4 * 1024 * 1024) // (c_pad * out_bytes)
        tile_n = int(max(8, min(4096, rows)))
    # Keep >= 4 grid steps so the "parallel" row axis can shard across both v7x
    # TensorCores (neutral on single-TC v5e/v6e).
    if N >= 4 * 8:
        tile_n = min(int(tile_n), _round_up(-(-N // 4), 8))
    tile_n = max(8, min(int(tile_n), _round_up(N, 8)))
    tile_n = (tile_n // 8) * 8
    grid = (pl.cdiv(N, tile_n),)     # ragged last block: Pallas masks its writeback

    # Explicit VMEM budget: double-buffered out + x blocks, resident W_aug, plus the
    # full-tile f32 angle/sin intermediates (not visible to Pallas' own accounting).
    vmem_est = (2 * tile_n * c_pad * out_bytes
                + 2 * tile_n * k_pad * 4
                + 2 * k_pad * c_pad * 4
                + 2 * tile_n * c_pad * 4)
    vmem_limit = int(min(48 * 1024 * 1024, max(2 * vmem_est, 16 * 1024 * 1024)))

    cost = pl.CostEstimate(
        flops=2 * N * c_pad * k_used,
        transcendentals=N * c_pad,
        bytes_accessed=N * c_pad * out_bytes + N * k_pad * 4 + k_pad * c_pad * 4,
    )

    if use_mxu:
        kernel = _abs_pos_embed_kernel_mxu
    else:
        kernel = functools.partial(_abs_pos_embed_kernel_vpu, k_used=k_used)

    out = pl.pallas_call(
        kernel,
        out_shape=jax.ShapeDtypeStruct((N, c_pad), out_dtype),
        grid_spec=pltpu.PrefetchScalarGridSpec(
            num_scalar_prefetch=0,
            grid=grid,
            in_specs=[
                pl.BlockSpec((tile_n, k_pad), lambda i: (i, 0)),
                pl.BlockSpec((k_pad, c_pad), lambda i: (0, 0)),   # resident W_aug
            ],
            out_specs=pl.BlockSpec((tile_n, c_pad), lambda i: (i, 0)),
        ),
        compiler_params=pltpu.CompilerParams(
            dimension_semantics=("parallel",),   # row axis shards across TCs (megacore)
            vmem_limit_bytes=vmem_limit,
        ),
        cost_estimate=cost,
    )(x_aug, w_aug)

    if slice_to_channels and c_pad != channels:
        # Typical configs (channels % 128 == 0, e.g. 1024) skip this extra XLA copy.
        out = out[:, :channels]
    return out


def _reference(x, channels, in_channels=3):
    """Plain numpy reference mirroring the PyTorch forward exactly."""
    x = np.asarray(x, dtype=np.float32)
    N, D = x.shape
    freq_dim = channels // in_channels // 2
    freqs = 1.0 / (10000.0 ** (np.arange(freq_dim, dtype=np.float32)
                               / np.float32(freq_dim)))
    flat = x.reshape(-1)                                       # (N*D,)
    out = np.outer(flat, freqs)                                # (N*D, F)
    out = np.concatenate([np.sin(out), np.cos(out)], axis=-1)  # (N*D, 2F)
    out = out.reshape(N, -1)                                   # (N, D*2F)
    if out.shape[1] < channels:
        out = np.concatenate(
            [out, np.zeros((N, channels - out.shape[1]), np.float32)], axis=-1)
    return out


if __name__ == "__main__":
    key = jax.random.PRNGKey(0)
    in_channels = 3
    ka, kb, kc = jax.random.split(key, 3)

    # Tolerances: cos is computed as sin(angle + fl(pi/2)) and the angle comes from a
    # HIGHEST-precision MXU matmul; both add at most a few f32 ulps of the angle (|angle|<~64),
    # so ~1e-4 absolute on sin/cos.

    # Config A: lane-aligned width (channels % 128 == 0, no zero-pad columns); N chosen so
    # the last grid block is ragged (exercises masked writeback).
    n_a, ch_a = 520, 384                 # freq_dim = 64 -> D*2F = 384 == channels
    x_a = jax.random.uniform(ka, (n_a, in_channels), dtype=jnp.float32) * 64.0
    out_a = jax.block_until_ready(
        absolute_position_embedder(x_a, channels=ch_a, in_channels=in_channels))
    np.testing.assert_allclose(np.asarray(out_a),
                               _reference(np.asarray(x_a), ch_a, in_channels),
                               rtol=1e-5, atol=1e-4)

    # Config B: small, non-128-multiple channels -> trailing zero-pad columns, C_pad=128
    # lane padding, and the wrapper slice path.
    n_b, ch_b = 64, 32                   # freq_dim = 5 -> D*2F = 30 < 32
    x_b = jax.random.uniform(kb, (n_b, in_channels), dtype=jnp.float32) * 64.0
    out_b = jax.block_until_ready(
        absolute_position_embedder(x_b, channels=ch_b, in_channels=in_channels))
    np.testing.assert_allclose(np.asarray(out_b),
                               _reference(np.asarray(x_b), ch_b, in_channels),
                               rtol=1e-5, atol=1e-4)

    # Config C: bf16 output (recommended when downstream tolerates it) -- halves HBM write
    # traffic on the bandwidth-bound generations; compute stays f32 in-kernel.
    n_c, ch_c = 256, 384
    x_c = jax.random.uniform(kc, (n_c, in_channels), dtype=jnp.float32) * 64.0
    out_c = jax.block_until_ready(
        absolute_position_embedder(x_c, channels=ch_c, in_channels=in_channels,
                                   out_dtype=jnp.bfloat16))
    np.testing.assert_allclose(np.asarray(out_c).astype(np.float32),
                               _reference(np.asarray(x_c), ch_c, in_channels),
                               rtol=2e-2, atol=2e-2)

    # Config D: VPU fallback path (use_mxu=False) stays correct.
    out_d = jax.block_until_ready(
        absolute_position_embedder(x_b, channels=ch_b, in_channels=in_channels,
                                   use_mxu=False))
    np.testing.assert_allclose(np.asarray(out_d),
                               _reference(np.asarray(x_b), ch_b, in_channels),
                               rtol=1e-5, atol=3e-5)

    print("KERNEL_OK")
</pallas_src>

<mosaic_0001>
module attributes {stable_mosaic.version = 11 : i64} {
  func.func @_abs_pos_embed_kernel_mxu(%arg0: i32, %arg1: memref<136x8xf32, #tpu.memory_space<vmem>>, %arg2: memref<8x384xf32, #tpu.memory_space<vmem>>, %arg3: memref<136x384xf32, #tpu.memory_space<vmem>>) attributes {dimension_semantics = [#tpu.dimension_semantics<parallel>], iteration_bounds = array<i64: 4>, scalar_prefetch = 0 : i64, scratch_operands = 0 : i64, tpu.core_type = #tpu.core_type<tc>, window_params = [{transform_indices = @transform_0, window_bounds = array<i64: 136, 8>}, {pipeline_mode = #tpu.pipeline_mode<synchronous>, transform_indices = @transform_1, window_bounds = array<i64: 8, 384>}, {transform_indices = @transform_2, window_bounds = array<i64: 136, 384>}]} {
    %c0 = arith.constant 0 : index
    %c0_0 = arith.constant 0 : index
    %0 = vector.load %arg1[%c0, %c0_0] : memref<136x8xf32, #tpu.memory_space<vmem>>, vector<136x8xf32>
    %c0_1 = arith.constant 0 : index
    %c0_2 = arith.constant 0 : index
    %1 = vector.load %arg2[%c0_1, %c0_2] : memref<8x384xf32, #tpu.memory_space<vmem>>, vector<8x384xf32>
    %cst = arith.constant dense<0.000000e+00> : vector<136x384xf32>
    %2 = tpu.matmul %0, %1, %cst {dimension_numbers = #tpu.dot_dimension_numbers<[1], [0], [0], [1], [0, 0, 1, 1], [], []>, precision = #tpu.contract_precision<fp32>} : vector<136x8xf32>, vector<8x384xf32>, vector<136x384xf32> -> vector<136x384xf32>
    %3 = math.sin %2 : vector<136x384xf32>
    %c0_3 = arith.constant 0 : index
    %c0_4 = arith.constant 0 : index
    %4 = vector.load %arg3[%c0_3, %c0_4] : memref<136x384xf32, #tpu.memory_space<vmem>>, vector<136x384xf32>
    tpu.vector_store %arg3[%c0_3, %c0_4], %3 {strides = array<i32>} : memref<136x384xf32, #tpu.memory_space<vmem>>, vector<136x384xf32>,
    return
  }
  func.func @transform_0(%arg0: i32) -> (i32, i32) {
    %c0_i32 = arith.constant 0 : i32
    %c0_i32_0 = arith.constant 0 : i32
    return %arg0, %c0_i32 : i32, i32
  }
  func.func @transform_1(%arg0: i32) -> (i32, i32) {
    %c0_i32 = arith.constant 0 : i32
    %c0_i32_0 = arith.constant 0 : i32
    %c0_i32_1 = arith.constant 0 : i32
    return %c0_i32, %c0_i32_0 : i32, i32
  }
  func.func @transform_2(%arg0: i32) -> (i32, i32) {
    %c0_i32 = arith.constant 0 : i32
    %c0_i32_0 = arith.constant 0 : i32
    return %arg0, %c0_i32 : i32, i32
  }
}

</mosaic_0001>

<llo_original>
// kernel: tpu_custom_call.1
$region0: #{tpu_custom_call.1}
  #allocation0 [shape = 'u32[]', space=smem, size = 0x4, offset = 0x4, fixed_abs, tag = 'smem constant byte address 0x4 - core index']
  #allocation1 [shape = 'u32[72,128]{1,0:T(1,128)}', space=vmem, size = 0x9000, scoped, tag = 'internal scratch']
  %s0 = inlined_call_operand.vmem [shape: f32[520,8], index: 0, kind: input, shape index: {}]
  %s1 = inlined_call_operand.vmem [shape: f32[8,384], index: 1, kind: input, shape index: {}]
  %s2 = inlined_call_operand.hbm [shape: f32[520,384], index: 2, kind: output, shape index: {}]
  %s3 = sld [smem:[#allocation0]]
  $region41: #{tpu_custom_call.1} parent=0
    _
  %s5 = ssub.s32 1, %s3
  %s6 = scalar_select 0, %s5, %s3
  $region1: #{tpu_custom_call.1} parent=0
    #allocation2 [shape = 'u8[417792]{0}', space=vmem, size = 0x66000, scoped, tag = 'output window, operand 0']
    #allocation3 [shape = 's32[2]{0}', space=sflag, size = 0x8, scoped, tag = 'scoped memory for tpu_custom_call.1']
    %7 = vsyncpa [#allocation3], 0
    %s8 = scalar_lea.sflag [#allocation3], 1
    %9 = vsyncpa %s8, 0
    loop: start=0, step=1, limit=6
    $region2: #{tpu_custom_call.1} parent=1 // loop_pre_header
      _
    $region3: #{tpu_custom_call.1} parent=1 // loop_header
      %s11 = sphi 0, %s15
      %p12 = scmp.ge.s32.totalorder %s11, 6
      %s21 = sphi 0, %s23
      %s24 = sphi 0, %s21
      %s25 = sphi 0, %s24
      %s41 = sphi 0, %s25
      %s45 = sphi 0, %s45
      %s47 = sphi 0, %s45
      %s48 = sphi 0, %s47
      %s62 = sphi 0, %s48
      %s68 = sphi 0, %s70
      %s71 = sphi 0, %s68
      %s72 = sphi 0, %s71
      %s88 = sphi 0, %s72
    $region4: #{tpu_custom_call.1} parent=1 // loop_header_branch
      %14 = sbr.rel (%p12) target = $region8
    $region5: #{tpu_custom_call.1} parent=1 // loop_body
      %s16 = ssub.s32 %s11, 1
      %s17 = ssub.s32 %s11, 2
      %s18 = sadd.s32 %s11, 1
      %s19 = ssub.s32 %s11, %s18
      %p20 = scmp.eq.s32.totalorder %s19, 0
      %s22 = sadd.s32 %s21, 1
      %s23 = scalar_select %p20, %s21, %s22
      %p26 = pneg %p20
      %p27 = scmp.eq.s32.totalorder %s11, 3
      %p28 = por %p26, %p27
      %p29 = scmp.ne.s32.totalorder %s21, %s24
      %p30 = scmp.eq.s32.totalorder %s11, 0
      %p31 = por %p29, %p30
      %p32 = scmp.ne.s32.totalorder %s21, %s24
      %p33 = scmp.eq.s32.totalorder %s16, 3
      %p34 = por %p32, %p33
      %p35 = scmp.ne.s32.totalorder %s24, %s25
      %p36 = scmp.eq.s32.totalorder %s16, 0
      %p37 = por %p35, %p36
      %p38 = scmp.ne.s32.totalorder %s24, %s25
      %p39 = scmp.eq.s32.totalorder %s17, 3
      %p40 = por %p38, %p39
      %p42 = scmp.ne.s32.totalorder %s25, %s41
      %p43 = scmp.eq.s32.totalorder %s17, 0
      %p44 = por %p42, %p43
      %s46 = sadd.s32 %s45, 1
      %p49 = scmp.eq.s32.totalorder %s11, 3
      %p50 = scmp.ne.s32.totalorder %s45, %s47
      %p51 = scmp.eq.s32.totalorder %s11, 0
      %p52 = por %p50, %p51
      %p53 = scmp.ne.s32.totalorder %s45, %s47
      %p54 = scmp.eq.s32.totalorder %s16, 3
      %p55 = por %p53, %p54
      %p56 = scmp.ne.s32.totalorder %s47, %s48
      %p57 = scmp.eq.s32.totalorder %s16, 0
      %p58 = por %p56, %p57
      %p59 = scmp.ne.s32.totalorder %s47, %s48
      %p60 = scmp.eq.s32.totalorder %s17, 3
      %p61 = por %p59, %p60
      %p63 = scmp.ne.s32.totalorder %s48, %s62
      %p64 = scmp.eq.s32.totalorder %s17, 0
      %p65 = por %p63, %p64
      %s66 = ssub.s32 %s11, %s18
      %p67 = scmp.eq.s32.totalorder %s66, 0
      %s69 = sadd.s32 %s68, 1
      %s70 = scalar_select %p67, %s68, %s69
      %p73 = pneg %p67
      %p74 = scmp.eq.s32.totalorder %s11, 3
      %p75 = por %p73, %p74
      %p76 = scmp.ne.s32.totalorder %s68, %s71
      %p77 = scmp.eq.s32.totalorder %s11, 0
      %p78 = por %p76, %p77
      %p79 = scmp.ne.s32.totalorder %s68, %s71
      %p80 = scmp.eq.s32.totalorder %s16, 3
      %p81 = por %p79, %p80
      %p82 = scmp.ne.s32.totalorder %s71, %s72
      %p83 = scmp.eq.s32.totalorder %s16, 0
      %p84 = por %p82, %p83
      %p85 = scmp.ne.s32.totalorder %s71, %s72
      %p86 = scmp.eq.s32.totalorder %s17, 3
      %p87 = por %p85, %p86
      %p89 = scmp.ne.s32.totalorder %s72, %s88
      %p90 = scmp.eq.s32.totalorder %s17, 0
      %p91 = por %p89, %p90
      %p92 = scmp.le.s32.totalorder 1, %s11
      %p93 = scmp.lt.s32.totalorder %s11, 5
      %p94 = pnand %p92, %p93
      %p95 = pneg %p94
      // Predicated region
      $region9: #{tpu_custom_call.1} parent=5 // pred_check
        _
      $region10: #{tpu_custom_call.1} parent=5 // pred_check_branch
        %97 = sbr.rel (%p94) target = $region12
      $region11: #{tpu_custom_call.1} parent=5 // pred_region
        %s98 = ssub.s32 %s11, 1
        // Predicated region
        $region13: #{tpu_custom_call.1} parent=11 // pred_check
          %p99 = pneg %p58
        $region14: #{tpu_custom_call.1} parent=11 // pred_check_branch
          %101 = sbr.rel (%p99) target = $region16
        $region15: #{tpu_custom_call.1} parent=11 // pred_region
          _
        $region16: #{tpu_custom_call.1} parent=11 // pred_fallthru
          _
      $region12: #{tpu_custom_call.1} parent=5 // pred_fallthru
        _
      %p102 = scmp.lt.s32.totalorder %s11, 4
      // Predicated region
      $region17: #{tpu_custom_call.1} parent=5 // pred_check
        %p103 = pneg %p102
      $region18: #{tpu_custom_call.1} parent=5 // pred_check_branch
        %105 = sbr.rel (%p103) target = $region20
      $region19: #{tpu_custom_call.1} parent=5 // pred_region
        // Predicated region
        $region21: #{tpu_custom_call.1} parent=19 // pred_check
          %p106 = pneg %p31
        $region22: #{tpu_custom_call.1} parent=19 // pred_check_branch
          %108 = sbr.rel (%p106) target = $region24
        $region23: #{tpu_custom_call.1} parent=19 // pred_region
          %s109 = smul.u32 17, %s11
          %s110 = ssub.s32 65, %s109
          %p111 = scmp.lt.s32.totalorder %s110, 17
          %s112 = scalar_select %p111, %s110, 17
          %s113 = smul.u32 8, %s112
          %p114 = scmp.lt.s32.totalorder %s109, 64
          %s115 = scalar_select %p114, %s109, 64
          %s116 = smul.addr %s115, 8
          %s117 = scalar_lea.vmem %s0, %s116
          %s118 = smul.u32 17, %s11
          %s119 = ssub.s32 65, %s118
          %p120 = scmp.lt.s32.totalorder %s119, 17
          %s121 = scalar_select %p120, %s119, 17
          %s122 = smul.u32 8, %s121
        $region24: #{tpu_custom_call.1} parent=19 // pred_fallthru
          _
      $region20: #{tpu_custom_call.1} parent=5 // pred_fallthru
        _
      %p123 = scmp.le.s32.totalorder 1, %s11
      %p124 = scmp.lt.s32.totalorder %s11, 5
      %p125 = pnand %p123, %p124
      %p126 = pneg %p125
      // Predicated region
      $region25: #{tpu_custom_call.1} parent=5 // pred_check
        _
      $region26: #{tpu_custom_call.1} parent=5 // pred_check_branch
        %128 = sbr.rel (%p125) target = $region28
      $region27: #{tpu_custom_call.1} parent=5 // pred_region
        %s129 = ssub.s32 %s11, 1
        %s130 = smul.u32 17, %s16
        %s131 = ssub.s32 65, %s130
        %p132 = scmp.lt.s32.totalorder %s131, 17
        %s133 = scalar_select %p132, %s131, 17
        %s134 = smul.u32 8, %s133
        %p135 = scmp.lt.s32.totalorder %s130, 64
        %s136 = scalar_select %p135, %s130, 64
        %s137 = smul.addr %s136, 8
        %s138 = scalar_lea.vmem %s0, %s137
        %p139 = pneg %p37
        %p140 = pneg %p34
        %p141 = pneg %p58
        %p142 = pneg %p55
        %p143 = pneg %p84
        %p144 = pneg %p81
        %s145 = sand.u32 %s71, 1
        %s146 = scalar_lea.sflag [#allocation3], %s145
        %s147 = sand.u32 %s71, 1
        %s148 = smul.addr %s147, 408
        %s149 = scalar_lea.vmem [#allocation2], %s148
        %s150 = smul.u32 17, %s16
        %s151 = ssub.s32 65, %s150
        %p152 = scmp.lt.s32.totalorder %s151, 17
        %s153 = scalar_select %p152, %s151, 17
        %s154 = smul.u32 8, %s153
        %p155 = scmp.lt.s32.totalorder %s150, 64
        %s156 = scalar_select %p155, %s150, 64
        %s157 = smul.addr %s156, 8
        %s158 = scalar_lea.vmem %s0, %s157
        %s159 = smul.u32 17, %s16
        %s160 = ssub.s32 65, %s159
        %p161 = scmp.lt.s32.totalorder %s160, 17
        %s162 = scalar_select %p161, %s160, 17
        %s163 = smul.u32 8, %s162
        %s164 = smul.u32 17, %s16
        %s165 = ssub.s32 65, %s164
        %p166 = scmp.lt.s32.totalorder %s165, 17
        %s167 = scalar_select %p166, %s165, 17
        %s168 = smul.u32 8, %s167
        %s169 = smul.u32 %s168, 3
        %v170 = vld [vmem:[%s158] sm:$0xff]
        %v171 = vld [vmem:[%s158 + $0x8] sm:$0xff]
        %v172 = vld [vmem:[%s158 + $0x10] sm:$0xff]
        %v173 = vld [vmem:[%s158 + $0x18] sm:$0xff]
        %v174 = vld [vmem:[%s158 + $0x20] sm:$0xff]
        %v175 = vld [vmem:[%s158 + $0x28] sm:$0xff]
        %v176 = vld [vmem:[%s158 + $0x30] sm:$0xff]
        %v177 = vld [vmem:[%s158 + $0x38] sm:$0xff]
        %v178 = vld [vmem:[%s158 + $0x40] sm:$0xff]
        %v179 = vld [vmem:[%s158 + $0x48] sm:$0xff]
        %v180 = vld [vmem:[%s158 + $0x50] sm:$0xff]
        %v181 = vld [vmem:[%s158 + $0x58] sm:$0xff]
        %v182 = vld [vmem:[%s158 + $0x60] sm:$0xff]
        %v183 = vld [vmem:[%s158 + $0x68] sm:$0xff]
        %v184 = vld [vmem:[%s158 + $0x70] sm:$0xff]
        %v185 = vld [vmem:[%s158 + $0x78] sm:$0xff]
        %v186 = vld [vmem:[%s158 + $0x80] sm:$0xff]
        %v187 = vld [vmem:[%s1] sm:$0xff]
        %v188 = vld [vmem:[%s1 + $0x8] sm:$0xff]
        %v189 = vld [vmem:[%s1 + $0x10] sm:$0xff]
        %vm190 = vcmask 64512
        %v192 = vsel %vm190, %v170, 0
        %v195 = vsel %vm190, %v171, 0
        %v198 = vsel %vm190, %v172, 0
        %v201 = vsel %vm190, %v173, 0
        %v204 = vsel %vm190, %v174, 0
        %v207 = vsel %vm190, %v175, 0
        %v210 = vsel %vm190, %v176, 0
        %v213 = vsel %vm190, %v177, 0
        %v216 = vsel %vm190, %v178, 0
        %v219 = vsel %vm190, %v179, 0
        %v222 = vsel %vm190, %v180, 0
        %v225 = vsel %vm190, %v181, 0
        %v228 = vsel %vm190, %v182, 0
        %v231 = vsel %vm190, %v183, 0
        %v234 = vsel %vm190, %v184, 0
        %v237 = vsel %vm190, %v185, 0
        %v240 = vsel %vm190, %v186, 0
        %242 = vmatpush.msra.mxu0 0.0
        %243 = vmatpush.msra.mxu0 0.0
        %244 = vmatpush.msra.mxu0 0.0
        %245 = vmatpush.msra.mxu0 0.0
        %246 = vmatpush.msra.mxu0 0.0
        %247 = vmatpush.msra.mxu0 0.0
        %248 = vmatpush.msra.mxu0 0.0
        %249 = vmatpush.msra.mxu0 0.0
        %250 = vmatpush.msra.mxu0 0.0
        %251 = vmatpush.msra.mxu0 0.0
        %252 = vmatpush.msra.mxu0 0.0
        %253 = vmatpush.msra.mxu0 0.0
        %254 = vmatpush.msra.mxu0 0.0
        %255 = vmatpush.msra.mxu0 0.0
        %256 = vmatpush.msra.mxu0 0.0
        %v257 = vand.u32 %v187, 4294901760
        %258 = vmatpush.msra.mxu0 %v257
        %v259 = vand.u32 %v192, 4294901760
        %v260 = vsub.f32 %v192, %v259
        %v261 = vand.u32 %v260, 4294901760
        %v262 = vsub.f32 %v260, %v261
        %v263 = vand.u32 %v262, 4294901760
        %264 = vmatmul.f32.gmra.mxu0 %v263
        %v265 = vpop.f32.mrf.mxu0
        %v266 = vadd.f32 0.0, %v265
        %v267 = vand.u32 %v195, 4294901760
        %v268 = vsub.f32 %v195, %v267
        %v269 = vand.u32 %v268, 4294901760
        %v270 = vsub.f32 %v268, %v269
        %v271 = vand.u32 %v270, 4294901760
        %272 = vmatmul.f32.gmra.mxu0 %v271
        %v273 = vpop.f32.mrf.mxu0
        %v274 = vadd.f32 0.0, %v273
        %v275 = vand.u32 %v198, 4294901760
        %v276 = vsub.f32 %v198, %v275
        %v277 = vand.u32 %v276, 4294901760
        %v278 = vsub.f32 %v276, %v277
        %v279 = vand.u32 %v278, 4294901760
        %280 = vmatmul.f32.gmra.mxu0 %v279
        %v281 = vpop.f32.mrf.mxu0
        %v282 = vadd.f32 0.0, %v281
        %v283 = vand.u32 %v201, 4294901760
        %v284 = vsub.f32 %v201, %v283
        %v285 = vand.u32 %v284, 4294901760
        %v286 = vsub.f32 %v284, %v285
        %v287 = vand.u32 %v286, 4294901760
        %288 = vmatmul.f32.gmra.mxu0 %v287
        %v289 = vpop.f32.mrf.mxu0
        %v290 = vadd.f32 0.0, %v289
        %v291 = vand.u32 %v204, 4294901760
        %v292 = vsub.f32 %v204, %v291
        %v293 = vand.u32 %v292, 4294901760
        %v294 = vsub.f32 %v292, %v293
        %v295 = vand.u32 %v294, 4294901760
        %296 = vmatmul.f32.gmra.mxu0 %v295
        %v297 = vpop.f32.mrf.mxu0
        %v298 = vadd.f32 0.0, %v297
        %v299 = vand.u32 %v207, 4294901760
        %v300 = vsub.f32 %v207, %v299
        %v301 = vand.u32 %v300, 4294901760
        %v302 = vsub.f32 %v300, %v301
        %v303 = vand.u32 %v302, 4294901760
        %304 = vmatmul.f32.gmra.mxu0 %v303
        %v305 = vpop.f32.mrf.mxu0
        %v306 = vadd.f32 0.0, %v305
        %v307 = vand.u32 %v210, 4294901760
        %v308 = vsub.f32 %v210, %v307
        %v309 = vand.u32 %v308, 4294901760
        %v310 = vsub.f32 %v308, %v309
        %v311 = vand.u32 %v310, 4294901760
        %312 = vmatmul.f32.gmra.mxu0 %v311
        %v313 = vpop.f32.mrf.mxu0
        %v314 = vadd.f32 0.0, %v313
        %v315 = vand.u32 %v213, 4294901760
        %v316 = vsub.f32 %v213, %v315
        %v317 = vand.u32 %v316, 4294901760
        %v318 = vsub.f32 %v316, %v317
        %v319 = vand.u32 %v318, 4294901760
        %320 = vmatmul.f32.gmra.mxu0 %v319
        %v321 = vpop.f32.mrf.mxu0
        %v322 = vadd.f32 0.0, %v321
        %v323 = vand.u32 %v216, 4294901760
        %v324 = vsub.f32 %v216, %v323
        %v325 = vand.u32 %v324, 4294901760
        %v326 = vsub.f32 %v324, %v325
        %v327 = vand.u32 %v326, 4294901760
        %328 = vmatmul.f32.gmra.mxu0 %v327
        %v329 = vpop.f32.mrf.mxu0
        %v330 = vadd.f32 0.0, %v329
        %v331 = vand.u32 %v219, 4294901760
        %v332 = vsub.f32 %v219, %v331
        %v333 = vand.u32 %v332, 4294901760
        %v334 = vsub.f32 %v332, %v333
        %v335 = vand.u32 %v334, 4294901760
        %336 = vmatmul.f32.gmra.mxu0 %v335
        %v337 = vpop.f32.mrf.mxu0
        %v338 = vadd.f32 0.0, %v337
        %v339 = vand.u32 %v222, 4294901760
        %v340 = vsub.f32 %v222, %v339
        %v341 = vand.u32 %v340, 4294901760
        %v342 = vsub.f32 %v340, %v341
        %v343 = vand.u32 %v342, 4294901760
        %344 = vmatmul.f32.gmra.mxu0 %v343
        %v345 = vpop.f32.mrf.mxu0
        %v346 = vadd.f32 0.0, %v345
        %v347 = vand.u32 %v225, 4294901760
        %v348 = vsub.f32 %v225, %v347
        %v349 = vand.u32 %v348, 4294901760
        %v350 = vsub.f32 %v348, %v349
        %v351 = vand.u32 %v350, 4294901760
        %352 = vmatmul.f32.gmra.mxu0 %v351
        %v353 = vpop.f32.mrf.mxu0
        %v354 = vadd.f32 0.0, %v353
        %v355 = vand.u32 %v228, 4294901760
        %v356 = vsub.f32 %v228, %v355
        %v357 = vand.u32 %v356, 4294901760
        %v358 = vsub.f32 %v356, %v357
        %v359 = vand.u32 %v358, 4294901760
        %360 = vmatmul.f32.gmra.mxu0 %v359
        %v361 = vpop.f32.mrf.mxu0
        %v362 = vadd.f32 0.0, %v361
        %v363 = vand.u32 %v231, 4294901760
        %v364 = vsub.f32 %v231, %v363
        %v365 = vand.u32 %v364, 4294901760
        %v366 = vsub.f32 %v364, %v365
        %v367 = vand.u32 %v366, 4294901760
        %368 = vmatmul.f32.gmra.mxu0 %v367
        %v369 = vpop.f32.mrf.mxu0
        %v370 = vadd.f32 0.0, %v369
        %v371 = vand.u32 %v234, 4294901760
        %v372 = vsub.f32 %v234, %v371
        %v373 = vand.u32 %v372, 4294901760
        %v374 = vsub.f32 %v372, %v373
        %v375 = vand.u32 %v374, 4294901760
        %376 = vmatmul.f32.gmra.mxu0 %v375
        %v377 = vpop.f32.mrf.mxu0
        %v378 = vadd.f32 0.0, %v377
        %v379 = vand.u32 %v237, 4294901760
        %v380 = vsub.f32 %v237, %v379
        %v381 = vand.u32 %v380, 4294901760
        %v382 = vsub.f32 %v380, %v381
        %v383 = vand.u32 %v382, 4294901760
        %384 = vmatmul.f32.gmra.mxu0 %v383
        %v385 = vpop.f32.mrf.mxu0
        %v386 = vadd.f32 0.0, %v385
        %v387 = vand.u32 %v240, 4294901760
        %v388 = vsub.f32 %v240, %v387
        %v389 = vand.u32 %v388, 4294901760
        %v390 = vsub.f32 %v388, %v389
        %v391 = vand.u32 %v390, 4294901760
        %392 = vmatmul.f32.gmra.mxu0 %v391
        %v393 = vpop.f32.mrf.mxu0
        %v394 = vadd.f32 0.0, %v393
        %395 = vdwg.mxu0
        %396 = vmatpush.msra.mxu0 0.0
        %397 = vmatpush.msra.mxu0 0.0
        %398 = vmatpush.msra.mxu0 0.0
        %399 = vmatpush.msra.mxu0 0.0
        %400 = vmatpush.msra.mxu0 0.0
        %401 = vmatpush.msra.mxu0 0.0
        %402 = vmatpush.msra.mxu0 0.0
        %403 = vmatpush.msra.mxu0 0.0
        %404 = vmatpush.msra.mxu0 0.0
        %405 = vmatpush.msra.mxu0 0.0
        %406 = vmatpush.msra.mxu0 0.0
        %407 = vmatpush.msra.mxu0 0.0
        %408 = vmatpush.msra.mxu0 0.0
        %409 = vmatpush.msra.mxu0 0.0
        %410 = vmatpush.msra.mxu0 0.0
        %v411 = vand.u32 %v187, 4294901760
        %v412 = vsub.f32 %v187, %v411
        %v413 = vand.u32 %v412, 4294901760
        %v414 = vsub.f32 %v412, %v413
        %v415 = vand.u32 %v414, 4294901760
        %416 = vmatpush.msra.mxu0 %v415
        %v417 = vand.u32 %v192, 4294901760
        %418 = vmatmul.f32.gmra.mxu0 %v417
        %v419 = vpop.f32.mrf.mxu0
        %v420 = vadd.f32 %v266, %v419
        %v421 = vand.u32 %v195, 4294901760
        %422 = vmatmul.f32.gmra.mxu0 %v421
        %v423 = vpop.f32.mrf.mxu0
        %v424 = vadd.f32 %v274, %v423
        %v425 = vand.u32 %v198, 4294901760
        %426 = vmatmul.f32.gmra.mxu0 %v425
        %v427 = vpop.f32.mrf.mxu0
        %v428 = vadd.f32 %v282, %v427
        %v429 = vand.u32 %v201, 4294901760
        %430 = vmatmul.f32.gmra.mxu0 %v429
        %v431 = vpop.f32.mrf.mxu0
        %v432 = vadd.f32 %v290, %v431
        %v433 = vand.u32 %v204, 4294901760
        %434 = vmatmul.f32.gmra.mxu0 %v433
        %v435 = vpop.f32.mrf.mxu0
        %v436 = vadd.f32 %v298, %v435
        %v437 = vand.u32 %v207, 4294901760
        %438 = vmatmul.f32.gmra.mxu0 %v437
        %v439 = vpop.f32.mrf.mxu0
        %v440 = vadd.f32 %v306, %v439
        %v441 = vand.u32 %v210, 4294901760
        %442 = vmatmul.f32.gmra.mxu0 %v441
        %v443 = vpop.f32.mrf.mxu0
        %v444 = vadd.f32 %v314, %v443
        %v445 = vand.u32 %v213, 4294901760
        %446 = vmatmul.f32.gmra.mxu0 %v445
        %v447 = vpop.f32.mrf.mxu0
        %v448 = vadd.f32 %v322, %v447
        %v449 = vand.u32 %v216, 4294901760
        %450 = vmatmul.f32.gmra.mxu0 %v449
        %v451 = vpop.f32.mrf.mxu0
        %v452 = vadd.f32 %v330, %v451
        %v453 = vand.u32 %v219, 4294901760
        %454 = vmatmul.f32.gmra.mxu0 %v453
        %v455 = vpop.f32.mrf.mxu0
        %v456 = vadd.f32 %v338, %v455
        %v457 = vand.u32 %v222, 4294901760
        %458 = vmatmul.f32.gmra.mxu0 %v457
        %v459 = vpop.f32.mrf.mxu0
        %v460 = vadd.f32 %v346, %v459
        %v461 = vand.u32 %v225, 4294901760
        %462 = vmatmul.f32.gmra.mxu0 %v461
        %v463 = vpop.f32.mrf.mxu0
        %v464 = vadd.f32 %v354, %v463
        %v465 = vand.u32 %v228, 4294901760
        %466 = vmatmul.f32.gmra.mxu0 %v465
        %v467 = vpop.f32.mrf.mxu0
        %v468 = vadd.f32 %v362, %v467
        %v469 = vand.u32 %v231, 4294901760
        %470 = vmatmul.f32.gmra.mxu0 %v469
        %v471 = vpop.f32.mrf.mxu0
        %v472 = vadd.f32 %v370, %v471
        %v473 = vand.u32 %v234, 4294901760
        %474 = vmatmul.f32.gmra.mxu0 %v473
        %v475 = vpop.f32.mrf.mxu0
        %v476 = vadd.f32 %v378, %v475
        %v477 = vand.u32 %v237, 4294901760
        %478 = vmatmul.f32.gmra.mxu0 %v477
        %v479 = vpop.f32.mrf.mxu0
        %v480 = vadd.f32 %v386, %v479
        %v481 = vand.u32 %v240, 4294901760
        %482 = vmatmul.f32.gmra.mxu0 %v481
        %v483 = vpop.f32.mrf.mxu0
        %v484 = vadd.f32 %v394, %v483
        %485 = vdwg.mxu0
        %486 = vmatpush.msra.mxu0 0.0
        %487 = vmatpush.msra.mxu0 0.0
        %488 = vmatpush.msra.mxu0 0.0
        %489 = vmatpush.msra.mxu0 0.0
        %490 = vmatpush.msra.mxu0 0.0
        %491 = vmatpush.msra.mxu0 0.0
        %492 = vmatpush.msra.mxu0 0.0
        %493 = vmatpush.msra.mxu0 0.0
        %494 = vmatpush.msra.mxu0 0.0
        %495 = vmatpush.msra.mxu0 0.0
        %496 = vmatpush.msra.mxu0 0.0
        %497 = vmatpush.msra.mxu0 0.0
        %498 = vmatpush.msra.mxu0 0.0
        %499 = vmatpush.msra.mxu0 0.0
        %500 = vmatpush.msra.mxu0 0.0
        %v501 = vand.u32 %v187, 4294901760
        %v502 = vsub.f32 %v187, %v501
        %503 = vmatpush.msra.mxu0 %v502
        %v504 = vand.u32 %v192, 4294901760
        %v505 = vsub.f32 %v192, %v504
        %506 = vmatmul.f32.gmra.mxu0 %v505
        %v507 = vpop.f32.mrf.mxu0
        %v508 = vadd.f32 %v420, %v507
        %v509 = vand.u32 %v195, 4294901760
        %v510 = vsub.f32 %v195, %v509
        %511 = vmatmul.f32.gmra.mxu0 %v510
        %v512 = vpop.f32.mrf.mxu0
        %v513 = vadd.f32 %v424, %v512
        %v514 = vand.u32 %v198, 4294901760
        %v515 = vsub.f32 %v198, %v514
        %516 = vmatmul.f32.gmra.mxu0 %v515
        %v517 = vpop.f32.mrf.mxu0
        %v518 = vadd.f32 %v428, %v517
        %v519 = vand.u32 %v201, 4294901760
        %v520 = vsub.f32 %v201, %v519
        %521 = vmatmul.f32.gmra.mxu0 %v520
        %v522 = vpop.f32.mrf.mxu0
        %v523 = vadd.f32 %v432, %v522
        %v524 = vand.u32 %v204, 4294901760
        %v525 = vsub.f32 %v204, %v524
        %526 = vmatmul.f32.gmra.mxu0 %v525
        %v527 = vpop.f32.mrf.mxu0
        %v528 = vadd.f32 %v436, %v527
        %v529 = vand.u32 %v207, 4294901760
        %v530 = vsub.f32 %v207, %v529
        %531 = vmatmul.f32.gmra.mxu0 %v530
        %v532 = vpop.f32.mrf.mxu0
        %v533 = vadd.f32 %v440, %v532
        %v534 = vand.u32 %v210, 4294901760
        %v535 = vsub.f32 %v210, %v534
        %536 = vmatmul.f32.gmra.mxu0 %v535
        %v537 = vpop.f32.mrf.mxu0
        %v538 = vadd.f32 %v444, %v537
        %v539 = vand.u32 %v213, 4294901760
        %v540 = vsub.f32 %v213, %v539
        %541 = vmatmul.f32.gmra.mxu0 %v540
        %v542 = vpop.f32.mrf.mxu0
        %v543 = vadd.f32 %v448, %v542
        %v544 = vand.u32 %v216, 4294901760
        %v545 = vsub.f32 %v216, %v544
        %546 = vmatmul.f32.gmra.mxu0 %v545
        %v547 = vpop.f32.mrf.mxu0
        %v548 = vadd.f32 %v452, %v547
        %v549 = vand.u32 %v219, 4294901760
        %v550 = vsub.f32 %v219, %v549
        %551 = vmatmul.f32.gmra.mxu0 %v550
        %v552 = vpop.f32.mrf.mxu0
        %v553 = vadd.f32 %v456, %v552
        %v554 = vand.u32 %v222, 4294901760
        %v555 = vsub.f32 %v222, %v554
        %556 = vmatmul.f32.gmra.mxu0 %v555
        %v557 = vpop.f32.mrf.mxu0
        %v558 = vadd.f32 %v460, %v557
        %v559 = vand.u32 %v225, 4294901760
        %v560 = vsub.f32 %v225, %v559
        %561 = vmatmul.f32.gmra.mxu0 %v560
        %v562 = vpop.f32.mrf.mxu0
        %v563 = vadd.f32 %v464, %v562
        %v564 = vand.u32 %v228, 4294901760
        %v565 = vsub.f32 %v228, %v564
        %566 = vmatmul.f32.gmra.mxu0 %v565
        %v567 = vpop.f32.mrf.mxu0
        %v568 = vadd.f32 %v468, %v567
        %v569 = vand.u32 %v231, 4294901760
        %v570 = vsub.f32 %v231, %v569
        %571 = vmatmul.f32.gmra.mxu0 %v570
        %v572 = vpop.f32.mrf.mxu0
        %v573 = vadd.f32 %v472, %v572
        %v574 = vand.u32 %v234, 4294901760
        %v575 = vsub.f32 %v234, %v574
        %576 = vmatmul.f32.gmra.mxu0 %v575
        %v577 = vpop.f32.mrf.mxu0
        %v578 = vadd.f32 %v476, %v577
        %v579 = vand.u32 %v237, 4294901760
        %v580 = vsub.f32 %v237, %v579
        %581 = vmatmul.f32.gmra.mxu0 %v580
        %v582 = vpop.f32.mrf.mxu0
        %v583 = vadd.f32 %v480, %v582
        %v584 = vand.u32 %v240, 4294901760
        %v585 = vsub.f32 %v240, %v584
        %586 = vmatmul.f32.gmra.mxu0 %v585
        %v587 = vpop.f32.mrf.mxu0
        %v588 = vadd.f32 %v484, %v587
        %589 = vdwg.mxu0
        %590 = vmatpush.msra.mxu0 0.0
        %591 = vmatpush.msra.mxu0 0.0
        %592 = vmatpush.msra.mxu0 0.0
        %593 = vmatpush.msra.mxu0 0.0
        %594 = vmatpush.msra.mxu0 0.0
        %595 = vmatpush.msra.mxu0 0.0
        %596 = vmatpush.msra.mxu0 0.0
        %597 = vmatpush.msra.mxu0 0.0
        %598 = vmatpush.msra.mxu0 0.0
        %599 = vmatpush.msra.mxu0 0.0
        %600 = vmatpush.msra.mxu0 0.0
        %601 = vmatpush.msra.mxu0 0.0
        %602 = vmatpush.msra.mxu0 0.0
        %603 = vmatpush.msra.mxu0 0.0
        %604 = vmatpush.msra.mxu0 0.0
        %v605 = vand.u32 %v187, 4294901760
        %606 = vmatpush.msra.mxu0 %v605
        %v607 = vand.u32 %v192, 4294901760
        %v608 = vsub.f32 %v192, %v607
        %v609 = vand.u32 %v608, 4294901760
        %610 = vmatmul.f32.gmra.mxu0 %v609
        %v611 = vpop.f32.mrf.mxu0
        %v612 = vadd.f32 %v508, %v611
        %v613 = vand.u32 %v195, 4294901760
        %v614 = vsub.f32 %v195, %v613
        %v615 = vand.u32 %v614, 4294901760
        %616 = vmatmul.f32.gmra.mxu0 %v615
        %v617 = vpop.f32.mrf.mxu0
        %v618 = vadd.f32 %v513, %v617
        %v619 = vand.u32 %v198, 4294901760
        %v620 = vsub.f32 %v198, %v619
        %v621 = vand.u32 %v620, 4294901760
        %622 = vmatmul.f32.gmra.mxu0 %v621
        %v623 = vpop.f32.mrf.mxu0
        %v624 = vadd.f32 %v518, %v623
        %v625 = vand.u32 %v201, 4294901760
        %v626 = vsub.f32 %v201, %v625
        %v627 = vand.u32 %v626, 4294901760
        %628 = vmatmul.f32.gmra.mxu0 %v627
        %v629 = vpop.f32.mrf.mxu0
        %v630 = vadd.f32 %v523, %v629
        %v631 = vand.u32 %v204, 4294901760
        %v632 = vsub.f32 %v204, %v631
        %v633 = vand.u32 %v632, 4294901760
        %634 = vmatmul.f32.gmra.mxu0 %v633
        %v635 = vpop.f32.mrf.mxu0
        %v636 = vadd.f32 %v528, %v635
        %v637 = vand.u32 %v207, 4294901760
        %v638 = vsub.f32 %v207, %v637
        %v639 = vand.u32 %v638, 4294901760
        %640 = vmatmul.f32.gmra.mxu0 %v639
        %v641 = vpop.f32.mrf.mxu0
        %v642 = vadd.f32 %v533, %v641
        %v643 = vand.u32 %v210, 4294901760
        %v644 = vsub.f32 %v210, %v643
        %v645 = vand.u32 %v644, 4294901760
        %646 = vmatmul.f32.gmra.mxu0 %v645
        %v647 = vpop.f32.mrf.mxu0
        %v648 = vadd.f32 %v538, %v647
        %v649 = vand.u32 %v213, 4294901760
        %v650 = vsub.f32 %v213, %v649
        %v651 = vand.u32 %v650, 4294901760
        %652 = vmatmul.f32.gmra.mxu0 %v651
        %v653 = vpop.f32.mrf.mxu0
        %v654 = vadd.f32 %v543, %v653
        %v655 = vand.u32 %v216, 4294901760
        %v656 = vsub.f32 %v216, %v655
        %v657 = vand.u32 %v656, 4294901760
        %658 = vmatmul.f32.gmra.mxu0 %v657
        %v659 = vpop.f32.mrf.mxu0
        %v660 = vadd.f32 %v548, %v659
        %v661 = vand.u32 %v219, 4294901760
        %v662 = vsub.f32 %v219, %v661
        %v663 = vand.u32 %v662, 4294901760
        %664 = vmatmul.f32.gmra.mxu0 %v663
        %v665 = vpop.f32.mrf.mxu0
        %v666 = vadd.f32 %v553, %v665
        %v667 = vand.u32 %v222, 4294901760
        %v668 = vsub.f32 %v222, %v667
        %v669 = vand.u32 %v668, 4294901760
        %670 = vmatmul.f32.gmra.mxu0 %v669
        %v671 = vpop.f32.mrf.mxu0
        %v672 = vadd.f32 %v558, %v671
        %v673 = vand.u32 %v225, 4294901760
        %v674 = vsub.f32 %v225, %v673
        %v675 = vand.u32 %v674, 4294901760
        %676 = vmatmul.f32.gmra.mxu0 %v675
        %v677 = vpop.f32.mrf.mxu0
        %v678 = vadd.f32 %v563, %v677
        %v679 = vand.u32 %v228, 4294901760
        %v680 = vsub.f32 %v228, %v679
        %v681 = vand.u32 %v680, 4294901760
        %682 = vmatmul.f32.gmra.mxu0 %v681
        %v683 = vpop.f32.mrf.mxu0
        %v684 = vadd.f32 %v568, %v683
        %v685 = vand.u32 %v231, 4294901760
        %v686 = vsub.f32 %v231, %v685
        %v687 = vand.u32 %v686, 4294901760
        %688 = vmatmul.f32.gmra.mxu0 %v687
        %v689 = vpop.f32.mrf.mxu0
        %v690 = vadd.f32 %v573, %v689
        %v691 = vand.u32 %v234, 4294901760
        %v692 = vsub.f32 %v234, %v691
        %v693 = vand.u32 %v692, 4294901760
        %694 = vmatmul.f32.gmra.mxu0 %v693
        %v695 = vpop.f32.mrf.mxu0
        %v696 = vadd.f32 %v578, %v695
        %v697 = vand.u32 %v237, 4294901760
        %v698 = vsub.f32 %v237, %v697
        %v699 = vand.u32 %v698, 4294901760
        %700 = vmatmul.f32.gmra.mxu0 %v699
        %v701 = vpop.f32.mrf.mxu0
        %v702 = vadd.f32 %v583, %v701
        %v703 = vand.u32 %v240, 4294901760
        %v704 = vsub.f32 %v240, %v703
        %v705 = vand.u32 %v704, 4294901760
        %706 = vmatmul.f32.gmra.mxu0 %v705
        %v707 = vpop.f32.mrf.mxu0
        %v708 = vadd.f32 %v588, %v707
        %709 = vdwg.mxu0
        %710 = vmatpush.msra.mxu0 0.0
        %711 = vmatpush.msra.mxu0 0.0
        %712 = vmatpush.msra.mxu0 0.0
        %713 = vmatpush.msra.mxu0 0.0
        %714 = vmatpush.msra.mxu0 0.0
        %715 = vmatpush.msra.mxu0 0.0
        %716 = vmatpush.msra.mxu0 0.0
        %717 = vmatpush.msra.mxu0 0.0
        %718 = vmatpush.msra.mxu0 0.0
        %719 = vmatpush.msra.mxu0 0.0
        %720 = vmatpush.msra.mxu0 0.0
        %721 = vmatpush.msra.mxu0 0.0
        %722 = vmatpush.msra.mxu0 0.0
        %723 = vmatpush.msra.mxu0 0.0
        %724 = vmatpush.msra.mxu0 0.0
        %v725 = vand.u32 %v187, 4294901760
        %v726 = vsub.f32 %v187, %v725
        %v727 = vand.u32 %v726, 4294901760
        %728 = vmatpush.msra.mxu0 %v727
        %v729 = vand.u32 %v192, 4294901760
        %730 = vmatmul.f32.gmra.mxu0 %v729
        %v731 = vpop.f32.mrf.mxu0
        %v732 = vadd.f32 %v612, %v731
        %v733 = vand.u32 %v195, 4294901760
        %734 = vmatmul.f32.gmra.mxu0 %v733
        %v735 = vpop.f32.mrf.mxu0
        %v736 = vadd.f32 %v618, %v735
        %v737 = vand.u32 %v198, 4294901760
        %738 = vmatmul.f32.gmra.mxu0 %v737
        %v739 = vpop.f32.mrf.mxu0
        %v740 = vadd.f32 %v624, %v739
        %v741 = vand.u32 %v201, 4294901760
        %742 = vmatmul.f32.gmra.mxu0 %v741
        %v743 = vpop.f32.mrf.mxu0
        %v744 = vadd.f32 %v630, %v743
        %v745 = vand.u32 %v204, 4294901760
        %746 = vmatmul.f32.gmra.mxu0 %v745
        %v747 = vpop.f32.mrf.mxu0
        %v748 = vadd.f32 %v636, %v747
        %v749 = vand.u32 %v207, 4294901760
        %750 = vmatmul.f32.gmra.mxu0 %v749
        %v751 = vpop.f32.mrf.mxu0
        %v752 = vadd.f32 %v642, %v751
        %v753 = vand.u32 %v210, 4294901760
        %754 = vmatmul.f32.gmra.mxu0 %v753
        %v755 = vpop.f32.mrf.mxu0
        %v756 = vadd.f32 %v648, %v755
        %v757 = vand.u32 %v213, 4294901760
        %758 = vmatmul.f32.gmra.mxu0 %v757
        %v759 = vpop.f32.mrf.mxu0
        %v760 = vadd.f32 %v654, %v759
        %v761 = vand.u32 %v216, 4294901760
        %762 = vmatmul.f32.gmra.mxu0 %v761
        %v763 = vpop.f32.mrf.mxu0
        %v764 = vadd.f32 %v660, %v763
        %v765 = vand.u32 %v219, 4294901760
        %766 = vmatmul.f32.gmra.mxu0 %v765
        %v767 = vpop.f32.mrf.mxu0
        %v768 = vadd.f32 %v666, %v767
        %v769 = vand.u32 %v222, 4294901760
        %770 = vmatmul.f32.gmra.mxu0 %v769
        %v771 = vpop.f32.mrf.mxu0
        %v772 = vadd.f32 %v672, %v771
        %v773 = vand.u32 %v225, 4294901760
        %774 = vmatmul.f32.gmra.mxu0 %v773
        %v775 = vpop.f32.mrf.mxu0
        %v776 = vadd.f32 %v678, %v775
        %v777 = vand.u32 %v228, 4294901760
        %778 = vmatmul.f32.gmra.mxu0 %v777
        %v779 = vpop.f32.mrf.mxu0
        %v780 = vadd.f32 %v684, %v779
        %v781 = vand.u32 %v231, 4294901760
        %782 = vmatmul.f32.gmra.mxu0 %v781
        %v783 = vpop.f32.mrf.mxu0
        %v784 = vadd.f32 %v690, %v783
        %v785 = vand.u32 %v234, 4294901760
        %786 = vmatmul.f32.gmra.mxu0 %v785
        %v787 = vpop.f32.mrf.mxu0
        %v788 = vadd.f32 %v696, %v787
        %v789 = vand.u32 %v237, 4294901760
        %790 = vmatmul.f32.gmra.mxu0 %v789
        %v791 = vpop.f32.mrf.mxu0
        %v792 = vadd.f32 %v702, %v791
        %v793 = vand.u32 %v240, 4294901760
        %794 = vmatmul.f32.gmra.mxu0 %v793
        %v795 = vpop.f32.mrf.mxu0
        %v796 = vadd.f32 %v708, %v795
        %797 = vdwg.mxu0
        %798 = vmatpush.msra.mxu0 0.0
        %799 = vmatpush.msra.mxu0 0.0
        %800 = vmatpush.msra.mxu0 0.0
        %801 = vmatpush.msra.mxu0 0.0
        %802 = vmatpush.msra.mxu0 0.0
        %803 = vmatpush.msra.mxu0 0.0
        %804 = vmatpush.msra.mxu0 0.0
        %805 = vmatpush.msra.mxu0 0.0
        %806 = vmatpush.msra.mxu0 0.0
        %807 = vmatpush.msra.mxu0 0.0
        %808 = vmatpush.msra.mxu0 0.0
        %809 = vmatpush.msra.mxu0 0.0
        %810 = vmatpush.msra.mxu0 0.0
        %811 = vmatpush.msra.mxu0 0.0
        %812 = vmatpush.msra.mxu0 0.0
        %v813 = vand.u32 %v187, 4294901760
        %814 = vmatpush.msra.mxu0 %v813
        %v815 = vand.u32 %v192, 4294901760
        %816 = vmatmul.f32.gmra.mxu0 %v815
        %v817 = vpop.f32.mrf.mxu0
        %v818 = vadd.f32 %v732, %v817
        %v819 = vand.u32 %v195, 4294901760
        %820 = vmatmul.f32.gmra.mxu0 %v819
        %v821 = vpop.f32.mrf.mxu0
        %v822 = vadd.f32 %v736, %v821
        %v823 = vand.u32 %v198, 4294901760
        %824 = vmatmul.f32.gmra.mxu0 %v823
        %v825 = vpop.f32.mrf.mxu0
        %v826 = vadd.f32 %v740, %v825
        %v827 = vand.u32 %v201, 4294901760
        %828 = vmatmul.f32.gmra.mxu0 %v827
        %v829 = vpop.f32.mrf.mxu0
        %v830 = vadd.f32 %v744, %v829
        %v831 = vand.u32 %v204, 4294901760
        %832 = vmatmul.f32.gmra.mxu0 %v831
        %v833 = vpop.f32.mrf.mxu0
        %v834 = vadd.f32 %v748, %v833
        %v835 = vand.u32 %v207, 4294901760
        %836 = vmatmul.f32.gmra.mxu0 %v835
        %v837 = vpop.f32.mrf.mxu0
        %v838 = vadd.f32 %v752, %v837
        %v839 = vand.u32 %v210, 4294901760
        %840 = vmatmul.f32.gmra.mxu0 %v839
        %v841 = vpop.f32.mrf.mxu0
        %v842 = vadd.f32 %v756, %v841
        %v843 = vand.u32 %v213, 4294901760
        %844 = vmatmul.f32.gmra.mxu0 %v843
        %v845 = vpop.f32.mrf.mxu0
        %v846 = vadd.f32 %v760, %v845
        %v847 = vand.u32 %v216, 4294901760
        %848 = vmatmul.f32.gmra.mxu0 %v847
        %v849 = vpop.f32.mrf.mxu0
        %v850 = vadd.f32 %v764, %v849
        %v851 = vand.u32 %v219, 4294901760
        %852 = vmatmul.f32.gmra.mxu0 %v851
        %v853 = vpop.f32.mrf.mxu0
        %v854 = vadd.f32 %v768, %v853
        %v855 = vand.u32 %v222, 4294901760
        %856 = vmatmul.f32.gmra.mxu0 %v855
        %v857 = vpop.f32.mrf.mxu0
        %v858 = vadd.f32 %v772, %v857
        %v859 = vand.u32 %v225, 4294901760
        %860 = vmatmul.f32.gmra.mxu0 %v859
        %v861 = vpop.f32.mrf.mxu0
        %v862 = vadd.f32 %v776, %v861
        %v863 = vand.u32 %v228, 4294901760
        %864 = vmatmul.f32.gmra.mxu0 %v863
        %v865 = vpop.f32.mrf.mxu0
        %v866 = vadd.f32 %v780, %v865
        %v867 = vand.u32 %v231, 4294901760
        %868 = vmatmul.f32.gmra.mxu0 %v867
        %v869 = vpop.f32.mrf.mxu0
        %v870 = vadd.f32 %v784, %v869
        %v871 = vand.u32 %v234, 4294901760
        %872 = vmatmul.f32.gmra.mxu0 %v871
        %v873 = vpop.f32.mrf.mxu0
        %v874 = vadd.f32 %v788, %v873
        %v875 = vand.u32 %v237, 4294901760
        %876 = vmatmul.f32.gmra.mxu0 %v875
        %v877 = vpop.f32.mrf.mxu0
        %v878 = vadd.f32 %v792, %v877
        %v879 = vand.u32 %v240, 4294901760
        %880 = vmatmul.f32.gmra.mxu0 %v879
        %v881 = vpop.f32.mrf.mxu0
        %v882 = vadd.f32 %v796, %v881
        %883 = vdwg.mxu0
        %884 = vmatpush.msra.mxu0 0.0
        %885 = vmatpush.msra.mxu0 0.0
        %886 = vmatpush.msra.mxu0 0.0
        %887 = vmatpush.msra.mxu0 0.0
        %888 = vmatpush.msra.mxu0 0.0
        %889 = vmatpush.msra.mxu0 0.0
        %890 = vmatpush.msra.mxu0 0.0
        %891 = vmatpush.msra.mxu0 0.0
        %892 = vmatpush.msra.mxu0 0.0
        %893 = vmatpush.msra.mxu0 0.0
        %894 = vmatpush.msra.mxu0 0.0
        %895 = vmatpush.msra.mxu0 0.0
        %896 = vmatpush.msra.mxu0 0.0
        %897 = vmatpush.msra.mxu0 0.0
        %898 = vmatpush.msra.mxu0 0.0
        %v899 = vand.u32 %v188, 4294901760
        %900 = vmatpush.msra.mxu0 %v899
        %v901 = vand.u32 %v192, 4294901760
        %v902 = vsub.f32 %v192, %v901
        %v903 = vand.u32 %v902, 4294901760
        %v904 = vsub.f32 %v902, %v903
        %v905 = vand.u32 %v904, 4294901760
        %906 = vmatmul.f32.gmra.mxu0 %v905
        %v907 = vpop.f32.mrf.mxu0
        %v908 = vadd.f32 0.0, %v907
        %v909 = vand.u32 %v195, 4294901760
        %v910 = vsub.f32 %v195, %v909
        %v911 = vand.u32 %v910, 4294901760
        %v912 = vsub.f32 %v910, %v911
        %v913 = vand.u32 %v912, 4294901760
        %914 = vmatmul.f32.gmra.mxu0 %v913
        %v915 = vpop.f32.mrf.mxu0
        %v916 = vadd.f32 0.0, %v915
        %v917 = vand.u32 %v198, 4294901760
        %v918 = vsub.f32 %v198, %v917
        %v919 = vand.u32 %v918, 4294901760
        %v920 = vsub.f32 %v918, %v919
        %v921 = vand.u32 %v920, 4294901760
        %922 = vmatmul.f32.gmra.mxu0 %v921
        %v923 = vpop.f32.mrf.mxu0
        %v924 = vadd.f32 0.0, %v923
        %v925 = vand.u32 %v201, 4294901760
        %v926 = vsub.f32 %v201, %v925
        %v927 = vand.u32 %v926, 4294901760
        %v928 = vsub.f32 %v926, %v927
        %v929 = vand.u32 %v928, 4294901760
        %930 = vmatmul.f32.gmra.mxu0 %v929
        %v931 = vpop.f32.mrf.mxu0
        %v932 = vadd.f32 0.0, %v931
        %v933 = vand.u32 %v204, 4294901760
        %v934 = vsub.f32 %v204, %v933
        %v935 = vand.u32 %v934, 4294901760
        %v936 = vsub.f32 %v934, %v935
        %v937 = vand.u32 %v936, 4294901760
        %938 = vmatmul.f32.gmra.mxu0 %v937
        %v939 = vpop.f32.mrf.mxu0
        %v940 = vadd.f32 0.0, %v939
        %v941 = vand.u32 %v207, 4294901760
        %v942 = vsub.f32 %v207, %v941
        %v943 = vand.u32 %v942, 4294901760
        %v944 = vsub.f32 %v942, %v943
        %v945 = vand.u32 %v944, 4294901760
        %946 = vmatmul.f32.gmra.mxu0 %v945
        %v947 = vpop.f32.mrf.mxu0
        %v948 = vadd.f32 0.0, %v947
        %v949 = vand.u32 %v210, 4294901760
        %v950 = vsub.f32 %v210, %v949
        %v951 = vand.u32 %v950, 4294901760
        %v952 = vsub.f32 %v950, %v951
        %v953 = vand.u32 %v952, 4294901760
        %954 = vmatmul.f32.gmra.mxu0 %v953
        %v955 = vpop.f32.mrf.mxu0
        %v956 = vadd.f32 0.0, %v955
        %v957 = vand.u32 %v213, 4294901760
        %v958 = vsub.f32 %v213, %v957
        %v959 = vand.u32 %v958, 4294901760
        %v960 = vsub.f32 %v958, %v959
        %v961 = vand.u32 %v960, 4294901760
        %962 = vmatmul.f32.gmra.mxu0 %v961
        %v963 = vpop.f32.mrf.mxu0
        %v964 = vadd.f32 0.0, %v963
        %v965 = vand.u32 %v216, 4294901760
        %v966 = vsub.f32 %v216, %v965
        %v967 = vand.u32 %v966, 4294901760
        %v968 = vsub.f32 %v966, %v967
        %v969 = vand.u32 %v968, 4294901760
        %970 = vmatmul.f32.gmra.mxu0 %v969
        %v971 = vpop.f32.mrf.mxu0
        %v972 = vadd.f32 0.0, %v971
        %v973 = vand.u32 %v219, 4294901760
        %v974 = vsub.f32 %v219, %v973
        %v975 = vand.u32 %v974, 4294901760
        %v976 = vsub.f32 %v974, %v975
        %v977 = vand.u32 %v976, 4294901760
        %978 = vmatmul.f32.gmra.mxu0 %v977
        %v979 = vpop.f32.mrf.mxu0
        %v980 = vadd.f32 0.0, %v979
        %v981 = vand.u32 %v222, 4294901760
        %v982 = vsub.f32 %v222, %v981
        %v983 = vand.u32 %v982, 4294901760
        %v984 = vsub.f32 %v982, %v983
        %v985 = vand.u32 %v984, 4294901760
        %986 = vmatmul.f32.gmra.mxu0 %v985
        %v987 = vpop.f32.mrf.mxu0
        %v988 = vadd.f32 0.0, %v987
        %v989 = vand.u32 %v225, 4294901760
        %v990 = vsub.f32 %v225, %v989
        %v991 = vand.u32 %v990, 4294901760
        %v992 = vsub.f32 %v990, %v991
        %v993 = vand.u32 %v992, 4294901760
        %994 = vmatmul.f32.gmra.mxu0 %v993
        %v995 = vpop.f32.mrf.mxu0
        %v996 = vadd.f32 0.0, %v995
        %v997 = vand.u32 %v228, 4294901760
        %v998 = vsub.f32 %v228, %v997
        %v999 = vand.u32 %v998, 4294901760
        %v1000 = vsub.f32 %v998, %v999
        %v1001 = vand.u32 %v1000, 4294901760
        %1002 = vmatmul.f32.gmra.mxu0 %v1001
        %v1003 = vpop.f32.mrf.mxu0
        %v1004 = vadd.f32 0.0, %v1003
        %v1005 = vand.u32 %v231, 4294901760
        %v1006 = vsub.f32 %v231, %v1005
        %v1007 = vand.u32 %v1006, 4294901760
        %v1008 = vsub.f32 %v1006, %v1007
        %v1009 = vand.u32 %v1008, 4294901760
        %1010 = vmatmul.f32.gmra.mxu0 %v1009
        %v1011 = vpop.f32.mrf.mxu0
        %v1012 = vadd.f32 0.0, %v1011
        %v1013 = vand.u32 %v234, 4294901760
        %v1014 = vsub.f32 %v234, %v1013
        %v1015 = vand.u32 %v1014, 4294901760
        %v1016 = vsub.f32 %v1014, %v1015
        %v1017 = vand.u32 %v1016, 4294901760
        %1018 = vmatmul.f32.gmra.mxu0 %v1017
        %v1019 = vpop.f32.mrf.mxu0
        %v1020 = vadd.f32 0.0, %v1019
        %v1021 = vand.u32 %v237, 4294901760
        %v1022 = vsub.f32 %v237, %v1021
        %v1023 = vand.u32 %v1022, 4294901760
        %v1024 = vsub.f32 %v1022, %v1023
        %v1025 = vand.u32 %v1024, 4294901760
        %1026 = vmatmul.f32.gmra.mxu0 %v1025
        %v1027 = vpop.f32.mrf.mxu0
        %v1028 = vadd.f32 0.0, %v1027
        %v1029 = vand.u32 %v240, 4294901760
        %v1030 = vsub.f32 %v240, %v1029
        %v1031 = vand.u32 %v1030, 4294901760
        %v1032 = vsub.f32 %v1030, %v1031
        %v1033 = vand.u32 %v1032, 4294901760
        %1034 = vmatmul.f32.gmra.mxu0 %v1033
        %v1035 = vpop.f32.mrf.mxu0
        %v1036 = vadd.f32 0.0, %v1035
        %1037 = vdwg.mxu0
        %1038 = vmatpush.msra.mxu0 0.0
        %1039 = vmatpush.msra.mxu0 0.0
        %1040 = vmatpush.msra.mxu0 0.0
        %1041 = vmatpush.msra.mxu0 0.0
        %1042 = vmatpush.msra.mxu0 0.0
        %1043 = vmatpush.msra.mxu0 0.0
        %1044 = vmatpush.msra.mxu0 0.0
        %1045 = vmatpush.msra.mxu0 0.0
        %1046 = vmatpush.msra.mxu0 0.0
        %1047 = vmatpush.msra.mxu0 0.0
        %1048 = vmatpush.msra.mxu0 0.0
        %1049 = vmatpush.msra.mxu0 0.0
        %1050 = vmatpush.msra.mxu0 0.0
        %1051 = vmatpush.msra.mxu0 0.0
        %1052 = vmatpush.msra.mxu0 0.0
        %v1053 = vand.u32 %v188, 4294901760
        %v1054 = vsub.f32 %v188, %v1053
        %v1055 = vand.u32 %v1054, 4294901760
        %v1056 = vsub.f32 %v1054, %v1055
        %v1057 = vand.u32 %v1056, 4294901760
        %1058 = vmatpush.msra.mxu0 %v1057
        %v1059 = vand.u32 %v192, 4294901760
        %1060 = vmatmul.f32.gmra.mxu0 %v1059
        %v1061 = vpop.f32.mrf.mxu0
        %v1062 = vadd.f32 %v908, %v1061
        %v1063 = vand.u32 %v195, 4294901760
        %1064 = vmatmul.f32.gmra.mxu0 %v1063
        %v1065 = vpop.f32.mrf.mxu0
        %v1066 = vadd.f32 %v916, %v1065
        %v1067 = vand.u32 %v198, 4294901760
        %1068 = vmatmul.f32.gmra.mxu0 %v1067
        %v1069 = vpop.f32.mrf.mxu0
        %v1070 = vadd.f32 %v924, %v1069
        %v1071 = vand.u32 %v201, 4294901760
        %1072 = vmatmul.f32.gmra.mxu0 %v1071
        %v1073 = vpop.f32.mrf.mxu0
        %v1074 = vadd.f32 %v932, %v1073
        %v1075 = vand.u32 %v204, 4294901760
        %1076 = vmatmul.f32.gmra.mxu0 %v1075
        %v1077 = vpop.f32.mrf.mxu0
        %v1078 = vadd.f32 %v940, %v1077
        %v1079 = vand.u32 %v207, 4294901760
        %1080 = vmatmul.f32.gmra.mxu0 %v1079
        %v1081 = vpop.f32.mrf.mxu0
        %v1082 = vadd.f32 %v948, %v1081
        %v1083 = vand.u32 %v210, 4294901760
        %1084 = vmatmul.f32.gmra.mxu0 %v1083
        %v1085 = vpop.f32.mrf.mxu0
        %v1086 = vadd.f32 %v956, %v1085
        %v1087 = vand.u32 %v213, 4294901760
        %1088 = vmatmul.f32.gmra.mxu0 %v1087
        %v1089 = vpop.f32.mrf.mxu0
        %v1090 = vadd.f32 %v964, %v1089
        %v1091 = vand.u32 %v216, 4294901760
        %1092 = vmatmul.f32.gmra.mxu0 %v1091
        %v1093 = vpop.f32.mrf.mxu0
        %v1094 = vadd.f32 %v972, %v1093
        %v1095 = vand.u32 %v219, 4294901760
        %1096 = vmatmul.f32.gmra.mxu0 %v1095
        %v1097 = vpop.f32.mrf.mxu0
        %v1098 = vadd.f32 %v980, %v1097
        %v1099 = vand.u32 %v222, 4294901760
        %1100 = vmatmul.f32.gmra.mxu0 %v1099
        %v1101 = vpop.f32.mrf.mxu0
        %v1102 = vadd.f32 %v988, %v1101
        %v1103 = vand.u32 %v225, 4294901760
        %1104 = vmatmul.f32.gmra.mxu0 %v1103
        %v1105 = vpop.f32.mrf.mxu0
        %v1106 = vadd.f32 %v996, %v1105
        %v1107 = vand.u32 %v228, 4294901760
        %1108 = vmatmul.f32.gmra.mxu0 %v1107
        %v1109 = vpop.f32.mrf.mxu0
        %v1110 = vadd.f32 %v1004, %v1109
        %v1111 = vand.u32 %v231, 4294901760
        %1112 = vmatmul.f32.gmra.mxu0 %v1111
        %v1113 = vpop.f32.mrf.mxu0
        %v1114 = vadd.f32 %v1012, %v1113
        %v1115 = vand.u32 %v234, 4294901760
        %1116 = vmatmul.f32.gmra.mxu0 %v1115
        %v1117 = vpop.f32.mrf.mxu0
        %v1118 = vadd.f32 %v1020, %v1117
        %v1119 = vand.u32 %v237, 4294901760
        %1120 = vmatmul.f32.gmra.mxu0 %v1119
        %v1121 = vpop.f32.mrf.mxu0
        %v1122 = vadd.f32 %v1028, %v1121
        %v1123 = vand.u32 %v240, 4294901760
        %1124 = vmatmul.f32.gmra.mxu0 %v1123
        %v1125 = vpop.f32.mrf.mxu0
        %v1126 = vadd.f32 %v1036, %v1125
        %1127 = vdwg.mxu0
        %1128 = vmatpush.msra.mxu0 0.0
        %1129 = vmatpush.msra.mxu0 0.0
        %1130 = vmatpush.msra.mxu0 0.0
        %1131 = vmatpush.msra.mxu0 0.0
        %1132 = vmatpush.msra.mxu0 0.0
        %1133 = vmatpush.msra.mxu0 0.0
        %1134 = vmatpush.msra.mxu0 0.0
        %1135 = vmatpush.msra.mxu0 0.0
        %1136 = vmatpush.msra.mxu0 0.0
        %1137 = vmatpush.msra.mxu0 0.0
        %1138 = vmatpush.msra.mxu0 0.0
        %1139 = vmatpush.msra.mxu0 0.0
        %1140 = vmatpush.msra.mxu0 0.0
        %1141 = vmatpush.msra.mxu0 0.0
        %1142 = vmatpush.msra.mxu0 0.0
        %v1143 = vand.u32 %v188, 4294901760
        %v1144 = vsub.f32 %v188, %v1143
        %1145 = vmatpush.msra.mxu0 %v1144
        %v1146 = vand.u32 %v192, 4294901760
        %v1147 = vsub.f32 %v192, %v1146
        %1148 = vmatmul.f32.gmra.mxu0 %v1147
        %v1149 = vpop.f32.mrf.mxu0
        %v1150 = vadd.f32 %v1062, %v1149
        %v1151 = vand.u32 %v195, 4294901760
        %v1152 = vsub.f32 %v195, %v1151
        %1153 = vmatmul.f32.gmra.mxu0 %v1152
        %v1154 = vpop.f32.mrf.mxu0
        %v1155 = vadd.f32 %v1066, %v1154
        %v1156 = vand.u32 %v198, 4294901760
        %v1157 = vsub.f32 %v198, %v1156
        %1158 = vmatmul.f32.gmra.mxu0 %v1157
        %v1159 = vpop.f32.mrf.mxu0
        %v1160 = vadd.f32 %v1070, %v1159
        %v1161 = vand.u32 %v201, 4294901760
        %v1162 = vsub.f32 %v201, %v1161
        %1163 = vmatmul.f32.gmra.mxu0 %v1162
        %v1164 = vpop.f32.mrf.mxu0
        %v1165 = vadd.f32 %v1074, %v1164
        %v1166 = vand.u32 %v204, 4294901760
        %v1167 = vsub.f32 %v204, %v1166
        %1168 = vmatmul.f32.gmra.mxu0 %v1167
        %v1169 = vpop.f32.mrf.mxu0
        %v1170 = vadd.f32 %v1078, %v1169
        %v1171 = vand.u32 %v207, 4294901760
        %v1172 = vsub.f32 %v207, %v1171
        %1173 = vmatmul.f32.gmra.mxu0 %v1172
        %v1174 = vpop.f32.mrf.mxu0
        %v1175 = vadd.f32 %v1082, %v1174
        %v1176 = vand.u32 %v210, 4294901760
        %v1177 = vsub.f32 %v210, %v1176
        %1178 = vmatmul.f32.gmra.mxu0 %v1177
        %v1179 = vpop.f32.mrf.mxu0
        %v1180 = vadd.f32 %v1086, %v1179
        %v1181 = vand.u32 %v213, 4294901760
        %v1182 = vsub.f32 %v213, %v1181
        %1183 = vmatmul.f32.gmra.mxu0 %v1182
        %v1184 = vpop.f32.mrf.mxu0
        %v1185 = vadd.f32 %v1090, %v1184
        %v1186 = vand.u32 %v216, 4294901760
        %v1187 = vsub.f32 %v216, %v1186
        %1188 = vmatmul.f32.gmra.mxu0 %v1187
        %v1189 = vpop.f32.mrf.mxu0
        %v1190 = vadd.f32 %v1094, %v1189
        %v1191 = vand.u32 %v219, 4294901760
        %v1192 = vsub.f32 %v219, %v1191
        %1193 = vmatmul.f32.gmra.mxu0 %v1192
        %v1194 = vpop.f32.mrf.mxu0
        %v1195 = vadd.f32 %v1098, %v1194
        %v1196 = vand.u32 %v222, 4294901760
        %v1197 = vsub.f32 %v222, %v1196
        %1198 = vmatmul.f32.gmra.mxu0 %v1197
        %v1199 = vpop.f32.mrf.mxu0
        %v1200 = vadd.f32 %v1102, %v1199
        %v1201 = vand.u32 %v225, 4294901760
        %v1202 = vsub.f32 %v225, %v1201
        %1203 = vmatmul.f32.gmra.mxu0 %v1202
        %v1204 = vpop.f32.mrf.mxu0
        %v1205 = vadd.f32 %v1106, %v1204
        %v1206 = vand.u32 %v228, 4294901760
        %v1207 = vsub.f32 %v228, %v1206
        %1208 = vmatmul.f32.gmra.mxu0 %v1207
        %v1209 = vpop.f32.mrf.mxu0
        %v1210 = vadd.f32 %v1110, %v1209
        %v1211 = vand.u32 %v231, 4294901760
        %v1212 = vsub.f32 %v231, %v1211
        %1213 = vmatmul.f32.gmra.mxu0 %v1212
        %v1214 = vpop.f32.mrf.mxu0
        %v1215 = vadd.f32 %v1114, %v1214
        %v1216 = vand.u32 %v234, 4294901760
        %v1217 = vsub.f32 %v234, %v1216
        %1218 = vmatmul.f32.gmra.mxu0 %v1217
        %v1219 = vpop.f32.mrf.mxu0
        %v1220 = vadd.f32 %v1118, %v1219
        %v1221 = vand.u32 %v237, 4294901760
        %v1222 = vsub.f32 %v237, %v1221
        %1223 = vmatmul.f32.gmra.mxu0 %v1222
        %v1224 = vpop.f32.mrf.mxu0
        %v1225 = vadd.f32 %v1122, %v1224
        %v1226 = vand.u32 %v240, 4294901760
        %v1227 = vsub.f32 %v240, %v1226
        %1228 = vmatmul.f32.gmra.mxu0 %v1227
        %v1229 = vpop.f32.mrf.mxu0
        %v1230 = vadd.f32 %v1126, %v1229
        %1231 = vdwg.mxu0
        %1232 = vmatpush.msra.mxu0 0.0
        %1233 = vmatpush.msra.mxu0 0.0
        %1234 = vmatpush.msra.mxu0 0.0
        %1235 = vmatpush.msra.mxu0 0.0
        %1236 = vmatpush.msra.mxu0 0.0
        %1237 = vmatpush.msra.mxu0 0.0
        %1238 = vmatpush.msra.mxu0 0.0
        %1239 = vmatpush.msra.mxu0 0.0
        %1240 = vmatpush.msra.mxu0 0.0
        %1241 = vmatpush.msra.mxu0 0.0
        %1242 = vmatpush.msra.mxu0 0.0
        %1243 = vmatpush.msra.mxu0 0.0
        %1244 = vmatpush.msra.mxu0 0.0
        %1245 = vmatpush.msra.mxu0 0.0
        %1246 = vmatpush.msra.mxu0 0.0
        %v1247 = vand.u32 %v188, 4294901760
        %1248 = vmatpush.msra.mxu0 %v1247
        %v1249 = vand.u32 %v192, 4294901760
        %v1250 = vsub.f32 %v192, %v1249
        %v1251 = vand.u32 %v1250, 4294901760
        %1252 = vmatmul.f32.gmra.mxu0 %v1251
        %v1253 = vpop.f32.mrf.mxu0
        %v1254 = vadd.f32 %v1150, %v1253
        %v1255 = vand.u32 %v195, 4294901760
        %v1256 = vsub.f32 %v195, %v1255
        %v1257 = vand.u32 %v1256, 4294901760
        %1258 = vmatmul.f32.gmra.mxu0 %v1257
        %v1259 = vpop.f32.mrf.mxu0
        %v1260 = vadd.f32 %v1155, %v1259
        %v1261 = vand.u32 %v198, 4294901760
        %v1262 = vsub.f32 %v198, %v1261
        %v1263 = vand.u32 %v1262, 4294901760
        %1264 = vmatmul.f32.gmra.mxu0 %v1263
        %v1265 = vpop.f32.mrf.mxu0
        %v1266 = vadd.f32 %v1160, %v1265
        %v1267 = vand.u32 %v201, 4294901760
        %v1268 = vsub.f32 %v201, %v1267
        %v1269 = vand.u32 %v1268, 4294901760
        %1270 = vmatmul.f32.gmra.mxu0 %v1269
        %v1271 = vpop.f32.mrf.mxu0
        %v1272 = vadd.f32 %v1165, %v1271
        %v1273 = vand.u32 %v204, 4294901760
        %v1274 = vsub.f32 %v204, %v1273
        %v1275 = vand.u32 %v1274, 4294901760
        %1276 = vmatmul.f32.gmra.mxu0 %v1275
        %v1277 = vpop.f32.mrf.mxu0
        %v1278 = vadd.f32 %v1170, %v1277
        %v1279 = vand.u32 %v207, 4294901760
        %v1280 = vsub.f32 %v207, %v1279
        %v1281 = vand.u32 %v1280, 4294901760
        %1282 = vmatmul.f32.gmra.mxu0 %v1281
        %v1283 = vpop.f32.mrf.mxu0
        %v1284 = vadd.f32 %v1175, %v1283
        %v1285 = vand.u32 %v210, 4294901760
        %v1286 = vsub.f32 %v210, %v1285
        %v1287 = vand.u32 %v1286, 4294901760
        %1288 = vmatmul.f32.gmra.mxu0 %v1287
        %v1289 = vpop.f32.mrf.mxu0
        %v1290 = vadd.f32 %v1180, %v1289
        %v1291 = vand.u32 %v213, 4294901760
        %v1292 = vsub.f32 %v213, %v1291
        %v1293 = vand.u32 %v1292, 4294901760
        %1294 = vmatmul.f32.gmra.mxu0 %v1293
        %v1295 = vpop.f32.mrf.mxu0
        %v1296 = vadd.f32 %v1185, %v1295
        %v1297 = vand.u32 %v216, 4294901760
        %v1298 = vsub.f32 %v216, %v1297
        %v1299 = vand.u32 %v1298, 4294901760
        %1300 = vmatmul.f32.gmra.mxu0 %v1299
        %v1301 = vpop.f32.mrf.mxu0
        %v1302 = vadd.f32 %v1190, %v1301
        %v1303 = vand.u32 %v219, 4294901760
        %v1304 = vsub.f32 %v219, %v1303
        %v1305 = vand.u32 %v1304, 4294901760
        %1306 = vmatmul.f32.gmra.mxu0 %v1305
        %v1307 = vpop.f32.mrf.mxu0
        %v1308 = vadd.f32 %v1195, %v1307
        %v1309 = vand.u32 %v222, 4294901760
        %v1310 = vsub.f32 %v222, %v1309
        %v1311 = vand.u32 %v1310, 4294901760
        %1312 = vmatmul.f32.gmra.mxu0 %v1311
        %v1313 = vpop.f32.mrf.mxu0
        %v1314 = vadd.f32 %v1200, %v1313
        %v1315 = vand.u32 %v225, 4294901760
        %v1316 = vsub.f32 %v225, %v1315
        %v1317 = vand.u32 %v1316, 4294901760
        %1318 = vmatmul.f32.gmra.mxu0 %v1317
        %v1319 = vpop.f32.mrf.mxu0
        %v1320 = vadd.f32 %v1205, %v1319
        %v1321 = vand.u32 %v228, 4294901760
        %v1322 = vsub.f32 %v228, %v1321
        %v1323 = vand.u32 %v1322, 4294901760
        %1324 = vmatmul.f32.gmra.mxu0 %v1323
        %v1325 = vpop.f32.mrf.mxu0
        %v1326 = vadd.f32 %v1210, %v1325
        %v1327 = vand.u32 %v231, 4294901760
        %v1328 = vsub.f32 %v231, %v1327
        %v1329 = vand.u32 %v1328, 4294901760
        %1330 = vmatmul.f32.gmra.mxu0 %v1329
        %v1331 = vpop.f32.mrf.mxu0
        %v1332 = vadd.f32 %v1215, %v1331
        %v1333 = vand.u32 %v234, 4294901760
        %v1334 = vsub.f32 %v234, %v1333
        %v1335 = vand.u32 %v1334, 4294901760
        %1336 = vmatmul.f32.gmra.mxu0 %v1335
        %v1337 = vpop.f32.mrf.mxu0
        %v1338 = vadd.f32 %v1220, %v1337
        %v1339 = vand.u32 %v237, 4294901760
        %v1340 = vsub.f32 %v237, %v1339
        %v1341 = vand.u32 %v1340, 4294901760
        %1342 = vmatmul.f32.gmra.mxu0 %v1341
        %v1343 = vpop.f32.mrf.mxu0
        %v1344 = vadd.f32 %v1225, %v1343
        %v1345 = vand.u32 %v240, 4294901760
        %v1346 = vsub.f32 %v240, %v1345
        %v1347 = vand.u32 %v1346, 4294901760
        %1348 = vmatmul.f32.gmra.mxu0 %v1347
        %v1349 = vpop.f32.mrf.mxu0
        %v1350 = vadd.f32 %v1230, %v1349
        %1351 = vdwg.mxu0
        %1352 = vmatpush.msra.mxu0 0.0
        %1353 = vmatpush.msra.mxu0 0.0
        %1354 = vmatpush.msra.mxu0 0.0
        %1355 = vmatpush.msra.mxu0 0.0
        %1356 = vmatpush.msra.mxu0 0.0
        %1357 = vmatpush.msra.mxu0 0.0
        %1358 = vmatpush.msra.mxu0 0.0
        %1359 = vmatpush.msra.mxu0 0.0
        %1360 = vmatpush.msra.mxu0 0.0
        %1361 = vmatpush.msra.mxu0 0.0
        %1362 = vmatpush.msra.mxu0 0.0
        %1363 = vmatpush.msra.mxu0 0.0
        %1364 = vmatpush.msra.mxu0 0.0
        %1365 = vmatpush.msra.mxu0 0.0
        %1366 = vmatpush.msra.mxu0 0.0
        %v1367 = vand.u32 %v188, 4294901760
        %v1368 = vsub.f32 %v188, %v1367
        %v1369 = vand.u32 %v1368, 4294901760
        %1370 = vmatpush.msra.mxu0 %v1369
        %v1371 = vand.u32 %v192, 4294901760
        %1372 = vmatmul.f32.gmra.mxu0 %v1371
        %v1373 = vpop.f32.mrf.mxu0
        %v1374 = vadd.f32 %v1254, %v1373
        %v1375 = vand.u32 %v195, 4294901760
        %1376 = vmatmul.f32.gmra.mxu0 %v1375
        %v1377 = vpop.f32.mrf.mxu0
        %v1378 = vadd.f32 %v1260, %v1377
        %v1379 = vand.u32 %v198, 4294901760
        %1380 = vmatmul.f32.gmra.mxu0 %v1379
        %v1381 = vpop.f32.mrf.mxu0
        %v1382 = vadd.f32 %v1266, %v1381
        %v1383 = vand.u32 %v201, 4294901760
        %1384 = vmatmul.f32.gmra.mxu0 %v1383
        %v1385 = vpop.f32.mrf.mxu0
        %v1386 = vadd.f32 %v1272, %v1385
        %v1387 = vand.u32 %v204, 4294901760
        %1388 = vmatmul.f32.gmra.mxu0 %v1387
        %v1389 = vpop.f32.mrf.mxu0
        %v1390 = vadd.f32 %v1278, %v1389
        %v1391 = vand.u32 %v207, 4294901760
        %1392 = vmatmul.f32.gmra.mxu0 %v1391
        %v1393 = vpop.f32.mrf.mxu0
        %v1394 = vadd.f32 %v1284, %v1393
        %v1395 = vand.u32 %v210, 4294901760
        %1396 = vmatmul.f32.gmra.mxu0 %v1395
        %v1397 = vpop.f32.mrf.mxu0
        %v1398 = vadd.f32 %v1290, %v1397
        %v1399 = vand.u32 %v213, 4294901760
        %1400 = vmatmul.f32.gmra.mxu0 %v1399
        %v1401 = vpop.f32.mrf.mxu0
        %v1402 = vadd.f32 %v1296, %v1401
        %v1403 = vand.u32 %v216, 4294901760
        %1404 = vmatmul.f32.gmra.mxu0 %v1403
        %v1405 = vpop.f32.mrf.mxu0
        %v1406 = vadd.f32 %v1302, %v1405
        %v1407 = vand.u32 %v219, 4294901760
        %1408 = vmatmul.f32.gmra.mxu0 %v1407
        %v1409 = vpop.f32.mrf.mxu0
        %v1410 = vadd.f32 %v1308, %v1409
        %v1411 = vand.u32 %v222, 4294901760
        %1412 = vmatmul.f32.gmra.mxu0 %v1411
        %v1413 = vpop.f32.mrf.mxu0
        %v1414 = vadd.f32 %v1314, %v1413
        %v1415 = vand.u32 %v225, 4294901760
        %1416 = vmatmul.f32.gmra.mxu0 %v1415
        %v1417 = vpop.f32.mrf.mxu0
        %v1418 = vadd.f32 %v1320, %v1417
        %v1419 = vand.u32 %v228, 4294901760
        %1420 = vmatmul.f32.gmra.mxu0 %v1419
        %v1421 = vpop.f32.mrf.mxu0
        %v1422 = vadd.f32 %v1326, %v1421
        %v1423 = vand.u32 %v231, 4294901760
        %1424 = vmatmul.f32.gmra.mxu0 %v1423
        %v1425 = vpop.f32.mrf.mxu0
        %v1426 = vadd.f32 %v1332, %v1425
        %v1427 = vand.u32 %v234, 4294901760
        %1428 = vmatmul.f32.gmra.mxu0 %v1427
        %v1429 = vpop.f32.mrf.mxu0
        %v1430 = vadd.f32 %v1338, %v1429
        %v1431 = vand.u32 %v237, 4294901760
        %1432 = vmatmul.f32.gmra.mxu0 %v1431
        %v1433 = vpop.f32.mrf.mxu0
        %v1434 = vadd.f32 %v1344, %v1433
        %v1435 = vand.u32 %v240, 4294901760
        %1436 = vmatmul.f32.gmra.mxu0 %v1435
        %v1437 = vpop.f32.mrf.mxu0
        %v1438 = vadd.f32 %v1350, %v1437
        %1439 = vdwg.mxu0
        %1440 = vmatpush.msra.mxu0 0.0
        %1441 = vmatpush.msra.mxu0 0.0
        %1442 = vmatpush.msra.mxu0 0.0
        %1443 = vmatpush.msra.mxu0 0.0
        %1444 = vmatpush.msra.mxu0 0.0
        %1445 = vmatpush.msra.mxu0 0.0
        %1446 = vmatpush.msra.mxu0 0.0
        %1447 = vmatpush.msra.mxu0 0.0
        %1448 = vmatpush.msra.mxu0 0.0
        %1449 = vmatpush.msra.mxu0 0.0
        %1450 = vmatpush.msra.mxu0 0.0
        %1451 = vmatpush.msra.mxu0 0.0
        %1452 = vmatpush.msra.mxu0 0.0
        %1453 = vmatpush.msra.mxu0 0.0
        %1454 = vmatpush.msra.mxu0 0.0
        %v1455 = vand.u32 %v188, 4294901760
        %1456 = vmatpush.msra.mxu0 %v1455
        %v1457 = vand.u32 %v192, 4294901760
        %1458 = vmatmul.f32.gmra.mxu0 %v1457
        %v1459 = vpop.f32.mrf.mxu0
        %v1460 = vadd.f32 %v1374, %v1459
        %v1461 = vand.u32 %v195, 4294901760
        %1462 = vmatmul.f32.gmra.mxu0 %v1461
        %v1463 = vpop.f32.mrf.mxu0
        %v1464 = vadd.f32 %v1378, %v1463
        %v1465 = vand.u32 %v198, 4294901760
        %1466 = vmatmul.f32.gmra.mxu0 %v1465
        %v1467 = vpop.f32.mrf.mxu0
        %v1468 = vadd.f32 %v1382, %v1467
        %v1469 = vand.u32 %v201, 4294901760
        %1470 = vmatmul.f32.gmra.mxu0 %v1469
        %v1471 = vpop.f32.mrf.mxu0
        %v1472 = vadd.f32 %v1386, %v1471
        %v1473 = vand.u32 %v204, 4294901760
        %1474 = vmatmul.f32.gmra.mxu0 %v1473
        %v1475 = vpop.f32.mrf.mxu0
        %v1476 = vadd.f32 %v1390, %v1475
        %v1477 = vand.u32 %v207, 4294901760
        %1478 = vmatmul.f32.gmra.mxu0 %v1477
        %v1479 = vpop.f32.mrf.mxu0
        %v1480 = vadd.f32 %v1394, %v1479
        %v1481 = vand.u32 %v210, 4294901760
        %1482 = vmatmul.f32.gmra.mxu0 %v1481
        %v1483 = vpop.f32.mrf.mxu0
        %v1484 = vadd.f32 %v1398, %v1483
        %v1485 = vand.u32 %v213, 4294901760
        %1486 = vmatmul.f32.gmra.mxu0 %v1485
        %v1487 = vpop.f32.mrf.mxu0
        %v1488 = vadd.f32 %v1402, %v1487
        %v1489 = vand.u32 %v216, 4294901760
        %1490 = vmatmul.f32.gmra.mxu0 %v1489
        %v1491 = vpop.f32.mrf.mxu0
        %v1492 = vadd.f32 %v1406, %v1491
        %v1493 = vand.u32 %v219, 4294901760
        %1494 = vmatmul.f32.gmra.mxu0 %v1493
        %v1495 = vpop.f32.mrf.mxu0
        %v1496 = vadd.f32 %v1410, %v1495
        %v1497 = vand.u32 %v222, 4294901760
        %1498 = vmatmul.f32.gmra.mxu0 %v1497
        %v1499 = vpop.f32.mrf.mxu0
        %v1500 = vadd.f32 %v1414, %v1499
        %v1501 = vand.u32 %v225, 4294901760
        %1502 = vmatmul.f32.gmra.mxu0 %v1501
        %v1503 = vpop.f32.mrf.mxu0
        %v1504 = vadd.f32 %v1418, %v1503
        %v1505 = vand.u32 %v228, 4294901760
        %1506 = vmatmul.f32.gmra.mxu0 %v1505
        %v1507 = vpop.f32.mrf.mxu0
        %v1508 = vadd.f32 %v1422, %v1507
        %v1509 = vand.u32 %v231, 4294901760
        %1510 = vmatmul.f32.gmra.mxu0 %v1509
        %v1511 = vpop.f32.mrf.mxu0
        %v1512 = vadd.f32 %v1426, %v1511
        %v1513 = vand.u32 %v234, 4294901760
        %1514 = vmatmul.f32.gmra.mxu0 %v1513
        %v1515 = vpop.f32.mrf.mxu0
        %v1516 = vadd.f32 %v1430, %v1515
        %v1517 = vand.u32 %v237, 4294901760
        %1518 = vmatmul.f32.gmra.mxu0 %v1517
        %v1519 = vpop.f32.mrf.mxu0
        %v1520 = vadd.f32 %v1434, %v1519
        %v1521 = vand.u32 %v240, 4294901760
        %1522 = vmatmul.f32.gmra.mxu0 %v1521
        %v1523 = vpop.f32.mrf.mxu0
        %v1524 = vadd.f32 %v1438, %v1523
        %1525 = vdwg.mxu0
        %1526 = vmatpush.msra.mxu0 0.0
        %1527 = vmatpush.msra.mxu0 0.0
        %1528 = vmatpush.msra.mxu0 0.0
        %1529 = vmatpush.msra.mxu0 0.0
        %1530 = vmatpush.msra.mxu0 0.0
        %1531 = vmatpush.msra.mxu0 0.0
        %1532 = vmatpush.msra.mxu0 0.0
        %1533 = vmatpush.msra.mxu0 0.0
        %1534 = vmatpush.msra.mxu0 0.0
        %1535 = vmatpush.msra.mxu0 0.0
        %1536 = vmatpush.msra.mxu0 0.0
        %1537 = vmatpush.msra.mxu0 0.0
        %1538 = vmatpush.msra.mxu0 0.0
        %1539 = vmatpush.msra.mxu0 0.0
        %1540 = vmatpush.msra.mxu0 0.0
        %v1541 = vand.u32 %v189, 4294901760
        %1542 = vmatpush.msra.mxu0 %v1541
        %v1543 = vand.u32 %v192, 4294901760
        %v1544 = vsub.f32 %v192, %v1543
        %v1545 = vand.u32 %v1544, 4294901760
        %v1546 = vsub.f32 %v1544, %v1545
        %v1547 = vand.u32 %v1546, 4294901760
        %1548 = vmatmul.f32.gmra.mxu0 %v1547
        %v1549 = vpop.f32.mrf.mxu0
        %v1550 = vadd.f32 0.0, %v1549
        %v1551 = vand.u32 %v195, 4294901760
        %v1552 = vsub.f32 %v195, %v1551
        %v1553 = vand.u32 %v1552, 4294901760
        %v1554 = vsub.f32 %v1552, %v1553
        %v1555 = vand.u32 %v1554, 4294901760
        %1556 = vmatmul.f32.gmra.mxu0 %v1555
        %v1557 = vpop.f32.mrf.mxu0
        %v1558 = vadd.f32 0.0, %v1557
        %v1559 = vand.u32 %v198, 4294901760
        %v1560 = vsub.f32 %v198, %v1559
        %v1561 = vand.u32 %v1560, 4294901760
        %v1562 = vsub.f32 %v1560, %v1561
        %v1563 = vand.u32 %v1562, 4294901760
        %1564 = vmatmul.f32.gmra.mxu0 %v1563
        %v1565 = vpop.f32.mrf.mxu0
        %v1566 = vadd.f32 0.0, %v1565
        %v1567 = vand.u32 %v201, 4294901760
        %v1568 = vsub.f32 %v201, %v1567
        %v1569 = vand.u32 %v1568, 4294901760
        %v1570 = vsub.f32 %v1568, %v1569
        %v1571 = vand.u32 %v1570, 4294901760
        %1572 = vmatmul.f32.gmra.mxu0 %v1571
        %v1573 = vpop.f32.mrf.mxu0
        %v1574 = vadd.f32 0.0, %v1573
        %v1575 = vand.u32 %v204, 4294901760
        %v1576 = vsub.f32 %v204, %v1575
        %v1577 = vand.u32 %v1576, 4294901760
        %v1578 = vsub.f32 %v1576, %v1577
        %v1579 = vand.u32 %v1578, 4294901760
        %1580 = vmatmul.f32.gmra.mxu0 %v1579
        %v1581 = vpop.f32.mrf.mxu0
        %v1582 = vadd.f32 0.0, %v1581
        %v1583 = vand.u32 %v207, 4294901760
        %v1584 = vsub.f32 %v207, %v1583
        %v1585 = vand.u32 %v1584, 4294901760
        %v1586 = vsub.f32 %v1584, %v1585
        %v1587 = vand.u32 %v1586, 4294901760
        %1588 = vmatmul.f32.gmra.mxu0 %v1587
        %v1589 = vpop.f32.mrf.mxu0
        %v1590 = vadd.f32 0.0, %v1589
        %v1591 = vand.u32 %v210, 4294901760
        %v1592 = vsub.f32 %v210, %v1591
        %v1593 = vand.u32 %v1592, 4294901760
        %v1594 = vsub.f32 %v1592, %v1593
        %v1595 = vand.u32 %v1594, 4294901760
        %1596 = vmatmul.f32.gmra.mxu0 %v1595
        %v1597 = vpop.f32.mrf.mxu0
        %v1598 = vadd.f32 0.0, %v1597
        %v1599 = vand.u32 %v213, 4294901760
        %v1600 = vsub.f32 %v213, %v1599
        %v1601 = vand.u32 %v1600, 4294901760
        %v1602 = vsub.f32 %v1600, %v1601
        %v1603 = vand.u32 %v1602, 4294901760
        %1604 = vmatmul.f32.gmra.mxu0 %v1603
        %v1605 = vpop.f32.mrf.mxu0
        %v1606 = vadd.f32 0.0, %v1605
        %v1607 = vand.u32 %v216, 4294901760
        %v1608 = vsub.f32 %v216, %v1607
        %v1609 = vand.u32 %v1608, 4294901760
        %v1610 = vsub.f32 %v1608, %v1609
        %v1611 = vand.u32 %v1610, 4294901760
        %1612 = vmatmul.f32.gmra.mxu0 %v1611
        %v1613 = vpop.f32.mrf.mxu0
        %v1614 = vadd.f32 0.0, %v1613
        %v1615 = vand.u32 %v219, 4294901760
        %v1616 = vsub.f32 %v219, %v1615
        %v1617 = vand.u32 %v1616, 4294901760
        %v1618 = vsub.f32 %v1616, %v1617
        %v1619 = vand.u32 %v1618, 4294901760
        %1620 = vmatmul.f32.gmra.mxu0 %v1619
        %v1621 = vpop.f32.mrf.mxu0
        %v1622 = vadd.f32 0.0, %v1621
        %v1623 = vand.u32 %v222, 4294901760
        %v1624 = vsub.f32 %v222, %v1623
        %v1625 = vand.u32 %v1624, 4294901760
        %v1626 = vsub.f32 %v1624, %v1625
        %v1627 = vand.u32 %v1626, 4294901760
        %1628 = vmatmul.f32.gmra.mxu0 %v1627
        %v1629 = vpop.f32.mrf.mxu0
        %v1630 = vadd.f32 0.0, %v1629
        %v1631 = vand.u32 %v225, 4294901760
        %v1632 = vsub.f32 %v225, %v1631
        %v1633 = vand.u32 %v1632, 4294901760
        %v1634 = vsub.f32 %v1632, %v1633
        %v1635 = vand.u32 %v1634, 4294901760
        %1636 = vmatmul.f32.gmra.mxu0 %v1635
        %v1637 = vpop.f32.mrf.mxu0
        %v1638 = vadd.f32 0.0, %v1637
        %v1639 = vand.u32 %v228, 4294901760
        %v1640 = vsub.f32 %v228, %v1639
        %v1641 = vand.u32 %v1640, 4294901760
        %v1642 = vsub.f32 %v1640, %v1641
        %v1643 = vand.u32 %v1642, 4294901760
        %1644 = vmatmul.f32.gmra.mxu0 %v1643
        %v1645 = vpop.f32.mrf.mxu0
        %v1646 = vadd.f32 0.0, %v1645
        %v1647 = vand.u32 %v231, 4294901760
        %v1648 = vsub.f32 %v231, %v1647
        %v1649 = vand.u32 %v1648, 4294901760
        %v1650 = vsub.f32 %v1648, %v1649
        %v1651 = vand.u32 %v1650, 4294901760
        %1652 = vmatmul.f32.gmra.mxu0 %v1651
        %v1653 = vpop.f32.mrf.mxu0
        %v1654 = vadd.f32 0.0, %v1653
        %v1655 = vand.u32 %v234, 4294901760
        %v1656 = vsub.f32 %v234, %v1655
        %v1657 = vand.u32 %v1656, 4294901760
        %v1658 = vsub.f32 %v1656, %v1657
        %v1659 = vand.u32 %v1658, 4294901760
        %1660 = vmatmul.f32.gmra.mxu0 %v1659
        %v1661 = vpop.f32.mrf.mxu0
        %v1662 = vadd.f32 0.0, %v1661
        %v1663 = vand.u32 %v237, 4294901760
        %v1664 = vsub.f32 %v237, %v1663
        %v1665 = vand.u32 %v1664, 4294901760
        %v1666 = vsub.f32 %v1664, %v1665
        %v1667 = vand.u32 %v1666, 4294901760
        %1668 = vmatmul.f32.gmra.mxu0 %v1667
        %v1669 = vpop.f32.mrf.mxu0
        %v1670 = vadd.f32 0.0, %v1669
        %v1671 = vand.u32 %v240, 4294901760
        %v1672 = vsub.f32 %v240, %v1671
        %v1673 = vand.u32 %v1672, 4294901760
        %v1674 = vsub.f32 %v1672, %v1673
        %v1675 = vand.u32 %v1674, 4294901760
        %1676 = vmatmul.f32.gmra.mxu0 %v1675
        %v1677 = vpop.f32.mrf.mxu0
        %v1678 = vadd.f32 0.0, %v1677
        %1679 = vdwg.mxu0
        %1680 = vmatpush.msra.mxu0 0.0
        %1681 = vmatpush.msra.mxu0 0.0
        %1682 = vmatpush.msra.mxu0 0.0
        %1683 = vmatpush.msra.mxu0 0.0
        %1684 = vmatpush.msra.mxu0 0.0
        %1685 = vmatpush.msra.mxu0 0.0
        %1686 = vmatpush.msra.mxu0 0.0
        %1687 = vmatpush.msra.mxu0 0.0
        %1688 = vmatpush.msra.mxu0 0.0
        %1689 = vmatpush.msra.mxu0 0.0
        %1690 = vmatpush.msra.mxu0 0.0
        %1691 = vmatpush.msra.mxu0 0.0
        %1692 = vmatpush.msra.mxu0 0.0
        %1693 = vmatpush.msra.mxu0 0.0
        %1694 = vmatpush.msra.mxu0 0.0
        %v1695 = vand.u32 %v189, 4294901760
        %v1696 = vsub.f32 %v189, %v1695
        %v1697 = vand.u32 %v1696, 4294901760
        %v1698 = vsub.f32 %v1696, %v1697
        %v1699 = vand.u32 %v1698, 4294901760
        %1700 = vmatpush.msra.mxu0 %v1699
        %v1701 = vand.u32 %v192, 4294901760
        %1702 = vmatmul.f32.gmra.mxu0 %v1701
        %v1703 = vpop.f32.mrf.mxu0
        %v1704 = vadd.f32 %v1550, %v1703
        %v1705 = vand.u32 %v195, 4294901760
        %1706 = vmatmul.f32.gmra.mxu0 %v1705
        %v1707 = vpop.f32.mrf.mxu0
        %v1708 = vadd.f32 %v1558, %v1707
        %v1709 = vand.u32 %v198, 4294901760
        %1710 = vmatmul.f32.gmra.mxu0 %v1709
        %v1711 = vpop.f32.mrf.mxu0
        %v1712 = vadd.f32 %v1566, %v1711
        %v1713 = vand.u32 %v201, 4294901760
        %1714 = vmatmul.f32.gmra.mxu0 %v1713
        %v1715 = vpop.f32.mrf.mxu0
        %v1716 = vadd.f32 %v1574, %v1715
        %v1717 = vand.u32 %v204, 4294901760
        %1718 = vmatmul.f32.gmra.mxu0 %v1717
        %v1719 = vpop.f32.mrf.mxu0
        %v1720 = vadd.f32 %v1582, %v1719
        %v1721 = vand.u32 %v207, 4294901760
        %1722 = vmatmul.f32.gmra.mxu0 %v1721
        %v1723 = vpop.f32.mrf.mxu0
        %v1724 = vadd.f32 %v1590, %v1723
        %v1725 = vand.u32 %v210, 4294901760
        %1726 = vmatmul.f32.gmra.mxu0 %v1725
        %v1727 = vpop.f32.mrf.mxu0
        %v1728 = vadd.f32 %v1598, %v1727
        %v1729 = vand.u32 %v213, 4294901760
        %1730 = vmatmul.f32.gmra.mxu0 %v1729
        %v1731 = vpop.f32.mrf.mxu0
        %v1732 = vadd.f32 %v1606, %v1731
        %v1733 = vand.u32 %v216, 4294901760
        %1734 = vmatmul.f32.gmra.mxu0 %v1733
        %v1735 = vpop.f32.mrf.mxu0
        %v1736 = vadd.f32 %v1614, %v1735
        %v1737 = vand.u32 %v219, 4294901760
        %1738 = vmatmul.f32.gmra.mxu0 %v1737
        %v1739 = vpop.f32.mrf.mxu0
        %v1740 = vadd.f32 %v1622, %v1739
        %v1741 = vand.u32 %v222, 4294901760
        %1742 = vmatmul.f32.gmra.mxu0 %v1741
        %v1743 = vpop.f32.mrf.mxu0
        %v1744 = vadd.f32 %v1630, %v1743
        %v1745 = vand.u32 %v225, 4294901760
        %1746 = vmatmul.f32.gmra.mxu0 %v1745
        %v1747 = vpop.f32.mrf.mxu0
        %v1748 = vadd.f32 %v1638, %v1747
        %v1749 = vand.u32 %v228, 4294901760
        %1750 = vmatmul.f32.gmra.mxu0 %v1749
        %v1751 = vpop.f32.mrf.mxu0
        %v1752 = vadd.f32 %v1646, %v1751
        %v1753 = vand.u32 %v231, 4294901760
        %1754 = vmatmul.f32.gmra.mxu0 %v1753
        %v1755 = vpop.f32.mrf.mxu0
        %v1756 = vadd.f32 %v1654, %v1755
        %v1757 = vand.u32 %v234, 4294901760
        %1758 = vmatmul.f32.gmra.mxu0 %v1757
        %v1759 = vpop.f32.mrf.mxu0
        %v1760 = vadd.f32 %v1662, %v1759
        %v1761 = vand.u32 %v237, 4294901760
        %1762 = vmatmul.f32.gmra.mxu0 %v1761
        %v1763 = vpop.f32.mrf.mxu0
        %v1764 = vadd.f32 %v1670, %v1763
        %v1765 = vand.u32 %v240, 4294901760
        %1766 = vmatmul.f32.gmra.mxu0 %v1765
        %v1767 = vpop.f32.mrf.mxu0
        %v1768 = vadd.f32 %v1678, %v1767
        %1769 = vdwg.mxu0
        %1770 = vmatpush.msra.mxu0 0.0
        %1771 = vmatpush.msra.mxu0 0.0
        %1772 = vmatpush.msra.mxu0 0.0
        %1773 = vmatpush.msra.mxu0 0.0
        %1774 = vmatpush.msra.mxu0 0.0
        %1775 = vmatpush.msra.mxu0 0.0
        %1776 = vmatpush.msra.mxu0 0.0
        %1777 = vmatpush.msra.mxu0 0.0
        %1778 = vmatpush.msra.mxu0 0.0
        %1779 = vmatpush.msra.mxu0 0.0
        %1780 = vmatpush.msra.mxu0 0.0
        %1781 = vmatpush.msra.mxu0 0.0
        %1782 = vmatpush.msra.mxu0 0.0
        %1783 = vmatpush.msra.mxu0 0.0
        %1784 = vmatpush.msra.mxu0 0.0
        %v1785 = vand.u32 %v189, 4294901760
        %v1786 = vsub.f32 %v189, %v1785
        %1787 = vmatpush.msra.mxu0 %v1786
        %v1788 = vand.u32 %v192, 4294901760
        %v1789 = vsub.f32 %v192, %v1788
        %1790 = vmatmul.f32.gmra.mxu0 %v1789
        %v1791 = vpop.f32.mrf.mxu0
        %v1792 = vadd.f32 %v1704, %v1791
        %v1793 = vand.u32 %v195, 4294901760
        %v1794 = vsub.f32 %v195, %v1793
        %1795 = vmatmul.f32.gmra.mxu0 %v1794
        %v1796 = vpop.f32.mrf.mxu0
        %v1797 = vadd.f32 %v1708, %v1796
        %v1798 = vand.u32 %v198, 4294901760
        %v1799 = vsub.f32 %v198, %v1798
        %1800 = vmatmul.f32.gmra.mxu0 %v1799
        %v1801 = vpop.f32.mrf.mxu0
        %v1802 = vadd.f32 %v1712, %v1801
        %v1803 = vand.u32 %v201, 4294901760
        %v1804 = vsub.f32 %v201, %v1803
        %1805 = vmatmul.f32.gmra.mxu0 %v1804
        %v1806 = vpop.f32.mrf.mxu0
        %v1807 = vadd.f32 %v1716, %v1806
        %v1808 = vand.u32 %v204, 4294901760
        %v1809 = vsub.f32 %v204, %v1808
        %1810 = vmatmul.f32.gmra.mxu0 %v1809
        %v1811 = vpop.f32.mrf.mxu0
        %v1812 = vadd.f32 %v1720, %v1811
        %v1813 = vand.u32 %v207, 4294901760
        %v1814 = vsub.f32 %v207, %v1813
        %1815 = vmatmul.f32.gmra.mxu0 %v1814
        %v1816 = vpop.f32.mrf.mxu0
        %v1817 = vadd.f32 %v1724, %v1816
        %v1818 = vand.u32 %v210, 4294901760
        %v1819 = vsub.f32 %v210, %v1818
        %1820 = vmatmul.f32.gmra.mxu0 %v1819
        %v1821 = vpop.f32.mrf.mxu0
        %v1822 = vadd.f32 %v1728, %v1821
        %v1823 = vand.u32 %v213, 4294901760
        %v1824 = vsub.f32 %v213, %v1823
        %1825 = vmatmul.f32.gmra.mxu0 %v1824
        %v1826 = vpop.f32.mrf.mxu0
        %v1827 = vadd.f32 %v1732, %v1826
        %v1828 = vand.u32 %v216, 4294901760
        %v1829 = vsub.f32 %v216, %v1828
        %1830 = vmatmul.f32.gmra.mxu0 %v1829
        %v1831 = vpop.f32.mrf.mxu0
        %v1832 = vadd.f32 %v1736, %v1831
        %v1833 = vand.u32 %v219, 4294901760
        %v1834 = vsub.f32 %v219, %v1833
        %1835 = vmatmul.f32.gmra.mxu0 %v1834
        %v1836 = vpop.f32.mrf.mxu0
        %v1837 = vadd.f32 %v1740, %v1836
        %v1838 = vand.u32 %v222, 4294901760
        %v1839 = vsub.f32 %v222, %v1838
        %1840 = vmatmul.f32.gmra.mxu0 %v1839
        %v1841 = vpop.f32.mrf.mxu0
        %v1842 = vadd.f32 %v1744, %v1841
        %v1843 = vand.u32 %v225, 4294901760
        %v1844 = vsub.f32 %v225, %v1843
        %1845 = vmatmul.f32.gmra.mxu0 %v1844
        %v1846 = vpop.f32.mrf.mxu0
        %v1847 = vadd.f32 %v1748, %v1846
        %v1848 = vand.u32 %v228, 4294901760
        %v1849 = vsub.f32 %v228, %v1848
        %1850 = vmatmul.f32.gmra.mxu0 %v1849
        %v1851 = vpop.f32.mrf.mxu0
        %v1852 = vadd.f32 %v1752, %v1851
        %v1853 = vand.u32 %v231, 4294901760
        %v1854 = vsub.f32 %v231, %v1853
        %1855 = vmatmul.f32.gmra.mxu0 %v1854
        %v1856 = vpop.f32.mrf.mxu0
        %v1857 = vadd.f32 %v1756, %v1856
        %v1858 = vand.u32 %v234, 4294901760
        %v1859 = vsub.f32 %v234, %v1858
        %1860 = vmatmul.f32.gmra.mxu0 %v1859
        %v1861 = vpop.f32.mrf.mxu0
        %v1862 = vadd.f32 %v1760, %v1861
        %v1863 = vand.u32 %v237, 4294901760
        %v1864 = vsub.f32 %v237, %v1863
        %1865 = vmatmul.f32.gmra.mxu0 %v1864
        %v1866 = vpop.f32.mrf.mxu0
        %v1867 = vadd.f32 %v1764, %v1866
        %v1868 = vand.u32 %v240, 4294901760
        %v1869 = vsub.f32 %v240, %v1868
        %1870 = vmatmul.f32.gmra.mxu0 %v1869
        %v1871 = vpop.f32.mrf.mxu0
        %v1872 = vadd.f32 %v1768, %v1871
        %1873 = vdwg.mxu0
        %1874 = vmatpush.msra.mxu0 0.0
        %1875 = vmatpush.msra.mxu0 0.0
        %1876 = vmatpush.msra.mxu0 0.0
        %1877 = vmatpush.msra.mxu0 0.0
        %1878 = vmatpush.msra.mxu0 0.0
        %1879 = vmatpush.msra.mxu0 0.0
        %1880 = vmatpush.msra.mxu0 0.0
        %1881 = vmatpush.msra.mxu0 0.0
        %1882 = vmatpush.msra.mxu0 0.0
        %1883 = vmatpush.msra.mxu0 0.0
        %1884 = vmatpush.msra.mxu0 0.0
        %1885 = vmatpush.msra.mxu0 0.0
        %1886 = vmatpush.msra.mxu0 0.0
        %1887 = vmatpush.msra.mxu0 0.0
        %1888 = vmatpush.msra.mxu0 0.0
        %v1889 = vand.u32 %v189, 4294901760
        %1890 = vmatpush.msra.mxu0 %v1889
        %v1891 = vand.u32 %v192, 4294901760
        %v1892 = vsub.f32 %v192, %v1891
        %v1893 = vand.u32 %v1892, 4294901760
        %1894 = vmatmul.f32.gmra.mxu0 %v1893
        %v1895 = vpop.f32.mrf.mxu0
        %v1896 = vadd.f32 %v1792, %v1895
        %v1897 = vand.u32 %v195, 4294901760
        %v1898 = vsub.f32 %v195, %v1897
        %v1899 = vand.u32 %v1898, 4294901760
        %1900 = vmatmul.f32.gmra.mxu0 %v1899
        %v1901 = vpop.f32.mrf.mxu0
        %v1902 = vadd.f32 %v1797, %v1901
        %v1903 = vand.u32 %v198, 4294901760
        %v1904 = vsub.f32 %v198, %v1903
        %v1905 = vand.u32 %v1904, 4294901760
        %1906 = vmatmul.f32.gmra.mxu0 %v1905
        %v1907 = vpop.f32.mrf.mxu0
        %v1908 = vadd.f32 %v1802, %v1907
        %v1909 = vand.u32 %v201, 4294901760
        %v1910 = vsub.f32 %v201, %v1909
        %v1911 = vand.u32 %v1910, 4294901760
        %1912 = vmatmul.f32.gmra.mxu0 %v1911
        %v1913 = vpop.f32.mrf.mxu0
        %v1914 = vadd.f32 %v1807, %v1913
        %v1915 = vand.u32 %v204, 4294901760
        %v1916 = vsub.f32 %v204, %v1915
        %v1917 = vand.u32 %v1916, 4294901760
        %1918 = vmatmul.f32.gmra.mxu0 %v1917
        %v1919 = vpop.f32.mrf.mxu0
        %v1920 = vadd.f32 %v1812, %v1919
        %v1921 = vand.u32 %v207, 4294901760
        %v1922 = vsub.f32 %v207, %v1921
        %v1923 = vand.u32 %v1922, 4294901760
        %1924 = vmatmul.f32.gmra.mxu0 %v1923
        %v1925 = vpop.f32.mrf.mxu0
        %v1926 = vadd.f32 %v1817, %v1925
        %v1927 = vand.u32 %v210, 4294901760
        %v1928 = vsub.f32 %v210, %v1927
        %v1929 = vand.u32 %v1928, 4294901760
        %1930 = vmatmul.f32.gmra.mxu0 %v1929
        %v1931 = vpop.f32.mrf.mxu0
        %v1932 = vadd.f32 %v1822, %v1931
        %v1933 = vand.u32 %v213, 4294901760
        %v1934 = vsub.f32 %v213, %v1933
        %v1935 = vand.u32 %v1934, 4294901760
        %1936 = vmatmul.f32.gmra.mxu0 %v1935
        %v1937 = vpop.f32.mrf.mxu0
        %v1938 = vadd.f32 %v1827, %v1937
        %v1939 = vand.u32 %v216, 4294901760
        %v1940 = vsub.f32 %v216, %v1939
        %v1941 = vand.u32 %v1940, 4294901760
        %1942 = vmatmul.f32.gmra.mxu0 %v1941
        %v1943 = vpop.f32.mrf.mxu0
        %v1944 = vadd.f32 %v1832, %v1943
        %v1945 = vand.u32 %v219, 4294901760
        %v1946 = vsub.f32 %v219, %v1945
        %v1947 = vand.u32 %v1946, 4294901760
        %1948 = vmatmul.f32.gmra.mxu0 %v1947
        %v1949 = vpop.f32.mrf.mxu0
        %v1950 = vadd.f32 %v1837, %v1949
        %v1951 = vand.u32 %v222, 4294901760
        %v1952 = vsub.f32 %v222, %v1951
        %v1953 = vand.u32 %v1952, 4294901760
        %1954 = vmatmul.f32.gmra.mxu0 %v1953
        %v1955 = vpop.f32.mrf.mxu0
        %v1956 = vadd.f32 %v1842, %v1955
        %v1957 = vand.u32 %v225, 4294901760
        %v1958 = vsub.f32 %v225, %v1957
        %v1959 = vand.u32 %v1958, 4294901760
        %1960 = vmatmul.f32.gmra.mxu0 %v1959
        %v1961 = vpop.f32.mrf.mxu0
        %v1962 = vadd.f32 %v1847, %v1961
        %v1963 = vand.u32 %v228, 4294901760
        %v1964 = vsub.f32 %v228, %v1963
        %v1965 = vand.u32 %v1964, 4294901760
        %1966 = vmatmul.f32.gmra.mxu0 %v1965
        %v1967 = vpop.f32.mrf.mxu0
        %v1968 = vadd.f32 %v1852, %v1967
        %v1969 = vand.u32 %v231, 4294901760
        %v1970 = vsub.f32 %v231, %v1969
        %v1971 = vand.u32 %v1970, 4294901760
        %1972 = vmatmul.f32.gmra.mxu0 %v1971
        %v1973 = vpop.f32.mrf.mxu0
        %v1974 = vadd.f32 %v1857, %v1973
        %v1975 = vand.u32 %v234, 4294901760
        %v1976 = vsub.f32 %v234, %v1975
        %v1977 = vand.u32 %v1976, 4294901760
        %1978 = vmatmul.f32.gmra.mxu0 %v1977
        %v1979 = vpop.f32.mrf.mxu0
        %v1980 = vadd.f32 %v1862, %v1979
        %v1981 = vand.u32 %v237, 4294901760
        %v1982 = vsub.f32 %v237, %v1981
        %v1983 = vand.u32 %v1982, 4294901760
        %1984 = vmatmul.f32.gmra.mxu0 %v1983
        %v1985 = vpop.f32.mrf.mxu0
        %v1986 = vadd.f32 %v1867, %v1985
        %v1987 = vand.u32 %v240, 4294901760
        %v1988 = vsub.f32 %v240, %v1987
        %v1989 = vand.u32 %v1988, 4294901760
        %1990 = vmatmul.f32.gmra.mxu0 %v1989
        %v1991 = vpop.f32.mrf.mxu0
        %v1992 = vadd.f32 %v1872, %v1991
        %1993 = vdwg.mxu0
        %1994 = vmatpush.msra.mxu0 0.0
        %1995 = vmatpush.msra.mxu0 0.0
        %1996 = vmatpush.msra.mxu0 0.0
        %1997 = vmatpush.msra.mxu0 0.0
        %1998 = vmatpush.msra.mxu0 0.0
        %1999 = vmatpush.msra.mxu0 0.0
        %2000 = vmatpush.msra.mxu0 0.0
        %2001 = vmatpush.msra.mxu0 0.0
        %2002 = vmatpush.msra.mxu0 0.0
        %2003 = vmatpush.msra.mxu0 0.0
        %2004 = vmatpush.msra.mxu0 0.0
        %2005 = vmatpush.msra.mxu0 0.0
        %2006 = vmatpush.msra.mxu0 0.0
        %2007 = vmatpush.msra.mxu0 0.0
        %2008 = vmatpush.msra.mxu0 0.0
        %v2009 = vand.u32 %v189, 4294901760
        %v2010 = vsub.f32 %v189, %v2009
        %v2011 = vand.u32 %v2010, 4294901760
        %2012 = vmatpush.msra.mxu0 %v2011
        %v2013 = vand.u32 %v192, 4294901760
        %2014 = vmatmul.f32.gmra.mxu0 %v2013
        %v2015 = vpop.f32.mrf.mxu0
        %v2016 = vadd.f32 %v1896, %v2015
        %v2017 = vand.u32 %v195, 4294901760
        %2018 = vmatmul.f32.gmra.mxu0 %v2017
        %v2019 = vpop.f32.mrf.mxu0
        %v2020 = vadd.f32 %v1902, %v2019
        %v2021 = vand.u32 %v198, 4294901760
        %2022 = vmatmul.f32.gmra.mxu0 %v2021
        %v2023 = vpop.f32.mrf.mxu0
        %v2024 = vadd.f32 %v1908, %v2023
        %v2025 = vand.u32 %v201, 4294901760
        %2026 = vmatmul.f32.gmra.mxu0 %v2025
        %v2027 = vpop.f32.mrf.mxu0
        %v2028 = vadd.f32 %v1914, %v2027
        %v2029 = vand.u32 %v204, 4294901760
        %2030 = vmatmul.f32.gmra.mxu0 %v2029
        %v2031 = vpop.f32.mrf.mxu0
        %v2032 = vadd.f32 %v1920, %v2031
        %v2033 = vand.u32 %v207, 4294901760
        %2034 = vmatmul.f32.gmra.mxu0 %v2033
        %v2035 = vpop.f32.mrf.mxu0
        %v2036 = vadd.f32 %v1926, %v2035
        %v2037 = vand.u32 %v210, 4294901760
        %2038 = vmatmul.f32.gmra.mxu0 %v2037
        %v2039 = vpop.f32.mrf.mxu0
        %v2040 = vadd.f32 %v1932, %v2039
        %v2041 = vand.u32 %v213, 4294901760
        %2042 = vmatmul.f32.gmra.mxu0 %v2041
        %v2043 = vpop.f32.mrf.mxu0
        %v2044 = vadd.f32 %v1938, %v2043
        %v2045 = vand.u32 %v216, 4294901760
        %2046 = vmatmul.f32.gmra.mxu0 %v2045
        %v2047 = vpop.f32.mrf.mxu0
        %v2048 = vadd.f32 %v1944, %v2047
        %v2049 = vand.u32 %v219, 4294901760
        %2050 = vmatmul.f32.gmra.mxu0 %v2049
        %v2051 = vpop.f32.mrf.mxu0
        %v2052 = vadd.f32 %v1950, %v2051
        %v2053 = vand.u32 %v222, 4294901760
        %2054 = vmatmul.f32.gmra.mxu0 %v2053
        %v2055 = vpop.f32.mrf.mxu0
        %v2056 = vadd.f32 %v1956, %v2055
        %v2057 = vand.u32 %v225, 4294901760
        %2058 = vmatmul.f32.gmra.mxu0 %v2057
        %v2059 = vpop.f32.mrf.mxu0
        %v2060 = vadd.f32 %v1962, %v2059
        %v2061 = vand.u32 %v228, 4294901760
        %2062 = vmatmul.f32.gmra.mxu0 %v2061
        %v2063 = vpop.f32.mrf.mxu0
        %v2064 = vadd.f32 %v1968, %v2063
        %v2065 = vand.u32 %v231, 4294901760
        %2066 = vmatmul.f32.gmra.mxu0 %v2065
        %v2067 = vpop.f32.mrf.mxu0
        %v2068 = vadd.f32 %v1974, %v2067
        %v2069 = vand.u32 %v234, 4294901760
        %2070 = vmatmul.f32.gmra.mxu0 %v2069
        %v2071 = vpop.f32.mrf.mxu0
        %v2072 = vadd.f32 %v1980, %v2071
        %v2073 = vand.u32 %v237, 4294901760
        %2074 = vmatmul.f32.gmra.mxu0 %v2073
        %v2075 = vpop.f32.mrf.mxu0
        %v2076 = vadd.f32 %v1986, %v2075
        %v2077 = vand.u32 %v240, 4294901760
        %2078 = vmatmul.f32.gmra.mxu0 %v2077
        %v2079 = vpop.f32.mrf.mxu0
        %v2080 = vadd.f32 %v1992, %v2079
        %2081 = vdwg.mxu0
        %2082 = vmatpush.msra.mxu0 0.0
        %2083 = vmatpush.msra.mxu0 0.0
        %2084 = vmatpush.msra.mxu0 0.0
        %2085 = vmatpush.msra.mxu0 0.0
        %2086 = vmatpush.msra.mxu0 0.0
        %2087 = vmatpush.msra.mxu0 0.0
        %2088 = vmatpush.msra.mxu0 0.0
        %2089 = vmatpush.msra.mxu0 0.0
        %2090 = vmatpush.msra.mxu0 0.0
        %2091 = vmatpush.msra.mxu0 0.0
        %2092 = vmatpush.msra.mxu0 0.0
        %2093 = vmatpush.msra.mxu0 0.0
        %2094 = vmatpush.msra.mxu0 0.0
        %2095 = vmatpush.msra.mxu0 0.0
        %2096 = vmatpush.msra.mxu0 0.0
        %v2097 = vand.u32 %v189, 4294901760
        %2098 = vmatpush.msra.mxu0 %v2097
        %v2099 = vand.u32 %v192, 4294901760
        %2100 = vmatmul.f32.gmra.mxu0 %v2099
        %v2101 = vpop.f32.mrf.mxu0
        %v2102 = vadd.f32 %v2016, %v2101
        %v2103 = vand.u32 %v195, 4294901760
        %2104 = vmatmul.f32.gmra.mxu0 %v2103
        %v2105 = vpop.f32.mrf.mxu0
        %v2106 = vadd.f32 %v2020, %v2105
        %v2107 = vand.u32 %v198, 4294901760
        %2108 = vmatmul.f32.gmra.mxu0 %v2107
        %v2109 = vpop.f32.mrf.mxu0
        %v2110 = vadd.f32 %v2024, %v2109
        %v2111 = vand.u32 %v201, 4294901760
        %2112 = vmatmul.f32.gmra.mxu0 %v2111
        %v2113 = vpop.f32.mrf.mxu0
        %v2114 = vadd.f32 %v2028, %v2113
        %v2115 = vand.u32 %v204, 4294901760
        %2116 = vmatmul.f32.gmra.mxu0 %v2115
        %v2117 = vpop.f32.mrf.mxu0
        %v2118 = vadd.f32 %v2032, %v2117
        %v2119 = vand.u32 %v207, 4294901760
        %2120 = vmatmul.f32.gmra.mxu0 %v2119
        %v2121 = vpop.f32.mrf.mxu0
        %v2122 = vadd.f32 %v2036, %v2121
        %v2123 = vand.u32 %v210, 4294901760
        %2124 = vmatmul.f32.gmra.mxu0 %v2123
        %v2125 = vpop.f32.mrf.mxu0
        %v2126 = vadd.f32 %v2040, %v2125
        %v2127 = vand.u32 %v213, 4294901760
        %2128 = vmatmul.f32.gmra.mxu0 %v2127
        %v2129 = vpop.f32.mrf.mxu0
        %v2130 = vadd.f32 %v2044, %v2129
        %v2131 = vand.u32 %v216, 4294901760
        %2132 = vmatmul.f32.gmra.mxu0 %v2131
        %v2133 = vpop.f32.mrf.mxu0
        %v2134 = vadd.f32 %v2048, %v2133
        %v2135 = vand.u32 %v219, 4294901760
        %2136 = vmatmul.f32.gmra.mxu0 %v2135
        %v2137 = vpop.f32.mrf.mxu0
        %v2138 = vadd.f32 %v2052, %v2137
        %v2139 = vand.u32 %v222, 4294901760
        %2140 = vmatmul.f32.gmra.mxu0 %v2139
        %v2141 = vpop.f32.mrf.mxu0
        %v2142 = vadd.f32 %v2056, %v2141
        %v2143 = vand.u32 %v225, 4294901760
        %2144 = vmatmul.f32.gmra.mxu0 %v2143
        %v2145 = vpop.f32.mrf.mxu0
        %v2146 = vadd.f32 %v2060, %v2145
        %v2147 = vand.u32 %v228, 4294901760
        %2148 = vmatmul.f32.gmra.mxu0 %v2147
        %v2149 = vpop.f32.mrf.mxu0
        %v2150 = vadd.f32 %v2064, %v2149
        %v2151 = vand.u32 %v231, 4294901760
        %2152 = vmatmul.f32.gmra.mxu0 %v2151
        %v2153 = vpop.f32.mrf.mxu0
        %v2154 = vadd.f32 %v2068, %v2153
        %v2155 = vand.u32 %v234, 4294901760
        %2156 = vmatmul.f32.gmra.mxu0 %v2155
        %v2157 = vpop.f32.mrf.mxu0
        %v2158 = vadd.f32 %v2072, %v2157
        %v2159 = vand.u32 %v237, 4294901760
        %2160 = vmatmul.f32.gmra.mxu0 %v2159
        %v2161 = vpop.f32.mrf.mxu0
        %v2162 = vadd.f32 %v2076, %v2161
        %v2163 = vand.u32 %v240, 4294901760
        %2164 = vmatmul.f32.gmra.mxu0 %v2163
        %v2165 = vpop.f32.mrf.mxu0
        %v2166 = vadd.f32 %v2080, %v2165
        %2167 = vdwg.mxu0
        %v2168 = vand.u32 2147483647, %v818
        %vm2169 = vcmp.le.f32.partialorder %v2168, 0.7853982
        %vm2170 = vcmp.lt.s32.totalorder %v818, 0
        %v2171 = vand.u32 %v818, 2139095040
        %v2172 = vshrl.u32 %v2171, 23
        %v2173 = vsub.s32 %v2172, 127
        %v2174 = vand.u32 2147483647, %v818
        %v2175 = vand.u32 %v2174, 8388607
        %v2176 = vor.u32 %v2175, 8388608
        %v2177 = vsub.s32 0, %v2176
        %v2178 = vadd.s32 %v2173, 1
        %vm2179 = vcmp.gt.s32.totalorder %v2178, 0
        %v2180 = vsel %vm2179, %v2178, 0
        %v2181 = vshrl.u32 %v2180, 5
        %v2182 = vand.u32 %v2180, 31
        %v2183 = vsub.s32 32, %v2182
        %v2184 = vshrl.u32 683565275, %v2183
        %v2185 = vshll.u32 683565275, %v2182
        %v2186 = vshrl.u32 2475754826, %v2183
        %v2187 = vor.u32 %v2185, %v2186
        %v2188 = vshll.u32 2475754826, %v2182
        %v2189 = vshrl.u32 2131351028, %v2183
        %v2190 = vor.u32 %v2188, %v2189
        %v2191 = vshll.u32 2131351028, %v2182
        %v2192 = vshrl.u32 2102212464, %v2183
        %v2193 = vor.u32 %v2191, %v2192
        %v2194 = vshll.u32 2102212464, %v2182
        %v2195 = vshrl.u32 920167782, %v2183
        %v2196 = vor.u32 %v2194, %v2195
        %v2197 = vshll.u32 920167782, %v2182
        %v2198 = vshrl.u32 1326507024, %v2183
        %v2199 = vor.u32 %v2197, %v2198
        %vm2200 = vcmp.lt.s32.totalorder %v2181, 1
        %vm2201 = vcmp.lt.s32.totalorder %v2181, 2
        %vm2202 = vcmp.lt.s32.totalorder %v2181, 3
        %vm2203 = vcmp.lt.s32.totalorder %v2181, 4
        %v2204 = vsel %vm2200, %v2184, %v2187
        %v2205 = vsel %vm2203, %v2193, 2102212464
        %v2206 = vsel %vm2202, %v2190, %v2205
        %v2207 = vsel %vm2201, %v2204, %v2206
        %v2208 = vsel %vm2200, %v2187, %v2190
        %v2209 = vsel %vm2203, %v2196, 920167782
        %v2210 = vsel %vm2202, %v2193, %v2209
        %v2211 = vsel %vm2201, %v2208, %v2210
        %v2212 = vsel %vm2200, %v2190, %v2193
        %v2213 = vsel %vm2203, %v2199, 1326507024
        %v2214 = vsel %vm2202, %v2196, %v2213
        %v2215 = vsel %vm2201, %v2212, %v2214
        %v2216 = vshll.u32 %v2176, 8
        %v2217 = vand.u32 %v2216, 65535
        %v2218 = vshrl.u32 %v2216, 16
        %v2219 = vand.u32 %v2215, 65535
        %v2220 = vshrl.u32 %v2215, 16
        %v2221 = vmul.u32 %v2217, %v2219
        %v2222 = vmul.u32 %v2217, %v2220
        %v2223 = vmul.u32 %v2218, %v2219
        %v2224 = vmul.u32 %v2218, %v2220
        %v2225 = vshll.u32 %v2222, 16
        %v2226 = vshrl.u32 %v2222, 16
        %v2227 = vshll.u32 %v2223, 16
        %v2228 = vshrl.u32 %v2223, 16
        %vm2229 = vc.u32 %v2221, %v2225
        %v2230 = vsel %vm2229, 1, 0
        %v2231 = vadd.s32 %v2221, %v2225
        %v2232 = vadd.s32 %v2224, %v2230
        %vm2233 = vc.u32 %v2231, %v2227
        %v2234 = vsel %vm2233, 1, 0
        %v2235 = vadd.s32 %v2231, %v2227
        %v2236 = vadd.s32 %v2232, %v2234
        %v2237 = vadd.s32 %v2236, %v2226
        %v2238 = vadd.s32 %v2237, %v2228
        %v2239 = vand.u32 %v2216, 65535
        %v2240 = vshrl.u32 %v2216, 16
        %v2241 = vand.u32 %v2211, 65535
        %v2242 = vshrl.u32 %v2211, 16
        %v2243 = vmul.u32 %v2239, %v2241
        %v2244 = vmul.u32 %v2239, %v2242
        %v2245 = vmul.u32 %v2240, %v2241
        %v2246 = vmul.u32 %v2240, %v2242
        %v2247 = vshll.u32 %v2244, 16
        %v2248 = vshrl.u32 %v2244, 16
        %v2249 = vshll.u32 %v2245, 16
        %v2250 = vshrl.u32 %v2245, 16
        %vm2251 = vc.u32 %v2243, %v2247
        %v2252 = vsel %vm2251, 1, 0
        %v2253 = vadd.s32 %v2243, %v2247
        %v2254 = vadd.s32 %v2246, %v2252
        %vm2255 = vc.u32 %v2253, %v2249
        %v2256 = vsel %vm2255, 1, 0
        %v2257 = vadd.s32 %v2253, %v2249
        %v2258 = vadd.s32 %v2254, %v2256
        %v2259 = vadd.s32 %v2258, %v2248
        %v2260 = vadd.s32 %v2259, %v2250
        %v2261 = vmul.u32 %v2216, %v2207
        %v2262 = vadd.s32 %v2238, %v2257
        %vm2263 = vc.u32 %v2238, %v2257
        %v2264 = vadd.s32 %v2260, 1
        %v2265 = vsel %vm2263, %v2264, %v2260
        %v2266 = vadd.s32 %v2261, %v2265
        %v2267 = vadd.s32 %v2266, 536870912
        %v2268 = vshrl.u32 %v2267, 30
        %v2269 = vshll.u32 %v2268, 30
        %v2270 = vsub.s32 %v2266, %v2269
        %vm2271 = vcmp.lt.s32.totalorder %v2270, 0
        %v2272 = vsub.s32 0, %v2270
        %v2273 = vsel %vm2271, %v2272, %v2270
        %v2274 = vclz %v2273
        %v2275 = vsub.s32 %v2274, 2
        %vm2276 = vcmp.gt.s32.totalorder 0, %v2275
        %v2277 = vsel %vm2276, 0, %v2275
        %v2278 = vsub.s32 32, %v2277
        %v2279 = vshll.u32 %v2270, %v2277
        %v2280 = vshrl.u32 %v2262, %v2278
        %v2281 = vor.u32 %v2279, %v2280
        %v2282 = vsub.s32 4294967266, %v2277
        %v2283 = vadd.s32 %v2282, 127
        %v2284 = vshll.u32 %v2283, 23
        %v2285 = vor.u32 4788187, %v2284
        %v2286 = vand.u32 2147483647, %v2285
        %v2288 = vcvt.s32.f32 %v2281
        %v2289 = vmul.f32 %v2288, %v2286
        %v2290 = vxor.u32 %v2289, 2147483648
        %v2291 = vsel %vm2170, %v2290, %v2289
        %v2292 = vsub.s32 4, %v2268
        %v2293 = vsel %vm2170, %v2292, %v2268
        %v2294 = vsel %vm2169, %v818, %v2291
        %v2295 = vsel %vm2169, 0, %v2293
        %v2296 = vmul.f32 %v2294, %v2294
        %v2297 = vmul.f32 %v2296, -0.001358992
        %v2298 = vadd.f32 %v2297, 0.041655596
        %v2299 = vmul.f32 %v2296, %v2298
        %v2300 = vadd.f32 %v2299, -0.4999988
        %v2301 = vmul.f32 %v2296, %v2300
        %v2302 = vadd.f32 1.0, %v2301
        %v2303 = vmul.f32 %v2294, %v2294
        %v2304 = vmul.f32 %v2303, -0.00019511016
        %v2305 = vadd.f32 %v2304, 0.008332121
        %v2306 = vmul.f32 %v2303, %v2305
        %v2307 = vadd.f32 %v2306, -0.16666654
        %v2308 = vmul.f32 %v2303, %v2307
        %v2309 = vadd.f32 %v2308, 1.0
        %v2310 = vmul.f32 %v2309, %v2294
        %vm2311 = vweird.f32 %v818
        %v2312 = vadd.s32 %v2295, 3
        %v2313 = vand.u32 %v2312, 3
        %vm2314 = vcmp.lt.s32.totalorder %v2313, 2
        %vm2315 = vcmp.eq.s32.totalorder %v2313, 0
        %v2316 = vxor.u32 %v2310, 2147483648
        %v2317 = vsel %vm2315, %v2302, %v2316
        %vm2318 = vcmp.eq.s32.totalorder %v2313, 2
        %v2319 = vxor.u32 %v2302, 2147483648
        %v2320 = vsel %vm2318, %v2319, %v2310
        %v2321 = vsel %vm2314, %v2317, %v2320
        %v2322 = vsel %vm2311, nan, %v2321
        %v2323 = vand.u32 2147483647, %v1460
        %vm2324 = vcmp.le.f32.partialorder %v2323, 0.7853982
        %vm2325 = vcmp.lt.s32.totalorder %v1460, 0
        %v2326 = vand.u32 %v1460, 2139095040
        %v2327 = vshrl.u32 %v2326, 23
        %v2328 = vsub.s32 %v2327, 127
        %v2329 = vand.u32 2147483647, %v1460
        %v2330 = vand.u32 %v2329, 8388607
        %v2331 = vor.u32 %v2330, 8388608
        %v2332 = vsub.s32 0, %v2331
        %v2333 = vadd.s32 %v2328, 1
        %vm2334 = vcmp.gt.s32.totalorder %v2333, 0
        %v2335 = vsel %vm2334, %v2333, 0
        %v2336 = vshrl.u32 %v2335, 5
        %v2337 = vand.u32 %v2335, 31
        %v2338 = vsub.s32 32, %v2337
        %v2339 = vshrl.u32 683565275, %v2338
        %v2340 = vshll.u32 683565275, %v2337
        %v2341 = vshrl.u32 2475754826, %v2338
        %v2342 = vor.u32 %v2340, %v2341
        %v2343 = vshll.u32 2475754826, %v2337
        %v2344 = vshrl.u32 2131351028, %v2338
        %v2345 = vor.u32 %v2343, %v2344
        %v2346 = vshll.u32 2131351028, %v2337
        %v2347 = vshrl.u32 2102212464, %v2338
        %v2348 = vor.u32 %v2346, %v2347
        %v2349 = vshll.u32 2102212464, %v2337
        %v2350 = vshrl.u32 920167782, %v2338
        %v2351 = vor.u32 %v2349, %v2350
        %v2352 = vshll.u32 920167782, %v2337
        %v2353 = vshrl.u32 1326507024, %v2338
        %v2354 = vor.u32 %v2352, %v2353
        %vm2355 = vcmp.lt.s32.totalorder %v2336, 1
        %vm2356 = vcmp.lt.s32.totalorder %v2336, 2
        %vm2357 = vcmp.lt.s32.totalorder %v2336, 3
        %vm2358 = vcmp.lt.s32.totalorder %v2336, 4
        %v2359 = vsel %vm2355, %v2339, %v2342
        %v2360 = vsel %vm2358, %v2348, 2102212464
        %v2361 = vsel %vm2357, %v2345, %v2360
        %v2362 = vsel %vm2356, %v2359, %v2361
        %v2363 = vsel %vm2355, %v2342, %v2345
        %v2364 = vsel %vm2358, %v2351, 920167782
        %v2365 = vsel %vm2357, %v2348, %v2364
        %v2366 = vsel %vm2356, %v2363, %v2365
        %v2367 = vsel %vm2355, %v2345, %v2348
        %v2368 = vsel %vm2358, %v2354, 1326507024
        %v2369 = vsel %vm2357, %v2351, %v2368
        %v2370 = vsel %vm2356, %v2367, %v2369
        %v2371 = vshll.u32 %v2331, 8
        %v2372 = vand.u32 %v2371, 65535
        %v2373 = vshrl.u32 %v2371, 16
        %v2374 = vand.u32 %v2370, 65535
        %v2375 = vshrl.u32 %v2370, 16
        %v2376 = vmul.u32 %v2372, %v2374
        %v2377 = vmul.u32 %v2372, %v2375
        %v2378 = vmul.u32 %v2373, %v2374
        %v2379 = vmul.u32 %v2373, %v2375
        %v2380 = vshll.u32 %v2377, 16
        %v2381 = vshrl.u32 %v2377, 16
        %v2382 = vshll.u32 %v2378, 16
        %v2383 = vshrl.u32 %v2378, 16
        %vm2384 = vc.u32 %v2376, %v2380
        %v2385 = vsel %vm2384, 1, 0
        %v2386 = vadd.s32 %v2376, %v2380
        %v2387 = vadd.s32 %v2379, %v2385
        %vm2388 = vc.u32 %v2386, %v2382
        %v2389 = vsel %vm2388, 1, 0
        %v2390 = vadd.s32 %v2386, %v2382
        %v2391 = vadd.s32 %v2387, %v2389
        %v2392 = vadd.s32 %v2391, %v2381
        %v2393 = vadd.s32 %v2392, %v2383
        %v2394 = vand.u32 %v2371, 65535
        %v2395 = vshrl.u32 %v2371, 16
        %v2396 = vand.u32 %v2366, 65535
        %v2397 = vshrl.u32 %v2366, 16
        %v2398 = vmul.u32 %v2394, %v2396
        %v2399 = vmul.u32 %v2394, %v2397
        %v2400 = vmul.u32 %v2395, %v2396
        %v2401 = vmul.u32 %v2395, %v2397
        %v2402 = vshll.u32 %v2399, 16
        %v2403 = vshrl.u32 %v2399, 16
        %v2404 = vshll.u32 %v2400, 16
        %v2405 = vshrl.u32 %v2400, 16
        %vm2406 = vc.u32 %v2398, %v2402
        %v2407 = vsel %vm2406, 1, 0
        %v2408 = vadd.s32 %v2398, %v2402
        %v2409 = vadd.s32 %v2401, %v2407
        %vm2410 = vc.u32 %v2408, %v2404
        %v2411 = vsel %vm2410, 1, 0
        %v2412 = vadd.s32 %v2408, %v2404
        %v2413 = vadd.s32 %v2409, %v2411
        %v2414 = vadd.s32 %v2413, %v2403
        %v2415 = vadd.s32 %v2414, %v2405
        %v2416 = vmul.u32 %v2371, %v2362
        %v2417 = vadd.s32 %v2393, %v2412
        %vm2418 = vc.u32 %v2393, %v2412
        %v2419 = vadd.s32 %v2415, 1
        %v2420 = vsel %vm2418, %v2419, %v2415
        %v2421 = vadd.s32 %v2416, %v2420
        %v2422 = vadd.s32 %v2421, 536870912
        %v2423 = vshrl.u32 %v2422, 30
        %v2424 = vshll.u32 %v2423, 30
        %v2425 = vsub.s32 %v2421, %v2424
        %vm2426 = vcmp.lt.s32.totalorder %v2425, 0
        %v2427 = vsub.s32 0, %v2425
        %v2428 = vsel %vm2426, %v2427, %v2425
        %v2429 = vclz %v2428
        %v2430 = vsub.s32 %v2429, 2
        %vm2431 = vcmp.gt.s32.totalorder 0, %v2430
        %v2432 = vsel %vm2431, 0, %v2430
        %v2433 = vsub.s32 32, %v2432
        %v2434 = vshll.u32 %v2425, %v2432
        %v2435 = vshrl.u32 %v2417, %v2433
        %v2436 = vor.u32 %v2434, %v2435
        %v2437 = vsub.s32 4294967266, %v2432
        %v2438 = vadd.s32 %v2437, 127
        %v2439 = vshll.u32 %v2438, 23
        %v2440 = vor.u32 4788187, %v2439
        %v2441 = vand.u32 2147483647, %v2440
        %v2443 = vcvt.s32.f32 %v2436
        %v2444 = vmul.f32 %v2443, %v2441
        %v2445 = vxor.u32 %v2444, 2147483648
        %v2446 = vsel %vm2325, %v2445, %v2444
        %v2447 = vsub.s32 4, %v2423
        %v2448 = vsel %vm2325, %v2447, %v2423
        %v2449 = vsel %vm2324, %v1460, %v2446
        %v2450 = vsel %vm2324, 0, %v2448
        %v2451 = vmul.f32 %v2449, %v2449
        %v2452 = vmul.f32 %v2451, -0.001358992
        %v2453 = vadd.f32 %v2452, 0.041655596
        %v2454 = vmul.f32 %v2451, %v2453
        %v2455 = vadd.f32 %v2454, -0.4999988
        %v2456 = vmul.f32 %v2451, %v2455
        %v2457 = vadd.f32 1.0, %v2456
        %v2458 = vmul.f32 %v2449, %v2449
        %v2459 = vmul.f32 %v2458, -0.00019511016
        %v2460 = vadd.f32 %v2459, 0.008332121
        %v2461 = vmul.f32 %v2458, %v2460
        %v2462 = vadd.f32 %v2461, -0.16666654
        %v2463 = vmul.f32 %v2458, %v2462
        %v2464 = vadd.f32 %v2463, 1.0
        %v2465 = vmul.f32 %v2464, %v2449
        %vm2466 = vweird.f32 %v1460
        %v2467 = vadd.s32 %v2450, 3
        %v2468 = vand.u32 %v2467, 3
        %vm2469 = vcmp.lt.s32.totalorder %v2468, 2
        %vm2470 = vcmp.eq.s32.totalorder %v2468, 0
        %v2471 = vxor.u32 %v2465, 2147483648
        %v2472 = vsel %vm2470, %v2457, %v2471
        %vm2473 = vcmp.eq.s32.totalorder %v2468, 2
        %v2474 = vxor.u32 %v2457, 2147483648
        %v2475 = vsel %vm2473, %v2474, %v2465
        %v2476 = vsel %vm2469, %v2472, %v2475
        %v2477 = vsel %vm2466, nan, %v2476
        %v2478 = vand.u32 2147483647, %v2102
        %vm2479 = vcmp.le.f32.partialorder %v2478, 0.7853982
        %vm2480 = vcmp.lt.s32.totalorder %v2102, 0
        %v2481 = vand.u32 %v2102, 2139095040
        %v2482 = vshrl.u32 %v2481, 23
        %v2483 = vsub.s32 %v2482, 127
        %v2484 = vand.u32 2147483647, %v2102
        %v2485 = vand.u32 %v2484, 8388607
        %v2486 = vor.u32 %v2485, 8388608
        %v2487 = vsub.s32 0, %v2486
        %v2488 = vadd.s32 %v2483, 1
        %vm2489 = vcmp.gt.s32.totalorder %v2488, 0
        %v2490 = vsel %vm2489, %v2488, 0
        %v2491 = vshrl.u32 %v2490, 5
        %v2492 = vand.u32 %v2490, 31
        %v2493 = vsub.s32 32, %v2492
        %v2494 = vshrl.u32 683565275, %v2493
        %v2495 = vshll.u32 683565275, %v2492
        %v2496 = vshrl.u32 2475754826, %v2493
        %v2497 = vor.u32 %v2495, %v2496
        %v2498 = vshll.u32 2475754826, %v2492
        %v2499 = vshrl.u32 2131351028, %v2493
        %v2500 = vor.u32 %v2498, %v2499
        %v2501 = vshll.u32 2131351028, %v2492
        %v2502 = vshrl.u32 2102212464, %v2493
        %v2503 = vor.u32 %v2501, %v2502
        %v2504 = vshll.u32 2102212464, %v2492
        %v2505 = vshrl.u32 920167782, %v2493
        %v2506 = vor.u32 %v2504, %v2505
        %v2507 = vshll.u32 920167782, %v2492
        %v2508 = vshrl.u32 1326507024, %v2493
        %v2509 = vor.u32 %v2507, %v2508
        %vm2510 = vcmp.lt.s32.totalorder %v2491, 1
        %vm2511 = vcmp.lt.s32.totalorder %v2491, 2
        %vm2512 = vcmp.lt.s32.totalorder %v2491, 3
        %vm2513 = vcmp.lt.s32.totalorder %v2491, 4
        %v2514 = vsel %vm2510, %v2494, %v2497
        %v2515 = vsel %vm2513, %v2503, 2102212464
        %v2516 = vsel %vm2512, %v2500, %v2515
        %v2517 = vsel %vm2511, %v2514, %v2516
        %v2518 = vsel %vm2510, %v2497, %v2500
        %v2519 = vsel %vm2513, %v2506, 920167782
        %v2520 = vsel %vm2512, %v2503, %v2519
        %v2521 = vsel %vm2511, %v2518, %v2520
        %v2522 = vsel %vm2510, %v2500, %v2503
        %v2523 = vsel %vm2513, %v2509, 1326507024
        %v2524 = vsel %vm2512, %v2506, %v2523
        %v2525 = vsel %vm2511, %v2522, %v2524
        %v2526 = vshll.u32 %v2486, 8
        %v2527 = vand.u32 %v2526, 65535
        %v2528 = vshrl.u32 %v2526, 16
        %v2529 = vand.u32 %v2525, 65535
        %v2530 = vshrl.u32 %v2525, 16
        %v2531 = vmul.u32 %v2527, %v2529
        %v2532 = vmul.u32 %v2527, %v2530
        %v2533 = vmul.u32 %v2528, %v2529
        %v2534 = vmul.u32 %v2528, %v2530
        %v2535 = vshll.u32 %v2532, 16
        %v2536 = vshrl.u32 %v2532, 16
        %v2537 = vshll.u32 %v2533, 16
        %v2538 = vshrl.u32 %v2533, 16
        %vm2539 = vc.u32 %v2531, %v2535
        %v2540 = vsel %vm2539, 1, 0
        %v2541 = vadd.s32 %v2531, %v2535
        %v2542 = vadd.s32 %v2534, %v2540
        %vm2543 = vc.u32 %v2541, %v2537
        %v2544 = vsel %vm2543, 1, 0
        %v2545 = vadd.s32 %v2541, %v2537
        %v2546 = vadd.s32 %v2542, %v2544
        %v2547 = vadd.s32 %v2546, %v2536
        %v2548 = vadd.s32 %v2547, %v2538
        %v2549 = vand.u32 %v2526, 65535
        %v2550 = vshrl.u32 %v2526, 16
        %v2551 = vand.u32 %v2521, 65535
        %v2552 = vshrl.u32 %v2521, 16
        %v2553 = vmul.u32 %v2549, %v2551
        %v2554 = vmul.u32 %v2549, %v2552
        %v2555 = vmul.u32 %v2550, %v2551
        %v2556 = vmul.u32 %v2550, %v2552
        %v2557 = vshll.u32 %v2554, 16
        %v2558 = vshrl.u32 %v2554, 16
        %v2559 = vshll.u32 %v2555, 16
        %v2560 = vshrl.u32 %v2555, 16
        %vm2561 = vc.u32 %v2553, %v2557
        %v2562 = vsel %vm2561, 1, 0
        %v2563 = vadd.s32 %v2553, %v2557
        %v2564 = vadd.s32 %v2556, %v2562
        %vm2565 = vc.u32 %v2563, %v2559
        %v2566 = vsel %vm2565, 1, 0
        %v2567 = vadd.s32 %v2563, %v2559
        %v2568 = vadd.s32 %v2564, %v2566
        %v2569 = vadd.s32 %v2568, %v2558
        %v2570 = vadd.s32 %v2569, %v2560
        %v2571 = vmul.u32 %v2526, %v2517
        %v2572 = vadd.s32 %v2548, %v2567
        %vm2573 = vc.u32 %v2548, %v2567
        %v2574 = vadd.s32 %v2570, 1
        %v2575 = vsel %vm2573, %v2574, %v2570
        %v2576 = vadd.s32 %v2571, %v2575
        %v2577 = vadd.s32 %v2576, 536870912
        %v2578 = vshrl.u32 %v2577, 30
        %v2579 = vshll.u32 %v2578, 30
        %v2580 = vsub.s32 %v2576, %v2579
        %vm2581 = vcmp.lt.s32.totalorder %v2580, 0
        %v2582 = vsub.s32 0, %v2580
        %v2583 = vsel %vm2581, %v2582, %v2580
        %v2584 = vclz %v2583
        %v2585 = vsub.s32 %v2584, 2
        %vm2586 = vcmp.gt.s32.totalorder 0, %v2585
        %v2587 = vsel %vm2586, 0, %v2585
        %v2588 = vsub.s32 32, %v2587
        %v2589 = vshll.u32 %v2580, %v2587
        %v2590 = vshrl.u32 %v2572, %v2588
        %v2591 = vor.u32 %v2589, %v2590
        %v2592 = vsub.s32 4294967266, %v2587
        %v2593 = vadd.s32 %v2592, 127
        %v2594 = vshll.u32 %v2593, 23
        %v2595 = vor.u32 4788187, %v2594
        %v2596 = vand.u32 2147483647, %v2595
        %v2598 = vcvt.s32.f32 %v2591
        %v2599 = vmul.f32 %v2598, %v2596
        %v2600 = vxor.u32 %v2599, 2147483648
        %v2601 = vsel %vm2480, %v2600, %v2599
        %v2602 = vsub.s32 4, %v2578
        %v2603 = vsel %vm2480, %v2602, %v2578
        %v2604 = vsel %vm2479, %v2102, %v2601
        %v2605 = vsel %vm2479, 0, %v2603
        %v2606 = vmul.f32 %v2604, %v2604
        %v2607 = vmul.f32 %v2606, -0.001358992
        %v2608 = vadd.f32 %v2607, 0.041655596
        %v2609 = vmul.f32 %v2606, %v2608
        %v2610 = vadd.f32 %v2609, -0.4999988
        %v2611 = vmul.f32 %v2606, %v2610
        %v2612 = vadd.f32 1.0, %v2611
        %v2613 = vmul.f32 %v2604, %v2604
        %v2614 = vmul.f32 %v2613, -0.00019511016
        %v2615 = vadd.f32 %v2614, 0.008332121
        %v2616 = vmul.f32 %v2613, %v2615
        %v2617 = vadd.f32 %v2616, -0.16666654
        %v2618 = vmul.f32 %v2613, %v2617
        %v2619 = vadd.f32 %v2618, 1.0
        %v2620 = vmul.f32 %v2619, %v2604
        %vm2621 = vweird.f32 %v2102
        %v2622 = vadd.s32 %v2605, 3
        %v2623 = vand.u32 %v2622, 3
        %vm2624 = vcmp.lt.s32.totalorder %v2623, 2
        %vm2625 = vcmp.eq.s32.totalorder %v2623, 0
        %v2626 = vxor.u32 %v2620, 2147483648
        %v2627 = vsel %vm2625, %v2612, %v2626
        %vm2628 = vcmp.eq.s32.totalorder %v2623, 2
        %v2629 = vxor.u32 %v2612, 2147483648
        %v2630 = vsel %vm2628, %v2629, %v2620
        %v2631 = vsel %vm2624, %v2627, %v2630
        %v2632 = vsel %vm2621, nan, %v2631
        %v2633 = vand.u32 2147483647, %v822
        %vm2634 = vcmp.le.f32.partialorder %v2633, 0.7853982
        %vm2635 = vcmp.lt.s32.totalorder %v822, 0
        %v2636 = vand.u32 %v822, 2139095040
        %v2637 = vshrl.u32 %v2636, 23
        %v2638 = vsub.s32 %v2637, 127
        %v2639 = vand.u32 2147483647, %v822
        %v2640 = vand.u32 %v2639, 8388607
        %v2641 = vor.u32 %v2640, 8388608
        %v2642 = vsub.s32 0, %v2641
        %v2643 = vadd.s32 %v2638, 1
        %vm2644 = vcmp.gt.s32.totalorder %v2643, 0
        %v2645 = vsel %vm2644, %v2643, 0
        %v2646 = vshrl.u32 %v2645, 5
        %v2647 = vand.u32 %v2645, 31
        %v2648 = vsub.s32 32, %v2647
        %v2649 = vshrl.u32 683565275, %v2648
        %v2650 = vshll.u32 683565275, %v2647
        %v2651 = vshrl.u32 2475754826, %v2648
        %v2652 = vor.u32 %v2650, %v2651
        %v2653 = vshll.u32 2475754826, %v2647
        %v2654 = vshrl.u32 2131351028, %v2648
        %v2655 = vor.u32 %v2653, %v2654
        %v2656 = vshll.u32 2131351028, %v2647
        %v2657 = vshrl.u32 2102212464, %v2648
        %v2658 = vor.u32 %v2656, %v2657
        %v2659 = vshll.u32 2102212464, %v2647
        %v2660 = vshrl.u32 920167782, %v2648
        %v2661 = vor.u32 %v2659, %v2660
        %v2662 = vshll.u32 920167782, %v2647
        %v2663 = vshrl.u32 1326507024, %v2648
        %v2664 = vor.u32 %v2662, %v2663
        %vm2665 = vcmp.lt.s32.totalorder %v2646, 1
        %vm2666 = vcmp.lt.s32.totalorder %v2646, 2
        %vm2667 = vcmp.lt.s32.totalorder %v2646, 3
        %vm2668 = vcmp.lt.s32.totalorder %v2646, 4
        %v2669 = vsel %vm2665, %v2649, %v2652
        %v2670 = vsel %vm2668, %v2658, 2102212464
        %v2671 = vsel %vm2667, %v2655, %v2670
        %v2672 = vsel %vm2666, %v2669, %v2671
        %v2673 = vsel %vm2665, %v2652, %v2655
        %v2674 = vsel %vm2668, %v2661, 920167782
        %v2675 = vsel %vm2667, %v2658, %v2674
        %v2676 = vsel %vm2666, %v2673, %v2675
        %v2677 = vsel %vm2665, %v2655, %v2658
        %v2678 = vsel %vm2668, %v2664, 1326507024
        %v2679 = vsel %vm2667, %v2661, %v2678
        %v2680 = vsel %vm2666, %v2677, %v2679
        %v2681 = vshll.u32 %v2641, 8
        %v2682 = vand.u32 %v2681, 65535
        %v2683 = vshrl.u32 %v2681, 16
        %v2684 = vand.u32 %v2680, 65535
        %v2685 = vshrl.u32 %v2680, 16
        %v2686 = vmul.u32 %v2682, %v2684
        %v2687 = vmul.u32 %v2682, %v2685
        %v2688 = vmul.u32 %v2683, %v2684
        %v2689 = vmul.u32 %v2683, %v2685
        %v2690 = vshll.u32 %v2687, 16
        %v2691 = vshrl.u32 %v2687, 16
        %v2692 = vshll.u32 %v2688, 16
        %v2693 = vshrl.u32 %v2688, 16
        %vm2694 = vc.u32 %v2686, %v2690
        %v2695 = vsel %vm2694, 1, 0
        %v2696 = vadd.s32 %v2686, %v2690
        %v2697 = vadd.s32 %v2689, %v2695
        %vm2698 = vc.u32 %v2696, %v2692
        %v2699 = vsel %vm2698, 1, 0
        %v2700 = vadd.s32 %v2696, %v2692
        %v2701 = vadd.s32 %v2697, %v2699
        %v2702 = vadd.s32 %v2701, %v2691
        %v2703 = vadd.s32 %v2702, %v2693
        %v2704 = vand.u32 %v2681, 65535
        %v2705 = vshrl.u32 %v2681, 16
        %v2706 = vand.u32 %v2676, 65535
        %v2707 = vshrl.u32 %v2676, 16
        %v2708 = vmul.u32 %v2704, %v2706
        %v2709 = vmul.u32 %v2704, %v2707
        %v2710 = vmul.u32 %v2705, %v2706
        %v2711 = vmul.u32 %v2705, %v2707
        %v2712 = vshll.u32 %v2709, 16
        %v2713 = vshrl.u32 %v2709, 16
        %v2714 = vshll.u32 %v2710, 16
        %v2715 = vshrl.u32 %v2710, 16
        %vm2716 = vc.u32 %v2708, %v2712
        %v2717 = vsel %vm2716, 1, 0
        %v2718 = vadd.s32 %v2708, %v2712
        %v2719 = vadd.s32 %v2711, %v2717
        %vm2720 = vc.u32 %v2718, %v2714
        %v2721 = vsel %vm2720, 1, 0
        %v2722 = vadd.s32 %v2718, %v2714
        %v2723 = vadd.s32 %v2719, %v2721
        %v2724 = vadd.s32 %v2723, %v2713
        %v2725 = vadd.s32 %v2724, %v2715
        %v2726 = vmul.u32 %v2681, %v2672
        %v2727 = vadd.s32 %v2703, %v2722
        %vm2728 = vc.u32 %v2703, %v2722
        %v2729 = vadd.s32 %v2725, 1
        %v2730 = vsel %vm2728, %v2729, %v2725
        %v2731 = vadd.s32 %v2726, %v2730
        %v2732 = vadd.s32 %v2731, 536870912
        %v2733 = vshrl.u32 %v2732, 30
        %v2734 = vshll.u32 %v2733, 30
        %v2735 = vsub.s32 %v2731, %v2734
        %vm2736 = vcmp.lt.s32.totalorder %v2735, 0
        %v2737 = vsub.s32 0, %v2735
        %v2738 = vsel %vm2736, %v2737, %v2735
        %v2739 = vclz %v2738
        %v2740 = vsub.s32 %v2739, 2
        %vm2741 = vcmp.gt.s32.totalorder 0, %v2740
        %v2742 = vsel %vm2741, 0, %v2740
        %v2743 = vsub.s32 32, %v2742
        %v2744 = vshll.u32 %v2735, %v2742
        %v2745 = vshrl.u32 %v2727, %v2743
        %v2746 = vor.u32 %v2744, %v2745
        %v2747 = vsub.s32 4294967266, %v2742
        %v2748 = vadd.s32 %v2747, 127
        %v2749 = vshll.u32 %v2748, 23
        %v2750 = vor.u32 4788187, %v2749
        %v2751 = vand.u32 2147483647, %v2750
        %v2753 = vcvt.s32.f32 %v2746
        %v2754 = vmul.f32 %v2753, %v2751
        %v2755 = vxor.u32 %v2754, 2147483648
        %v2756 = vsel %vm2635, %v2755, %v2754
        %v2757 = vsub.s32 4, %v2733
        %v2758 = vsel %vm2635, %v2757, %v2733
        %v2759 = vsel %vm2634, %v822, %v2756
        %v2760 = vsel %vm2634, 0, %v2758
        %v2761 = vmul.f32 %v2759, %v2759
        %v2762 = vmul.f32 %v2761, -0.001358992
        %v2763 = vadd.f32 %v2762, 0.041655596
        %v2764 = vmul.f32 %v2761, %v2763
        %v2765 = vadd.f32 %v2764, -0.4999988
        %v2766 = vmul.f32 %v2761, %v2765
        %v2767 = vadd.f32 1.0, %v2766
        %v2768 = vmul.f32 %v2759, %v2759
        %v2769 = vmul.f32 %v2768, -0.00019511016
        %v2770 = vadd.f32 %v2769, 0.008332121
        %v2771 = vmul.f32 %v2768, %v2770
        %v2772 = vadd.f32 %v2771, -0.16666654
        %v2773 = vmul.f32 %v2768, %v2772
        %v2774 = vadd.f32 %v2773, 1.0
        %v2775 = vmul.f32 %v2774, %v2759
        %vm2776 = vweird.f32 %v822
        %v2777 = vadd.s32 %v2760, 3
        %v2778 = vand.u32 %v2777, 3
        %vm2779 = vcmp.lt.s32.totalorder %v2778, 2
        %vm2780 = vcmp.eq.s32.totalorder %v2778, 0
        %v2781 = vxor.u32 %v2775, 2147483648
        %v2782 = vsel %vm2780, %v2767, %v2781
        %vm2783 = vcmp.eq.s32.totalorder %v2778, 2
        %v2784 = vxor.u32 %v2767, 2147483648
        %v2785 = vsel %vm2783, %v2784, %v2775
        %v2786 = vsel %vm2779, %v2782, %v2785
        %v2787 = vsel %vm2776, nan, %v2786
        %v2788 = vand.u32 2147483647, %v1464
        %vm2789 = vcmp.le.f32.partialorder %v2788, 0.7853982
        %vm2790 = vcmp.lt.s32.totalorder %v1464, 0
        %v2791 = vand.u32 %v1464, 2139095040
        %v2792 = vshrl.u32 %v2791, 23
        %v2793 = vsub.s32 %v2792, 127
        %v2794 = vand.u32 2147483647, %v1464
        %v2795 = vand.u32 %v2794, 8388607
        %v2796 = vor.u32 %v2795, 8388608
        %v2797 = vsub.s32 0, %v2796
        %v2798 = vadd.s32 %v2793, 1
        %vm2799 = vcmp.gt.s32.totalorder %v2798, 0
        %v2800 = vsel %vm2799, %v2798, 0
        %v2801 = vshrl.u32 %v2800, 5
        %v2802 = vand.u32 %v2800, 31
        %v2803 = vsub.s32 32, %v2802
        %v2804 = vshrl.u32 683565275, %v2803
        %v2805 = vshll.u32 683565275, %v2802
        %v2806 = vshrl.u32 2475754826, %v2803
        %v2807 = vor.u32 %v2805, %v2806
        %v2808 = vshll.u32 2475754826, %v2802
        %v2809 = vshrl.u32 2131351028, %v2803
        %v2810 = vor.u32 %v2808, %v2809
        %v2811 = vshll.u32 2131351028, %v2802
        %v2812 = vshrl.u32 2102212464, %v2803
        %v2813 = vor.u32 %v2811, %v2812
        %v2814 = vshll.u32 2102212464, %v2802
        %v2815 = vshrl.u32 920167782, %v2803
        %v2816 = vor.u32 %v2814, %v2815
        %v2817 = vshll.u32 920167782, %v2802
        %v2818 = vshrl.u32 1326507024, %v2803
        %v2819 = vor.u32 %v2817, %v2818
        %vm2820 = vcmp.lt.s32.totalorder %v2801, 1
        %vm2821 = vcmp.lt.s32.totalorder %v2801, 2
        %vm2822 = vcmp.lt.s32.totalorder %v2801, 3
        %vm2823 = vcmp.lt.s32.totalorder %v2801, 4
        %v2824 = vsel %vm2820, %v2804, %v2807
        %v2825 = vsel %vm2823, %v2813, 2102212464
        %v2826 = vsel %vm2822, %v2810, %v2825
        %v2827 = vsel %vm2821, %v2824, %v2826
        %v2828 = vsel %vm2820, %v2807, %v2810
        %v2829 = vsel %vm2823, %v2816, 920167782
        %v2830 = vsel %vm2822, %v2813, %v2829
        %v2831 = vsel %vm2821, %v2828, %v2830
        %v2832 = vsel %vm2820, %v2810, %v2813
        %v2833 = vsel %vm2823, %v2819, 1326507024
        %v2834 = vsel %vm2822, %v2816, %v2833
        %v2835 = vsel %vm2821, %v2832, %v2834
        %v2836 = vshll.u32 %v2796, 8
        %v2837 = vand.u32 %v2836, 65535
        %v2838 = vshrl.u32 %v2836, 16
        %v2839 = vand.u32 %v2835, 65535
        %v2840 = vshrl.u32 %v2835, 16
        %v2841 = vmul.u32 %v2837, %v2839
        %v2842 = vmul.u32 %v2837, %v2840
        %v2843 = vmul.u32 %v2838, %v2839
        %v2844 = vmul.u32 %v2838, %v2840
        %v2845 = vshll.u32 %v2842, 16
        %v2846 = vshrl.u32 %v2842, 16
        %v2847 = vshll.u32 %v2843, 16
        %v2848 = vshrl.u32 %v2843, 16
        %vm2849 = vc.u32 %v2841, %v2845
        %v2850 = vsel %vm2849, 1, 0
        %v2851 = vadd.s32 %v2841, %v2845
        %v2852 = vadd.s32 %v2844, %v2850
        %vm2853 = vc.u32 %v2851, %v2847
        %v2854 = vsel %vm2853, 1, 0
        %v2855 = vadd.s32 %v2851, %v2847
        %v2856 = vadd.s32 %v2852, %v2854
        %v2857 = vadd.s32 %v2856, %v2846
        %v2858 = vadd.s32 %v2857, %v2848
        %v2859 = vand.u32 %v2836, 65535
        %v2860 = vshrl.u32 %v2836, 16
        %v2861 = vand.u32 %v2831, 65535
        %v2862 = vshrl.u32 %v2831, 16
        %v2863 = vmul.u32 %v2859, %v2861
        %v2864 = vmul.u32 %v2859, %v2862
        %v2865 = vmul.u32 %v2860, %v2861
        %v2866 = vmul.u32 %v2860, %v2862
        %v2867 = vshll.u32 %v2864, 16
        %v2868 = vshrl.u32 %v2864, 16
        %v2869 = vshll.u32 %v2865, 16
        %v2870 = vshrl.u32 %v2865, 16
        %vm2871 = vc.u32 %v2863, %v2867
        %v2872 = vsel %vm2871, 1, 0
        %v2873 = vadd.s32 %v2863, %v2867
        %v2874 = vadd.s32 %v2866, %v2872
        %vm2875 = vc.u32 %v2873, %v2869
        %v2876 = vsel %vm2875, 1, 0
        %v2877 = vadd.s32 %v2873, %v2869
        %v2878 = vadd.s32 %v2874, %v2876
        %v2879 = vadd.s32 %v2878, %v2868
        %v2880 = vadd.s32 %v2879, %v2870
        %v2881 = vmul.u32 %v2836, %v2827
        %v2882 = vadd.s32 %v2858, %v2877
        %vm2883 = vc.u32 %v2858, %v2877
        %v2884 = vadd.s32 %v2880, 1
        %v2885 = vsel %vm2883, %v2884, %v2880
        %v2886 = vadd.s32 %v2881, %v2885
        %v2887 = vadd.s32 %v2886, 536870912
        %v2888 = vshrl.u32 %v2887, 30
        %v2889 = vshll.u32 %v2888, 30
        %v2890 = vsub.s32 %v2886, %v2889
        %vm2891 = vcmp.lt.s32.totalorder %v2890, 0
        %v2892 = vsub.s32 0, %v2890
        %v2893 = vsel %vm2891, %v2892, %v2890
        %v2894 = vclz %v2893
        %v2895 = vsub.s32 %v2894, 2
        %vm2896 = vcmp.gt.s32.totalorder 0, %v2895
        %v2897 = vsel %vm2896, 0, %v2895
        %v2898 = vsub.s32 32, %v2897
        %v2899 = vshll.u32 %v2890, %v2897
        %v2900 = vshrl.u32 %v2882, %v2898
        %v2901 = vor.u32 %v2899, %v2900
        %v2902 = vsub.s32 4294967266, %v2897
        %v2903 = vadd.s32 %v2902, 127
        %v2904 = vshll.u32 %v2903, 23
        %v2905 = vor.u32 4788187, %v2904
        %v2906 = vand.u32 2147483647, %v2905
        %v2908 = vcvt.s32.f32 %v2901
        %v2909 = vmul.f32 %v2908, %v2906
        %v2910 = vxor.u32 %v2909, 2147483648
        %v2911 = vsel %vm2790, %v2910, %v2909
        %v2912 = vsub.s32 4, %v2888
        %v2913 = vsel %vm2790, %v2912, %v2888
        %v2914 = vsel %vm2789, %v1464, %v2911
        %v2915 = vsel %vm2789, 0, %v2913
        %v2916 = vmul.f32 %v2914, %v2914
        %v2917 = vmul.f32 %v2916, -0.001358992
        %v2918 = vadd.f32 %v2917, 0.041655596
        %v2919 = vmul.f32 %v2916, %v2918
        %v2920 = vadd.f32 %v2919, -0.4999988
        %v2921 = vmul.f32 %v2916, %v2920
        %v2922 = vadd.f32 1.0, %v2921
        %v2923 = vmul.f32 %v2914, %v2914
        %v2924 = vmul.f32 %v2923, -0.00019511016
        %v2925 = vadd.f32 %v2924, 0.008332121
        %v2926 = vmul.f32 %v2923, %v2925
        %v2927 = vadd.f32 %v2926, -0.16666654
        %v2928 = vmul.f32 %v2923, %v2927
        %v2929 = vadd.f32 %v2928, 1.0
        %v2930 = vmul.f32 %v2929, %v2914
        %vm2931 = vweird.f32 %v1464
        %v2932 = vadd.s32 %v2915, 3
        %v2933 = vand.u32 %v2932, 3
        %vm2934 = vcmp.lt.s32.totalorder %v2933, 2
        %vm2935 = vcmp.eq.s32.totalorder %v2933, 0
        %v2936 = vxor.u32 %v2930, 2147483648
        %v2937 = vsel %vm2935, %v2922, %v2936
        %vm2938 = vcmp.eq.s32.totalorder %v2933, 2
        %v2939 = vxor.u32 %v2922, 2147483648
        %v2940 = vsel %vm2938, %v2939, %v2930
        %v2941 = vsel %vm2934, %v2937, %v2940
        %v2942 = vsel %vm2931, nan, %v2941
        %v2943 = vand.u32 2147483647, %v2106
        %vm2944 = vcmp.le.f32.partialorder %v2943, 0.7853982
        %vm2945 = vcmp.lt.s32.totalorder %v2106, 0
        %v2946 = vand.u32 %v2106, 2139095040
        %v2947 = vshrl.u32 %v2946, 23
        %v2948 = vsub.s32 %v2947, 127
        %v2949 = vand.u32 2147483647, %v2106
        %v2950 = vand.u32 %v2949, 8388607
        %v2951 = vor.u32 %v2950, 8388608
        %v2952 = vsub.s32 0, %v2951
        %v2953 = vadd.s32 %v2948, 1
        %vm2954 = vcmp.gt.s32.totalorder %v2953, 0
        %v2955 = vsel %vm2954, %v2953, 0
        %v2956 = vshrl.u32 %v2955, 5
        %v2957 = vand.u32 %v2955, 31
        %v2958 = vsub.s32 32, %v2957
        %v2959 = vshrl.u32 683565275, %v2958
        %v2960 = vshll.u32 683565275, %v2957
        %v2961 = vshrl.u32 2475754826, %v2958
        %v2962 = vor.u32 %v2960, %v2961
        %v2963 = vshll.u32 2475754826, %v2957
        %v2964 = vshrl.u32 2131351028, %v2958
        %v2965 = vor.u32 %v2963, %v2964
        %v2966 = vshll.u32 2131351028, %v2957
        %v2967 = vshrl.u32 2102212464, %v2958
        %v2968 = vor.u32 %v2966, %v2967
        %v2969 = vshll.u32 2102212464, %v2957
        %v2970 = vshrl.u32 920167782, %v2958
        %v2971 = vor.u32 %v2969, %v2970
        %v2972 = vshll.u32 920167782, %v2957
        %v2973 = vshrl.u32 1326507024, %v2958
        %v2974 = vor.u32 %v2972, %v2973
        %vm2975 = vcmp.lt.s32.totalorder %v2956, 1
        %vm2976 = vcmp.lt.s32.totalorder %v2956, 2
        %vm2977 = vcmp.lt.s32.totalorder %v2956, 3
        %vm2978 = vcmp.lt.s32.totalorder %v2956, 4
        %v2979 = vsel %vm2975, %v2959, %v2962
        %v2980 = vsel %vm2978, %v2968, 2102212464
        %v2981 = vsel %vm2977, %v2965, %v2980
        %v2982 = vsel %vm2976, %v2979, %v2981
        %v2983 = vsel %vm2975, %v2962, %v2965
        %v2984 = vsel %vm2978, %v2971, 920167782
        %v2985 = vsel %vm2977, %v2968, %v2984
        %v2986 = vsel %vm2976, %v2983, %v2985
        %v2987 = vsel %vm2975, %v2965, %v2968
        %v2988 = vsel %vm2978, %v2974, 1326507024
        %v2989 = vsel %vm2977, %v2971, %v2988
        %v2990 = vsel %vm2976, %v2987, %v2989
        %v2991 = vshll.u32 %v2951, 8
        %v2992 = vand.u32 %v2991, 65535
        %v2993 = vshrl.u32 %v2991, 16
        %v2994 = vand.u32 %v2990, 65535
        %v2995 = vshrl.u32 %v2990, 16
        %v2996 = vmul.u32 %v2992, %v2994
        %v2997 = vmul.u32 %v2992, %v2995
        %v2998 = vmul.u32 %v2993, %v2994
        %v2999 = vmul.u32 %v2993, %v2995
        %v3000 = vshll.u32 %v2997, 16
        %v3001 = vshrl.u32 %v2997, 16
        %v3002 = vshll.u32 %v2998, 16
        %v3003 = vshrl.u32 %v2998, 16
        %vm3004 = vc.u32 %v2996, %v3000
        %v3005 = vsel %vm3004, 1, 0
        %v3006 = vadd.s32 %v2996, %v3000
        %v3007 = vadd.s32 %v2999, %v3005
        %vm3008 = vc.u32 %v3006, %v3002
        %v3009 = vsel %vm3008, 1, 0
        %v3010 = vadd.s32 %v3006, %v3002
        %v3011 = vadd.s32 %v3007, %v3009
        %v3012 = vadd.s32 %v3011, %v3001
        %v3013 = vadd.s32 %v3012, %v3003
        %v3014 = vand.u32 %v2991, 65535
        %v3015 = vshrl.u32 %v2991, 16
        %v3016 = vand.u32 %v2986, 65535
        %v3017 = vshrl.u32 %v2986, 16
        %v3018 = vmul.u32 %v3014, %v3016
        %v3019 = vmul.u32 %v3014, %v3017
        %v3020 = vmul.u32 %v3015, %v3016
        %v3021 = vmul.u32 %v3015, %v3017
        %v3022 = vshll.u32 %v3019, 16
        %v3023 = vshrl.u32 %v3019, 16
        %v3024 = vshll.u32 %v3020, 16
        %v3025 = vshrl.u32 %v3020, 16
        %vm3026 = vc.u32 %v3018, %v3022
        %v3027 = vsel %vm3026, 1, 0
        %v3028 = vadd.s32 %v3018, %v3022
        %v3029 = vadd.s32 %v3021, %v3027
        %vm3030 = vc.u32 %v3028, %v3024
        %v3031 = vsel %vm3030, 1, 0
        %v3032 = vadd.s32 %v3028, %v3024
        %v3033 = vadd.s32 %v3029, %v3031
        %v3034 = vadd.s32 %v3033, %v3023
        %v3035 = vadd.s32 %v3034, %v3025
        %v3036 = vmul.u32 %v2991, %v2982
        %v3037 = vadd.s32 %v3013, %v3032
        %vm3038 = vc.u32 %v3013, %v3032
        %v3039 = vadd.s32 %v3035, 1
        %v3040 = vsel %vm3038, %v3039, %v3035
        %v3041 = vadd.s32 %v3036, %v3040
        %v3042 = vadd.s32 %v3041, 536870912
        %v3043 = vshrl.u32 %v3042, 30
        %v3044 = vshll.u32 %v3043, 30
        %v3045 = vsub.s32 %v3041, %v3044
        %vm3046 = vcmp.lt.s32.totalorder %v3045, 0
        %v3047 = vsub.s32 0, %v3045
        %v3048 = vsel %vm3046, %v3047, %v3045
        %v3049 = vclz %v3048
        %v3050 = vsub.s32 %v3049, 2
        %vm3051 = vcmp.gt.s32.totalorder 0, %v3050
        %v3052 = vsel %vm3051, 0, %v3050
        %v3053 = vsub.s32 32, %v3052
        %v3054 = vshll.u32 %v3045, %v3052
        %v3055 = vshrl.u32 %v3037, %v3053
        %v3056 = vor.u32 %v3054, %v3055
        %v3057 = vsub.s32 4294967266, %v3052
        %v3058 = vadd.s32 %v3057, 127
        %v3059 = vshll.u32 %v3058, 23
        %v3060 = vor.u32 4788187, %v3059
        %v3061 = vand.u32 2147483647, %v3060
        %v3063 = vcvt.s32.f32 %v3056
        %v3064 = vmul.f32 %v3063, %v3061
        %v3065 = vxor.u32 %v3064, 2147483648
        %v3066 = vsel %vm2945, %v3065, %v3064
        %v3067 = vsub.s32 4, %v3043
        %v3068 = vsel %vm2945, %v3067, %v3043
        %v3069 = vsel %vm2944, %v2106, %v3066
        %v3070 = vsel %vm2944, 0, %v3068
        %v3071 = vmul.f32 %v3069, %v3069
        %v3072 = vmul.f32 %v3071, -0.001358992
        %v3073 = vadd.f32 %v3072, 0.041655596
        %v3074 = vmul.f32 %v3071, %v3073
        %v3075 = vadd.f32 %v3074, -0.4999988
        %v3076 = vmul.f32 %v3071, %v3075
        %v3077 = vadd.f32 1.0, %v3076
        %v3078 = vmul.f32 %v3069, %v3069
        %v3079 = vmul.f32 %v3078, -0.00019511016
        %v3080 = vadd.f32 %v3079, 0.008332121
        %v3081 = vmul.f32 %v3078, %v3080
        %v3082 = vadd.f32 %v3081, -0.16666654
        %v3083 = vmul.f32 %v3078, %v3082
        %v3084 = vadd.f32 %v3083, 1.0
        %v3085 = vmul.f32 %v3084, %v3069
        %vm3086 = vweird.f32 %v2106
        %v3087 = vadd.s32 %v3070, 3
        %v3088 = vand.u32 %v3087, 3
        %vm3089 = vcmp.lt.s32.totalorder %v3088, 2
        %vm3090 = vcmp.eq.s32.totalorder %v3088, 0
        %v3091 = vxor.u32 %v3085, 2147483648
        %v3092 = vsel %vm3090, %v3077, %v3091
        %vm3093 = vcmp.eq.s32.totalorder %v3088, 2
        %v3094 = vxor.u32 %v3077, 2147483648
        %v3095 = vsel %vm3093, %v3094, %v3085
        %v3096 = vsel %vm3089, %v3092, %v3095
        %v3097 = vsel %vm3086, nan, %v3096
        %v3098 = vand.u32 2147483647, %v826
        %vm3099 = vcmp.le.f32.partialorder %v3098, 0.7853982
        %vm3100 = vcmp.lt.s32.totalorder %v826, 0
        %v3101 = vand.u32 %v826, 2139095040
        %v3102 = vshrl.u32 %v3101, 23
        %v3103 = vsub.s32 %v3102, 127
        %v3104 = vand.u32 2147483647, %v826
        %v3105 = vand.u32 %v3104, 8388607
        %v3106 = vor.u32 %v3105, 8388608
        %v3107 = vsub.s32 0, %v3106
        %v3108 = vadd.s32 %v3103, 1
        %vm3109 = vcmp.gt.s32.totalorder %v3108, 0
        %v3110 = vsel %vm3109, %v3108, 0
        %v3111 = vshrl.u32 %v3110, 5
        %v3112 = vand.u32 %v3110, 31
        %v3113 = vsub.s32 32, %v3112
        %v3114 = vshrl.u32 683565275, %v3113
        %v3115 = vshll.u32 683565275, %v3112
        %v3116 = vshrl.u32 2475754826, %v3113
        %v3117 = vor.u32 %v3115, %v3116
        %v3118 = vshll.u32 2475754826, %v3112
        %v3119 = vshrl.u32 2131351028, %v3113
        %v3120 = vor.u32 %v3118, %v3119
        %v3121 = vshll.u32 2131351028, %v3112
        %v3122 = vshrl.u32 2102212464, %v3113
        %v3123 = vor.u32 %v3121, %v3122
        %v3124 = vshll.u32 2102212464, %v3112
        %v3125 = vshrl.u32 920167782, %v3113
        %v3126 = vor.u32 %v3124, %v3125
        %v3127 = vshll.u32 920167782, %v3112
        %v3128 = vshrl.u32 1326507024, %v3113
        %v3129 = vor.u32 %v3127, %v3128
        %vm3130 = vcmp.lt.s32.totalorder %v3111, 1
        %vm3131 = vcmp.lt.s32.totalorder %v3111, 2
        %vm3132 = vcmp.lt.s32.totalorder %v3111, 3
        %vm3133 = vcmp.lt.s32.totalorder %v3111, 4
        %v3134 = vsel %vm3130, %v3114, %v3117
        %v3135 = vsel %vm3133, %v3123, 2102212464
        %v3136 = vsel %vm3132, %v3120, %v3135
        %v3137 = vsel %vm3131, %v3134, %v3136
        %v3138 = vsel %vm3130, %v3117, %v3120
        %v3139 = vsel %vm3133, %v3126, 920167782
        %v3140 = vsel %vm3132, %v3123, %v3139
        %v3141 = vsel %vm3131, %v3138, %v3140
        %v3142 = vsel %vm3130, %v3120, %v3123
        %v3143 = vsel %vm3133, %v3129, 1326507024
        %v3144 = vsel %vm3132, %v3126, %v3143
        %v3145 = vsel %vm3131, %v3142, %v3144
        %v3146 = vshll.u32 %v3106, 8
        %v3147 = vand.u32 %v3146, 65535
        %v3148 = vshrl.u32 %v3146, 16
        %v3149 = vand.u32 %v3145, 65535
        %v3150 = vshrl.u32 %v3145, 16
        %v3151 = vmul.u32 %v3147, %v3149
        %v3152 = vmul.u32 %v3147, %v3150
        %v3153 = vmul.u32 %v3148, %v3149
        %v3154 = vmul.u32 %v3148, %v3150
        %v3155 = vshll.u32 %v3152, 16
        %v3156 = vshrl.u32 %v3152, 16
        %v3157 = vshll.u32 %v3153, 16
        %v3158 = vshrl.u32 %v3153, 16
        %vm3159 = vc.u32 %v3151, %v3155
        %v3160 = vsel %vm3159, 1, 0
        %v3161 = vadd.s32 %v3151, %v3155
        %v3162 = vadd.s32 %v3154, %v3160
        %vm3163 = vc.u32 %v3161, %v3157
        %v3164 = vsel %vm3163, 1, 0
        %v3165 = vadd.s32 %v3161, %v3157
        %v3166 = vadd.s32 %v3162, %v3164
        %v3167 = vadd.s32 %v3166, %v3156
        %v3168 = vadd.s32 %v3167, %v3158
        %v3169 = vand.u32 %v3146, 65535
        %v3170 = vshrl.u32 %v3146, 16
        %v3171 = vand.u32 %v3141, 65535
        %v3172 = vshrl.u32 %v3141, 16
        %v3173 = vmul.u32 %v3169, %v3171
        %v3174 = vmul.u32 %v3169, %v3172
        %v3175 = vmul.u32 %v3170, %v3171
        %v3176 = vmul.u32 %v3170, %v3172
        %v3177 = vshll.u32 %v3174, 16
        %v3178 = vshrl.u32 %v3174, 16
        %v3179 = vshll.u32 %v3175, 16
        %v3180 = vshrl.u32 %v3175, 16
        %vm3181 = vc.u32 %v3173, %v3177
        %v3182 = vsel %vm3181, 1, 0
        %v3183 = vadd.s32 %v3173, %v3177
        %v3184 = vadd.s32 %v3176, %v3182
        %vm3185 = vc.u32 %v3183, %v3179
        %v3186 = vsel %vm3185, 1, 0
        %v3187 = vadd.s32 %v3183, %v3179
        %v3188 = vadd.s32 %v3184, %v3186
        %v3189 = vadd.s32 %v3188, %v3178
        %v3190 = vadd.s32 %v3189, %v3180
        %v3191 = vmul.u32 %v3146, %v3137
        %v3192 = vadd.s32 %v3168, %v3187
        %vm3193 = vc.u32 %v3168, %v3187
        %v3194 = vadd.s32 %v3190, 1
        %v3195 = vsel %vm3193, %v3194, %v3190
        %v3196 = vadd.s32 %v3191, %v3195
        %v3197 = vadd.s32 %v3196, 536870912
        %v3198 = vshrl.u32 %v3197, 30
        %v3199 = vshll.u32 %v3198, 30
        %v3200 = vsub.s32 %v3196, %v3199
        %vm3201 = vcmp.lt.s32.totalorder %v3200, 0
        %v3202 = vsub.s32 0, %v3200
        %v3203 = vsel %vm3201, %v3202, %v3200
        %v3204 = vclz %v3203
        %v3205 = vsub.s32 %v3204, 2
        %vm3206 = vcmp.gt.s32.totalorder 0, %v3205
        %v3207 = vsel %vm3206, 0, %v3205
        %v3208 = vsub.s32 32, %v3207
        %v3209 = vshll.u32 %v3200, %v3207
        %v3210 = vshrl.u32 %v3192, %v3208
        %v3211 = vor.u32 %v3209, %v3210
        %v3212 = vsub.s32 4294967266, %v3207
        %v3213 = vadd.s32 %v3212, 127
        %v3214 = vshll.u32 %v3213, 23
        %v3215 = vor.u32 4788187, %v3214
        %v3216 = vand.u32 2147483647, %v3215
        %v3218 = vcvt.s32.f32 %v3211
        %v3219 = vmul.f32 %v3218, %v3216
        %v3220 = vxor.u32 %v3219, 2147483648
        %v3221 = vsel %vm3100, %v3220, %v3219
        %v3222 = vsub.s32 4, %v3198
        %v3223 = vsel %vm3100, %v3222, %v3198
        %v3224 = vsel %vm3099, %v826, %v3221
        %v3225 = vsel %vm3099, 0, %v3223
        %v3226 = vmul.f32 %v3224, %v3224
        %v3227 = vmul.f32 %v3226, -0.001358992
        %v3228 = vadd.f32 %v3227, 0.041655596
        %v3229 = vmul.f32 %v3226, %v3228
        %v3230 = vadd.f32 %v3229, -0.4999988
        %v3231 = vmul.f32 %v3226, %v3230
        %v3232 = vadd.f32 1.0, %v3231
        %v3233 = vmul.f32 %v3224, %v3224
        %v3234 = vmul.f32 %v3233, -0.00019511016
        %v3235 = vadd.f32 %v3234, 0.008332121
        %v3236 = vmul.f32 %v3233, %v3235
        %v3237 = vadd.f32 %v3236, -0.16666654
        %v3238 = vmul.f32 %v3233, %v3237
        %v3239 = vadd.f32 %v3238, 1.0
        %v3240 = vmul.f32 %v3239, %v3224
        %vm3241 = vweird.f32 %v826
        %v3242 = vadd.s32 %v3225, 3
        %v3243 = vand.u32 %v3242, 3
        %vm3244 = vcmp.lt.s32.totalorder %v3243, 2
        %vm3245 = vcmp.eq.s32.totalorder %v3243, 0
        %v3246 = vxor.u32 %v3240, 2147483648
        %v3247 = vsel %vm3245, %v3232, %v3246
        %vm3248 = vcmp.eq.s32.totalorder %v3243, 2
        %v3249 = vxor.u32 %v3232, 2147483648
        %v3250 = vsel %vm3248, %v3249, %v3240
        %v3251 = vsel %vm3244, %v3247, %v3250
        %v3252 = vsel %vm3241, nan, %v3251
        %v3253 = vand.u32 2147483647, %v1468
        %vm3254 = vcmp.le.f32.partialorder %v3253, 0.7853982
        %vm3255 = vcmp.lt.s32.totalorder %v1468, 0
        %v3256 = vand.u32 %v1468, 2139095040
        %v3257 = vshrl.u32 %v3256, 23
        %v3258 = vsub.s32 %v3257, 127
        %v3259 = vand.u32 2147483647, %v1468
        %v3260 = vand.u32 %v3259, 8388607
        %v3261 = vor.u32 %v3260, 8388608
        %v3262 = vsub.s32 0, %v3261
        %v3263 = vadd.s32 %v3258, 1
        %vm3264 = vcmp.gt.s32.totalorder %v3263, 0
        %v3265 = vsel %vm3264, %v3263, 0
        %v3266 = vshrl.u32 %v3265, 5
        %v3267 = vand.u32 %v3265, 31
        %v3268 = vsub.s32 32, %v3267
        %v3269 = vshrl.u32 683565275, %v3268
        %v3270 = vshll.u32 683565275, %v3267
        %v3271 = vshrl.u32 2475754826, %v3268
        %v3272 = vor.u32 %v3270, %v3271
        %v3273 = vshll.u32 2475754826, %v3267
        %v3274 = vshrl.u32 2131351028, %v3268
        %v3275 = vor.u32 %v3273, %v3274
        %v3276 = vshll.u32 2131351028, %v3267
        %v3277 = vshrl.u32 2102212464, %v3268
        %v3278 = vor.u32 %v3276, %v3277
        %v3279 = vshll.u32 2102212464, %v3267
        %v3280 = vshrl.u32 920167782, %v3268
        %v3281 = vor.u32 %v3279, %v3280
        %v3282 = vshll.u32 920167782, %v3267
        %v3283 = vshrl.u32 1326507024, %v3268
        %v3284 = vor.u32 %v3282, %v3283
        %vm3285 = vcmp.lt.s32.totalorder %v3266, 1
        %vm3286 = vcmp.lt.s32.totalorder %v3266, 2
        %vm3287 = vcmp.lt.s32.totalorder %v3266, 3
        %vm3288 = vcmp.lt.s32.totalorder %v3266, 4
        %v3289 = vsel %vm3285, %v3269, %v3272
        %v3290 = vsel %vm3288, %v3278, 2102212464
        %v3291 = vsel %vm3287, %v3275, %v3290
        %v3292 = vsel %vm3286, %v3289, %v3291
        %v3293 = vsel %vm3285, %v3272, %v3275
        %v3294 = vsel %vm3288, %v3281, 920167782
        %v3295 = vsel %vm3287, %v3278, %v3294
        %v3296 = vsel %vm3286, %v3293, %v3295
        %v3297 = vsel %vm3285, %v3275, %v3278
        %v3298 = vsel %vm3288, %v3284, 1326507024
        %v3299 = vsel %vm3287, %v3281, %v3298
        %v3300 = vsel %vm3286, %v3297, %v3299
        %v3301 = vshll.u32 %v3261, 8
        %v3302 = vand.u32 %v3301, 65535
        %v3303 = vshrl.u32 %v3301, 16
        %v3304 = vand.u32 %v3300, 65535
        %v3305 = vshrl.u32 %v3300, 16
        %v3306 = vmul.u32 %v3302, %v3304
        %v3307 = vmul.u32 %v3302, %v3305
        %v3308 = vmul.u32 %v3303, %v3304
        %v3309 = vmul.u32 %v3303, %v3305
        %v3310 = vshll.u32 %v3307, 16
        %v3311 = vshrl.u32 %v3307, 16
        %v3312 = vshll.u32 %v3308, 16
        %v3313 = vshrl.u32 %v3308, 16
        %vm3314 = vc.u32 %v3306, %v3310
        %v3315 = vsel %vm3314, 1, 0
        %v3316 = vadd.s32 %v3306, %v3310
        %v3317 = vadd.s32 %v3309, %v3315
        %vm3318 = vc.u32 %v3316, %v3312
        %v3319 = vsel %vm3318, 1, 0
        %v3320 = vadd.s32 %v3316, %v3312
        %v3321 = vadd.s32 %v3317, %v3319
        %v3322 = vadd.s32 %v3321, %v3311
        %v3323 = vadd.s32 %v3322, %v3313
        %v3324 = vand.u32 %v3301, 65535
        %v3325 = vshrl.u32 %v3301, 16
        %v3326 = vand.u32 %v3296, 65535
        %v3327 = vshrl.u32 %v3296, 16
        %v3328 = vmul.u32 %v3324, %v3326
        %v3329 = vmul.u32 %v3324, %v3327
        %v3330 = vmul.u32 %v3325, %v3326
        %v3331 = vmul.u32 %v3325, %v3327
        %v3332 = vshll.u32 %v3329, 16
        %v3333 = vshrl.u32 %v3329, 16
        %v3334 = vshll.u32 %v3330, 16
        %v3335 = vshrl.u32 %v3330, 16
        %vm3336 = vc.u32 %v3328, %v3332
        %v3337 = vsel %vm3336, 1, 0
        %v3338 = vadd.s32 %v3328, %v3332
        %v3339 = vadd.s32 %v3331, %v3337
        %vm3340 = vc.u32 %v3338, %v3334
        %v3341 = vsel %vm3340, 1, 0
        %v3342 = vadd.s32 %v3338, %v3334
        %v3343 = vadd.s32 %v3339, %v3341
        %v3344 = vadd.s32 %v3343, %v3333
        %v3345 = vadd.s32 %v3344, %v3335
        %v3346 = vmul.u32 %v3301, %v3292
        %v3347 = vadd.s32 %v3323, %v3342
        %vm3348 = vc.u32 %v3323, %v3342
        %v3349 = vadd.s32 %v3345, 1
        %v3350 = vsel %vm3348, %v3349, %v3345
        %v3351 = vadd.s32 %v3346, %v3350
        %v3352 = vadd.s32 %v3351, 536870912
        %v3353 = vshrl.u32 %v3352, 30
        %v3354 = vshll.u32 %v3353, 30
        %v3355 = vsub.s32 %v3351, %v3354
        %vm3356 = vcmp.lt.s32.totalorder %v3355, 0
        %v3357 = vsub.s32 0, %v3355
        %v3358 = vsel %vm3356, %v3357, %v3355
        %v3359 = vclz %v3358
        %v3360 = vsub.s32 %v3359, 2
        %vm3361 = vcmp.gt.s32.totalorder 0, %v3360
        %v3362 = vsel %vm3361, 0, %v3360
        %v3363 = vsub.s32 32, %v3362
        %v3364 = vshll.u32 %v3355, %v3362
        %v3365 = vshrl.u32 %v3347, %v3363
        %v3366 = vor.u32 %v3364, %v3365
        %v3367 = vsub.s32 4294967266, %v3362
        %v3368 = vadd.s32 %v3367, 127
        %v3369 = vshll.u32 %v3368, 23
        %v3370 = vor.u32 4788187, %v3369
        %v3371 = vand.u32 2147483647, %v3370
        %v3373 = vcvt.s32.f32 %v3366
        %v3374 = vmul.f32 %v3373, %v3371
        %v3375 = vxor.u32 %v3374, 2147483648
        %v3376 = vsel %vm3255, %v3375, %v3374
        %v3377 = vsub.s32 4, %v3353
        %v3378 = vsel %vm3255, %v3377, %v3353
        %v3379 = vsel %vm3254, %v1468, %v3376
        %v3380 = vsel %vm3254, 0, %v3378
        %v3381 = vmul.f32 %v3379, %v3379
        %v3382 = vmul.f32 %v3381, -0.001358992
        %v3383 = vadd.f32 %v3382, 0.041655596
        %v3384 = vmul.f32 %v3381, %v3383
        %v3385 = vadd.f32 %v3384, -0.4999988
        %v3386 = vmul.f32 %v3381, %v3385
        %v3387 = vadd.f32 1.0, %v3386
        %v3388 = vmul.f32 %v3379, %v3379
        %v3389 = vmul.f32 %v3388, -0.00019511016
        %v3390 = vadd.f32 %v3389, 0.008332121
        %v3391 = vmul.f32 %v3388, %v3390
        %v3392 = vadd.f32 %v3391, -0.16666654
        %v3393 = vmul.f32 %v3388, %v3392
        %v3394 = vadd.f32 %v3393, 1.0
        %v3395 = vmul.f32 %v3394, %v3379
        %vm3396 = vweird.f32 %v1468
        %v3397 = vadd.s32 %v3380, 3
        %v3398 = vand.u32 %v3397, 3
        %vm3399 = vcmp.lt.s32.totalorder %v3398, 2
        %vm3400 = vcmp.eq.s32.totalorder %v3398, 0
        %v3401 = vxor.u32 %v3395, 2147483648
        %v3402 = vsel %vm3400, %v3387, %v3401
        %vm3403 = vcmp.eq.s32.totalorder %v3398, 2
        %v3404 = vxor.u32 %v3387, 2147483648
        %v3405 = vsel %vm3403, %v3404, %v3395
        %v3406 = vsel %vm3399, %v3402, %v3405
        %v3407 = vsel %vm3396, nan, %v3406
        %v3408 = vand.u32 2147483647, %v2110
        %vm3409 = vcmp.le.f32.partialorder %v3408, 0.7853982
        %vm3410 = vcmp.lt.s32.totalorder %v2110, 0
        %v3411 = vand.u32 %v2110, 2139095040
        %v3412 = vshrl.u32 %v3411, 23
        %v3413 = vsub.s32 %v3412, 127
        %v3414 = vand.u32 2147483647, %v2110
        %v3415 = vand.u32 %v3414, 8388607
        %v3416 = vor.u32 %v3415, 8388608
        %v3417 = vsub.s32 0, %v3416
        %v3418 = vadd.s32 %v3413, 1
        %vm3419 = vcmp.gt.s32.totalorder %v3418, 0
        %v3420 = vsel %vm3419, %v3418, 0
        %v3421 = vshrl.u32 %v3420, 5
        %v3422 = vand.u32 %v3420, 31
        %v3423 = vsub.s32 32, %v3422
        %v3424 = vshrl.u32 683565275, %v3423
        %v3425 = vshll.u32 683565275, %v3422
        %v3426 = vshrl.u32 2475754826, %v3423
        %v3427 = vor.u32 %v3425, %v3426
        %v3428 = vshll.u32 2475754826, %v3422
        %v3429 = vshrl.u32 2131351028, %v3423
        %v3430 = vor.u32 %v3428, %v3429
        %v3431 = vshll.u32 2131351028, %v3422
        %v3432 = vshrl.u32 2102212464, %v3423
        %v3433 = vor.u32 %v3431, %v3432
        %v3434 = vshll.u32 2102212464, %v3422
        %v3435 = vshrl.u32 920167782, %v3423
        %v3436 = vor.u32 %v3434, %v3435
        %v3437 = vshll.u32 920167782, %v3422
        %v3438 = vshrl.u32 1326507024, %v3423
        %v3439 = vor.u32 %v3437, %v3438
        %vm3440 = vcmp.lt.s32.totalorder %v3421, 1
        %vm3441 = vcmp.lt.s32.totalorder %v3421, 2
        %vm3442 = vcmp.lt.s32.totalorder %v3421, 3
        %vm3443 = vcmp.lt.s32.totalorder %v3421, 4
        %v3444 = vsel %vm3440, %v3424, %v3427
        %v3445 = vsel %vm3443, %v3433, 2102212464
        %v3446 = vsel %vm3442, %v3430, %v3445
        %v3447 = vsel %vm3441, %v3444, %v3446
        %v3448 = vsel %vm3440, %v3427, %v3430
        %v3449 = vsel %vm3443, %v3436, 920167782
        %v3450 = vsel %vm3442, %v3433, %v3449
        %v3451 = vsel %vm3441, %v3448, %v3450
        %v3452 = vsel %vm3440, %v3430, %v3433
        %v3453 = vsel %vm3443, %v3439, 1326507024
        %v3454 = vsel %vm3442, %v3436, %v3453
        %v3455 = vsel %vm3441, %v3452, %v3454
        %v3456 = vshll.u32 %v3416, 8
        %v3457 = vand.u32 %v3456, 65535
        %v3458 = vshrl.u32 %v3456, 16
        %v3459 = vand.u32 %v3455, 65535
        %v3460 = vshrl.u32 %v3455, 16
        %v3461 = vmul.u32 %v3457, %v3459
        %v3462 = vmul.u32 %v3457, %v3460
        %v3463 = vmul.u32 %v3458, %v3459
        %v3464 = vmul.u32 %v3458, %v3460
        %v3465 = vshll.u32 %v3462, 16
        %v3466 = vshrl.u32 %v3462, 16
        %v3467 = vshll.u32 %v3463, 16
        %v3468 = vshrl.u32 %v3463, 16
        %vm3469 = vc.u32 %v3461, %v3465
        %v3470 = vsel %vm3469, 1, 0
        %v3471 = vadd.s32 %v3461, %v3465
        %v3472 = vadd.s32 %v3464, %v3470
        %vm3473 = vc.u32 %v3471, %v3467
        %v3474 = vsel %vm3473, 1, 0
        %v3475 = vadd.s32 %v3471, %v3467
        %v3476 = vadd.s32 %v3472, %v3474
        %v3477 = vadd.s32 %v3476, %v3466
        %v3478 = vadd.s32 %v3477, %v3468
        %v3479 = vand.u32 %v3456, 65535
        %v3480 = vshrl.u32 %v3456, 16
        %v3481 = vand.u32 %v3451, 65535
        %v3482 = vshrl.u32 %v3451, 16
        %v3483 = vmul.u32 %v3479, %v3481
        %v3484 = vmul.u32 %v3479, %v3482
        %v3485 = vmul.u32 %v3480, %v3481
        %v3486 = vmul.u32 %v3480, %v3482
        %v3487 = vshll.u32 %v3484, 16
        %v3488 = vshrl.u32 %v3484, 16
        %v3489 = vshll.u32 %v3485, 16
        %v3490 = vshrl.u32 %v3485, 16
        %vm3491 = vc.u32 %v3483, %v3487
        %v3492 = vsel %vm3491, 1, 0
        %v3493 = vadd.s32 %v3483, %v3487
        %v3494 = vadd.s32 %v3486, %v3492
        %vm3495 = vc.u32 %v3493, %v3489
        %v3496 = vsel %vm3495, 1, 0
        %v3497 = vadd.s32 %v3493, %v3489
        %v3498 = vadd.s32 %v3494, %v3496
        %v3499 = vadd.s32 %v3498, %v3488
        %v3500 = vadd.s32 %v3499, %v3490
        %v3501 = vmul.u32 %v3456, %v3447
        %v3502 = vadd.s32 %v3478, %v3497
        %vm3503 = vc.u32 %v3478, %v3497
        %v3504 = vadd.s32 %v3500, 1
        %v3505 = vsel %vm3503, %v3504, %v3500
        %v3506 = vadd.s32 %v3501, %v3505
        %v3507 = vadd.s32 %v3506, 536870912
        %v3508 = vshrl.u32 %v3507, 30
        %v3509 = vshll.u32 %v3508, 30
        %v3510 = vsub.s32 %v3506, %v3509
        %vm3511 = vcmp.lt.s32.totalorder %v3510, 0
        %v3512 = vsub.s32 0, %v3510
        %v3513 = vsel %vm3511, %v3512, %v3510
        %v3514 = vclz %v3513
        %v3515 = vsub.s32 %v3514, 2
        %vm3516 = vcmp.gt.s32.totalorder 0, %v3515
        %v3517 = vsel %vm3516, 0, %v3515
        %v3518 = vsub.s32 32, %v3517
        %v3519 = vshll.u32 %v3510, %v3517
        %v3520 = vshrl.u32 %v3502, %v3518
        %v3521 = vor.u32 %v3519, %v3520
        %v3522 = vsub.s32 4294967266, %v3517
        %v3523 = vadd.s32 %v3522, 127
        %v3524 = vshll.u32 %v3523, 23
        %v3525 = vor.u32 4788187, %v3524
        %v3526 = vand.u32 2147483647, %v3525
        %v3528 = vcvt.s32.f32 %v3521
        %v3529 = vmul.f32 %v3528, %v3526
        %v3530 = vxor.u32 %v3529, 2147483648
        %v3531 = vsel %vm3410, %v3530, %v3529
        %v3532 = vsub.s32 4, %v3508
        %v3533 = vsel %vm3410, %v3532, %v3508
        %v3534 = vsel %vm3409, %v2110, %v3531
        %v3535 = vsel %vm3409, 0, %v3533
        %v3536 = vmul.f32 %v3534, %v3534
        %v3537 = vmul.f32 %v3536, -0.001358992
        %v3538 = vadd.f32 %v3537, 0.041655596
        %v3539 = vmul.f32 %v3536, %v3538
        %v3540 = vadd.f32 %v3539, -0.4999988
        %v3541 = vmul.f32 %v3536, %v3540
        %v3542 = vadd.f32 1.0, %v3541
        %v3543 = vmul.f32 %v3534, %v3534
        %v3544 = vmul.f32 %v3543, -0.00019511016
        %v3545 = vadd.f32 %v3544, 0.008332121
        %v3546 = vmul.f32 %v3543, %v3545
        %v3547 = vadd.f32 %v3546, -0.16666654
        %v3548 = vmul.f32 %v3543, %v3547
        %v3549 = vadd.f32 %v3548, 1.0
        %v3550 = vmul.f32 %v3549, %v3534
        %vm3551 = vweird.f32 %v2110
        %v3552 = vadd.s32 %v3535, 3
        %v3553 = vand.u32 %v3552, 3
        %vm3554 = vcmp.lt.s32.totalorder %v3553, 2
        %vm3555 = vcmp.eq.s32.totalorder %v3553, 0
        %v3556 = vxor.u32 %v3550, 2147483648
        %v3557 = vsel %vm3555, %v3542, %v3556
        %vm3558 = vcmp.eq.s32.totalorder %v3553, 2
        %v3559 = vxor.u32 %v3542, 2147483648
        %v3560 = vsel %vm3558, %v3559, %v3550
        %v3561 = vsel %vm3554, %v3557, %v3560
        %v3562 = vsel %vm3551, nan, %v3561
        %v3563 = vand.u32 2147483647, %v830
        %vm3564 = vcmp.le.f32.partialorder %v3563, 0.7853982
        %vm3565 = vcmp.lt.s32.totalorder %v830, 0
        %v3566 = vand.u32 %v830, 2139095040
        %v3567 = vshrl.u32 %v3566, 23
        %v3568 = vsub.s32 %v3567, 127
        %v3569 = vand.u32 2147483647, %v830
        %v3570 = vand.u32 %v3569, 8388607
        %v3571 = vor.u32 %v3570, 8388608
        %v3572 = vsub.s32 0, %v3571
        %v3573 = vadd.s32 %v3568, 1
        %vm3574 = vcmp.gt.s32.totalorder %v3573, 0
        %v3575 = vsel %vm3574, %v3573, 0
        %v3576 = vshrl.u32 %v3575, 5
        %v3577 = vand.u32 %v3575, 31
        %v3578 = vsub.s32 32, %v3577
        %v3579 = vshrl.u32 683565275, %v3578
        %v3580 = vshll.u32 683565275, %v3577
        %v3581 = vshrl.u32 2475754826, %v3578
        %v3582 = vor.u32 %v3580, %v3581
        %v3583 = vshll.u32 2475754826, %v3577
        %v3584 = vshrl.u32 2131351028, %v3578
        %v3585 = vor.u32 %v3583, %v3584
        %v3586 = vshll.u32 2131351028, %v3577
        %v3587 = vshrl.u32 2102212464, %v3578
        %v3588 = vor.u32 %v3586, %v3587
        %v3589 = vshll.u32 2102212464, %v3577
        %v3590 = vshrl.u32 920167782, %v3578
        %v3591 = vor.u32 %v3589, %v3590
        %v3592 = vshll.u32 920167782, %v3577
        %v3593 = vshrl.u32 1326507024, %v3578
        %v3594 = vor.u32 %v3592, %v3593
        %vm3595 = vcmp.lt.s32.totalorder %v3576, 1
        %vm3596 = vcmp.lt.s32.totalorder %v3576, 2
        %vm3597 = vcmp.lt.s32.totalorder %v3576, 3
        %vm3598 = vcmp.lt.s32.totalorder %v3576, 4
        %v3599 = vsel %vm3595, %v3579, %v3582
        %v3600 = vsel %vm3598, %v3588, 2102212464
        %v3601 = vsel %vm3597, %v3585, %v3600
        %v3602 = vsel %vm3596, %v3599, %v3601
        %v3603 = vsel %vm3595, %v3582, %v3585
        %v3604 = vsel %vm3598, %v3591, 920167782
        %v3605 = vsel %vm3597, %v3588, %v3604
        %v3606 = vsel %vm3596, %v3603, %v3605
        %v3607 = vsel %vm3595, %v3585, %v3588
        %v3608 = vsel %vm3598, %v3594, 1326507024
        %v3609 = vsel %vm3597, %v3591, %v3608
        %v3610 = vsel %vm3596, %v3607, %v3609
        %v3611 = vshll.u32 %v3571, 8
        %v3612 = vand.u32 %v3611, 65535
        %v3613 = vshrl.u32 %v3611, 16
        %v3614 = vand.u32 %v3610, 65535
        %v3615 = vshrl.u32 %v3610, 16
        %v3616 = vmul.u32 %v3612, %v3614
        %v3617 = vmul.u32 %v3612, %v3615
        %v3618 = vmul.u32 %v3613, %v3614
        %v3619 = vmul.u32 %v3613, %v3615
        %v3620 = vshll.u32 %v3617, 16
        %v3621 = vshrl.u32 %v3617, 16
        %v3622 = vshll.u32 %v3618, 16
        %v3623 = vshrl.u32 %v3618, 16
        %vm3624 = vc.u32 %v3616, %v3620
        %v3625 = vsel %vm3624, 1, 0
        %v3626 = vadd.s32 %v3616, %v3620
        %v3627 = vadd.s32 %v3619, %v3625
        %vm3628 = vc.u32 %v3626, %v3622
        %v3629 = vsel %vm3628, 1, 0
        %v3630 = vadd.s32 %v3626, %v3622
        %v3631 = vadd.s32 %v3627, %v3629
        %v3632 = vadd.s32 %v3631, %v3621
        %v3633 = vadd.s32 %v3632, %v3623
        %v3634 = vand.u32 %v3611, 65535
        %v3635 = vshrl.u32 %v3611, 16
        %v3636 = vand.u32 %v3606, 65535
        %v3637 = vshrl.u32 %v3606, 16
        %v3638 = vmul.u32 %v3634, %v3636
        %v3639 = vmul.u32 %v3634, %v3637
        %v3640 = vmul.u32 %v3635, %v3636
        %v3641 = vmul.u32 %v3635, %v3637
        %v3642 = vshll.u32 %v3639, 16
        %v3643 = vshrl.u32 %v3639, 16
        %v3644 = vshll.u32 %v3640, 16
        %v3645 = vshrl.u32 %v3640, 16
        %vm3646 = vc.u32 %v3638, %v3642
        %v3647 = vsel %vm3646, 1, 0
        %v3648 = vadd.s32 %v3638, %v3642
        %v3649 = vadd.s32 %v3641, %v3647
        %vm3650 = vc.u32 %v3648, %v3644
        %v3651 = vsel %vm3650, 1, 0
        %v3652 = vadd.s32 %v3648, %v3644
        %v3653 = vadd.s32 %v3649, %v3651
        %v3654 = vadd.s32 %v3653, %v3643
        %v3655 = vadd.s32 %v3654, %v3645
        %v3656 = vmul.u32 %v3611, %v3602
        %v3657 = vadd.s32 %v3633, %v3652
        %vm3658 = vc.u32 %v3633, %v3652
        %v3659 = vadd.s32 %v3655, 1
        %v3660 = vsel %vm3658, %v3659, %v3655
        %v3661 = vadd.s32 %v3656, %v3660
        %v3662 = vadd.s32 %v3661, 536870912
        %v3663 = vshrl.u32 %v3662, 30
        %v3664 = vshll.u32 %v3663, 30
        %v3665 = vsub.s32 %v3661, %v3664
        %vm3666 = vcmp.lt.s32.totalorder %v3665, 0
        %v3667 = vsub.s32 0, %v3665
        %v3668 = vsel %vm3666, %v3667, %v3665
        %v3669 = vclz %v3668
        %v3670 = vsub.s32 %v3669, 2
        %vm3671 = vcmp.gt.s32.totalorder 0, %v3670
        %v3672 = vsel %vm3671, 0, %v3670
        %v3673 = vsub.s32 32, %v3672
        %v3674 = vshll.u32 %v3665, %v3672
        %v3675 = vshrl.u32 %v3657, %v3673
        %v3676 = vor.u32 %v3674, %v3675
        %v3677 = vsub.s32 4294967266, %v3672
        %v3678 = vadd.s32 %v3677, 127
        %v3679 = vshll.u32 %v3678, 23
        %v3680 = vor.u32 4788187, %v3679
        %v3681 = vand.u32 2147483647, %v3680
        %v3683 = vcvt.s32.f32 %v3676
        %v3684 = vmul.f32 %v3683, %v3681
        %v3685 = vxor.u32 %v3684, 2147483648
        %v3686 = vsel %vm3565, %v3685, %v3684
        %v3687 = vsub.s32 4, %v3663
        %v3688 = vsel %vm3565, %v3687, %v3663
        %v3689 = vsel %vm3564, %v830, %v3686
        %v3690 = vsel %vm3564, 0, %v3688
        %v3691 = vmul.f32 %v3689, %v3689
        %v3692 = vmul.f32 %v3691, -0.001358992
        %v3693 = vadd.f32 %v3692, 0.041655596
        %v3694 = vmul.f32 %v3691, %v3693
        %v3695 = vadd.f32 %v3694, -0.4999988
        %v3696 = vmul.f32 %v3691, %v3695
        %v3697 = vadd.f32 1.0, %v3696
        %v3698 = vmul.f32 %v3689, %v3689
        %v3699 = vmul.f32 %v3698, -0.00019511016
        %v3700 = vadd.f32 %v3699, 0.008332121
        %v3701 = vmul.f32 %v3698, %v3700
        %v3702 = vadd.f32 %v3701, -0.16666654
        %v3703 = vmul.f32 %v3698, %v3702
        %v3704 = vadd.f32 %v3703, 1.0
        %v3705 = vmul.f32 %v3704, %v3689
        %vm3706 = vweird.f32 %v830
        %v3707 = vadd.s32 %v3690, 3
        %v3708 = vand.u32 %v3707, 3
        %vm3709 = vcmp.lt.s32.totalorder %v3708, 2
        %vm3710 = vcmp.eq.s32.totalorder %v3708, 0
        %v3711 = vxor.u32 %v3705, 2147483648
        %v3712 = vsel %vm3710, %v3697, %v3711
        %vm3713 = vcmp.eq.s32.totalorder %v3708, 2
        %v3714 = vxor.u32 %v3697, 2147483648
        %v3715 = vsel %vm3713, %v3714, %v3705
        %v3716 = vsel %vm3709, %v3712, %v3715
        %v3717 = vsel %vm3706, nan, %v3716
        %v3718 = vand.u32 2147483647, %v1472
        %vm3719 = vcmp.le.f32.partialorder %v3718, 0.7853982
        %vm3720 = vcmp.lt.s32.totalorder %v1472, 0
        %v3721 = vand.u32 %v1472, 2139095040
        %v3722 = vshrl.u32 %v3721, 23
        %v3723 = vsub.s32 %v3722, 127
        %v3724 = vand.u32 2147483647, %v1472
        %v3725 = vand.u32 %v3724, 8388607
        %v3726 = vor.u32 %v3725, 8388608
        %v3727 = vsub.s32 0, %v3726
        %v3728 = vadd.s32 %v3723, 1
        %vm3729 = vcmp.gt.s32.totalorder %v3728, 0
        %v3730 = vsel %vm3729, %v3728, 0
        %v3731 = vshrl.u32 %v3730, 5
        %v3732 = vand.u32 %v3730, 31
        %v3733 = vsub.s32 32, %v3732
        %v3734 = vshrl.u32 683565275, %v3733
        %v3735 = vshll.u32 683565275, %v3732
        %v3736 = vshrl.u32 2475754826, %v3733
        %v3737 = vor.u32 %v3735, %v3736
        %v3738 = vshll.u32 2475754826, %v3732
        %v3739 = vshrl.u32 2131351028, %v3733
        %v3740 = vor.u32 %v3738, %v3739
        %v3741 = vshll.u32 2131351028, %v3732
        %v3742 = vshrl.u32 2102212464, %v3733
        %v3743 = vor.u32 %v3741, %v3742
        %v3744 = vshll.u32 2102212464, %v3732
        %v3745 = vshrl.u32 920167782, %v3733
        %v3746 = vor.u32 %v3744, %v3745
        %v3747 = vshll.u32 920167782, %v3732
        %v3748 = vshrl.u32 1326507024, %v3733
        %v3749 = vor.u32 %v3747, %v3748
        %vm3750 = vcmp.lt.s32.totalorder %v3731, 1
        %vm3751 = vcmp.lt.s32.totalorder %v3731, 2
        %vm3752 = vcmp.lt.s32.totalorder %v3731, 3
        %vm3753 = vcmp.lt.s32.totalorder %v3731, 4
        %v3754 = vsel %vm3750, %v3734, %v3737
        %v3755 = vsel %vm3753, %v3743, 2102212464
        %v3756 = vsel %vm3752, %v3740, %v3755
        %v3757 = vsel %vm3751, %v3754, %v3756
        %v3758 = vsel %vm3750, %v3737, %v3740
        %v3759 = vsel %vm3753, %v3746, 920167782
        %v3760 = vsel %vm3752, %v3743, %v3759
        %v3761 = vsel %vm3751, %v3758, %v3760
        %v3762 = vsel %vm3750, %v3740, %v3743
        %v3763 = vsel %vm3753, %v3749, 1326507024
        %v3764 = vsel %vm3752, %v3746, %v3763
        %v3765 = vsel %vm3751, %v3762, %v3764
        %v3766 = vshll.u32 %v3726, 8
        %v3767 = vand.u32 %v3766, 65535
        %v3768 = vshrl.u32 %v3766, 16
        %v3769 = vand.u32 %v3765, 65535
        %v3770 = vshrl.u32 %v3765, 16
        %v3771 = vmul.u32 %v3767, %v3769
        %v3772 = vmul.u32 %v3767, %v3770
        %v3773 = vmul.u32 %v3768, %v3769
        %v3774 = vmul.u32 %v3768, %v3770
        %v3775 = vshll.u32 %v3772, 16
        %v3776 = vshrl.u32 %v3772, 16
        %v3777 = vshll.u32 %v3773, 16
        %v3778 = vshrl.u32 %v3773, 16
        %vm3779 = vc.u32 %v3771, %v3775
        %v3780 = vsel %vm3779, 1, 0
        %v3781 = vadd.s32 %v3771, %v3775
        %v3782 = vadd.s32 %v3774, %v3780
        %vm3783 = vc.u32 %v3781, %v3777
        %v3784 = vsel %vm3783, 1, 0
        %v3785 = vadd.s32 %v3781, %v3777
        %v3786 = vadd.s32 %v3782, %v3784
        %v3787 = vadd.s32 %v3786, %v3776
        %v3788 = vadd.s32 %v3787, %v3778
        %v3789 = vand.u32 %v3766, 65535
        %v3790 = vshrl.u32 %v3766, 16
        %v3791 = vand.u32 %v3761, 65535
        %v3792 = vshrl.u32 %v3761, 16
        %v3793 = vmul.u32 %v3789, %v3791
        %v3794 = vmul.u32 %v3789, %v3792
        %v3795 = vmul.u32 %v3790, %v3791
        %v3796 = vmul.u32 %v3790, %v3792
        %v3797 = vshll.u32 %v3794, 16
        %v3798 = vshrl.u32 %v3794, 16
        %v3799 = vshll.u32 %v3795, 16
        %v3800 = vshrl.u32 %v3795, 16
        %vm3801 = vc.u32 %v3793, %v3797
        %v3802 = vsel %vm3801, 1, 0
        %v3803 = vadd.s32 %v3793, %v3797
        %v3804 = vadd.s32 %v3796, %v3802
        %vm3805 = vc.u32 %v3803, %v3799
        %v3806 = vsel %vm3805, 1, 0
        %v3807 = vadd.s32 %v3803, %v3799
        %v3808 = vadd.s32 %v3804, %v3806
        %v3809 = vadd.s32 %v3808, %v3798
        %v3810 = vadd.s32 %v3809, %v3800
        %v3811 = vmul.u32 %v3766, %v3757
        %v3812 = vadd.s32 %v3788, %v3807
        %vm3813 = vc.u32 %v3788, %v3807
        %v3814 = vadd.s32 %v3810, 1
        %v3815 = vsel %vm3813, %v3814, %v3810
        %v3816 = vadd.s32 %v3811, %v3815
        %v3817 = vadd.s32 %v3816, 536870912
        %v3818 = vshrl.u32 %v3817, 30
        %v3819 = vshll.u32 %v3818, 30
        %v3820 = vsub.s32 %v3816, %v3819
        %vm3821 = vcmp.lt.s32.totalorder %v3820, 0
        %v3822 = vsub.s32 0, %v3820
        %v3823 = vsel %vm3821, %v3822, %v3820
        %v3824 = vclz %v3823
        %v3825 = vsub.s32 %v3824, 2
        %vm3826 = vcmp.gt.s32.totalorder 0, %v3825
        %v3827 = vsel %vm3826, 0, %v3825
        %v3828 = vsub.s32 32, %v3827
        %v3829 = vshll.u32 %v3820, %v3827
        %v3830 = vshrl.u32 %v3812, %v3828
        %v3831 = vor.u32 %v3829, %v3830
        %v3832 = vsub.s32 4294967266, %v3827
        %v3833 = vadd.s32 %v3832, 127
        %v3834 = vshll.u32 %v3833, 23
        %v3835 = vor.u32 4788187, %v3834
        %v3836 = vand.u32 2147483647, %v3835
        %v3838 = vcvt.s32.f32 %v3831
        %v3839 = vmul.f32 %v3838, %v3836
        %v3840 = vxor.u32 %v3839, 2147483648
        %v3841 = vsel %vm3720, %v3840, %v3839
        %v3842 = vsub.s32 4, %v3818
        %v3843 = vsel %vm3720, %v3842, %v3818
        %v3844 = vsel %vm3719, %v1472, %v3841
        %v3845 = vsel %vm3719, 0, %v3843
        %v3846 = vmul.f32 %v3844, %v3844
        %v3847 = vmul.f32 %v3846, -0.001358992
        %v3848 = vadd.f32 %v3847, 0.041655596
        %v3849 = vmul.f32 %v3846, %v3848
        %v3850 = vadd.f32 %v3849, -0.4999988
        %v3851 = vmul.f32 %v3846, %v3850
        %v3852 = vadd.f32 1.0, %v3851
        %v3853 = vmul.f32 %v3844, %v3844
        %v3854 = vmul.f32 %v3853, -0.00019511016
        %v3855 = vadd.f32 %v3854, 0.008332121
        %v3856 = vmul.f32 %v3853, %v3855
        %v3857 = vadd.f32 %v3856, -0.16666654
        %v3858 = vmul.f32 %v3853, %v3857
        %v3859 = vadd.f32 %v3858, 1.0
        %v3860 = vmul.f32 %v3859, %v3844
        %vm3861 = vweird.f32 %v1472
        %v3862 = vadd.s32 %v3845, 3
        %v3863 = vand.u32 %v3862, 3
        %vm3864 = vcmp.lt.s32.totalorder %v3863, 2
        %vm3865 = vcmp.eq.s32.totalorder %v3863, 0
        %v3866 = vxor.u32 %v3860, 2147483648
        %v3867 = vsel %vm3865, %v3852, %v3866
        %vm3868 = vcmp.eq.s32.totalorder %v3863, 2
        %v3869 = vxor.u32 %v3852, 2147483648
        %v3870 = vsel %vm3868, %v3869, %v3860
        %v3871 = vsel %vm3864, %v3867, %v3870
        %v3872 = vsel %vm3861, nan, %v3871
        %v3873 = vand.u32 2147483647, %v2114
        %vm3874 = vcmp.le.f32.partialorder %v3873, 0.7853982
        %vm3875 = vcmp.lt.s32.totalorder %v2114, 0
        %v3876 = vand.u32 %v2114, 2139095040
        %v3877 = vshrl.u32 %v3876, 23
        %v3878 = vsub.s32 %v3877, 127
        %v3879 = vand.u32 2147483647, %v2114
        %v3880 = vand.u32 %v3879, 8388607
        %v3881 = vor.u32 %v3880, 8388608
        %v3882 = vsub.s32 0, %v3881
        %v3883 = vadd.s32 %v3878, 1
        %vm3884 = vcmp.gt.s32.totalorder %v3883, 0
        %v3885 = vsel %vm3884, %v3883, 0
        %v3886 = vshrl.u32 %v3885, 5
        %v3887 = vand.u32 %v3885, 31
        %v3888 = vsub.s32 32, %v3887
        %v3889 = vshrl.u32 683565275, %v3888
        %v3890 = vshll.u32 683565275, %v3887
        %v3891 = vshrl.u32 2475754826, %v3888
        %v3892 = vor.u32 %v3890, %v3891
        %v3893 = vshll.u32 2475754826, %v3887
        %v3894 = vshrl.u32 2131351028, %v3888
        %v3895 = vor.u32 %v3893, %v3894
        %v3896 = vshll.u32 2131351028, %v3887
        %v3897 = vshrl.u32 2102212464, %v3888
        %v3898 = vor.u32 %v3896, %v3897
        %v3899 = vshll.u32 2102212464, %v3887
        %v3900 = vshrl.u32 920167782, %v3888
        %v3901 = vor.u32 %v3899, %v3900
        %v3902 = vshll.u32 920167782, %v3887
        %v3903 = vshrl.u32 1326507024, %v3888
        %v3904 = vor.u32 %v3902, %v3903
        %vm3905 = vcmp.lt.s32.totalorder %v3886, 1
        %vm3906 = vcmp.lt.s32.totalorder %v3886, 2
        %vm3907 = vcmp.lt.s32.totalorder %v3886, 3
        %vm3908 = vcmp.lt.s32.totalorder %v3886, 4
        %v3909 = vsel %vm3905, %v3889, %v3892
        %v3910 = vsel %vm3908, %v3898, 2102212464
        %v3911 = vsel %vm3907, %v3895, %v3910
        %v3912 = vsel %vm3906, %v3909, %v3911
        %v3913 = vsel %vm3905, %v3892, %v3895
        %v3914 = vsel %vm3908, %v3901, 920167782
        %v3915 = vsel %vm3907, %v3898, %v3914
        %v3916 = vsel %vm3906, %v3913, %v3915
        %v3917 = vsel %vm3905, %v3895, %v3898
        %v3918 = vsel %vm3908, %v3904, 1326507024
        %v3919 = vsel %vm3907, %v3901, %v3918
        %v3920 = vsel %vm3906, %v3917, %v3919
        %v3921 = vshll.u32 %v3881, 8
        %v3922 = vand.u32 %v3921, 65535
        %v3923 = vshrl.u32 %v3921, 16
        %v3924 = vand.u32 %v3920, 65535
        %v3925 = vshrl.u32 %v3920, 16
        %v3926 = vmul.u32 %v3922, %v3924
        %v3927 = vmul.u32 %v3922, %v3925
        %v3928 = vmul.u32 %v3923, %v3924
        %v3929 = vmul.u32 %v3923, %v3925
        %v3930 = vshll.u32 %v3927, 16
        %v3931 = vshrl.u32 %v3927, 16
        %v3932 = vshll.u32 %v3928, 16
        %v3933 = vshrl.u32 %v3928, 16
        %vm3934 = vc.u32 %v3926, %v3930
        %v3935 = vsel %vm3934, 1, 0
        %v3936 = vadd.s32 %v3926, %v3930
        %v3937 = vadd.s32 %v3929, %v3935
        %vm3938 = vc.u32 %v3936, %v3932
        %v3939 = vsel %vm3938, 1, 0
        %v3940 = vadd.s32 %v3936, %v3932
        %v3941 = vadd.s32 %v3937, %v3939
        %v3942 = vadd.s32 %v3941, %v3931
        %v3943 = vadd.s32 %v3942, %v3933
        %v3944 = vand.u32 %v3921, 65535
        %v3945 = vshrl.u32 %v3921, 16
        %v3946 = vand.u32 %v3916, 65535
        %v3947 = vshrl.u32 %v3916, 16
        %v3948 = vmul.u32 %v3944, %v3946
        %v3949 = vmul.u32 %v3944, %v3947
        %v3950 = vmul.u32 %v3945, %v3946
        %v3951 = vmul.u32 %v3945, %v3947
        %v3952 = vshll.u32 %v3949, 16
        %v3953 = vshrl.u32 %v3949, 16
        %v3954 = vshll.u32 %v3950, 16
        %v3955 = vshrl.u32 %v3950, 16
        %vm3956 = vc.u32 %v3948, %v3952
        %v3957 = vsel %vm3956, 1, 0
        %v3958 = vadd.s32 %v3948, %v3952
        %v3959 = vadd.s32 %v3951, %v3957
        %vm3960 = vc.u32 %v3958, %v3954
        %v3961 = vsel %vm3960, 1, 0
        %v3962 = vadd.s32 %v3958, %v3954
        %v3963 = vadd.s32 %v3959, %v3961
        %v3964 = vadd.s32 %v3963, %v3953
        %v3965 = vadd.s32 %v3964, %v3955
        %v3966 = vmul.u32 %v3921, %v3912
        %v3967 = vadd.s32 %v3943, %v3962
        %vm3968 = vc.u32 %v3943, %v3962
        %v3969 = vadd.s32 %v3965, 1
        %v3970 = vsel %vm3968, %v3969, %v3965
        %v3971 = vadd.s32 %v3966, %v3970
        %v3972 = vadd.s32 %v3971, 536870912
        %v3973 = vshrl.u32 %v3972, 30
        %v3974 = vshll.u32 %v3973, 30
        %v3975 = vsub.s32 %v3971, %v3974
        %vm3976 = vcmp.lt.s32.totalorder %v3975, 0
        %v3977 = vsub.s32 0, %v3975
        %v3978 = vsel %vm3976, %v3977, %v3975
        %v3979 = vclz %v3978
        %v3980 = vsub.s32 %v3979, 2
        %vm3981 = vcmp.gt.s32.totalorder 0, %v3980
        %v3982 = vsel %vm3981, 0, %v3980
        %v3983 = vsub.s32 32, %v3982
        %v3984 = vshll.u32 %v3975, %v3982
        %v3985 = vshrl.u32 %v3967, %v3983
        %v3986 = vor.u32 %v3984, %v3985
        %v3987 = vsub.s32 4294967266, %v3982
        %v3988 = vadd.s32 %v3987, 127
        %v3989 = vshll.u32 %v3988, 23
        %v3990 = vor.u32 4788187, %v3989
        %v3991 = vand.u32 2147483647, %v3990
        %v3993 = vcvt.s32.f32 %v3986
        %v3994 = vmul.f32 %v3993, %v3991
        %v3995 = vxor.u32 %v3994, 2147483648
        %v3996 = vsel %vm3875, %v3995, %v3994
        %v3997 = vsub.s32 4, %v3973
        %v3998 = vsel %vm3875, %v3997, %v3973
        %v3999 = vsel %vm3874, %v2114, %v3996
        %v4000 = vsel %vm3874, 0, %v3998
        %v4001 = vmul.f32 %v3999, %v3999
        %v4002 = vmul.f32 %v4001, -0.001358992
        %v4003 = vadd.f32 %v4002, 0.041655596
        %v4004 = vmul.f32 %v4001, %v4003
        %v4005 = vadd.f32 %v4004, -0.4999988
        %v4006 = vmul.f32 %v4001, %v4005
        %v4007 = vadd.f32 1.0, %v4006
        %v4008 = vmul.f32 %v3999, %v3999
        %v4009 = vmul.f32 %v4008, -0.00019511016
        %v4010 = vadd.f32 %v4009, 0.008332121
        %v4011 = vmul.f32 %v4008, %v4010
        %v4012 = vadd.f32 %v4011, -0.16666654
        %v4013 = vmul.f32 %v4008, %v4012
        %v4014 = vadd.f32 %v4013, 1.0
        %v4015 = vmul.f32 %v4014, %v3999
        %vm4016 = vweird.f32 %v2114
        %v4017 = vadd.s32 %v4000, 3
        %v4018 = vand.u32 %v4017, 3
        %vm4019 = vcmp.lt.s32.totalorder %v4018, 2
        %vm4020 = vcmp.eq.s32.totalorder %v4018, 0
        %v4021 = vxor.u32 %v4015, 2147483648
        %v4022 = vsel %vm4020, %v4007, %v4021
        %vm4023 = vcmp.eq.s32.totalorder %v4018, 2
        %v4024 = vxor.u32 %v4007, 2147483648
        %v4025 = vsel %vm4023, %v4024, %v4015
        %v4026 = vsel %vm4019, %v4022, %v4025
        %v4027 = vsel %vm4016, nan, %v4026
        %v4028 = vand.u32 2147483647, %v834
        %vm4029 = vcmp.le.f32.partialorder %v4028, 0.7853982
        %vm4030 = vcmp.lt.s32.totalorder %v834, 0
        %v4031 = vand.u32 %v834, 2139095040
        %v4032 = vshrl.u32 %v4031, 23
        %v4033 = vsub.s32 %v4032, 127
        %v4034 = vand.u32 2147483647, %v834
        %v4035 = vand.u32 %v4034, 8388607
        %v4036 = vor.u32 %v4035, 8388608
        %v4037 = vsub.s32 0, %v4036
        %v4038 = vadd.s32 %v4033, 1
        %vm4039 = vcmp.gt.s32.totalorder %v4038, 0
        %v4040 = vsel %vm4039, %v4038, 0
        %v4041 = vshrl.u32 %v4040, 5
        %v4042 = vand.u32 %v4040, 31
        %v4043 = vsub.s32 32, %v4042
        %v4044 = vshrl.u32 683565275, %v4043
        %v4045 = vshll.u32 683565275, %v4042
        %v4046 = vshrl.u32 2475754826, %v4043
        %v4047 = vor.u32 %v4045, %v4046
        %v4048 = vshll.u32 2475754826, %v4042
        %v4049 = vshrl.u32 2131351028, %v4043
        %v4050 = vor.u32 %v4048, %v4049
        %v4051 = vshll.u32 2131351028, %v4042
        %v4052 = vshrl.u32 2102212464, %v4043
        %v4053 = vor.u32 %v4051, %v4052
        %v4054 = vshll.u32 2102212464, %v4042
        %v4055 = vshrl.u32 920167782, %v4043
        %v4056 = vor.u32 %v4054, %v4055
        %v4057 = vshll.u32 920167782, %v4042
        %v4058 = vshrl.u32 1326507024, %v4043
        %v4059 = vor.u32 %v4057, %v4058
        %vm4060 = vcmp.lt.s32.totalorder %v4041, 1
        %vm4061 = vcmp.lt.s32.totalorder %v4041, 2
        %vm4062 = vcmp.lt.s32.totalorder %v4041, 3
        %vm4063 = vcmp.lt.s32.totalorder %v4041, 4
        %v4064 = vsel %vm4060, %v4044, %v4047
        %v4065 = vsel %vm4063, %v4053, 2102212464
        %v4066 = vsel %vm4062, %v4050, %v4065
        %v4067 = vsel %vm4061, %v4064, %v4066
        %v4068 = vsel %vm4060, %v4047, %v4050
        %v4069 = vsel %vm4063, %v4056, 920167782
        %v4070 = vsel %vm4062, %v4053, %v4069
        %v4071 = vsel %vm4061, %v4068, %v4070
        %v4072 = vsel %vm4060, %v4050, %v4053
        %v4073 = vsel %vm4063, %v4059, 1326507024
        %v4074 = vsel %vm4062, %v4056, %v4073
        %v4075 = vsel %vm4061, %v4072, %v4074
        %v4076 = vshll.u32 %v4036, 8
        %v4077 = vand.u32 %v4076, 65535
        %v4078 = vshrl.u32 %v4076, 16
        %v4079 = vand.u32 %v4075, 65535
        %v4080 = vshrl.u32 %v4075, 16
        %v4081 = vmul.u32 %v4077, %v4079
        %v4082 = vmul.u32 %v4077, %v4080
        %v4083 = vmul.u32 %v4078, %v4079
        %v4084 = vmul.u32 %v4078, %v4080
        %v4085 = vshll.u32 %v4082, 16
        %v4086 = vshrl.u32 %v4082, 16
        %v4087 = vshll.u32 %v4083, 16
        %v4088 = vshrl.u32 %v4083, 16
        %vm4089 = vc.u32 %v4081, %v4085
        %v4090 = vsel %vm4089, 1, 0
        %v4091 = vadd.s32 %v4081, %v4085
        %v4092 = vadd.s32 %v4084, %v4090
        %vm4093 = vc.u32 %v4091, %v4087
        %v4094 = vsel %vm4093, 1, 0
        %v4095 = vadd.s32 %v4091, %v4087
        %v4096 = vadd.s32 %v4092, %v4094
        %v4097 = vadd.s32 %v4096, %v4086
        %v4098 = vadd.s32 %v4097, %v4088
        %v4099 = vand.u32 %v4076, 65535
        %v4100 = vshrl.u32 %v4076, 16
        %v4101 = vand.u32 %v4071, 65535
        %v4102 = vshrl.u32 %v4071, 16
        %v4103 = vmul.u32 %v4099, %v4101
        %v4104 = vmul.u32 %v4099, %v4102
        %v4105 = vmul.u32 %v4100, %v4101
        %v4106 = vmul.u32 %v4100, %v4102
        %v4107 = vshll.u32 %v4104, 16
        %v4108 = vshrl.u32 %v4104, 16
        %v4109 = vshll.u32 %v4105, 16
        %v4110 = vshrl.u32 %v4105, 16
        %vm4111 = vc.u32 %v4103, %v4107
        %v4112 = vsel %vm4111, 1, 0
        %v4113 = vadd.s32 %v4103, %v4107
        %v4114 = vadd.s32 %v4106, %v4112
        %vm4115 = vc.u32 %v4113, %v4109
        %v4116 = vsel %vm4115, 1, 0
        %v4117 = vadd.s32 %v4113, %v4109
        %v4118 = vadd.s32 %v4114, %v4116
        %v4119 = vadd.s32 %v4118, %v4108
        %v4120 = vadd.s32 %v4119, %v4110
        %v4121 = vmul.u32 %v4076, %v4067
        %v4122 = vadd.s32 %v4098, %v4117
        %vm4123 = vc.u32 %v4098, %v4117
        %v4124 = vadd.s32 %v4120, 1
        %v4125 = vsel %vm4123, %v4124, %v4120
        %v4126 = vadd.s32 %v4121, %v4125
        %v4127 = vadd.s32 %v4126, 536870912
        %v4128 = vshrl.u32 %v4127, 30
        %v4129 = vshll.u32 %v4128, 30
        %v4130 = vsub.s32 %v4126, %v4129
        %vm4131 = vcmp.lt.s32.totalorder %v4130, 0
        %v4132 = vsub.s32 0, %v4130
        %v4133 = vsel %vm4131, %v4132, %v4130
        %v4134 = vclz %v4133
        %v4135 = vsub.s32 %v4134, 2
        %vm4136 = vcmp.gt.s32.totalorder 0, %v4135
        %v4137 = vsel %vm4136, 0, %v4135
        %v4138 = vsub.s32 32, %v4137
        %v4139 = vshll.u32 %v4130, %v4137
        %v4140 = vshrl.u32 %v4122, %v4138
        %v4141 = vor.u32 %v4139, %v4140
        %v4142 = vsub.s32 4294967266, %v4137
        %v4143 = vadd.s32 %v4142, 127
        %v4144 = vshll.u32 %v4143, 23
        %v4145 = vor.u32 4788187, %v4144
        %v4146 = vand.u32 2147483647, %v4145
        %v4148 = vcvt.s32.f32 %v4141
        %v4149 = vmul.f32 %v4148, %v4146
        %v4150 = vxor.u32 %v4149, 2147483648
        %v4151 = vsel %vm4030, %v4150, %v4149
        %v4152 = vsub.s32 4, %v4128
        %v4153 = vsel %vm4030, %v4152, %v4128
        %v4154 = vsel %vm4029, %v834, %v4151
        %v4155 = vsel %vm4029, 0, %v4153
        %v4156 = vmul.f32 %v4154, %v4154
        %v4157 = vmul.f32 %v4156, -0.001358992
        %v4158 = vadd.f32 %v4157, 0.041655596
        %v4159 = vmul.f32 %v4156, %v4158
        %v4160 = vadd.f32 %v4159, -0.4999988
        %v4161 = vmul.f32 %v4156, %v4160
        %v4162 = vadd.f32 1.0, %v4161
        %v4163 = vmul.f32 %v4154, %v4154
        %v4164 = vmul.f32 %v4163, -0.00019511016
        %v4165 = vadd.f32 %v4164, 0.008332121
        %v4166 = vmul.f32 %v4163, %v4165
        %v4167 = vadd.f32 %v4166, -0.16666654
        %v4168 = vmul.f32 %v4163, %v4167
        %v4169 = vadd.f32 %v4168, 1.0
        %v4170 = vmul.f32 %v4169, %v4154
        %vm4171 = vweird.f32 %v834
        %v4172 = vadd.s32 %v4155, 3
        %v4173 = vand.u32 %v4172, 3
        %vm4174 = vcmp.lt.s32.totalorder %v4173, 2
        %vm4175 = vcmp.eq.s32.totalorder %v4173, 0
        %v4176 = vxor.u32 %v4170, 2147483648
        %v4177 = vsel %vm4175, %v4162, %v4176
        %vm4178 = vcmp.eq.s32.totalorder %v4173, 2
        %v4179 = vxor.u32 %v4162, 2147483648
        %v4180 = vsel %vm4178, %v4179, %v4170
        %v4181 = vsel %vm4174, %v4177, %v4180
        %v4182 = vsel %vm4171, nan, %v4181
        %v4183 = vand.u32 2147483647, %v1476
        %vm4184 = vcmp.le.f32.partialorder %v4183, 0.7853982
        %vm4185 = vcmp.lt.s32.totalorder %v1476, 0
        %v4186 = vand.u32 %v1476, 2139095040
        %v4187 = vshrl.u32 %v4186, 23
        %v4188 = vsub.s32 %v4187, 127
        %v4189 = vand.u32 2147483647, %v1476
        %v4190 = vand.u32 %v4189, 8388607
        %v4191 = vor.u32 %v4190, 8388608
        %v4192 = vsub.s32 0, %v4191
        %v4193 = vadd.s32 %v4188, 1
        %vm4194 = vcmp.gt.s32.totalorder %v4193, 0
        %v4195 = vsel %vm4194, %v4193, 0
        %v4196 = vshrl.u32 %v4195, 5
        %v4197 = vand.u32 %v4195, 31
        %v4198 = vsub.s32 32, %v4197
        %v4199 = vshrl.u32 683565275, %v4198
        %v4200 = vshll.u32 683565275, %v4197
        %v4201 = vshrl.u32 2475754826, %v4198
        %v4202 = vor.u32 %v4200, %v4201
        %v4203 = vshll.u32 2475754826, %v4197
        %v4204 = vshrl.u32 2131351028, %v4198
        %v4205 = vor.u32 %v4203, %v4204
        %v4206 = vshll.u32 2131351028, %v4197
        %v4207 = vshrl.u32 2102212464, %v4198
        %v4208 = vor.u32 %v4206, %v4207
        %v4209 = vshll.u32 2102212464, %v4197
        %v4210 = vshrl.u32 920167782, %v4198
        %v4211 = vor.u32 %v4209, %v4210
        %v4212 = vshll.u32 920167782, %v4197
        %v4213 = vshrl.u32 1326507024, %v4198
        %v4214 = vor.u32 %v4212, %v4213
        %vm4215 = vcmp.lt.s32.totalorder %v4196, 1
        %vm4216 = vcmp.lt.s32.totalorder %v4196, 2
        %vm4217 = vcmp.lt.s32.totalorder %v4196, 3
        %vm4218 = vcmp.lt.s32.totalorder %v4196, 4
        %v4219 = vsel %vm4215, %v4199, %v4202
        %v4220 = vsel %vm4218, %v4208, 2102212464
        %v4221 = vsel %vm4217, %v4205, %v4220
        %v4222 = vsel %vm4216, %v4219, %v4221
        %v4223 = vsel %vm4215, %v4202, %v4205
        %v4224 = vsel %vm4218, %v4211, 920167782
        %v4225 = vsel %vm4217, %v4208, %v4224
        %v4226 = vsel %vm4216, %v4223, %v4225
        %v4227 = vsel %vm4215, %v4205, %v4208
        %v4228 = vsel %vm4218, %v4214, 1326507024
        %v4229 = vsel %vm4217, %v4211, %v4228
        %v4230 = vsel %vm4216, %v4227, %v4229
        %v4231 = vshll.u32 %v4191, 8
        %v4232 = vand.u32 %v4231, 65535
        %v4233 = vshrl.u32 %v4231, 16
        %v4234 = vand.u32 %v4230, 65535
        %v4235 = vshrl.u32 %v4230, 16
        %v4236 = vmul.u32 %v4232, %v4234
        %v4237 = vmul.u32 %v4232, %v4235
        %v4238 = vmul.u32 %v4233, %v4234
        %v4239 = vmul.u32 %v4233, %v4235
        %v4240 = vshll.u32 %v4237, 16
        %v4241 = vshrl.u32 %v4237, 16
        %v4242 = vshll.u32 %v4238, 16
        %v4243 = vshrl.u32 %v4238, 16
        %vm4244 = vc.u32 %v4236, %v4240
        %v4245 = vsel %vm4244, 1, 0
        %v4246 = vadd.s32 %v4236, %v4240
        %v4247 = vadd.s32 %v4239, %v4245
        %vm4248 = vc.u32 %v4246, %v4242
        %v4249 = vsel %vm4248, 1, 0
        %v4250 = vadd.s32 %v4246, %v4242
        %v4251 = vadd.s32 %v4247, %v4249
        %v4252 = vadd.s32 %v4251, %v4241
        %v4253 = vadd.s32 %v4252, %v4243
        %v4254 = vand.u32 %v4231, 65535
        %v4255 = vshrl.u32 %v4231, 16
        %v4256 = vand.u32 %v4226, 65535
        %v4257 = vshrl.u32 %v4226, 16
        %v4258 = vmul.u32 %v4254, %v4256
        %v4259 = vmul.u32 %v4254, %v4257
        %v4260 = vmul.u32 %v4255, %v4256
        %v4261 = vmul.u32 %v4255, %v4257
        %v4262 = vshll.u32 %v4259, 16
        %v4263 = vshrl.u32 %v4259, 16
        %v4264 = vshll.u32 %v4260, 16
        %v4265 = vshrl.u32 %v4260, 16
        %vm4266 = vc.u32 %v4258, %v4262
        %v4267 = vsel %vm4266, 1, 0
        %v4268 = vadd.s32 %v4258, %v4262
        %v4269 = vadd.s32 %v4261, %v4267
        %vm4270 = vc.u32 %v4268, %v4264
        %v4271 = vsel %vm4270, 1, 0
        %v4272 = vadd.s32 %v4268, %v4264
        %v4273 = vadd.s32 %v4269, %v4271
        %v4274 = vadd.s32 %v4273, %v4263
        %v4275 = vadd.s32 %v4274, %v4265
        %v4276 = vmul.u32 %v4231, %v4222
        %v4277 = vadd.s32 %v4253, %v4272
        %vm4278 = vc.u32 %v4253, %v4272
        %v4279 = vadd.s32 %v4275, 1
        %v4280 = vsel %vm4278, %v4279, %v4275
        %v4281 = vadd.s32 %v4276, %v4280
        %v4282 = vadd.s32 %v4281, 536870912
        %v4283 = vshrl.u32 %v4282, 30
        %v4284 = vshll.u32 %v4283, 30
        %v4285 = vsub.s32 %v4281, %v4284
        %vm4286 = vcmp.lt.s32.totalorder %v4285, 0
        %v4287 = vsub.s32 0, %v4285
        %v4288 = vsel %vm4286, %v4287, %v4285
        %v4289 = vclz %v4288
        %v4290 = vsub.s32 %v4289, 2
        %vm4291 = vcmp.gt.s32.totalorder 0, %v4290
        %v4292 = vsel %vm4291, 0, %v4290
        %v4293 = vsub.s32 32, %v4292
        %v4294 = vshll.u32 %v4285, %v4292
        %v4295 = vshrl.u32 %v4277, %v4293
        %v4296 = vor.u32 %v4294, %v4295
        %v4297 = vsub.s32 4294967266, %v4292
        %v4298 = vadd.s32 %v4297, 127
        %v4299 = vshll.u32 %v4298, 23
        %v4300 = vor.u32 4788187, %v4299
        %v4301 = vand.u32 2147483647, %v4300
        %v4303 = vcvt.s32.f32 %v4296
        %v4304 = vmul.f32 %v4303, %v4301
        %v4305 = vxor.u32 %v4304, 2147483648
        %v4306 = vsel %vm4185, %v4305, %v4304
        %v4307 = vsub.s32 4, %v4283
        %v4308 = vsel %vm4185, %v4307, %v4283
        %v4309 = vsel %vm4184, %v1476, %v4306
        %v4310 = vsel %vm4184, 0, %v4308
        %v4311 = vmul.f32 %v4309, %v4309
        %v4312 = vmul.f32 %v4311, -0.001358992
        %v4313 = vadd.f32 %v4312, 0.041655596
        %v4314 = vmul.f32 %v4311, %v4313
        %v4315 = vadd.f32 %v4314, -0.4999988
        %v4316 = vmul.f32 %v4311, %v4315
        %v4317 = vadd.f32 1.0, %v4316
        %v4318 = vmul.f32 %v4309, %v4309
        %v4319 = vmul.f32 %v4318, -0.00019511016
        %v4320 = vadd.f32 %v4319, 0.008332121
        %v4321 = vmul.f32 %v4318, %v4320
        %v4322 = vadd.f32 %v4321, -0.16666654
        %v4323 = vmul.f32 %v4318, %v4322
        %v4324 = vadd.f32 %v4323, 1.0
        %v4325 = vmul.f32 %v4324, %v4309
        %vm4326 = vweird.f32 %v1476
        %v4327 = vadd.s32 %v4310, 3
        %v4328 = vand.u32 %v4327, 3
        %vm4329 = vcmp.lt.s32.totalorder %v4328, 2
        %vm4330 = vcmp.eq.s32.totalorder %v4328, 0
        %v4331 = vxor.u32 %v4325, 2147483648
        %v4332 = vsel %vm4330, %v4317, %v4331
        %vm4333 = vcmp.eq.s32.totalorder %v4328, 2
        %v4334 = vxor.u32 %v4317, 2147483648
        %v4335 = vsel %vm4333, %v4334, %v4325
        %v4336 = vsel %vm4329, %v4332, %v4335
        %v4337 = vsel %vm4326, nan, %v4336
        %v4338 = vand.u32 2147483647, %v2118
        %vm4339 = vcmp.le.f32.partialorder %v4338, 0.7853982
        %vm4340 = vcmp.lt.s32.totalorder %v2118, 0
        %v4341 = vand.u32 %v2118, 2139095040
        %v4342 = vshrl.u32 %v4341, 23
        %v4343 = vsub.s32 %v4342, 127
        %v4344 = vand.u32 2147483647, %v2118
        %v4345 = vand.u32 %v4344, 8388607
        %v4346 = vor.u32 %v4345, 8388608
        %v4347 = vsub.s32 0, %v4346
        %v4348 = vadd.s32 %v4343, 1
        %vm4349 = vcmp.gt.s32.totalorder %v4348, 0
        %v4350 = vsel %vm4349, %v4348, 0
        %v4351 = vshrl.u32 %v4350, 5
        %v4352 = vand.u32 %v4350, 31
        %v4353 = vsub.s32 32, %v4352
        %v4354 = vshrl.u32 683565275, %v4353
        %v4355 = vshll.u32 683565275, %v4352
        %v4356 = vshrl.u32 2475754826, %v4353
        %v4357 = vor.u32 %v4355, %v4356
        %v4358 = vshll.u32 2475754826, %v4352
        %v4359 = vshrl.u32 2131351028, %v4353
        %v4360 = vor.u32 %v4358, %v4359
        %v4361 = vshll.u32 2131351028, %v4352
        %v4362 = vshrl.u32 2102212464, %v4353
        %v4363 = vor.u32 %v4361, %v4362
        %v4364 = vshll.u32 2102212464, %v4352
        %v4365 = vshrl.u32 920167782, %v4353
        %v4366 = vor.u32 %v4364, %v4365
        %v4367 = vshll.u32 920167782, %v4352
        %v4368 = vshrl.u32 1326507024, %v4353
        %v4369 = vor.u32 %v4367, %v4368
        %vm4370 = vcmp.lt.s32.totalorder %v4351, 1
        %vm4371 = vcmp.lt.s32.totalorder %v4351, 2
        %vm4372 = vcmp.lt.s32.totalorder %v4351, 3
        %vm4373 = vcmp.lt.s32.totalorder %v4351, 4
        %v4374 = vsel %vm4370, %v4354, %v4357
        %v4375 = vsel %vm4373, %v4363, 2102212464
        %v4376 = vsel %vm4372, %v4360, %v4375
        %v4377 = vsel %vm4371, %v4374, %v4376
        %v4378 = vsel %vm4370, %v4357, %v4360
        %v4379 = vsel %vm4373, %v4366, 920167782
        %v4380 = vsel %vm4372, %v4363, %v4379
        %v4381 = vsel %vm4371, %v4378, %v4380
        %v4382 = vsel %vm4370, %v4360, %v4363
        %v4383 = vsel %vm4373, %v4369, 1326507024
        %v4384 = vsel %vm4372, %v4366, %v4383
        %v4385 = vsel %vm4371, %v4382, %v4384
        %v4386 = vshll.u32 %v4346, 8
        %v4387 = vand.u32 %v4386, 65535
        %v4388 = vshrl.u32 %v4386, 16
        %v4389 = vand.u32 %v4385, 65535
        %v4390 = vshrl.u32 %v4385, 16
        %v4391 = vmul.u32 %v4387, %v4389
        %v4392 = vmul.u32 %v4387, %v4390
        %v4393 = vmul.u32 %v4388, %v4389
        %v4394 = vmul.u32 %v4388, %v4390
        %v4395 = vshll.u32 %v4392, 16
        %v4396 = vshrl.u32 %v4392, 16
        %v4397 = vshll.u32 %v4393, 16
        %v4398 = vshrl.u32 %v4393, 16
        %vm4399 = vc.u32 %v4391, %v4395
        %v4400 = vsel %vm4399, 1, 0
        %v4401 = vadd.s32 %v4391, %v4395
        %v4402 = vadd.s32 %v4394, %v4400
        %vm4403 = vc.u32 %v4401, %v4397
        %v4404 = vsel %vm4403, 1, 0
        %v4405 = vadd.s32 %v4401, %v4397
        %v4406 = vadd.s32 %v4402, %v4404
        %v4407 = vadd.s32 %v4406, %v4396
        %v4408 = vadd.s32 %v4407, %v4398
        %v4409 = vand.u32 %v4386, 65535
        %v4410 = vshrl.u32 %v4386, 16
        %v4411 = vand.u32 %v4381, 65535
        %v4412 = vshrl.u32 %v4381, 16
        %v4413 = vmul.u32 %v4409, %v4411
        %v4414 = vmul.u32 %v4409, %v4412
        %v4415 = vmul.u32 %v4410, %v4411
        %v4416 = vmul.u32 %v4410, %v4412
        %v4417 = vshll.u32 %v4414, 16
        %v4418 = vshrl.u32 %v4414, 16
        %v4419 = vshll.u32 %v4415, 16
        %v4420 = vshrl.u32 %v4415, 16
        %vm4421 = vc.u32 %v4413, %v4417
        %v4422 = vsel %vm4421, 1, 0
        %v4423 = vadd.s32 %v4413, %v4417
        %v4424 = vadd.s32 %v4416, %v4422
        %vm4425 = vc.u32 %v4423, %v4419
        %v4426 = vsel %vm4425, 1, 0
        %v4427 = vadd.s32 %v4423, %v4419
        %v4428 = vadd.s32 %v4424, %v4426
        %v4429 = vadd.s32 %v4428, %v4418
        %v4430 = vadd.s32 %v4429, %v4420
        %v4431 = vmul.u32 %v4386, %v4377
        %v4432 = vadd.s32 %v4408, %v4427
        %vm4433 = vc.u32 %v4408, %v4427
        %v4434 = vadd.s32 %v4430, 1
        %v4435 = vsel %vm4433, %v4434, %v4430
        %v4436 = vadd.s32 %v4431, %v4435
        %v4437 = vadd.s32 %v4436, 536870912
        %v4438 = vshrl.u32 %v4437, 30
        %v4439 = vshll.u32 %v4438, 30
        %v4440 = vsub.s32 %v4436, %v4439
        %vm4441 = vcmp.lt.s32.totalorder %v4440, 0
        %v4442 = vsub.s32 0, %v4440
        %v4443 = vsel %vm4441, %v4442, %v4440
        %v4444 = vclz %v4443
        %v4445 = vsub.s32 %v4444, 2
        %vm4446 = vcmp.gt.s32.totalorder 0, %v4445
        %v4447 = vsel %vm4446, 0, %v4445
        %v4448 = vsub.s32 32, %v4447
        %v4449 = vshll.u32 %v4440, %v4447
        %v4450 = vshrl.u32 %v4432, %v4448
        %v4451 = vor.u32 %v4449, %v4450
        %v4452 = vsub.s32 4294967266, %v4447
        %v4453 = vadd.s32 %v4452, 127
        %v4454 = vshll.u32 %v4453, 23
        %v4455 = vor.u32 4788187, %v4454
        %v4456 = vand.u32 2147483647, %v4455
        %v4458 = vcvt.s32.f32 %v4451
        %v4459 = vmul.f32 %v4458, %v4456
        %v4460 = vxor.u32 %v4459, 2147483648
        %v4461 = vsel %vm4340, %v4460, %v4459
        %v4462 = vsub.s32 4, %v4438
        %v4463 = vsel %vm4340, %v4462, %v4438
        %v4464 = vsel %vm4339, %v2118, %v4461
        %v4465 = vsel %vm4339, 0, %v4463
        %v4466 = vmul.f32 %v4464, %v4464
        %v4467 = vmul.f32 %v4466, -0.001358992
        %v4468 = vadd.f32 %v4467, 0.041655596
        %v4469 = vmul.f32 %v4466, %v4468
        %v4470 = vadd.f32 %v4469, -0.4999988
        %v4471 = vmul.f32 %v4466, %v4470
        %v4472 = vadd.f32 1.0, %v4471
        %v4473 = vmul.f32 %v4464, %v4464
        %v4474 = vmul.f32 %v4473, -0.00019511016
        %v4475 = vadd.f32 %v4474, 0.008332121
        %v4476 = vmul.f32 %v4473, %v4475
        %v4477 = vadd.f32 %v4476, -0.16666654
        %v4478 = vmul.f32 %v4473, %v4477
        %v4479 = vadd.f32 %v4478, 1.0
        %v4480 = vmul.f32 %v4479, %v4464
        %vm4481 = vweird.f32 %v2118
        %v4482 = vadd.s32 %v4465, 3
        %v4483 = vand.u32 %v4482, 3
        %vm4484 = vcmp.lt.s32.totalorder %v4483, 2
        %vm4485 = vcmp.eq.s32.totalorder %v4483, 0
        %v4486 = vxor.u32 %v4480, 2147483648
        %v4487 = vsel %vm4485, %v4472, %v4486
        %vm4488 = vcmp.eq.s32.totalorder %v4483, 2
        %v4489 = vxor.u32 %v4472, 2147483648
        %v4490 = vsel %vm4488, %v4489, %v4480
        %v4491 = vsel %vm4484, %v4487, %v4490
        %v4492 = vsel %vm4481, nan, %v4491
        %v4493 = vand.u32 2147483647, %v838
        %vm4494 = vcmp.le.f32.partialorder %v4493, 0.7853982
        %vm4495 = vcmp.lt.s32.totalorder %v838, 0
        %v4496 = vand.u32 %v838, 2139095040
        %v4497 = vshrl.u32 %v4496, 23
        %v4498 = vsub.s32 %v4497, 127
        %v4499 = vand.u32 2147483647, %v838
        %v4500 = vand.u32 %v4499, 8388607
        %v4501 = vor.u32 %v4500, 8388608
        %v4502 = vsub.s32 0, %v4501
        %v4503 = vadd.s32 %v4498, 1
        %vm4504 = vcmp.gt.s32.totalorder %v4503, 0
        %v4505 = vsel %vm4504, %v4503, 0
        %v4506 = vshrl.u32 %v4505, 5
        %v4507 = vand.u32 %v4505, 31
        %v4508 = vsub.s32 32, %v4507
        %v4509 = vshrl.u32 683565275, %v4508
        %v4510 = vshll.u32 683565275, %v4507
        %v4511 = vshrl.u32 2475754826, %v4508
        %v4512 = vor.u32 %v4510, %v4511
        %v4513 = vshll.u32 2475754826, %v4507
        %v4514 = vshrl.u32 2131351028, %v4508
        %v4515 = vor.u32 %v4513, %v4514
        %v4516 = vshll.u32 2131351028, %v4507
        %v4517 = vshrl.u32 2102212464, %v4508
        %v4518 = vor.u32 %v4516, %v4517
        %v4519 = vshll.u32 2102212464, %v4507
        %v4520 = vshrl.u32 920167782, %v4508
        %v4521 = vor.u32 %v4519, %v4520
        %v4522 = vshll.u32 920167782, %v4507
        %v4523 = vshrl.u32 1326507024, %v4508
        %v4524 = vor.u32 %v4522, %v4523
        %vm4525 = vcmp.lt.s32.totalorder %v4506, 1
        %vm4526 = vcmp.lt.s32.totalorder %v4506, 2
        %vm4527 = vcmp.lt.s32.totalorder %v4506, 3
        %vm4528 = vcmp.lt.s32.totalorder %v4506, 4
        %v4529 = vsel %vm4525, %v4509, %v4512
        %v4530 = vsel %vm4528, %v4518, 2102212464
        %v4531 = vsel %vm4527, %v4515, %v4530
        %v4532 = vsel %vm4526, %v4529, %v4531
        %v4533 = vsel %vm4525, %v4512, %v4515
        %v4534 = vsel %vm4528, %v4521, 920167782
        %v4535 = vsel %vm4527, %v4518, %v4534
        %v4536 = vsel %vm4526, %v4533, %v4535
        %v4537 = vsel %vm4525, %v4515, %v4518
        %v4538 = vsel %vm4528, %v4524, 1326507024
        %v4539 = vsel %vm4527, %v4521, %v4538
        %v4540 = vsel %vm4526, %v4537, %v4539
        %v4541 = vshll.u32 %v4501, 8
        %v4542 = vand.u32 %v4541, 65535
        %v4543 = vshrl.u32 %v4541, 16
        %v4544 = vand.u32 %v4540, 65535
        %v4545 = vshrl.u32 %v4540, 16
        %v4546 = vmul.u32 %v4542, %v4544
        %v4547 = vmul.u32 %v4542, %v4545
        %v4548 = vmul.u32 %v4543, %v4544
        %v4549 = vmul.u32 %v4543, %v4545
        %v4550 = vshll.u32 %v4547, 16
        %v4551 = vshrl.u32 %v4547, 16
        %v4552 = vshll.u32 %v4548, 16
        %v4553 = vshrl.u32 %v4548, 16
        %vm4554 = vc.u32 %v4546, %v4550
        %v4555 = vsel %vm4554, 1, 0
        %v4556 = vadd.s32 %v4546, %v4550
        %v4557 = vadd.s32 %v4549, %v4555
        %vm4558 = vc.u32 %v4556, %v4552
        %v4559 = vsel %vm4558, 1, 0
        %v4560 = vadd.s32 %v4556, %v4552
        %v4561 = vadd.s32 %v4557, %v4559
        %v4562 = vadd.s32 %v4561, %v4551
        %v4563 = vadd.s32 %v4562, %v4553
        %v4564 = vand.u32 %v4541, 65535
        %v4565 = vshrl.u32 %v4541, 16
        %v4566 = vand.u32 %v4536, 65535
        %v4567 = vshrl.u32 %v4536, 16
        %v4568 = vmul.u32 %v4564, %v4566
        %v4569 = vmul.u32 %v4564, %v4567
        %v4570 = vmul.u32 %v4565, %v4566
        %v4571 = vmul.u32 %v4565, %v4567
        %v4572 = vshll.u32 %v4569, 16
        %v4573 = vshrl.u32 %v4569, 16
        %v4574 = vshll.u32 %v4570, 16
        %v4575 = vshrl.u32 %v4570, 16
        %vm4576 = vc.u32 %v4568, %v4572
        %v4577 = vsel %vm4576, 1, 0
        %v4578 = vadd.s32 %v4568, %v4572
        %v4579 = vadd.s32 %v4571, %v4577
        %vm4580 = vc.u32 %v4578, %v4574
        %v4581 = vsel %vm4580, 1, 0
        %v4582 = vadd.s32 %v4578, %v4574
        %v4583 = vadd.s32 %v4579, %v4581
        %v4584 = vadd.s32 %v4583, %v4573
        %v4585 = vadd.s32 %v4584, %v4575
        %v4586 = vmul.u32 %v4541, %v4532
        %v4587 = vadd.s32 %v4563, %v4582
        %vm4588 = vc.u32 %v4563, %v4582
        %v4589 = vadd.s32 %v4585, 1
        %v4590 = vsel %vm4588, %v4589, %v4585
        %v4591 = vadd.s32 %v4586, %v4590
        %v4592 = vadd.s32 %v4591, 536870912
        %v4593 = vshrl.u32 %v4592, 30
        %v4594 = vshll.u32 %v4593, 30
        %v4595 = vsub.s32 %v4591, %v4594
        %vm4596 = vcmp.lt.s32.totalorder %v4595, 0
        %v4597 = vsub.s32 0, %v4595
        %v4598 = vsel %vm4596, %v4597, %v4595
        %v4599 = vclz %v4598
        %v4600 = vsub.s32 %v4599, 2
        %vm4601 = vcmp.gt.s32.totalorder 0, %v4600
        %v4602 = vsel %vm4601, 0, %v4600
        %v4603 = vsub.s32 32, %v4602
        %v4604 = vshll.u32 %v4595, %v4602
        %v4605 = vshrl.u32 %v4587, %v4603
        %v4606 = vor.u32 %v4604, %v4605
        %v4607 = vsub.s32 4294967266, %v4602
        %v4608 = vadd.s32 %v4607, 127
        %v4609 = vshll.u32 %v4608, 23
        %v4610 = vor.u32 4788187, %v4609
        %v4611 = vand.u32 2147483647, %v4610
        %v4613 = vcvt.s32.f32 %v4606
        %v4614 = vmul.f32 %v4613, %v4611
        %v4615 = vxor.u32 %v4614, 2147483648
        %v4616 = vsel %vm4495, %v4615, %v4614
        %v4617 = vsub.s32 4, %v4593
        %v4618 = vsel %vm4495, %v4617, %v4593
        %v4619 = vsel %vm4494, %v838, %v4616
        %v4620 = vsel %vm4494, 0, %v4618
        %v4621 = vmul.f32 %v4619, %v4619
        %v4622 = vmul.f32 %v4621, -0.001358992
        %v4623 = vadd.f32 %v4622, 0.041655596
        %v4624 = vmul.f32 %v4621, %v4623
        %v4625 = vadd.f32 %v4624, -0.4999988
        %v4626 = vmul.f32 %v4621, %v4625
        %v4627 = vadd.f32 1.0, %v4626
        %v4628 = vmul.f32 %v4619, %v4619
        %v4629 = vmul.f32 %v4628, -0.00019511016
        %v4630 = vadd.f32 %v4629, 0.008332121
        %v4631 = vmul.f32 %v4628, %v4630
        %v4632 = vadd.f32 %v4631, -0.16666654
        %v4633 = vmul.f32 %v4628, %v4632
        %v4634 = vadd.f32 %v4633, 1.0
        %v4635 = vmul.f32 %v4634, %v4619
        %vm4636 = vweird.f32 %v838
        %v4637 = vadd.s32 %v4620, 3
        %v4638 = vand.u32 %v4637, 3
        %vm4639 = vcmp.lt.s32.totalorder %v4638, 2
        %vm4640 = vcmp.eq.s32.totalorder %v4638, 0
        %v4641 = vxor.u32 %v4635, 2147483648
        %v4642 = vsel %vm4640, %v4627, %v4641
        %vm4643 = vcmp.eq.s32.totalorder %v4638, 2
        %v4644 = vxor.u32 %v4627, 2147483648
        %v4645 = vsel %vm4643, %v4644, %v4635
        %v4646 = vsel %vm4639, %v4642, %v4645
        %v4647 = vsel %vm4636, nan, %v4646
        %v4648 = vand.u32 2147483647, %v1480
        %vm4649 = vcmp.le.f32.partialorder %v4648, 0.7853982
        %vm4650 = vcmp.lt.s32.totalorder %v1480, 0
        %v4651 = vand.u32 %v1480, 2139095040
        %v4652 = vshrl.u32 %v4651, 23
        %v4653 = vsub.s32 %v4652, 127
        %v4654 = vand.u32 2147483647, %v1480
        %v4655 = vand.u32 %v4654, 8388607
        %v4656 = vor.u32 %v4655, 8388608
        %v4657 = vsub.s32 0, %v4656
        %v4658 = vadd.s32 %v4653, 1
        %vm4659 = vcmp.gt.s32.totalorder %v4658, 0
        %v4660 = vsel %vm4659, %v4658, 0
        %v4661 = vshrl.u32 %v4660, 5
        %v4662 = vand.u32 %v4660, 31
        %v4663 = vsub.s32 32, %v4662
        %v4664 = vshrl.u32 683565275, %v4663
        %v4665 = vshll.u32 683565275, %v4662
        %v4666 = vshrl.u32 2475754826, %v4663
        %v4667 = vor.u32 %v4665, %v4666
        %v4668 = vshll.u32 2475754826, %v4662
        %v4669 = vshrl.u32 2131351028, %v4663
        %v4670 = vor.u32 %v4668, %v4669
        %v4671 = vshll.u32 2131351028, %v4662
        %v4672 = vshrl.u32 2102212464, %v4663
        %v4673 = vor.u32 %v4671, %v4672
        %v4674 = vshll.u32 2102212464, %v4662
        %v4675 = vshrl.u32 920167782, %v4663
        %v4676 = vor.u32 %v4674, %v4675
        %v4677 = vshll.u32 920167782, %v4662
        %v4678 = vshrl.u32 1326507024, %v4663
        %v4679 = vor.u32 %v4677, %v4678
        %vm4680 = vcmp.lt.s32.totalorder %v4661, 1
        %vm4681 = vcmp.lt.s32.totalorder %v4661, 2
        %vm4682 = vcmp.lt.s32.totalorder %v4661, 3
        %vm4683 = vcmp.lt.s32.totalorder %v4661, 4
        %v4684 = vsel %vm4680, %v4664, %v4667
        %v4685 = vsel %vm4683, %v4673, 2102212464
        %v4686 = vsel %vm4682, %v4670, %v4685
        %v4687 = vsel %vm4681, %v4684, %v4686
        %v4688 = vsel %vm4680, %v4667, %v4670
        %v4689 = vsel %vm4683, %v4676, 920167782
        %v4690 = vsel %vm4682, %v4673, %v4689
        %v4691 = vsel %vm4681, %v4688, %v4690
        %v4692 = vsel %vm4680, %v4670, %v4673
        %v4693 = vsel %vm4683, %v4679, 1326507024
        %v4694 = vsel %vm4682, %v4676, %v4693
        %v4695 = vsel %vm4681, %v4692, %v4694
        %v4696 = vshll.u32 %v4656, 8
        %v4697 = vand.u32 %v4696, 65535
        %v4698 = vshrl.u32 %v4696, 16
        %v4699 = vand.u32 %v4695, 65535
        %v4700 = vshrl.u32 %v4695, 16
        %v4701 = vmul.u32 %v4697, %v4699
        %v4702 = vmul.u32 %v4697, %v4700
        %v4703 = vmul.u32 %v4698, %v4699
        %v4704 = vmul.u32 %v4698, %v4700
        %v4705 = vshll.u32 %v4702, 16
        %v4706 = vshrl.u32 %v4702, 16
        %v4707 = vshll.u32 %v4703, 16
        %v4708 = vshrl.u32 %v4703, 16
        %vm4709 = vc.u32 %v4701, %v4705
        %v4710 = vsel %vm4709, 1, 0
        %v4711 = vadd.s32 %v4701, %v4705
        %v4712 = vadd.s32 %v4704, %v4710
        %vm4713 = vc.u32 %v4711, %v4707
        %v4714 = vsel %vm4713, 1, 0
        %v4715 = vadd.s32 %v4711, %v4707
        %v4716 = vadd.s32 %v4712, %v4714
        %v4717 = vadd.s32 %v4716, %v4706
        %v4718 = vadd.s32 %v4717, %v4708
        %v4719 = vand.u32 %v4696, 65535
        %v4720 = vshrl.u32 %v4696, 16
        %v4721 = vand.u32 %v4691, 65535
        %v4722 = vshrl.u32 %v4691, 16
        %v4723 = vmul.u32 %v4719, %v4721
        %v4724 = vmul.u32 %v4719, %v4722
        %v4725 = vmul.u32 %v4720, %v4721
        %v4726 = vmul.u32 %v4720, %v4722
        %v4727 = vshll.u32 %v4724, 16
        %v4728 = vshrl.u32 %v4724, 16
        %v4729 = vshll.u32 %v4725, 16
        %v4730 = vshrl.u32 %v4725, 16
        %vm4731 = vc.u32 %v4723, %v4727
        %v4732 = vsel %vm4731, 1, 0
        %v4733 = vadd.s32 %v4723, %v4727
        %v4734 = vadd.s32 %v4726, %v4732
        %vm4735 = vc.u32 %v4733, %v4729
        %v4736 = vsel %vm4735, 1, 0
        %v4737 = vadd.s32 %v4733, %v4729
        %v4738 = vadd.s32 %v4734, %v4736
        %v4739 = vadd.s32 %v4738, %v4728
        %v4740 = vadd.s32 %v4739, %v4730
        %v4741 = vmul.u32 %v4696, %v4687
        %v4742 = vadd.s32 %v4718, %v4737
        %vm4743 = vc.u32 %v4718, %v4737
        %v4744 = vadd.s32 %v4740, 1
        %v4745 = vsel %vm4743, %v4744, %v4740
        %v4746 = vadd.s32 %v4741, %v4745
        %v4747 = vadd.s32 %v4746, 536870912
        %v4748 = vshrl.u32 %v4747, 30
        %v4749 = vshll.u32 %v4748, 30
        %v4750 = vsub.s32 %v4746, %v4749
        %vm4751 = vcmp.lt.s32.totalorder %v4750, 0
        %v4752 = vsub.s32 0, %v4750
        %v4753 = vsel %vm4751, %v4752, %v4750
        %v4754 = vclz %v4753
        %v4755 = vsub.s32 %v4754, 2
        %vm4756 = vcmp.gt.s32.totalorder 0, %v4755
        %v4757 = vsel %vm4756, 0, %v4755
        %v4758 = vsub.s32 32, %v4757
        %v4759 = vshll.u32 %v4750, %v4757
        %v4760 = vshrl.u32 %v4742, %v4758
        %v4761 = vor.u32 %v4759, %v4760
        %v4762 = vsub.s32 4294967266, %v4757
        %v4763 = vadd.s32 %v4762, 127
        %v4764 = vshll.u32 %v4763, 23
        %v4765 = vor.u32 4788187, %v4764
        %v4766 = vand.u32 2147483647, %v4765
        %v4768 = vcvt.s32.f32 %v4761
        %v4769 = vmul.f32 %v4768, %v4766
        %v4770 = vxor.u32 %v4769, 2147483648
        %v4771 = vsel %vm4650, %v4770, %v4769
        %v4772 = vsub.s32 4, %v4748
        %v4773 = vsel %vm4650, %v4772, %v4748
        %v4774 = vsel %vm4649, %v1480, %v4771
        %v4775 = vsel %vm4649, 0, %v4773
        %v4776 = vmul.f32 %v4774, %v4774
        %v4777 = vmul.f32 %v4776, -0.001358992
        %v4778 = vadd.f32 %v4777, 0.041655596
        %v4779 = vmul.f32 %v4776, %v4778
        %v4780 = vadd.f32 %v4779, -0.4999988
        %v4781 = vmul.f32 %v4776, %v4780
        %v4782 = vadd.f32 1.0, %v4781
        %v4783 = vmul.f32 %v4774, %v4774
        %v4784 = vmul.f32 %v4783, -0.00019511016
        %v4785 = vadd.f32 %v4784, 0.008332121
        %v4786 = vmul.f32 %v4783, %v4785
        %v4787 = vadd.f32 %v4786, -0.16666654
        %v4788 = vmul.f32 %v4783, %v4787
        %v4789 = vadd.f32 %v4788, 1.0
        %v4790 = vmul.f32 %v4789, %v4774
        %vm4791 = vweird.f32 %v1480
        %v4792 = vadd.s32 %v4775, 3
        %v4793 = vand.u32 %v4792, 3
        %vm4794 = vcmp.lt.s32.totalorder %v4793, 2
        %vm4795 = vcmp.eq.s32.totalorder %v4793, 0
        %v4796 = vxor.u32 %v4790, 2147483648
        %v4797 = vsel %vm4795, %v4782, %v4796
        %vm4798 = vcmp.eq.s32.totalorder %v4793, 2
        %v4799 = vxor.u32 %v4782, 2147483648
        %v4800 = vsel %vm4798, %v4799, %v4790
        %v4801 = vsel %vm4794, %v4797, %v4800
        %v4802 = vsel %vm4791, nan, %v4801
        %v4803 = vand.u32 2147483647, %v2122
        %vm4804 = vcmp.le.f32.partialorder %v4803, 0.7853982
        %vm4805 = vcmp.lt.s32.totalorder %v2122, 0
        %v4806 = vand.u32 %v2122, 2139095040
        %v4807 = vshrl.u32 %v4806, 23
        %v4808 = vsub.s32 %v4807, 127
        %v4809 = vand.u32 2147483647, %v2122
        %v4810 = vand.u32 %v4809, 8388607
        %v4811 = vor.u32 %v4810, 8388608
        %v4812 = vsub.s32 0, %v4811
        %v4813 = vadd.s32 %v4808, 1
        %vm4814 = vcmp.gt.s32.totalorder %v4813, 0
        %v4815 = vsel %vm4814, %v4813, 0
        %v4816 = vshrl.u32 %v4815, 5
        %v4817 = vand.u32 %v4815, 31
        %v4818 = vsub.s32 32, %v4817
        %v4819 = vshrl.u32 683565275, %v4818
        %v4820 = vshll.u32 683565275, %v4817
        %v4821 = vshrl.u32 2475754826, %v4818
        %v4822 = vor.u32 %v4820, %v4821
        %v4823 = vshll.u32 2475754826, %v4817
        %v4824 = vshrl.u32 2131351028, %v4818
        %v4825 = vor.u32 %v4823, %v4824
        %v4826 = vshll.u32 2131351028, %v4817
        %v4827 = vshrl.u32 2102212464, %v4818
        %v4828 = vor.u32 %v4826, %v4827
        %v4829 = vshll.u32 2102212464, %v4817
        %v4830 = vshrl.u32 920167782, %v4818
        %v4831 = vor.u32 %v4829, %v4830
        %v4832 = vshll.u32 920167782, %v4817
        %v4833 = vshrl.u32 1326507024, %v4818
        %v4834 = vor.u32 %v4832, %v4833
        %vm4835 = vcmp.lt.s32.totalorder %v4816, 1
        %vm4836 = vcmp.lt.s32.totalorder %v4816, 2
        %vm4837 = vcmp.lt.s32.totalorder %v4816, 3
        %vm4838 = vcmp.lt.s32.totalorder %v4816, 4
        %v4839 = vsel %vm4835, %v4819, %v4822
        %v4840 = vsel %vm4838, %v4828, 2102212464
        %v4841 = vsel %vm4837, %v4825, %v4840
        %v4842 = vsel %vm4836, %v4839, %v4841
        %v4843 = vsel %vm4835, %v4822, %v4825
        %v4844 = vsel %vm4838, %v4831, 920167782
        %v4845 = vsel %vm4837, %v4828, %v4844
        %v4846 = vsel %vm4836, %v4843, %v4845
        %v4847 = vsel %vm4835, %v4825, %v4828
        %v4848 = vsel %vm4838, %v4834, 1326507024
        %v4849 = vsel %vm4837, %v4831, %v4848
        %v4850 = vsel %vm4836, %v4847, %v4849
        %v4851 = vshll.u32 %v4811, 8
        %v4852 = vand.u32 %v4851, 65535
        %v4853 = vshrl.u32 %v4851, 16
        %v4854 = vand.u32 %v4850, 65535
        %v4855 = vshrl.u32 %v4850, 16
        %v4856 = vmul.u32 %v4852, %v4854
        %v4857 = vmul.u32 %v4852, %v4855
        %v4858 = vmul.u32 %v4853, %v4854
        %v4859 = vmul.u32 %v4853, %v4855
        %v4860 = vshll.u32 %v4857, 16
        %v4861 = vshrl.u32 %v4857, 16
        %v4862 = vshll.u32 %v4858, 16
        %v4863 = vshrl.u32 %v4858, 16
        %vm4864 = vc.u32 %v4856, %v4860
        %v4865 = vsel %vm4864, 1, 0
        %v4866 = vadd.s32 %v4856, %v4860
        %v4867 = vadd.s32 %v4859, %v4865
        %vm4868 = vc.u32 %v4866, %v4862
        %v4869 = vsel %vm4868, 1, 0
        %v4870 = vadd.s32 %v4866, %v4862
        %v4871 = vadd.s32 %v4867, %v4869
        %v4872 = vadd.s32 %v4871, %v4861
        %v4873 = vadd.s32 %v4872, %v4863
        %v4874 = vand.u32 %v4851, 65535
        %v4875 = vshrl.u32 %v4851, 16
        %v4876 = vand.u32 %v4846, 65535
        %v4877 = vshrl.u32 %v4846, 16
        %v4878 = vmul.u32 %v4874, %v4876
        %v4879 = vmul.u32 %v4874, %v4877
        %v4880 = vmul.u32 %v4875, %v4876
        %v4881 = vmul.u32 %v4875, %v4877
        %v4882 = vshll.u32 %v4879, 16
        %v4883 = vshrl.u32 %v4879, 16
        %v4884 = vshll.u32 %v4880, 16
        %v4885 = vshrl.u32 %v4880, 16
        %vm4886 = vc.u32 %v4878, %v4882
        %v4887 = vsel %vm4886, 1, 0
        %v4888 = vadd.s32 %v4878, %v4882
        %v4889 = vadd.s32 %v4881, %v4887
        %vm4890 = vc.u32 %v4888, %v4884
        %v4891 = vsel %vm4890, 1, 0
        %v4892 = vadd.s32 %v4888, %v4884
        %v4893 = vadd.s32 %v4889, %v4891
        %v4894 = vadd.s32 %v4893, %v4883
        %v4895 = vadd.s32 %v4894, %v4885
        %v4896 = vmul.u32 %v4851, %v4842
        %v4897 = vadd.s32 %v4873, %v4892
        %vm4898 = vc.u32 %v4873, %v4892
        %v4899 = vadd.s32 %v4895, 1
        %v4900 = vsel %vm4898, %v4899, %v4895
        %v4901 = vadd.s32 %v4896, %v4900
        %v4902 = vadd.s32 %v4901, 536870912
        %v4903 = vshrl.u32 %v4902, 30
        %v4904 = vshll.u32 %v4903, 30
        %v4905 = vsub.s32 %v4901, %v4904
        %vm4906 = vcmp.lt.s32.totalorder %v4905, 0
        %v4907 = vsub.s32 0, %v4905
        %v4908 = vsel %vm4906, %v4907, %v4905
        %v4909 = vclz %v4908
        %v4910 = vsub.s32 %v4909, 2
        %vm4911 = vcmp.gt.s32.totalorder 0, %v4910
        %v4912 = vsel %vm4911, 0, %v4910
        %v4913 = vsub.s32 32, %v4912
        %v4914 = vshll.u32 %v4905, %v4912
        %v4915 = vshrl.u32 %v4897, %v4913
        %v4916 = vor.u32 %v4914, %v4915
        %v4917 = vsub.s32 4294967266, %v4912
        %v4918 = vadd.s32 %v4917, 127
        %v4919 = vshll.u32 %v4918, 23
        %v4920 = vor.u32 4788187, %v4919
        %v4921 = vand.u32 2147483647, %v4920
        %v4923 = vcvt.s32.f32 %v4916
        %v4924 = vmul.f32 %v4923, %v4921
        %v4925 = vxor.u32 %v4924, 2147483648
        %v4926 = vsel %vm4805, %v4925, %v4924
        %v4927 = vsub.s32 4, %v4903
        %v4928 = vsel %vm4805, %v4927, %v4903
        %v4929 = vsel %vm4804, %v2122, %v4926
        %v4930 = vsel %vm4804, 0, %v4928
        %v4931 = vmul.f32 %v4929, %v4929
        %v4932 = vmul.f32 %v4931, -0.001358992
        %v4933 = vadd.f32 %v4932, 0.041655596
        %v4934 = vmul.f32 %v4931, %v4933
        %v4935 = vadd.f32 %v4934, -0.4999988
        %v4936 = vmul.f32 %v4931, %v4935
        %v4937 = vadd.f32 1.0, %v4936
        %v4938 = vmul.f32 %v4929, %v4929
        %v4939 = vmul.f32 %v4938, -0.00019511016
        %v4940 = vadd.f32 %v4939, 0.008332121
        %v4941 = vmul.f32 %v4938, %v4940
        %v4942 = vadd.f32 %v4941, -0.16666654
        %v4943 = vmul.f32 %v4938, %v4942
        %v4944 = vadd.f32 %v4943, 1.0
        %v4945 = vmul.f32 %v4944, %v4929
        %vm4946 = vweird.f32 %v2122
        %v4947 = vadd.s32 %v4930, 3
        %v4948 = vand.u32 %v4947, 3
        %vm4949 = vcmp.lt.s32.totalorder %v4948, 2
        %vm4950 = vcmp.eq.s32.totalorder %v4948, 0
        %v4951 = vxor.u32 %v4945, 2147483648
        %v4952 = vsel %vm4950, %v4937, %v4951
        %vm4953 = vcmp.eq.s32.totalorder %v4948, 2
        %v4954 = vxor.u32 %v4937, 2147483648
        %v4955 = vsel %vm4953, %v4954, %v4945
        %v4956 = vsel %vm4949, %v4952, %v4955
        %v4957 = vsel %vm4946, nan, %v4956
        %v4958 = vand.u32 2147483647, %v842
        %vm4959 = vcmp.le.f32.partialorder %v4958, 0.7853982
        %vm4960 = vcmp.lt.s32.totalorder %v842, 0
        %v4961 = vand.u32 %v842, 2139095040
        %v4962 = vshrl.u32 %v4961, 23
        %v4963 = vsub.s32 %v4962, 127
        %v4964 = vand.u32 2147483647, %v842
        %v4965 = vand.u32 %v4964, 8388607
        %v4966 = vor.u32 %v4965, 8388608
        %v4967 = vsub.s32 0, %v4966
        %v4968 = vadd.s32 %v4963, 1
        %vm4969 = vcmp.gt.s32.totalorder %v4968, 0
        %v4970 = vsel %vm4969, %v4968, 0
        %v4971 = vshrl.u32 %v4970, 5
        %v4972 = vand.u32 %v4970, 31
        %v4973 = vsub.s32 32, %v4972
        %v4974 = vshrl.u32 683565275, %v4973
        %v4975 = vshll.u32 683565275, %v4972
        %v4976 = vshrl.u32 2475754826, %v4973
        %v4977 = vor.u32 %v4975, %v4976
        %v4978 = vshll.u32 2475754826, %v4972
        %v4979 = vshrl.u32 2131351028, %v4973
        %v4980 = vor.u32 %v4978, %v4979
        %v4981 = vshll.u32 2131351028, %v4972
        %v4982 = vshrl.u32 2102212464, %v4973
        %v4983 = vor.u32 %v4981, %v4982
        %v4984 = vshll.u32 2102212464, %v4972
        %v4985 = vshrl.u32 920167782, %v4973
        %v4986 = vor.u32 %v4984, %v4985
        %v4987 = vshll.u32 920167782, %v4972
        %v4988 = vshrl.u32 1326507024, %v4973
        %v4989 = vor.u32 %v4987, %v4988
        %vm4990 = vcmp.lt.s32.totalorder %v4971, 1
        %vm4991 = vcmp.lt.s32.totalorder %v4971, 2
        %vm4992 = vcmp.lt.s32.totalorder %v4971, 3
        %vm4993 = vcmp.lt.s32.totalorder %v4971, 4
        %v4994 = vsel %vm4990, %v4974, %v4977
        %v4995 = vsel %vm4993, %v4983, 2102212464
        %v4996 = vsel %vm4992, %v4980, %v4995
        %v4997 = vsel %vm4991, %v4994, %v4996
        %v4998 = vsel %vm4990, %v4977, %v4980
        %v4999 = vsel %vm4993, %v4986, 920167782
        %v5000 = vsel %vm4992, %v4983, %v4999
        %v5001 = vsel %vm4991, %v4998, %v5000
        %v5002 = vsel %vm4990, %v4980, %v4983
        %v5003 = vsel %vm4993, %v4989, 1326507024
        %v5004 = vsel %vm4992, %v4986, %v5003
        %v5005 = vsel %vm4991, %v5002, %v5004
        %v5006 = vshll.u32 %v4966, 8
        %v5007 = vand.u32 %v5006, 65535
        %v5008 = vshrl.u32 %v5006, 16
        %v5009 = vand.u32 %v5005, 65535
        %v5010 = vshrl.u32 %v5005, 16
        %v5011 = vmul.u32 %v5007, %v5009
        %v5012 = vmul.u32 %v5007, %v5010
        %v5013 = vmul.u32 %v5008, %v5009
        %v5014 = vmul.u32 %v5008, %v5010
        %v5015 = vshll.u32 %v5012, 16
        %v5016 = vshrl.u32 %v5012, 16
        %v5017 = vshll.u32 %v5013, 16
        %v5018 = vshrl.u32 %v5013, 16
        %vm5019 = vc.u32 %v5011, %v5015
        %v5020 = vsel %vm5019, 1, 0
        %v5021 = vadd.s32 %v5011, %v5015
        %v5022 = vadd.s32 %v5014, %v5020
        %vm5023 = vc.u32 %v5021, %v5017
        %v5024 = vsel %vm5023, 1, 0
        %v5025 = vadd.s32 %v5021, %v5017
        %v5026 = vadd.s32 %v5022, %v5024
        %v5027 = vadd.s32 %v5026, %v5016
        %v5028 = vadd.s32 %v5027, %v5018
        %v5029 = vand.u32 %v5006, 65535
        %v5030 = vshrl.u32 %v5006, 16
        %v5031 = vand.u32 %v5001, 65535
        %v5032 = vshrl.u32 %v5001, 16
        %v5033 = vmul.u32 %v5029, %v5031
        %v5034 = vmul.u32 %v5029, %v5032
        %v5035 = vmul.u32 %v5030, %v5031
        %v5036 = vmul.u32 %v5030, %v5032
        %v5037 = vshll.u32 %v5034, 16
        %v5038 = vshrl.u32 %v5034, 16
        %v5039 = vshll.u32 %v5035, 16
        %v5040 = vshrl.u32 %v5035, 16
        %vm5041 = vc.u32 %v5033, %v5037
        %v5042 = vsel %vm5041, 1, 0
        %v5043 = vadd.s32 %v5033, %v5037
        %v5044 = vadd.s32 %v5036, %v5042
        %vm5045 = vc.u32 %v5043, %v5039
        %v5046 = vsel %vm5045, 1, 0
        %v5047 = vadd.s32 %v5043, %v5039
        %v5048 = vadd.s32 %v5044, %v5046
        %v5049 = vadd.s32 %v5048, %v5038
        %v5050 = vadd.s32 %v5049, %v5040
        %v5051 = vmul.u32 %v5006, %v4997
        %v5052 = vadd.s32 %v5028, %v5047
        %vm5053 = vc.u32 %v5028, %v5047
        %v5054 = vadd.s32 %v5050, 1
        %v5055 = vsel %vm5053, %v5054, %v5050
        %v5056 = vadd.s32 %v5051, %v5055
        %v5057 = vadd.s32 %v5056, 536870912
        %v5058 = vshrl.u32 %v5057, 30
        %v5059 = vshll.u32 %v5058, 30
        %v5060 = vsub.s32 %v5056, %v5059
        %vm5061 = vcmp.lt.s32.totalorder %v5060, 0
        %v5062 = vsub.s32 0, %v5060
        %v5063 = vsel %vm5061, %v5062, %v5060
        %v5064 = vclz %v5063
        %v5065 = vsub.s32 %v5064, 2
        %vm5066 = vcmp.gt.s32.totalorder 0, %v5065
        %v5067 = vsel %vm5066, 0, %v5065
        %v5068 = vsub.s32 32, %v5067
        %v5069 = vshll.u32 %v5060, %v5067
        %v5070 = vshrl.u32 %v5052, %v5068
        %v5071 = vor.u32 %v5069, %v5070
        %v5072 = vsub.s32 4294967266, %v5067
        %v5073 = vadd.s32 %v5072, 127
        %v5074 = vshll.u32 %v5073, 23
        %v5075 = vor.u32 4788187, %v5074
        %v5076 = vand.u32 2147483647, %v5075
        %v5078 = vcvt.s32.f32 %v5071
        %v5079 = vmul.f32 %v5078, %v5076
        %v5080 = vxor.u32 %v5079, 2147483648
        %v5081 = vsel %vm4960, %v5080, %v5079
        %v5082 = vsub.s32 4, %v5058
        %v5083 = vsel %vm4960, %v5082, %v5058
        %v5084 = vsel %vm4959, %v842, %v5081
        %v5085 = vsel %vm4959, 0, %v5083
        %v5086 = vmul.f32 %v5084, %v5084
        %v5087 = vmul.f32 %v5086, -0.001358992
        %v5088 = vadd.f32 %v5087, 0.041655596
        %v5089 = vmul.f32 %v5086, %v5088
        %v5090 = vadd.f32 %v5089, -0.4999988
        %v5091 = vmul.f32 %v5086, %v5090
        %v5092 = vadd.f32 1.0, %v5091
        %v5093 = vmul.f32 %v5084, %v5084
        %v5094 = vmul.f32 %v5093, -0.00019511016
        %v5095 = vadd.f32 %v5094, 0.008332121
        %v5096 = vmul.f32 %v5093, %v5095
        %v5097 = vadd.f32 %v5096, -0.16666654
        %v5098 = vmul.f32 %v5093, %v5097
        %v5099 = vadd.f32 %v5098, 1.0
        %v5100 = vmul.f32 %v5099, %v5084
        %vm5101 = vweird.f32 %v842
        %v5102 = vadd.s32 %v5085, 3
        %v5103 = vand.u32 %v5102, 3
        %vm5104 = vcmp.lt.s32.totalorder %v5103, 2
        %vm5105 = vcmp.eq.s32.totalorder %v5103, 0
        %v5106 = vxor.u32 %v5100, 2147483648
        %v5107 = vsel %vm5105, %v5092, %v5106
        %vm5108 = vcmp.eq.s32.totalorder %v5103, 2
        %v5109 = vxor.u32 %v5092, 2147483648
        %v5110 = vsel %vm5108, %v5109, %v5100
        %v5111 = vsel %vm5104, %v5107, %v5110
        %v5112 = vsel %vm5101, nan, %v5111
        %v5113 = vand.u32 2147483647, %v1484
        %vm5114 = vcmp.le.f32.partialorder %v5113, 0.7853982
        %vm5115 = vcmp.lt.s32.totalorder %v1484, 0
        %v5116 = vand.u32 %v1484, 2139095040
        %v5117 = vshrl.u32 %v5116, 23
        %v5118 = vsub.s32 %v5117, 127
        %v5119 = vand.u32 2147483647, %v1484
        %v5120 = vand.u32 %v5119, 8388607
        %v5121 = vor.u32 %v5120, 8388608
        %v5122 = vsub.s32 0, %v5121
        %v5123 = vadd.s32 %v5118, 1
        %vm5124 = vcmp.gt.s32.totalorder %v5123, 0
        %v5125 = vsel %vm5124, %v5123, 0
        %v5126 = vshrl.u32 %v5125, 5
        %v5127 = vand.u32 %v5125, 31
        %v5128 = vsub.s32 32, %v5127
        %v5129 = vshrl.u32 683565275, %v5128
        %v5130 = vshll.u32 683565275, %v5127
        %v5131 = vshrl.u32 2475754826, %v5128
        %v5132 = vor.u32 %v5130, %v5131
        %v5133 = vshll.u32 2475754826, %v5127
        %v5134 = vshrl.u32 2131351028, %v5128
        %v5135 = vor.u32 %v5133, %v5134
        %v5136 = vshll.u32 2131351028, %v5127
        %v5137 = vshrl.u32 2102212464, %v5128
        %v5138 = vor.u32 %v5136, %v5137
        %v5139 = vshll.u32 2102212464, %v5127
        %v5140 = vshrl.u32 920167782, %v5128
        %v5141 = vor.u32 %v5139, %v5140
        %v5142 = vshll.u32 920167782, %v5127
        %v5143 = vshrl.u32 1326507024, %v5128
        %v5144 = vor.u32 %v5142, %v5143
        %vm5145 = vcmp.lt.s32.totalorder %v5126, 1
        %vm5146 = vcmp.lt.s32.totalorder %v5126, 2
        %vm5147 = vcmp.lt.s32.totalorder %v5126, 3
        %vm5148 = vcmp.lt.s32.totalorder %v5126, 4
        %v5149 = vsel %vm5145, %v5129, %v5132
        %v5150 = vsel %vm5148, %v5138, 2102212464
        %v5151 = vsel %vm5147, %v5135, %v5150
        %v5152 = vsel %vm5146, %v5149, %v5151
        %v5153 = vsel %vm5145, %v5132, %v5135
        %v5154 = vsel %vm5148, %v5141, 920167782
        %v5155 = vsel %vm5147, %v5138, %v5154
        %v5156 = vsel %vm5146, %v5153, %v5155
        %v5157 = vsel %vm5145, %v5135, %v5138
        %v5158 = vsel %vm5148, %v5144, 1326507024
        %v5159 = vsel %vm5147, %v5141, %v5158
        %v5160 = vsel %vm5146, %v5157, %v5159
        %v5161 = vshll.u32 %v5121, 8
        %v5162 = vand.u32 %v5161, 65535
        %v5163 = vshrl.u32 %v5161, 16
        %v5164 = vand.u32 %v5160, 65535
        %v5165 = vshrl.u32 %v5160, 16
        %v5166 = vmul.u32 %v5162, %v5164
        %v5167 = vmul.u32 %v5162, %v5165
        %v5168 = vmul.u32 %v5163, %v5164
        %v5169 = vmul.u32 %v5163, %v5165
        %v5170 = vshll.u32 %v5167, 16
        %v5171 = vshrl.u32 %v5167, 16
        %v5172 = vshll.u32 %v5168, 16
        %v5173 = vshrl.u32 %v5168, 16
        %vm5174 = vc.u32 %v5166, %v5170
        %v5175 = vsel %vm5174, 1, 0
        %v5176 = vadd.s32 %v5166, %v5170
        %v5177 = vadd.s32 %v5169, %v5175
        %vm5178 = vc.u32 %v5176, %v5172
        %v5179 = vsel %vm5178, 1, 0
        %v5180 = vadd.s32 %v5176, %v5172
        %v5181 = vadd.s32 %v5177, %v5179
        %v5182 = vadd.s32 %v5181, %v5171
        %v5183 = vadd.s32 %v5182, %v5173
        %v5184 = vand.u32 %v5161, 65535
        %v5185 = vshrl.u32 %v5161, 16
        %v5186 = vand.u32 %v5156, 65535
        %v5187 = vshrl.u32 %v5156, 16
        %v5188 = vmul.u32 %v5184, %v5186
        %v5189 = vmul.u32 %v5184, %v5187
        %v5190 = vmul.u32 %v5185, %v5186
        %v5191 = vmul.u32 %v5185, %v5187
        %v5192 = vshll.u32 %v5189, 16
        %v5193 = vshrl.u32 %v5189, 16
        %v5194 = vshll.u32 %v5190, 16
        %v5195 = vshrl.u32 %v5190, 16
        %vm5196 = vc.u32 %v5188, %v5192
        %v5197 = vsel %vm5196, 1, 0
        %v5198 = vadd.s32 %v5188, %v5192
        %v5199 = vadd.s32 %v5191, %v5197
        %vm5200 = vc.u32 %v5198, %v5194
        %v5201 = vsel %vm5200, 1, 0
        %v5202 = vadd.s32 %v5198, %v5194
        %v5203 = vadd.s32 %v5199, %v5201
        %v5204 = vadd.s32 %v5203, %v5193
        %v5205 = vadd.s32 %v5204, %v5195
        %v5206 = vmul.u32 %v5161, %v5152
        %v5207 = vadd.s32 %v5183, %v5202
        %vm5208 = vc.u32 %v5183, %v5202
        %v5209 = vadd.s32 %v5205, 1
        %v5210 = vsel %vm5208, %v5209, %v5205
        %v5211 = vadd.s32 %v5206, %v5210
        %v5212 = vadd.s32 %v5211, 536870912
        %v5213 = vshrl.u32 %v5212, 30
        %v5214 = vshll.u32 %v5213, 30
        %v5215 = vsub.s32 %v5211, %v5214
        %vm5216 = vcmp.lt.s32.totalorder %v5215, 0
        %v5217 = vsub.s32 0, %v5215
        %v5218 = vsel %vm5216, %v5217, %v5215
        %v5219 = vclz %v5218
        %v5220 = vsub.s32 %v5219, 2
        %vm5221 = vcmp.gt.s32.totalorder 0, %v5220
        %v5222 = vsel %vm5221, 0, %v5220
        %v5223 = vsub.s32 32, %v5222
        %v5224 = vshll.u32 %v5215, %v5222
        %v5225 = vshrl.u32 %v5207, %v5223
        %v5226 = vor.u32 %v5224, %v5225
        %v5227 = vsub.s32 4294967266, %v5222
        %v5228 = vadd.s32 %v5227, 127
        %v5229 = vshll.u32 %v5228, 23
        %v5230 = vor.u32 4788187, %v5229
        %v5231 = vand.u32 2147483647, %v5230
        %v5233 = vcvt.s32.f32 %v5226
        %v5234 = vmul.f32 %v5233, %v5231
        %v5235 = vxor.u32 %v5234, 2147483648
        %v5236 = vsel %vm5115, %v5235, %v5234
        %v5237 = vsub.s32 4, %v5213
        %v5238 = vsel %vm5115, %v5237, %v5213
        %v5239 = vsel %vm5114, %v1484, %v5236
        %v5240 = vsel %vm5114, 0, %v5238
        %v5241 = vmul.f32 %v5239, %v5239
        %v5242 = vmul.f32 %v5241, -0.001358992
        %v5243 = vadd.f32 %v5242, 0.041655596
        %v5244 = vmul.f32 %v5241, %v5243
        %v5245 = vadd.f32 %v5244, -0.4999988
        %v5246 = vmul.f32 %v5241, %v5245
        %v5247 = vadd.f32 1.0, %v5246
        %v5248 = vmul.f32 %v5239, %v5239
        %v5249 = vmul.f32 %v5248, -0.00019511016
        %v5250 = vadd.f32 %v5249, 0.008332121
        %v5251 = vmul.f32 %v5248, %v5250
        %v5252 = vadd.f32 %v5251, -0.16666654
        %v5253 = vmul.f32 %v5248, %v5252
        %v5254 = vadd.f32 %v5253, 1.0
        %v5255 = vmul.f32 %v5254, %v5239
        %vm5256 = vweird.f32 %v1484
        %v5257 = vadd.s32 %v5240, 3
        %v5258 = vand.u32 %v5257, 3
        %vm5259 = vcmp.lt.s32.totalorder %v5258, 2
        %vm5260 = vcmp.eq.s32.totalorder %v5258, 0
        %v5261 = vxor.u32 %v5255, 2147483648
        %v5262 = vsel %vm5260, %v5247, %v5261
        %vm5263 = vcmp.eq.s32.totalorder %v5258, 2
        %v5264 = vxor.u32 %v5247, 2147483648
        %v5265 = vsel %vm5263, %v5264, %v5255
        %v5266 = vsel %vm5259, %v5262, %v5265
        %v5267 = vsel %vm5256, nan, %v5266
        %v5268 = vand.u32 2147483647, %v2126
        %vm5269 = vcmp.le.f32.partialorder %v5268, 0.7853982
        %vm5270 = vcmp.lt.s32.totalorder %v2126, 0
        %v5271 = vand.u32 %v2126, 2139095040
        %v5272 = vshrl.u32 %v5271, 23
        %v5273 = vsub.s32 %v5272, 127
        %v5274 = vand.u32 2147483647, %v2126
        %v5275 = vand.u32 %v5274, 8388607
        %v5276 = vor.u32 %v5275, 8388608
        %v5277 = vsub.s32 0, %v5276
        %v5278 = vadd.s32 %v5273, 1
        %vm5279 = vcmp.gt.s32.totalorder %v5278, 0
        %v5280 = vsel %vm5279, %v5278, 0
        %v5281 = vshrl.u32 %v5280, 5
        %v5282 = vand.u32 %v5280, 31
        %v5283 = vsub.s32 32, %v5282
        %v5284 = vshrl.u32 683565275, %v5283
        %v5285 = vshll.u32 683565275, %v5282
        %v5286 = vshrl.u32 2475754826, %v5283
        %v5287 = vor.u32 %v5285, %v5286
        %v5288 = vshll.u32 2475754826, %v5282
        %v5289 = vshrl.u32 2131351028, %v5283
        %v5290 = vor.u32 %v5288, %v5289
        %v5291 = vshll.u32 2131351028, %v5282
        %v5292 = vshrl.u32 2102212464, %v5283
        %v5293 = vor.u32 %v5291, %v5292
        %v5294 = vshll.u32 2102212464, %v5282
        %v5295 = vshrl.u32 920167782, %v5283
        %v5296 = vor.u32 %v5294, %v5295
        %v5297 = vshll.u32 920167782, %v5282
        %v5298 = vshrl.u32 1326507024, %v5283
        %v5299 = vor.u32 %v5297, %v5298
        %vm5300 = vcmp.lt.s32.totalorder %v5281, 1
        %vm5301 = vcmp.lt.s32.totalorder %v5281, 2
        %vm5302 = vcmp.lt.s32.totalorder %v5281, 3
        %vm5303 = vcmp.lt.s32.totalorder %v5281, 4
        %v5304 = vsel %vm5300, %v5284, %v5287
        %v5305 = vsel %vm5303, %v5293, 2102212464
        %v5306 = vsel %vm5302, %v5290, %v5305
        %v5307 = vsel %vm5301, %v5304, %v5306
        %v5308 = vsel %vm5300, %v5287, %v5290
        %v5309 = vsel %vm5303, %v5296, 920167782
        %v5310 = vsel %vm5302, %v5293, %v5309
        %v5311 = vsel %vm5301, %v5308, %v5310
        %v5312 = vsel %vm5300, %v5290, %v5293
        %v5313 = vsel %vm5303, %v5299, 1326507024
        %v5314 = vsel %vm5302, %v5296, %v5313
        %v5315 = vsel %vm5301, %v5312, %v5314
        %v5316 = vshll.u32 %v5276, 8
        %v5317 = vand.u32 %v5316, 65535
        %v5318 = vshrl.u32 %v5316, 16
        %v5319 = vand.u32 %v5315, 65535
        %v5320 = vshrl.u32 %v5315, 16
        %v5321 = vmul.u32 %v5317, %v5319
        %v5322 = vmul.u32 %v5317, %v5320
        %v5323 = vmul.u32 %v5318, %v5319
        %v5324 = vmul.u32 %v5318, %v5320
        %v5325 = vshll.u32 %v5322, 16
        %v5326 = vshrl.u32 %v5322, 16
        %v5327 = vshll.u32 %v5323, 16
        %v5328 = vshrl.u32 %v5323, 16
        %vm5329 = vc.u32 %v5321, %v5325
        %v5330 = vsel %vm5329, 1, 0
        %v5331 = vadd.s32 %v5321, %v5325
        %v5332 = vadd.s32 %v5324, %v5330
        %vm5333 = vc.u32 %v5331, %v5327
        %v5334 = vsel %vm5333, 1, 0
        %v5335 = vadd.s32 %v5331, %v5327
        %v5336 = vadd.s32 %v5332, %v5334
        %v5337 = vadd.s32 %v5336, %v5326
        %v5338 = vadd.s32 %v5337, %v5328
        %v5339 = vand.u32 %v5316, 65535
        %v5340 = vshrl.u32 %v5316, 16
        %v5341 = vand.u32 %v5311, 65535
        %v5342 = vshrl.u32 %v5311, 16
        %v5343 = vmul.u32 %v5339, %v5341
        %v5344 = vmul.u32 %v5339, %v5342
        %v5345 = vmul.u32 %v5340, %v5341
        %v5346 = vmul.u32 %v5340, %v5342
        %v5347 = vshll.u32 %v5344, 16
        %v5348 = vshrl.u32 %v5344, 16
        %v5349 = vshll.u32 %v5345, 16
        %v5350 = vshrl.u32 %v5345, 16
        %vm5351 = vc.u32 %v5343, %v5347
        %v5352 = vsel %vm5351, 1, 0
        %v5353 = vadd.s32 %v5343, %v5347
        %v5354 = vadd.s32 %v5346, %v5352
        %vm5355 = vc.u32 %v5353, %v5349
        %v5356 = vsel %vm5355, 1, 0
        %v5357 = vadd.s32 %v5353, %v5349
        %v5358 = vadd.s32 %v5354, %v5356
        %v5359 = vadd.s32 %v5358, %v5348
        %v5360 = vadd.s32 %v5359, %v5350
        %v5361 = vmul.u32 %v5316, %v5307
        %v5362 = vadd.s32 %v5338, %v5357
        %vm5363 = vc.u32 %v5338, %v5357
        %v5364 = vadd.s32 %v5360, 1
        %v5365 = vsel %vm5363, %v5364, %v5360
        %v5366 = vadd.s32 %v5361, %v5365
        %v5367 = vadd.s32 %v5366, 536870912
        %v5368 = vshrl.u32 %v5367, 30
        %v5369 = vshll.u32 %v5368, 30
        %v5370 = vsub.s32 %v5366, %v5369
        %vm5371 = vcmp.lt.s32.totalorder %v5370, 0
        %v5372 = vsub.s32 0, %v5370
        %v5373 = vsel %vm5371, %v5372, %v5370
        %v5374 = vclz %v5373
        %v5375 = vsub.s32 %v5374, 2
        %vm5376 = vcmp.gt.s32.totalorder 0, %v5375
        %v5377 = vsel %vm5376, 0, %v5375
        %v5378 = vsub.s32 32, %v5377
        %v5379 = vshll.u32 %v5370, %v5377
        %v5380 = vshrl.u32 %v5362, %v5378
        %v5381 = vor.u32 %v5379, %v5380
        %v5382 = vsub.s32 4294967266, %v5377
        %v5383 = vadd.s32 %v5382, 127
        %v5384 = vshll.u32 %v5383, 23
        %v5385 = vor.u32 4788187, %v5384
        %v5386 = vand.u32 2147483647, %v5385
        %v5388 = vcvt.s32.f32 %v5381
        %v5389 = vmul.f32 %v5388, %v5386
        %v5390 = vxor.u32 %v5389, 2147483648
        %v5391 = vsel %vm5270, %v5390, %v5389
        %v5392 = vsub.s32 4, %v5368
        %v5393 = vsel %vm5270, %v5392, %v5368
        %v5394 = vsel %vm5269, %v2126, %v5391
        %v5395 = vsel %vm5269, 0, %v5393
        %v5396 = vmul.f32 %v5394, %v5394
        %v5397 = vmul.f32 %v5396, -0.001358992
        %v5398 = vadd.f32 %v5397, 0.041655596
        %v5399 = vmul.f32 %v5396, %v5398
        %v5400 = vadd.f32 %v5399, -0.4999988
        %v5401 = vmul.f32 %v5396, %v5400
        %v5402 = vadd.f32 1.0, %v5401
        %v5403 = vmul.f32 %v5394, %v5394
        %v5404 = vmul.f32 %v5403, -0.00019511016
        %v5405 = vadd.f32 %v5404, 0.008332121
        %v5406 = vmul.f32 %v5403, %v5405
        %v5407 = vadd.f32 %v5406, -0.16666654
        %v5408 = vmul.f32 %v5403, %v5407
        %v5409 = vadd.f32 %v5408, 1.0
        %v5410 = vmul.f32 %v5409, %v5394
        %vm5411 = vweird.f32 %v2126
        %v5412 = vadd.s32 %v5395, 3
        %v5413 = vand.u32 %v5412, 3
        %vm5414 = vcmp.lt.s32.totalorder %v5413, 2
        %vm5415 = vcmp.eq.s32.totalorder %v5413, 0
        %v5416 = vxor.u32 %v5410, 2147483648
        %v5417 = vsel %vm5415, %v5402, %v5416
        %vm5418 = vcmp.eq.s32.totalorder %v5413, 2
        %v5419 = vxor.u32 %v5402, 2147483648
        %v5420 = vsel %vm5418, %v5419, %v5410
        %v5421 = vsel %vm5414, %v5417, %v5420
        %v5422 = vsel %vm5411, nan, %v5421
        %v5423 = vand.u32 2147483647, %v846
        %vm5424 = vcmp.le.f32.partialorder %v5423, 0.7853982
        %vm5425 = vcmp.lt.s32.totalorder %v846, 0
        %v5426 = vand.u32 %v846, 2139095040
        %v5427 = vshrl.u32 %v5426, 23
        %v5428 = vsub.s32 %v5427, 127
        %v5429 = vand.u32 2147483647, %v846
        %v5430 = vand.u32 %v5429, 8388607
        %v5431 = vor.u32 %v5430, 8388608
        %v5432 = vsub.s32 0, %v5431
        %v5433 = vadd.s32 %v5428, 1
        %vm5434 = vcmp.gt.s32.totalorder %v5433, 0
        %v5435 = vsel %vm5434, %v5433, 0
        %v5436 = vshrl.u32 %v5435, 5
        %v5437 = vand.u32 %v5435, 31
        %v5438 = vsub.s32 32, %v5437
        %v5439 = vshrl.u32 683565275, %v5438
        %v5440 = vshll.u32 683565275, %v5437
        %v5441 = vshrl.u32 2475754826, %v5438
        %v5442 = vor.u32 %v5440, %v5441
        %v5443 = vshll.u32 2475754826, %v5437
        %v5444 = vshrl.u32 2131351028, %v5438
        %v5445 = vor.u32 %v5443, %v5444
        %v5446 = vshll.u32 2131351028, %v5437
        %v5447 = vshrl.u32 2102212464, %v5438
        %v5448 = vor.u32 %v5446, %v5447
        %v5449 = vshll.u32 2102212464, %v5437
        %v5450 = vshrl.u32 920167782, %v5438
        %v5451 = vor.u32 %v5449, %v5450
        %v5452 = vshll.u32 920167782, %v5437
        %v5453 = vshrl.u32 1326507024, %v5438
        %v5454 = vor.u32 %v5452, %v5453
        %vm5455 = vcmp.lt.s32.totalorder %v5436, 1
        %vm5456 = vcmp.lt.s32.totalorder %v5436, 2
        %vm5457 = vcmp.lt.s32.totalorder %v5436, 3
        %vm5458 = vcmp.lt.s32.totalorder %v5436, 4
        %v5459 = vsel %vm5455, %v5439, %v5442
        %v5460 = vsel %vm5458, %v5448, 2102212464
        %v5461 = vsel %vm5457, %v5445, %v5460
        %v5462 = vsel %vm5456, %v5459, %v5461
        %v5463 = vsel %vm5455, %v5442, %v5445
        %v5464 = vsel %vm5458, %v5451, 920167782
        %v5465 = vsel %vm5457, %v5448, %v5464
        %v5466 = vsel %vm5456, %v5463, %v5465
        %v5467 = vsel %vm5455, %v5445, %v5448
        %v5468 = vsel %vm5458, %v5454, 1326507024
        %v5469 = vsel %vm5457, %v5451, %v5468
        %v5470 = vsel %vm5456, %v5467, %v5469
        %v5471 = vshll.u32 %v5431, 8
        %v5472 = vand.u32 %v5471, 65535
        %v5473 = vshrl.u32 %v5471, 16
        %v5474 = vand.u32 %v5470, 65535
        %v5475 = vshrl.u32 %v5470, 16
        %v5476 = vmul.u32 %v5472, %v5474
        %v5477 = vmul.u32 %v5472, %v5475
        %v5478 = vmul.u32 %v5473, %v5474
        %v5479 = vmul.u32 %v5473, %v5475
        %v5480 = vshll.u32 %v5477, 16
        %v5481 = vshrl.u32 %v5477, 16
        %v5482 = vshll.u32 %v5478, 16
        %v5483 = vshrl.u32 %v5478, 16
        %vm5484 = vc.u32 %v5476, %v5480
        %v5485 = vsel %vm5484, 1, 0
        %v5486 = vadd.s32 %v5476, %v5480
        %v5487 = vadd.s32 %v5479, %v5485
        %vm5488 = vc.u32 %v5486, %v5482
        %v5489 = vsel %vm5488, 1, 0
        %v5490 = vadd.s32 %v5486, %v5482
        %v5491 = vadd.s32 %v5487, %v5489
        %v5492 = vadd.s32 %v5491, %v5481
        %v5493 = vadd.s32 %v5492, %v5483
        %v5494 = vand.u32 %v5471, 65535
        %v5495 = vshrl.u32 %v5471, 16
        %v5496 = vand.u32 %v5466, 65535
        %v5497 = vshrl.u32 %v5466, 16
        %v5498 = vmul.u32 %v5494, %v5496
        %v5499 = vmul.u32 %v5494, %v5497
        %v5500 = vmul.u32 %v5495, %v5496
        %v5501 = vmul.u32 %v5495, %v5497
        %v5502 = vshll.u32 %v5499, 16
        %v5503 = vshrl.u32 %v5499, 16
        %v5504 = vshll.u32 %v5500, 16
        %v5505 = vshrl.u32 %v5500, 16
        %vm5506 = vc.u32 %v5498, %v5502
        %v5507 = vsel %vm5506, 1, 0
        %v5508 = vadd.s32 %v5498, %v5502
        %v5509 = vadd.s32 %v5501, %v5507
        %vm5510 = vc.u32 %v5508, %v5504
        %v5511 = vsel %vm5510, 1, 0
        %v5512 = vadd.s32 %v5508, %v5504
        %v5513 = vadd.s32 %v5509, %v5511
        %v5514 = vadd.s32 %v5513, %v5503
        %v5515 = vadd.s32 %v5514, %v5505
        %v5516 = vmul.u32 %v5471, %v5462
        %v5517 = vadd.s32 %v5493, %v5512
        %vm5518 = vc.u32 %v5493, %v5512
        %v5519 = vadd.s32 %v5515, 1
        %v5520 = vsel %vm5518, %v5519, %v5515
        %v5521 = vadd.s32 %v5516, %v5520
        %v5522 = vadd.s32 %v5521, 536870912
        %v5523 = vshrl.u32 %v5522, 30
        %v5524 = vshll.u32 %v5523, 30
        %v5525 = vsub.s32 %v5521, %v5524
        %vm5526 = vcmp.lt.s32.totalorder %v5525, 0
        %v5527 = vsub.s32 0, %v5525
        %v5528 = vsel %vm5526, %v5527, %v5525
        %v5529 = vclz %v5528
        %v5530 = vsub.s32 %v5529, 2
        %vm5531 = vcmp.gt.s32.totalorder 0, %v5530
        %v5532 = vsel %vm5531, 0, %v5530
        %v5533 = vsub.s32 32, %v5532
        %v5534 = vshll.u32 %v5525, %v5532
        %v5535 = vshrl.u32 %v5517, %v5533
        %v5536 = vor.u32 %v5534, %v5535
        %v5537 = vsub.s32 4294967266, %v5532
        %v5538 = vadd.s32 %v5537, 127
        %v5539 = vshll.u32 %v5538, 23
        %v5540 = vor.u32 4788187, %v5539
        %v5541 = vand.u32 2147483647, %v5540
        %v5543 = vcvt.s32.f32 %v5536
        %v5544 = vmul.f32 %v5543, %v5541
        %v5545 = vxor.u32 %v5544, 2147483648
        %v5546 = vsel %vm5425, %v5545, %v5544
        %v5547 = vsub.s32 4, %v5523
        %v5548 = vsel %vm5425, %v5547, %v5523
        %v5549 = vsel %vm5424, %v846, %v5546
        %v5550 = vsel %vm5424, 0, %v5548
        %v5551 = vmul.f32 %v5549, %v5549
        %v5552 = vmul.f32 %v5551, -0.001358992
        %v5553 = vadd.f32 %v5552, 0.041655596
        %v5554 = vmul.f32 %v5551, %v5553
        %v5555 = vadd.f32 %v5554, -0.4999988
        %v5556 = vmul.f32 %v5551, %v5555
        %v5557 = vadd.f32 1.0, %v5556
        %v5558 = vmul.f32 %v5549, %v5549
        %v5559 = vmul.f32 %v5558, -0.00019511016
        %v5560 = vadd.f32 %v5559, 0.008332121
        %v5561 = vmul.f32 %v5558, %v5560
        %v5562 = vadd.f32 %v5561, -0.16666654
        %v5563 = vmul.f32 %v5558, %v5562
        %v5564 = vadd.f32 %v5563, 1.0
        %v5565 = vmul.f32 %v5564, %v5549
        %vm5566 = vweird.f32 %v846
        %v5567 = vadd.s32 %v5550, 3
        %v5568 = vand.u32 %v5567, 3
        %vm5569 = vcmp.lt.s32.totalorder %v5568, 2
        %vm5570 = vcmp.eq.s32.totalorder %v5568, 0
        %v5571 = vxor.u32 %v5565, 2147483648
        %v5572 = vsel %vm5570, %v5557, %v5571
        %vm5573 = vcmp.eq.s32.totalorder %v5568, 2
        %v5574 = vxor.u32 %v5557, 2147483648
        %v5575 = vsel %vm5573, %v5574, %v5565
        %v5576 = vsel %vm5569, %v5572, %v5575
        %v5577 = vsel %vm5566, nan, %v5576
        %v5578 = vand.u32 2147483647, %v1488
        %vm5579 = vcmp.le.f32.partialorder %v5578, 0.7853982
        %vm5580 = vcmp.lt.s32.totalorder %v1488, 0
        %v5581 = vand.u32 %v1488, 2139095040
        %v5582 = vshrl.u32 %v5581, 23
        %v5583 = vsub.s32 %v5582, 127
        %v5584 = vand.u32 2147483647, %v1488
        %v5585 = vand.u32 %v5584, 8388607
        %v5586 = vor.u32 %v5585, 8388608
        %v5587 = vsub.s32 0, %v5586
        %v5588 = vadd.s32 %v5583, 1
        %vm5589 = vcmp.gt.s32.totalorder %v5588, 0
        %v5590 = vsel %vm5589, %v5588, 0
        %v5591 = vshrl.u32 %v5590, 5
        %v5592 = vand.u32 %v5590, 31
        %v5593 = vsub.s32 32, %v5592
        %v5594 = vshrl.u32 683565275, %v5593
        %v5595 = vshll.u32 683565275, %v5592
        %v5596 = vshrl.u32 2475754826, %v5593
        %v5597 = vor.u32 %v5595, %v5596
        %v5598 = vshll.u32 2475754826, %v5592
        %v5599 = vshrl.u32 2131351028, %v5593
        %v5600 = vor.u32 %v5598, %v5599
        %v5601 = vshll.u32 2131351028, %v5592
        %v5602 = vshrl.u32 2102212464, %v5593
        %v5603 = vor.u32 %v5601, %v5602
        %v5604 = vshll.u32 2102212464, %v5592
        %v5605 = vshrl.u32 920167782, %v5593
        %v5606 = vor.u32 %v5604, %v5605
        %v5607 = vshll.u32 920167782, %v5592
        %v5608 = vshrl.u32 1326507024, %v5593
        %v5609 = vor.u32 %v5607, %v5608
        %vm5610 = vcmp.lt.s32.totalorder %v5591, 1
        %vm5611 = vcmp.lt.s32.totalorder %v5591, 2
        %vm5612 = vcmp.lt.s32.totalorder %v5591, 3
        %vm5613 = vcmp.lt.s32.totalorder %v5591, 4
        %v5614 = vsel %vm5610, %v5594, %v5597
        %v5615 = vsel %vm5613, %v5603, 2102212464
        %v5616 = vsel %vm5612, %v5600, %v5615
        %v5617 = vsel %vm5611, %v5614, %v5616
        %v5618 = vsel %vm5610, %v5597, %v5600
        %v5619 = vsel %vm5613, %v5606, 920167782
        %v5620 = vsel %vm5612, %v5603, %v5619
        %v5621 = vsel %vm5611, %v5618, %v5620
        %v5622 = vsel %vm5610, %v5600, %v5603
        %v5623 = vsel %vm5613, %v5609, 1326507024
        %v5624 = vsel %vm5612, %v5606, %v5623
        %v5625 = vsel %vm5611, %v5622, %v5624
        %v5626 = vshll.u32 %v5586, 8
        %v5627 = vand.u32 %v5626, 65535
        %v5628 = vshrl.u32 %v5626, 16
        %v5629 = vand.u32 %v5625, 65535
        %v5630 = vshrl.u32 %v5625, 16
        %v5631 = vmul.u32 %v5627, %v5629
        %v5632 = vmul.u32 %v5627, %v5630
        %v5633 = vmul.u32 %v5628, %v5629
        %v5634 = vmul.u32 %v5628, %v5630
        %v5635 = vshll.u32 %v5632, 16
        %v5636 = vshrl.u32 %v5632, 16
        %v5637 = vshll.u32 %v5633, 16
        %v5638 = vshrl.u32 %v5633, 16
        %vm5639 = vc.u32 %v5631, %v5635
        %v5640 = vsel %vm5639, 1, 0
        %v5641 = vadd.s32 %v5631, %v5635
        %v5642 = vadd.s32 %v5634, %v5640
        %vm5643 = vc.u32 %v5641, %v5637
        %v5644 = vsel %vm5643, 1, 0
        %v5645 = vadd.s32 %v5641, %v5637
        %v5646 = vadd.s32 %v5642, %v5644
        %v5647 = vadd.s32 %v5646, %v5636
        %v5648 = vadd.s32 %v5647, %v5638
        %v5649 = vand.u32 %v5626, 65535
        %v5650 = vshrl.u32 %v5626, 16
        %v5651 = vand.u32 %v5621, 65535
        %v5652 = vshrl.u32 %v5621, 16
        %v5653 = vmul.u32 %v5649, %v5651
        %v5654 = vmul.u32 %v5649, %v5652
        %v5655 = vmul.u32 %v5650, %v5651
        %v5656 = vmul.u32 %v5650, %v5652
        %v5657 = vshll.u32 %v5654, 16
        %v5658 = vshrl.u32 %v5654, 16
        %v5659 = vshll.u32 %v5655, 16
        %v5660 = vshrl.u32 %v5655, 16
        %vm5661 = vc.u32 %v5653, %v5657
        %v5662 = vsel %vm5661, 1, 0
        %v5663 = vadd.s32 %v5653, %v5657
        %v5664 = vadd.s32 %v5656, %v5662
        %vm5665 = vc.u32 %v5663, %v5659
        %v5666 = vsel %vm5665, 1, 0
        %v5667 = vadd.s32 %v5663, %v5659
        %v5668 = vadd.s32 %v5664, %v5666
        %v5669 = vadd.s32 %v5668, %v5658
        %v5670 = vadd.s32 %v5669, %v5660
        %v5671 = vmul.u32 %v5626, %v5617
        %v5672 = vadd.s32 %v5648, %v5667
        %vm5673 = vc.u32 %v5648, %v5667
        %v5674 = vadd.s32 %v5670, 1
        %v5675 = vsel %vm5673, %v5674, %v5670
        %v5676 = vadd.s32 %v5671, %v5675
        %v5677 = vadd.s32 %v5676, 536870912
        %v5678 = vshrl.u32 %v5677, 30
        %v5679 = vshll.u32 %v5678, 30
        %v5680 = vsub.s32 %v5676, %v5679
        %vm5681 = vcmp.lt.s32.totalorder %v5680, 0
        %v5682 = vsub.s32 0, %v5680
        %v5683 = vsel %vm5681, %v5682, %v5680
        %v5684 = vclz %v5683
        %v5685 = vsub.s32 %v5684, 2
        %vm5686 = vcmp.gt.s32.totalorder 0, %v5685
        %v5687 = vsel %vm5686, 0, %v5685
        %v5688 = vsub.s32 32, %v5687
        %v5689 = vshll.u32 %v5680, %v5687
        %v5690 = vshrl.u32 %v5672, %v5688
        %v5691 = vor.u32 %v5689, %v5690
        %v5692 = vsub.s32 4294967266, %v5687
        %v5693 = vadd.s32 %v5692, 127
        %v5694 = vshll.u32 %v5693, 23
        %v5695 = vor.u32 4788187, %v5694
        %v5696 = vand.u32 2147483647, %v5695
        %v5698 = vcvt.s32.f32 %v5691
        %v5699 = vmul.f32 %v5698, %v5696
        %v5700 = vxor.u32 %v5699, 2147483648
        %v5701 = vsel %vm5580, %v5700, %v5699
        %v5702 = vsub.s32 4, %v5678
        %v5703 = vsel %vm5580, %v5702, %v5678
        %v5704 = vsel %vm5579, %v1488, %v5701
        %v5705 = vsel %vm5579, 0, %v5703
        %v5706 = vmul.f32 %v5704, %v5704
        %v5707 = vmul.f32 %v5706, -0.001358992
        %v5708 = vadd.f32 %v5707, 0.041655596
        %v5709 = vmul.f32 %v5706, %v5708
        %v5710 = vadd.f32 %v5709, -0.4999988
        %v5711 = vmul.f32 %v5706, %v5710
        %v5712 = vadd.f32 1.0, %v5711
        %v5713 = vmul.f32 %v5704, %v5704
        %v5714 = vmul.f32 %v5713, -0.00019511016
        %v5715 = vadd.f32 %v5714, 0.008332121
        %v5716 = vmul.f32 %v5713, %v5715
        %v5717 = vadd.f32 %v5716, -0.16666654
        %v5718 = vmul.f32 %v5713, %v5717
        %v5719 = vadd.f32 %v5718, 1.0
        %v5720 = vmul.f32 %v5719, %v5704
        %vm5721 = vweird.f32 %v1488
        %v5722 = vadd.s32 %v5705, 3
        %v5723 = vand.u32 %v5722, 3
        %vm5724 = vcmp.lt.s32.totalorder %v5723, 2
        %vm5725 = vcmp.eq.s32.totalorder %v5723, 0
        %v5726 = vxor.u32 %v5720, 2147483648
        %v5727 = vsel %vm5725, %v5712, %v5726
        %vm5728 = vcmp.eq.s32.totalorder %v5723, 2
        %v5729 = vxor.u32 %v5712, 2147483648
        %v5730 = vsel %vm5728, %v5729, %v5720
        %v5731 = vsel %vm5724, %v5727, %v5730
        %v5732 = vsel %vm5721, nan, %v5731
        %v5733 = vand.u32 2147483647, %v2130
        %vm5734 = vcmp.le.f32.partialorder %v5733, 0.7853982
        %vm5735 = vcmp.lt.s32.totalorder %v2130, 0
        %v5736 = vand.u32 %v2130, 2139095040
        %v5737 = vshrl.u32 %v5736, 23
        %v5738 = vsub.s32 %v5737, 127
        %v5739 = vand.u32 2147483647, %v2130
        %v5740 = vand.u32 %v5739, 8388607
        %v5741 = vor.u32 %v5740, 8388608
        %v5742 = vsub.s32 0, %v5741
        %v5743 = vadd.s32 %v5738, 1
        %vm5744 = vcmp.gt.s32.totalorder %v5743, 0
        %v5745 = vsel %vm5744, %v5743, 0
        %v5746 = vshrl.u32 %v5745, 5
        %v5747 = vand.u32 %v5745, 31
        %v5748 = vsub.s32 32, %v5747
        %v5749 = vshrl.u32 683565275, %v5748
        %v5750 = vshll.u32 683565275, %v5747
        %v5751 = vshrl.u32 2475754826, %v5748
        %v5752 = vor.u32 %v5750, %v5751
        %v5753 = vshll.u32 2475754826, %v5747
        %v5754 = vshrl.u32 2131351028, %v5748
        %v5755 = vor.u32 %v5753, %v5754
        %v5756 = vshll.u32 2131351028, %v5747
        %v5757 = vshrl.u32 2102212464, %v5748
        %v5758 = vor.u32 %v5756, %v5757
        %v5759 = vshll.u32 2102212464, %v5747
        %v5760 = vshrl.u32 920167782, %v5748
        %v5761 = vor.u32 %v5759, %v5760
        %v5762 = vshll.u32 920167782, %v5747
        %v5763 = vshrl.u32 1326507024, %v5748
        %v5764 = vor.u32 %v5762, %v5763
        %vm5765 = vcmp.lt.s32.totalorder %v5746, 1
        %vm5766 = vcmp.lt.s32.totalorder %v5746, 2
        %vm5767 = vcmp.lt.s32.totalorder %v5746, 3
        %vm5768 = vcmp.lt.s32.totalorder %v5746, 4
        %v5769 = vsel %vm5765, %v5749, %v5752
        %v5770 = vsel %vm5768, %v5758, 2102212464
        %v5771 = vsel %vm5767, %v5755, %v5770
        %v5772 = vsel %vm5766, %v5769, %v5771
        %v5773 = vsel %vm5765, %v5752, %v5755
        %v5774 = vsel %vm5768, %v5761, 920167782
        %v5775 = vsel %vm5767, %v5758, %v5774
        %v5776 = vsel %vm5766, %v5773, %v5775
        %v5777 = vsel %vm5765, %v5755, %v5758
        %v5778 = vsel %vm5768, %v5764, 1326507024
        %v5779 = vsel %vm5767, %v5761, %v5778
        %v5780 = vsel %vm5766, %v5777, %v5779
        %v5781 = vshll.u32 %v5741, 8
        %v5782 = vand.u32 %v5781, 65535
        %v5783 = vshrl.u32 %v5781, 16
        %v5784 = vand.u32 %v5780, 65535
        %v5785 = vshrl.u32 %v5780, 16
        %v5786 = vmul.u32 %v5782, %v5784
        %v5787 = vmul.u32 %v5782, %v5785
        %v5788 = vmul.u32 %v5783, %v5784
        %v5789 = vmul.u32 %v5783, %v5785
        %v5790 = vshll.u32 %v5787, 16
        %v5791 = vshrl.u32 %v5787, 16
        %v5792 = vshll.u32 %v5788, 16
        %v5793 = vshrl.u32 %v5788, 16
        %vm5794 = vc.u32 %v5786, %v5790
        %v5795 = vsel %vm5794, 1, 0
        %v5796 = vadd.s32 %v5786, %v5790
        %v5797 = vadd.s32 %v5789, %v5795
        %vm5798 = vc.u32 %v5796, %v5792
        %v5799 = vsel %vm5798, 1, 0
        %v5800 = vadd.s32 %v5796, %v5792
        %v5801 = vadd.s32 %v5797, %v5799
        %v5802 = vadd.s32 %v5801, %v5791
        %v5803 = vadd.s32 %v5802, %v5793
        %v5804 = vand.u32 %v5781, 65535
        %v5805 = vshrl.u32 %v5781, 16
        %v5806 = vand.u32 %v5776, 65535
        %v5807 = vshrl.u32 %v5776, 16
        %v5808 = vmul.u32 %v5804, %v5806
        %v5809 = vmul.u32 %v5804, %v5807
        %v5810 = vmul.u32 %v5805, %v5806
        %v5811 = vmul.u32 %v5805, %v5807
        %v5812 = vshll.u32 %v5809, 16
        %v5813 = vshrl.u32 %v5809, 16
        %v5814 = vshll.u32 %v5810, 16
        %v5815 = vshrl.u32 %v5810, 16
        %vm5816 = vc.u32 %v5808, %v5812
        %v5817 = vsel %vm5816, 1, 0
        %v5818 = vadd.s32 %v5808, %v5812
        %v5819 = vadd.s32 %v5811, %v5817
        %vm5820 = vc.u32 %v5818, %v5814
        %v5821 = vsel %vm5820, 1, 0
        %v5822 = vadd.s32 %v5818, %v5814
        %v5823 = vadd.s32 %v5819, %v5821
        %v5824 = vadd.s32 %v5823, %v5813
        %v5825 = vadd.s32 %v5824, %v5815
        %v5826 = vmul.u32 %v5781, %v5772
        %v5827 = vadd.s32 %v5803, %v5822
        %vm5828 = vc.u32 %v5803, %v5822
        %v5829 = vadd.s32 %v5825, 1
        %v5830 = vsel %vm5828, %v5829, %v5825
        %v5831 = vadd.s32 %v5826, %v5830
        %v5832 = vadd.s32 %v5831, 536870912
        %v5833 = vshrl.u32 %v5832, 30
        %v5834 = vshll.u32 %v5833, 30
        %v5835 = vsub.s32 %v5831, %v5834
        %vm5836 = vcmp.lt.s32.totalorder %v5835, 0
        %v5837 = vsub.s32 0, %v5835
        %v5838 = vsel %vm5836, %v5837, %v5835
        %v5839 = vclz %v5838
        %v5840 = vsub.s32 %v5839, 2
        %vm5841 = vcmp.gt.s32.totalorder 0, %v5840
        %v5842 = vsel %vm5841, 0, %v5840
        %v5843 = vsub.s32 32, %v5842
        %v5844 = vshll.u32 %v5835, %v5842
        %v5845 = vshrl.u32 %v5827, %v5843
        %v5846 = vor.u32 %v5844, %v5845
        %v5847 = vsub.s32 4294967266, %v5842
        %v5848 = vadd.s32 %v5847, 127
        %v5849 = vshll.u32 %v5848, 23
        %v5850 = vor.u32 4788187, %v5849
        %v5851 = vand.u32 2147483647, %v5850
        %v5853 = vcvt.s32.f32 %v5846
        %v5854 = vmul.f32 %v5853, %v5851
        %v5855 = vxor.u32 %v5854, 2147483648
        %v5856 = vsel %vm5735, %v5855, %v5854
        %v5857 = vsub.s32 4, %v5833
        %v5858 = vsel %vm5735, %v5857, %v5833
        %v5859 = vsel %vm5734, %v2130, %v5856
        %v5860 = vsel %vm5734, 0, %v5858
        %v5861 = vmul.f32 %v5859, %v5859
        %v5862 = vmul.f32 %v5861, -0.001358992
        %v5863 = vadd.f32 %v5862, 0.041655596
        %v5864 = vmul.f32 %v5861, %v5863
        %v5865 = vadd.f32 %v5864, -0.4999988
        %v5866 = vmul.f32 %v5861, %v5865
        %v5867 = vadd.f32 1.0, %v5866
        %v5868 = vmul.f32 %v5859, %v5859
        %v5869 = vmul.f32 %v5868, -0.00019511016
        %v5870 = vadd.f32 %v5869, 0.008332121
        %v5871 = vmul.f32 %v5868, %v5870
        %v5872 = vadd.f32 %v5871, -0.16666654
        %v5873 = vmul.f32 %v5868, %v5872
        %v5874 = vadd.f32 %v5873, 1.0
        %v5875 = vmul.f32 %v5874, %v5859
        %vm5876 = vweird.f32 %v2130
        %v5877 = vadd.s32 %v5860, 3
        %v5878 = vand.u32 %v5877, 3
        %vm5879 = vcmp.lt.s32.totalorder %v5878, 2
        %vm5880 = vcmp.eq.s32.totalorder %v5878, 0
        %v5881 = vxor.u32 %v5875, 2147483648
        %v5882 = vsel %vm5880, %v5867, %v5881
        %vm5883 = vcmp.eq.s32.totalorder %v5878, 2
        %v5884 = vxor.u32 %v5867, 2147483648
        %v5885 = vsel %vm5883, %v5884, %v5875
        %v5886 = vsel %vm5879, %v5882, %v5885
        %v5887 = vsel %vm5876, nan, %v5886
        %v5888 = vand.u32 2147483647, %v850
        %vm5889 = vcmp.le.f32.partialorder %v5888, 0.7853982
        %vm5890 = vcmp.lt.s32.totalorder %v850, 0
        %v5891 = vand.u32 %v850, 2139095040
        %v5892 = vshrl.u32 %v5891, 23
        %v5893 = vsub.s32 %v5892, 127
        %v5894 = vand.u32 2147483647, %v850
        %v5895 = vand.u32 %v5894, 8388607
        %v5896 = vor.u32 %v5895, 8388608
        %v5897 = vsub.s32 0, %v5896
        %v5898 = vadd.s32 %v5893, 1
        %vm5899 = vcmp.gt.s32.totalorder %v5898, 0
        %v5900 = vsel %vm5899, %v5898, 0
        %v5901 = vshrl.u32 %v5900, 5
        %v5902 = vand.u32 %v5900, 31
        %v5903 = vsub.s32 32, %v5902
        %v5904 = vshrl.u32 683565275, %v5903
        %v5905 = vshll.u32 683565275, %v5902
        %v5906 = vshrl.u32 2475754826, %v5903
        %v5907 = vor.u32 %v5905, %v5906
        %v5908 = vshll.u32 2475754826, %v5902
        %v5909 = vshrl.u32 2131351028, %v5903
        %v5910 = vor.u32 %v5908, %v5909
        %v5911 = vshll.u32 2131351028, %v5902
        %v5912 = vshrl.u32 2102212464, %v5903
        %v5913 = vor.u32 %v5911, %v5912
        %v5914 = vshll.u32 2102212464, %v5902
        %v5915 = vshrl.u32 920167782, %v5903
        %v5916 = vor.u32 %v5914, %v5915
        %v5917 = vshll.u32 920167782, %v5902
        %v5918 = vshrl.u32 1326507024, %v5903
        %v5919 = vor.u32 %v5917, %v5918
        %vm5920 = vcmp.lt.s32.totalorder %v5901, 1
        %vm5921 = vcmp.lt.s32.totalorder %v5901, 2
        %vm5922 = vcmp.lt.s32.totalorder %v5901, 3
        %vm5923 = vcmp.lt.s32.totalorder %v5901, 4
        %v5924 = vsel %vm5920, %v5904, %v5907
        %v5925 = vsel %vm5923, %v5913, 2102212464
        %v5926 = vsel %vm5922, %v5910, %v5925
        %v5927 = vsel %vm5921, %v5924, %v5926
        %v5928 = vsel %vm5920, %v5907, %v5910
        %v5929 = vsel %vm5923, %v5916, 920167782
        %v5930 = vsel %vm5922, %v5913, %v5929
        %v5931 = vsel %vm5921, %v5928, %v5930
        %v5932 = vsel %vm5920, %v5910, %v5913
        %v5933 = vsel %vm5923, %v5919, 1326507024
        %v5934 = vsel %vm5922, %v5916, %v5933
        %v5935 = vsel %vm5921, %v5932, %v5934
        %v5936 = vshll.u32 %v5896, 8
        %v5937 = vand.u32 %v5936, 65535
        %v5938 = vshrl.u32 %v5936, 16
        %v5939 = vand.u32 %v5935, 65535
        %v5940 = vshrl.u32 %v5935, 16
        %v5941 = vmul.u32 %v5937, %v5939
        %v5942 = vmul.u32 %v5937, %v5940
        %v5943 = vmul.u32 %v5938, %v5939
        %v5944 = vmul.u32 %v5938, %v5940
        %v5945 = vshll.u32 %v5942, 16
        %v5946 = vshrl.u32 %v5942, 16
        %v5947 = vshll.u32 %v5943, 16
        %v5948 = vshrl.u32 %v5943, 16
        %vm5949 = vc.u32 %v5941, %v5945
        %v5950 = vsel %vm5949, 1, 0
        %v5951 = vadd.s32 %v5941, %v5945
        %v5952 = vadd.s32 %v5944, %v5950
        %vm5953 = vc.u32 %v5951, %v5947
        %v5954 = vsel %vm5953, 1, 0
        %v5955 = vadd.s32 %v5951, %v5947
        %v5956 = vadd.s32 %v5952, %v5954
        %v5957 = vadd.s32 %v5956, %v5946
        %v5958 = vadd.s32 %v5957, %v5948
        %v5959 = vand.u32 %v5936, 65535
        %v5960 = vshrl.u32 %v5936, 16
        %v5961 = vand.u32 %v5931, 65535
        %v5962 = vshrl.u32 %v5931, 16
        %v5963 = vmul.u32 %v5959, %v5961
        %v5964 = vmul.u32 %v5959, %v5962
        %v5965 = vmul.u32 %v5960, %v5961
        %v5966 = vmul.u32 %v5960, %v5962
        %v5967 = vshll.u32 %v5964, 16
        %v5968 = vshrl.u32 %v5964, 16
        %v5969 = vshll.u32 %v5965, 16
        %v5970 = vshrl.u32 %v5965, 16
        %vm5971 = vc.u32 %v5963, %v5967
        %v5972 = vsel %vm5971, 1, 0
        %v5973 = vadd.s32 %v5963, %v5967
        %v5974 = vadd.s32 %v5966, %v5972
        %vm5975 = vc.u32 %v5973, %v5969
        %v5976 = vsel %vm5975, 1, 0
        %v5977 = vadd.s32 %v5973, %v5969
        %v5978 = vadd.s32 %v5974, %v5976
        %v5979 = vadd.s32 %v5978, %v5968
        %v5980 = vadd.s32 %v5979, %v5970
        %v5981 = vmul.u32 %v5936, %v5927
        %v5982 = vadd.s32 %v5958, %v5977
        %vm5983 = vc.u32 %v5958, %v5977
        %v5984 = vadd.s32 %v5980, 1
        %v5985 = vsel %vm5983, %v5984, %v5980
        %v5986 = vadd.s32 %v5981, %v5985
        %v5987 = vadd.s32 %v5986, 536870912
        %v5988 = vshrl.u32 %v5987, 30
        %v5989 = vshll.u32 %v5988, 30
        %v5990 = vsub.s32 %v5986, %v5989
        %vm5991 = vcmp.lt.s32.totalorder %v5990, 0
        %v5992 = vsub.s32 0, %v5990
        %v5993 = vsel %vm5991, %v5992, %v5990
        %v5994 = vclz %v5993
        %v5995 = vsub.s32 %v5994, 2
        %vm5996 = vcmp.gt.s32.totalorder 0, %v5995
        %v5997 = vsel %vm5996, 0, %v5995
        %v5998 = vsub.s32 32, %v5997
        %v5999 = vshll.u32 %v5990, %v5997
        %v6000 = vshrl.u32 %v5982, %v5998
        %v6001 = vor.u32 %v5999, %v6000
        %v6002 = vsub.s32 4294967266, %v5997
        %v6003 = vadd.s32 %v6002, 127
        %v6004 = vshll.u32 %v6003, 23
        %v6005 = vor.u32 4788187, %v6004
        %v6006 = vand.u32 2147483647, %v6005
        %v6008 = vcvt.s32.f32 %v6001
        %v6009 = vmul.f32 %v6008, %v6006
        %v6010 = vxor.u32 %v6009, 2147483648
        %v6011 = vsel %vm5890, %v6010, %v6009
        %v6012 = vsub.s32 4, %v5988
        %v6013 = vsel %vm5890, %v6012, %v5988
        %v6014 = vsel %vm5889, %v850, %v6011
        %v6015 = vsel %vm5889, 0, %v6013
        %v6016 = vmul.f32 %v6014, %v6014
        %v6017 = vmul.f32 %v6016, -0.001358992
        %v6018 = vadd.f32 %v6017, 0.041655596
        %v6019 = vmul.f32 %v6016, %v6018
        %v6020 = vadd.f32 %v6019, -0.4999988
        %v6021 = vmul.f32 %v6016, %v6020
        %v6022 = vadd.f32 1.0, %v6021
        %v6023 = vmul.f32 %v6014, %v6014
        %v6024 = vmul.f32 %v6023, -0.00019511016
        %v6025 = vadd.f32 %v6024, 0.008332121
        %v6026 = vmul.f32 %v6023, %v6025
        %v6027 = vadd.f32 %v6026, -0.16666654
        %v6028 = vmul.f32 %v6023, %v6027
        %v6029 = vadd.f32 %v6028, 1.0
        %v6030 = vmul.f32 %v6029, %v6014
        %vm6031 = vweird.f32 %v850
        %v6032 = vadd.s32 %v6015, 3
        %v6033 = vand.u32 %v6032, 3
        %vm6034 = vcmp.lt.s32.totalorder %v6033, 2
        %vm6035 = vcmp.eq.s32.totalorder %v6033, 0
        %v6036 = vxor.u32 %v6030, 2147483648
        %v6037 = vsel %vm6035, %v6022, %v6036
        %vm6038 = vcmp.eq.s32.totalorder %v6033, 2
        %v6039 = vxor.u32 %v6022, 2147483648
        %v6040 = vsel %vm6038, %v6039, %v6030
        %v6041 = vsel %vm6034, %v6037, %v6040
        %v6042 = vsel %vm6031, nan, %v6041
        %v6043 = vand.u32 2147483647, %v1492
        %vm6044 = vcmp.le.f32.partialorder %v6043, 0.7853982
        %vm6045 = vcmp.lt.s32.totalorder %v1492, 0
        %v6046 = vand.u32 %v1492, 2139095040
        %v6047 = vshrl.u32 %v6046, 23
        %v6048 = vsub.s32 %v6047, 127
        %v6049 = vand.u32 2147483647, %v1492
        %v6050 = vand.u32 %v6049, 8388607
        %v6051 = vor.u32 %v6050, 8388608
        %v6052 = vsub.s32 0, %v6051
        %v6053 = vadd.s32 %v6048, 1
        %vm6054 = vcmp.gt.s32.totalorder %v6053, 0
        %v6055 = vsel %vm6054, %v6053, 0
        %v6056 = vshrl.u32 %v6055, 5
        %v6057 = vand.u32 %v6055, 31
        %v6058 = vsub.s32 32, %v6057
        %v6059 = vshrl.u32 683565275, %v6058
        %v6060 = vshll.u32 683565275, %v6057
        %v6061 = vshrl.u32 2475754826, %v6058
        %v6062 = vor.u32 %v6060, %v6061
        %v6063 = vshll.u32 2475754826, %v6057
        %v6064 = vshrl.u32 2131351028, %v6058
        %v6065 = vor.u32 %v6063, %v6064
        %v6066 = vshll.u32 2131351028, %v6057
        %v6067 = vshrl.u32 2102212464, %v6058
        %v6068 = vor.u32 %v6066, %v6067
        %v6069 = vshll.u32 2102212464, %v6057
        %v6070 = vshrl.u32 920167782, %v6058
        %v6071 = vor.u32 %v6069, %v6070
        %v6072 = vshll.u32 920167782, %v6057
        %v6073 = vshrl.u32 1326507024, %v6058
        %v6074 = vor.u32 %v6072, %v6073
        %vm6075 = vcmp.lt.s32.totalorder %v6056, 1
        %vm6076 = vcmp.lt.s32.totalorder %v6056, 2
        %vm6077 = vcmp.lt.s32.totalorder %v6056, 3
        %vm6078 = vcmp.lt.s32.totalorder %v6056, 4
        %v6079 = vsel %vm6075, %v6059, %v6062
        %v6080 = vsel %vm6078, %v6068, 2102212464
        %v6081 = vsel %vm6077, %v6065, %v6080
        %v6082 = vsel %vm6076, %v6079, %v6081
        %v6083 = vsel %vm6075, %v6062, %v6065
        %v6084 = vsel %vm6078, %v6071, 920167782
        %v6085 = vsel %vm6077, %v6068, %v6084
        %v6086 = vsel %vm6076, %v6083, %v6085
        %v6087 = vsel %vm6075, %v6065, %v6068
        %v6088 = vsel %vm6078, %v6074, 1326507024
        %v6089 = vsel %vm6077, %v6071, %v6088
        %v6090 = vsel %vm6076, %v6087, %v6089
        %v6091 = vshll.u32 %v6051, 8
        %v6092 = vand.u32 %v6091, 65535
        %v6093 = vshrl.u32 %v6091, 16
        %v6094 = vand.u32 %v6090, 65535
        %v6095 = vshrl.u32 %v6090, 16
        %v6096 = vmul.u32 %v6092, %v6094
        %v6097 = vmul.u32 %v6092, %v6095
        %v6098 = vmul.u32 %v6093, %v6094
        %v6099 = vmul.u32 %v6093, %v6095
        %v6100 = vshll.u32 %v6097, 16
        %v6101 = vshrl.u32 %v6097, 16
        %v6102 = vshll.u32 %v6098, 16
        %v6103 = vshrl.u32 %v6098, 16
        %vm6104 = vc.u32 %v6096, %v6100
        %v6105 = vsel %vm6104, 1, 0
        %v6106 = vadd.s32 %v6096, %v6100
        %v6107 = vadd.s32 %v6099, %v6105
        %vm6108 = vc.u32 %v6106, %v6102
        %v6109 = vsel %vm6108, 1, 0
        %v6110 = vadd.s32 %v6106, %v6102
        %v6111 = vadd.s32 %v6107, %v6109
        %v6112 = vadd.s32 %v6111, %v6101
        %v6113 = vadd.s32 %v6112, %v6103
        %v6114 = vand.u32 %v6091, 65535
        %v6115 = vshrl.u32 %v6091, 16
        %v6116 = vand.u32 %v6086, 65535
        %v6117 = vshrl.u32 %v6086, 16
        %v6118 = vmul.u32 %v6114, %v6116
        %v6119 = vmul.u32 %v6114, %v6117
        %v6120 = vmul.u32 %v6115, %v6116
        %v6121 = vmul.u32 %v6115, %v6117
        %v6122 = vshll.u32 %v6119, 16
        %v6123 = vshrl.u32 %v6119, 16
        %v6124 = vshll.u32 %v6120, 16
        %v6125 = vshrl.u32 %v6120, 16
        %vm6126 = vc.u32 %v6118, %v6122
        %v6127 = vsel %vm6126, 1, 0
        %v6128 = vadd.s32 %v6118, %v6122
        %v6129 = vadd.s32 %v6121, %v6127
        %vm6130 = vc.u32 %v6128, %v6124
        %v6131 = vsel %vm6130, 1, 0
        %v6132 = vadd.s32 %v6128, %v6124
        %v6133 = vadd.s32 %v6129, %v6131
        %v6134 = vadd.s32 %v6133, %v6123
        %v6135 = vadd.s32 %v6134, %v6125
        %v6136 = vmul.u32 %v6091, %v6082
        %v6137 = vadd.s32 %v6113, %v6132
        %vm6138 = vc.u32 %v6113, %v6132
        %v6139 = vadd.s32 %v6135, 1
        %v6140 = vsel %vm6138, %v6139, %v6135
        %v6141 = vadd.s32 %v6136, %v6140
        %v6142 = vadd.s32 %v6141, 536870912
        %v6143 = vshrl.u32 %v6142, 30
        %v6144 = vshll.u32 %v6143, 30
        %v6145 = vsub.s32 %v6141, %v6144
        %vm6146 = vcmp.lt.s32.totalorder %v6145, 0
        %v6147 = vsub.s32 0, %v6145
        %v6148 = vsel %vm6146, %v6147, %v6145
        %v6149 = vclz %v6148
        %v6150 = vsub.s32 %v6149, 2
        %vm6151 = vcmp.gt.s32.totalorder 0, %v6150
        %v6152 = vsel %vm6151, 0, %v6150
        %v6153 = vsub.s32 32, %v6152
        %v6154 = vshll.u32 %v6145, %v6152
        %v6155 = vshrl.u32 %v6137, %v6153
        %v6156 = vor.u32 %v6154, %v6155
        %v6157 = vsub.s32 4294967266, %v6152
        %v6158 = vadd.s32 %v6157, 127
        %v6159 = vshll.u32 %v6158, 23
        %v6160 = vor.u32 4788187, %v6159
        %v6161 = vand.u32 2147483647, %v6160
        %v6163 = vcvt.s32.f32 %v6156
        %v6164 = vmul.f32 %v6163, %v6161
        %v6165 = vxor.u32 %v6164, 2147483648
        %v6166 = vsel %vm6045, %v6165, %v6164
        %v6167 = vsub.s32 4, %v6143
        %v6168 = vsel %vm6045, %v6167, %v6143
        %v6169 = vsel %vm6044, %v1492, %v6166
        %v6170 = vsel %vm6044, 0, %v6168
        %v6171 = vmul.f32 %v6169, %v6169
        %v6172 = vmul.f32 %v6171, -0.001358992
        %v6173 = vadd.f32 %v6172, 0.041655596
        %v6174 = vmul.f32 %v6171, %v6173
        %v6175 = vadd.f32 %v6174, -0.4999988
        %v6176 = vmul.f32 %v6171, %v6175
        %v6177 = vadd.f32 1.0, %v6176
        %v6178 = vmul.f32 %v6169, %v6169
        %v6179 = vmul.f32 %v6178, -0.00019511016
        %v6180 = vadd.f32 %v6179, 0.008332121
        %v6181 = vmul.f32 %v6178, %v6180
        %v6182 = vadd.f32 %v6181, -0.16666654
        %v6183 = vmul.f32 %v6178, %v6182
        %v6184 = vadd.f32 %v6183, 1.0
        %v6185 = vmul.f32 %v6184, %v6169
        %vm6186 = vweird.f32 %v1492
        %v6187 = vadd.s32 %v6170, 3
        %v6188 = vand.u32 %v6187, 3
        %vm6189 = vcmp.lt.s32.totalorder %v6188, 2
        %vm6190 = vcmp.eq.s32.totalorder %v6188, 0
        %v6191 = vxor.u32 %v6185, 2147483648
        %v6192 = vsel %vm6190, %v6177, %v6191
        %vm6193 = vcmp.eq.s32.totalorder %v6188, 2
        %v6194 = vxor.u32 %v6177, 2147483648
        %v6195 = vsel %vm6193, %v6194, %v6185
        %v6196 = vsel %vm6189, %v6192, %v6195
        %v6197 = vsel %vm6186, nan, %v6196
        %v6198 = vand.u32 2147483647, %v2134
        %vm6199 = vcmp.le.f32.partialorder %v6198, 0.7853982
        %vm6200 = vcmp.lt.s32.totalorder %v2134, 0
        %v6201 = vand.u32 %v2134, 2139095040
        %v6202 = vshrl.u32 %v6201, 23
        %v6203 = vsub.s32 %v6202, 127
        %v6204 = vand.u32 2147483647, %v2134
        %v6205 = vand.u32 %v6204, 8388607
        %v6206 = vor.u32 %v6205, 8388608
        %v6207 = vsub.s32 0, %v6206
        %v6208 = vadd.s32 %v6203, 1
        %vm6209 = vcmp.gt.s32.totalorder %v6208, 0
        %v6210 = vsel %vm6209, %v6208, 0
        %v6211 = vshrl.u32 %v6210, 5
        %v6212 = vand.u32 %v6210, 31
        %v6213 = vsub.s32 32, %v6212
        %v6214 = vshrl.u32 683565275, %v6213
        %v6215 = vshll.u32 683565275, %v6212
        %v6216 = vshrl.u32 2475754826, %v6213
        %v6217 = vor.u32 %v6215, %v6216
        %v6218 = vshll.u32 2475754826, %v6212
        %v6219 = vshrl.u32 2131351028, %v6213
        %v6220 = vor.u32 %v6218, %v6219
        %v6221 = vshll.u32 2131351028, %v6212
        %v6222 = vshrl.u32 2102212464, %v6213
        %v6223 = vor.u32 %v6221, %v6222
        %v6224 = vshll.u32 2102212464, %v6212
        %v6225 = vshrl.u32 920167782, %v6213
        %v6226 = vor.u32 %v6224, %v6225
        %v6227 = vshll.u32 920167782, %v6212
        %v6228 = vshrl.u32 1326507024, %v6213
        %v6229 = vor.u32 %v6227, %v6228
        %vm6230 = vcmp.lt.s32.totalorder %v6211, 1
        %vm6231 = vcmp.lt.s32.totalorder %v6211, 2
        %vm6232 = vcmp.lt.s32.totalorder %v6211, 3
        %vm6233 = vcmp.lt.s32.totalorder %v6211, 4
        %v6234 = vsel %vm6230, %v6214, %v6217
        %v6235 = vsel %vm6233, %v6223, 2102212464
        %v6236 = vsel %vm6232, %v6220, %v6235
        %v6237 = vsel %vm6231, %v6234, %v6236
        %v6238 = vsel %vm6230, %v6217, %v6220
        %v6239 = vsel %vm6233, %v6226, 920167782
        %v6240 = vsel %vm6232, %v6223, %v6239
        %v6241 = vsel %vm6231, %v6238, %v6240
        %v6242 = vsel %vm6230, %v6220, %v6223
        %v6243 = vsel %vm6233, %v6229, 1326507024
        %v6244 = vsel %vm6232, %v6226, %v6243
        %v6245 = vsel %vm6231, %v6242, %v6244
        %v6246 = vshll.u32 %v6206, 8
        %v6247 = vand.u32 %v6246, 65535
        %v6248 = vshrl.u32 %v6246, 16
        %v6249 = vand.u32 %v6245, 65535
        %v6250 = vshrl.u32 %v6245, 16
        %v6251 = vmul.u32 %v6247, %v6249
        %v6252 = vmul.u32 %v6247, %v6250
        %v6253 = vmul.u32 %v6248, %v6249
        %v6254 = vmul.u32 %v6248, %v6250
        %v6255 = vshll.u32 %v6252, 16
        %v6256 = vshrl.u32 %v6252, 16
        %v6257 = vshll.u32 %v6253, 16
        %v6258 = vshrl.u32 %v6253, 16
        %vm6259 = vc.u32 %v6251, %v6255
        %v6260 = vsel %vm6259, 1, 0
        %v6261 = vadd.s32 %v6251, %v6255
        %v6262 = vadd.s32 %v6254, %v6260
        %vm6263 = vc.u32 %v6261, %v6257
        %v6264 = vsel %vm6263, 1, 0
        %v6265 = vadd.s32 %v6261, %v6257
        %v6266 = vadd.s32 %v6262, %v6264
        %v6267 = vadd.s32 %v6266, %v6256
        %v6268 = vadd.s32 %v6267, %v6258
        %v6269 = vand.u32 %v6246, 65535
        %v6270 = vshrl.u32 %v6246, 16
        %v6271 = vand.u32 %v6241, 65535
        %v6272 = vshrl.u32 %v6241, 16
        %v6273 = vmul.u32 %v6269, %v6271
        %v6274 = vmul.u32 %v6269, %v6272
        %v6275 = vmul.u32 %v6270, %v6271
        %v6276 = vmul.u32 %v6270, %v6272
        %v6277 = vshll.u32 %v6274, 16
        %v6278 = vshrl.u32 %v6274, 16
        %v6279 = vshll.u32 %v6275, 16
        %v6280 = vshrl.u32 %v6275, 16
        %vm6281 = vc.u32 %v6273, %v6277
        %v6282 = vsel %vm6281, 1, 0
        %v6283 = vadd.s32 %v6273, %v6277
        %v6284 = vadd.s32 %v6276, %v6282
        %vm6285 = vc.u32 %v6283, %v6279
        %v6286 = vsel %vm6285, 1, 0
        %v6287 = vadd.s32 %v6283, %v6279
        %v6288 = vadd.s32 %v6284, %v6286
        %v6289 = vadd.s32 %v6288, %v6278
        %v6290 = vadd.s32 %v6289, %v6280
        %v6291 = vmul.u32 %v6246, %v6237
        %v6292 = vadd.s32 %v6268, %v6287
        %vm6293 = vc.u32 %v6268, %v6287
        %v6294 = vadd.s32 %v6290, 1
        %v6295 = vsel %vm6293, %v6294, %v6290
        %v6296 = vadd.s32 %v6291, %v6295
        %v6297 = vadd.s32 %v6296, 536870912
        %v6298 = vshrl.u32 %v6297, 30
        %v6299 = vshll.u32 %v6298, 30
        %v6300 = vsub.s32 %v6296, %v6299
        %vm6301 = vcmp.lt.s32.totalorder %v6300, 0
        %v6302 = vsub.s32 0, %v6300
        %v6303 = vsel %vm6301, %v6302, %v6300
        %v6304 = vclz %v6303
        %v6305 = vsub.s32 %v6304, 2
        %vm6306 = vcmp.gt.s32.totalorder 0, %v6305
        %v6307 = vsel %vm6306, 0, %v6305
        %v6308 = vsub.s32 32, %v6307
        %v6309 = vshll.u32 %v6300, %v6307
        %v6310 = vshrl.u32 %v6292, %v6308
        %v6311 = vor.u32 %v6309, %v6310
        %v6312 = vsub.s32 4294967266, %v6307
        %v6313 = vadd.s32 %v6312, 127
        %v6314 = vshll.u32 %v6313, 23
        %v6315 = vor.u32 4788187, %v6314
        %v6316 = vand.u32 2147483647, %v6315
        %v6318 = vcvt.s32.f32 %v6311
        %v6319 = vmul.f32 %v6318, %v6316
        %v6320 = vxor.u32 %v6319, 2147483648
        %v6321 = vsel %vm6200, %v6320, %v6319
        %v6322 = vsub.s32 4, %v6298
        %v6323 = vsel %vm6200, %v6322, %v6298
        %v6324 = vsel %vm6199, %v2134, %v6321
        %v6325 = vsel %vm6199, 0, %v6323
        %v6326 = vmul.f32 %v6324, %v6324
        %v6327 = vmul.f32 %v6326, -0.001358992
        %v6328 = vadd.f32 %v6327, 0.041655596
        %v6329 = vmul.f32 %v6326, %v6328
        %v6330 = vadd.f32 %v6329, -0.4999988
        %v6331 = vmul.f32 %v6326, %v6330
        %v6332 = vadd.f32 1.0, %v6331
        %v6333 = vmul.f32 %v6324, %v6324
        %v6334 = vmul.f32 %v6333, -0.00019511016
        %v6335 = vadd.f32 %v6334, 0.008332121
        %v6336 = vmul.f32 %v6333, %v6335
        %v6337 = vadd.f32 %v6336, -0.16666654
        %v6338 = vmul.f32 %v6333, %v6337
        %v6339 = vadd.f32 %v6338, 1.0
        %v6340 = vmul.f32 %v6339, %v6324
        %vm6341 = vweird.f32 %v2134
        %v6342 = vadd.s32 %v6325, 3
        %v6343 = vand.u32 %v6342, 3
        %vm6344 = vcmp.lt.s32.totalorder %v6343, 2
        %vm6345 = vcmp.eq.s32.totalorder %v6343, 0
        %v6346 = vxor.u32 %v6340, 2147483648
        %v6347 = vsel %vm6345, %v6332, %v6346
        %vm6348 = vcmp.eq.s32.totalorder %v6343, 2
        %v6349 = vxor.u32 %v6332, 2147483648
        %v6350 = vsel %vm6348, %v6349, %v6340
        %v6351 = vsel %vm6344, %v6347, %v6350
        %v6352 = vsel %vm6341, nan, %v6351
        %v6353 = vand.u32 2147483647, %v854
        %vm6354 = vcmp.le.f32.partialorder %v6353, 0.7853982
        %vm6355 = vcmp.lt.s32.totalorder %v854, 0
        %v6356 = vand.u32 %v854, 2139095040
        %v6357 = vshrl.u32 %v6356, 23
        %v6358 = vsub.s32 %v6357, 127
        %v6359 = vand.u32 2147483647, %v854
        %v6360 = vand.u32 %v6359, 8388607
        %v6361 = vor.u32 %v6360, 8388608
        %v6362 = vsub.s32 0, %v6361
        %v6363 = vadd.s32 %v6358, 1
        %vm6364 = vcmp.gt.s32.totalorder %v6363, 0
        %v6365 = vsel %vm6364, %v6363, 0
        %v6366 = vshrl.u32 %v6365, 5
        %v6367 = vand.u32 %v6365, 31
        %v6368 = vsub.s32 32, %v6367
        %v6369 = vshrl.u32 683565275, %v6368
        %v6370 = vshll.u32 683565275, %v6367
        %v6371 = vshrl.u32 2475754826, %v6368
        %v6372 = vor.u32 %v6370, %v6371
        %v6373 = vshll.u32 2475754826, %v6367
        %v6374 = vshrl.u32 2131351028, %v6368
        %v6375 = vor.u32 %v6373, %v6374
        %v6376 = vshll.u32 2131351028, %v6367
        %v6377 = vshrl.u32 2102212464, %v6368
        %v6378 = vor.u32 %v6376, %v6377
        %v6379 = vshll.u32 2102212464, %v6367
        %v6380 = vshrl.u32 920167782, %v6368
        %v6381 = vor.u32 %v6379, %v6380
        %v6382 = vshll.u32 920167782, %v6367
        %v6383 = vshrl.u32 1326507024, %v6368
        %v6384 = vor.u32 %v6382, %v6383
        %vm6385 = vcmp.lt.s32.totalorder %v6366, 1
        %vm6386 = vcmp.lt.s32.totalorder %v6366, 2
        %vm6387 = vcmp.lt.s32.totalorder %v6366, 3
        %vm6388 = vcmp.lt.s32.totalorder %v6366, 4
        %v6389 = vsel %vm6385, %v6369, %v6372
        %v6390 = vsel %vm6388, %v6378, 2102212464
        %v6391 = vsel %vm6387, %v6375, %v6390
        %v6392 = vsel %vm6386, %v6389, %v6391
        %v6393 = vsel %vm6385, %v6372, %v6375
        %v6394 = vsel %vm6388, %v6381, 920167782
        %v6395 = vsel %vm6387, %v6378, %v6394
        %v6396 = vsel %vm6386, %v6393, %v6395
        %v6397 = vsel %vm6385, %v6375, %v6378
        %v6398 = vsel %vm6388, %v6384, 1326507024
        %v6399 = vsel %vm6387, %v6381, %v6398
        %v6400 = vsel %vm6386, %v6397, %v6399
        %v6401 = vshll.u32 %v6361, 8
        %v6402 = vand.u32 %v6401, 65535
        %v6403 = vshrl.u32 %v6401, 16
        %v6404 = vand.u32 %v6400, 65535
        %v6405 = vshrl.u32 %v6400, 16
        %v6406 = vmul.u32 %v6402, %v6404
        %v6407 = vmul.u32 %v6402, %v6405
        %v6408 = vmul.u32 %v6403, %v6404
        %v6409 = vmul.u32 %v6403, %v6405
        %v6410 = vshll.u32 %v6407, 16
        %v6411 = vshrl.u32 %v6407, 16
        %v6412 = vshll.u32 %v6408, 16
        %v6413 = vshrl.u32 %v6408, 16
        %vm6414 = vc.u32 %v6406, %v6410
        %v6415 = vsel %vm6414, 1, 0
        %v6416 = vadd.s32 %v6406, %v6410
        %v6417 = vadd.s32 %v6409, %v6415
        %vm6418 = vc.u32 %v6416, %v6412
        %v6419 = vsel %vm6418, 1, 0
        %v6420 = vadd.s32 %v6416, %v6412
        %v6421 = vadd.s32 %v6417, %v6419
        %v6422 = vadd.s32 %v6421, %v6411
        %v6423 = vadd.s32 %v6422, %v6413
        %v6424 = vand.u32 %v6401, 65535
        %v6425 = vshrl.u32 %v6401, 16
        %v6426 = vand.u32 %v6396, 65535
        %v6427 = vshrl.u32 %v6396, 16
        %v6428 = vmul.u32 %v6424, %v6426
        %v6429 = vmul.u32 %v6424, %v6427
        %v6430 = vmul.u32 %v6425, %v6426
        %v6431 = vmul.u32 %v6425, %v6427
        %v6432 = vshll.u32 %v6429, 16
        %v6433 = vshrl.u32 %v6429, 16
        %v6434 = vshll.u32 %v6430, 16
        %v6435 = vshrl.u32 %v6430, 16
        %vm6436 = vc.u32 %v6428, %v6432
        %v6437 = vsel %vm6436, 1, 0
        %v6438 = vadd.s32 %v6428, %v6432
        %v6439 = vadd.s32 %v6431, %v6437
        %vm6440 = vc.u32 %v6438, %v6434
        %v6441 = vsel %vm6440, 1, 0
        %v6442 = vadd.s32 %v6438, %v6434
        %v6443 = vadd.s32 %v6439, %v6441
        %v6444 = vadd.s32 %v6443, %v6433
        %v6445 = vadd.s32 %v6444, %v6435
        %v6446 = vmul.u32 %v6401, %v6392
        %v6447 = vadd.s32 %v6423, %v6442
        %vm6448 = vc.u32 %v6423, %v6442
        %v6449 = vadd.s32 %v6445, 1
        %v6450 = vsel %vm6448, %v6449, %v6445
        %v6451 = vadd.s32 %v6446, %v6450
        %v6452 = vadd.s32 %v6451, 536870912
        %v6453 = vshrl.u32 %v6452, 30
        %v6454 = vshll.u32 %v6453, 30
        %v6455 = vsub.s32 %v6451, %v6454
        %vm6456 = vcmp.lt.s32.totalorder %v6455, 0
        %v6457 = vsub.s32 0, %v6455
        %v6458 = vsel %vm6456, %v6457, %v6455
        %v6459 = vclz %v6458
        %v6460 = vsub.s32 %v6459, 2
        %vm6461 = vcmp.gt.s32.totalorder 0, %v6460
        %v6462 = vsel %vm6461, 0, %v6460
        %v6463 = vsub.s32 32, %v6462
        %v6464 = vshll.u32 %v6455, %v6462
        %v6465 = vshrl.u32 %v6447, %v6463
        %v6466 = vor.u32 %v6464, %v6465
        %v6467 = vsub.s32 4294967266, %v6462
        %v6468 = vadd.s32 %v6467, 127
        %v6469 = vshll.u32 %v6468, 23
        %v6470 = vor.u32 4788187, %v6469
        %v6471 = vand.u32 2147483647, %v6470
        %v6473 = vcvt.s32.f32 %v6466
        %v6474 = vmul.f32 %v6473, %v6471
        %v6475 = vxor.u32 %v6474, 2147483648
        %v6476 = vsel %vm6355, %v6475, %v6474
        %v6477 = vsub.s32 4, %v6453
        %v6478 = vsel %vm6355, %v6477, %v6453
        %v6479 = vsel %vm6354, %v854, %v6476
        %v6480 = vsel %vm6354, 0, %v6478
        %v6481 = vmul.f32 %v6479, %v6479
        %v6482 = vmul.f32 %v6481, -0.001358992
        %v6483 = vadd.f32 %v6482, 0.041655596
        %v6484 = vmul.f32 %v6481, %v6483
        %v6485 = vadd.f32 %v6484, -0.4999988
        %v6486 = vmul.f32 %v6481, %v6485
        %v6487 = vadd.f32 1.0, %v6486
        %v6488 = vmul.f32 %v6479, %v6479
        %v6489 = vmul.f32 %v6488, -0.00019511016
        %v6490 = vadd.f32 %v6489, 0.008332121
        %v6491 = vmul.f32 %v6488, %v6490
        %v6492 = vadd.f32 %v6491, -0.16666654
        %v6493 = vmul.f32 %v6488, %v6492
        %v6494 = vadd.f32 %v6493, 1.0
        %v6495 = vmul.f32 %v6494, %v6479
        %vm6496 = vweird.f32 %v854
        %v6497 = vadd.s32 %v6480, 3
        %v6498 = vand.u32 %v6497, 3
        %vm6499 = vcmp.lt.s32.totalorder %v6498, 2
        %vm6500 = vcmp.eq.s32.totalorder %v6498, 0
        %v6501 = vxor.u32 %v6495, 2147483648
        %v6502 = vsel %vm6500, %v6487, %v6501
        %vm6503 = vcmp.eq.s32.totalorder %v6498, 2
        %v6504 = vxor.u32 %v6487, 2147483648
        %v6505 = vsel %vm6503, %v6504, %v6495
        %v6506 = vsel %vm6499, %v6502, %v6505
        %v6507 = vsel %vm6496, nan, %v6506
        %v6508 = vand.u32 2147483647, %v1496
        %vm6509 = vcmp.le.f32.partialorder %v6508, 0.7853982
        %vm6510 = vcmp.lt.s32.totalorder %v1496, 0
        %v6511 = vand.u32 %v1496, 2139095040
        %v6512 = vshrl.u32 %v6511, 23
        %v6513 = vsub.s32 %v6512, 127
        %v6514 = vand.u32 2147483647, %v1496
        %v6515 = vand.u32 %v6514, 8388607
        %v6516 = vor.u32 %v6515, 8388608
        %v6517 = vsub.s32 0, %v6516
        %v6518 = vadd.s32 %v6513, 1
        %vm6519 = vcmp.gt.s32.totalorder %v6518, 0
        %v6520 = vsel %vm6519, %v6518, 0
        %v6521 = vshrl.u32 %v6520, 5
        %v6522 = vand.u32 %v6520, 31
        %v6523 = vsub.s32 32, %v6522
        %v6524 = vshrl.u32 683565275, %v6523
        %v6525 = vshll.u32 683565275, %v6522
        %v6526 = vshrl.u32 2475754826, %v6523
        %v6527 = vor.u32 %v6525, %v6526
        %v6528 = vshll.u32 2475754826, %v6522
        %v6529 = vshrl.u32 2131351028, %v6523
        %v6530 = vor.u32 %v6528, %v6529
        %v6531 = vshll.u32 2131351028, %v6522
        %v6532 = vshrl.u32 2102212464, %v6523
        %v6533 = vor.u32 %v6531, %v6532
        %v6534 = vshll.u32 2102212464, %v6522
        %v6535 = vshrl.u32 920167782, %v6523
        %v6536 = vor.u32 %v6534, %v6535
        %v6537 = vshll.u32 920167782, %v6522
        %v6538 = vshrl.u32 1326507024, %v6523
        %v6539 = vor.u32 %v6537, %v6538
        %vm6540 = vcmp.lt.s32.totalorder %v6521, 1
        %vm6541 = vcmp.lt.s32.totalorder %v6521, 2
        %vm6542 = vcmp.lt.s32.totalorder %v6521, 3
        %vm6543 = vcmp.lt.s32.totalorder %v6521, 4
        %v6544 = vsel %vm6540, %v6524, %v6527
        %v6545 = vsel %vm6543, %v6533, 2102212464
        %v6546 = vsel %vm6542, %v6530, %v6545
        %v6547 = vsel %vm6541, %v6544, %v6546
        %v6548 = vsel %vm6540, %v6527, %v6530
        %v6549 = vsel %vm6543, %v6536, 920167782
        %v6550 = vsel %vm6542, %v6533, %v6549
        %v6551 = vsel %vm6541, %v6548, %v6550
        %v6552 = vsel %vm6540, %v6530, %v6533
        %v6553 = vsel %vm6543, %v6539, 1326507024
        %v6554 = vsel %vm6542, %v6536, %v6553
        %v6555 = vsel %vm6541, %v6552, %v6554
        %v6556 = vshll.u32 %v6516, 8
        %v6557 = vand.u32 %v6556, 65535
        %v6558 = vshrl.u32 %v6556, 16
        %v6559 = vand.u32 %v6555, 65535
        %v6560 = vshrl.u32 %v6555, 16
        %v6561 = vmul.u32 %v6557, %v6559
        %v6562 = vmul.u32 %v6557, %v6560
        %v6563 = vmul.u32 %v6558, %v6559
        %v6564 = vmul.u32 %v6558, %v6560
        %v6565 = vshll.u32 %v6562, 16
        %v6566 = vshrl.u32 %v6562, 16
        %v6567 = vshll.u32 %v6563, 16
        %v6568 = vshrl.u32 %v6563, 16
        %vm6569 = vc.u32 %v6561, %v6565
        %v6570 = vsel %vm6569, 1, 0
        %v6571 = vadd.s32 %v6561, %v6565
        %v6572 = vadd.s32 %v6564, %v6570
        %vm6573 = vc.u32 %v6571, %v6567
        %v6574 = vsel %vm6573, 1, 0
        %v6575 = vadd.s32 %v6571, %v6567
        %v6576 = vadd.s32 %v6572, %v6574
        %v6577 = vadd.s32 %v6576, %v6566
        %v6578 = vadd.s32 %v6577, %v6568
        %v6579 = vand.u32 %v6556, 65535
        %v6580 = vshrl.u32 %v6556, 16
        %v6581 = vand.u32 %v6551, 65535
        %v6582 = vshrl.u32 %v6551, 16
        %v6583 = vmul.u32 %v6579, %v6581
        %v6584 = vmul.u32 %v6579, %v6582
        %v6585 = vmul.u32 %v6580, %v6581
        %v6586 = vmul.u32 %v6580, %v6582
        %v6587 = vshll.u32 %v6584, 16
        %v6588 = vshrl.u32 %v6584, 16
        %v6589 = vshll.u32 %v6585, 16
        %v6590 = vshrl.u32 %v6585, 16
        %vm6591 = vc.u32 %v6583, %v6587
        %v6592 = vsel %vm6591, 1, 0
        %v6593 = vadd.s32 %v6583, %v6587
        %v6594 = vadd.s32 %v6586, %v6592
        %vm6595 = vc.u32 %v6593, %v6589
        %v6596 = vsel %vm6595, 1, 0
        %v6597 = vadd.s32 %v6593, %v6589
        %v6598 = vadd.s32 %v6594, %v6596
        %v6599 = vadd.s32 %v6598, %v6588
        %v6600 = vadd.s32 %v6599, %v6590
        %v6601 = vmul.u32 %v6556, %v6547
        %v6602 = vadd.s32 %v6578, %v6597
        %vm6603 = vc.u32 %v6578, %v6597
        %v6604 = vadd.s32 %v6600, 1
        %v6605 = vsel %vm6603, %v6604, %v6600
        %v6606 = vadd.s32 %v6601, %v6605
        %v6607 = vadd.s32 %v6606, 536870912
        %v6608 = vshrl.u32 %v6607, 30
        %v6609 = vshll.u32 %v6608, 30
        %v6610 = vsub.s32 %v6606, %v6609
        %vm6611 = vcmp.lt.s32.totalorder %v6610, 0
        %v6612 = vsub.s32 0, %v6610
        %v6613 = vsel %vm6611, %v6612, %v6610
        %v6614 = vclz %v6613
        %v6615 = vsub.s32 %v6614, 2
        %vm6616 = vcmp.gt.s32.totalorder 0, %v6615
        %v6617 = vsel %vm6616, 0, %v6615
        %v6618 = vsub.s32 32, %v6617
        %v6619 = vshll.u32 %v6610, %v6617
        %v6620 = vshrl.u32 %v6602, %v6618
        %v6621 = vor.u32 %v6619, %v6620
        %v6622 = vsub.s32 4294967266, %v6617
        %v6623 = vadd.s32 %v6622, 127
        %v6624 = vshll.u32 %v6623, 23
        %v6625 = vor.u32 4788187, %v6624
        %v6626 = vand.u32 2147483647, %v6625
        %v6628 = vcvt.s32.f32 %v6621
        %v6629 = vmul.f32 %v6628, %v6626
        %v6630 = vxor.u32 %v6629, 2147483648
        %v6631 = vsel %vm6510, %v6630, %v6629
        %v6632 = vsub.s32 4, %v6608
        %v6633 = vsel %vm6510, %v6632, %v6608
        %v6634 = vsel %vm6509, %v1496, %v6631
        %v6635 = vsel %vm6509, 0, %v6633
        %v6636 = vmul.f32 %v6634, %v6634
        %v6637 = vmul.f32 %v6636, -0.001358992
        %v6638 = vadd.f32 %v6637, 0.041655596
        %v6639 = vmul.f32 %v6636, %v6638
        %v6640 = vadd.f32 %v6639, -0.4999988
        %v6641 = vmul.f32 %v6636, %v6640
        %v6642 = vadd.f32 1.0, %v6641
        %v6643 = vmul.f32 %v6634, %v6634
        %v6644 = vmul.f32 %v6643, -0.00019511016
        %v6645 = vadd.f32 %v6644, 0.008332121
        %v6646 = vmul.f32 %v6643, %v6645
        %v6647 = vadd.f32 %v6646, -0.16666654
        %v6648 = vmul.f32 %v6643, %v6647
        %v6649 = vadd.f32 %v6648, 1.0
        %v6650 = vmul.f32 %v6649, %v6634
        %vm6651 = vweird.f32 %v1496
        %v6652 = vadd.s32 %v6635, 3
        %v6653 = vand.u32 %v6652, 3
        %vm6654 = vcmp.lt.s32.totalorder %v6653, 2
        %vm6655 = vcmp.eq.s32.totalorder %v6653, 0
        %v6656 = vxor.u32 %v6650, 2147483648
        %v6657 = vsel %vm6655, %v6642, %v6656
        %vm6658 = vcmp.eq.s32.totalorder %v6653, 2
        %v6659 = vxor.u32 %v6642, 2147483648
        %v6660 = vsel %vm6658, %v6659, %v6650
        %v6661 = vsel %vm6654, %v6657, %v6660
        %v6662 = vsel %vm6651, nan, %v6661
        %v6663 = vand.u32 2147483647, %v2138
        %vm6664 = vcmp.le.f32.partialorder %v6663, 0.7853982
        %vm6665 = vcmp.lt.s32.totalorder %v2138, 0
        %v6666 = vand.u32 %v2138, 2139095040
        %v6667 = vshrl.u32 %v6666, 23
        %v6668 = vsub.s32 %v6667, 127
        %v6669 = vand.u32 2147483647, %v2138
        %v6670 = vand.u32 %v6669, 8388607
        %v6671 = vor.u32 %v6670, 8388608
        %v6672 = vsub.s32 0, %v6671
        %v6673 = vadd.s32 %v6668, 1
        %vm6674 = vcmp.gt.s32.totalorder %v6673, 0
        %v6675 = vsel %vm6674, %v6673, 0
        %v6676 = vshrl.u32 %v6675, 5
        %v6677 = vand.u32 %v6675, 31
        %v6678 = vsub.s32 32, %v6677
        %v6679 = vshrl.u32 683565275, %v6678
        %v6680 = vshll.u32 683565275, %v6677
        %v6681 = vshrl.u32 2475754826, %v6678
        %v6682 = vor.u32 %v6680, %v6681
        %v6683 = vshll.u32 2475754826, %v6677
        %v6684 = vshrl.u32 2131351028, %v6678
        %v6685 = vor.u32 %v6683, %v6684
        %v6686 = vshll.u32 2131351028, %v6677
        %v6687 = vshrl.u32 2102212464, %v6678
        %v6688 = vor.u32 %v6686, %v6687
        %v6689 = vshll.u32 2102212464, %v6677
        %v6690 = vshrl.u32 920167782, %v6678
        %v6691 = vor.u32 %v6689, %v6690
        %v6692 = vshll.u32 920167782, %v6677
        %v6693 = vshrl.u32 1326507024, %v6678
        %v6694 = vor.u32 %v6692, %v6693
        %vm6695 = vcmp.lt.s32.totalorder %v6676, 1
        %vm6696 = vcmp.lt.s32.totalorder %v6676, 2
        %vm6697 = vcmp.lt.s32.totalorder %v6676, 3
        %vm6698 = vcmp.lt.s32.totalorder %v6676, 4
        %v6699 = vsel %vm6695, %v6679, %v6682
        %v6700 = vsel %vm6698, %v6688, 2102212464
        %v6701 = vsel %vm6697, %v6685, %v6700
        %v6702 = vsel %vm6696, %v6699, %v6701
        %v6703 = vsel %vm6695, %v6682, %v6685
        %v6704 = vsel %vm6698, %v6691, 920167782
        %v6705 = vsel %vm6697, %v6688, %v6704
        %v6706 = vsel %vm6696, %v6703, %v6705
        %v6707 = vsel %vm6695, %v6685, %v6688
        %v6708 = vsel %vm6698, %v6694, 1326507024
        %v6709 = vsel %vm6697, %v6691, %v6708
        %v6710 = vsel %vm6696, %v6707, %v6709
        %v6711 = vshll.u32 %v6671, 8
        %v6712 = vand.u32 %v6711, 65535
        %v6713 = vshrl.u32 %v6711, 16
        %v6714 = vand.u32 %v6710, 65535
        %v6715 = vshrl.u32 %v6710, 16
        %v6716 = vmul.u32 %v6712, %v6714
        %v6717 = vmul.u32 %v6712, %v6715
        %v6718 = vmul.u32 %v6713, %v6714
        %v6719 = vmul.u32 %v6713, %v6715
        %v6720 = vshll.u32 %v6717, 16
        %v6721 = vshrl.u32 %v6717, 16
        %v6722 = vshll.u32 %v6718, 16
        %v6723 = vshrl.u32 %v6718, 16
        %vm6724 = vc.u32 %v6716, %v6720
        %v6725 = vsel %vm6724, 1, 0
        %v6726 = vadd.s32 %v6716, %v6720
        %v6727 = vadd.s32 %v6719, %v6725
        %vm6728 = vc.u32 %v6726, %v6722
        %v6729 = vsel %vm6728, 1, 0
        %v6730 = vadd.s32 %v6726, %v6722
        %v6731 = vadd.s32 %v6727, %v6729
        %v6732 = vadd.s32 %v6731, %v6721
        %v6733 = vadd.s32 %v6732, %v6723
        %v6734 = vand.u32 %v6711, 65535
        %v6735 = vshrl.u32 %v6711, 16
        %v6736 = vand.u32 %v6706, 65535
        %v6737 = vshrl.u32 %v6706, 16
        %v6738 = vmul.u32 %v6734, %v6736
        %v6739 = vmul.u32 %v6734, %v6737
        %v6740 = vmul.u32 %v6735, %v6736
        %v6741 = vmul.u32 %v6735, %v6737
        %v6742 = vshll.u32 %v6739, 16
        %v6743 = vshrl.u32 %v6739, 16
        %v6744 = vshll.u32 %v6740, 16
        %v6745 = vshrl.u32 %v6740, 16
        %vm6746 = vc.u32 %v6738, %v6742
        %v6747 = vsel %vm6746, 1, 0
        %v6748 = vadd.s32 %v6738, %v6742
        %v6749 = vadd.s32 %v6741, %v6747
        %vm6750 = vc.u32 %v6748, %v6744
        %v6751 = vsel %vm6750, 1, 0
        %v6752 = vadd.s32 %v6748, %v6744
        %v6753 = vadd.s32 %v6749, %v6751
        %v6754 = vadd.s32 %v6753, %v6743
        %v6755 = vadd.s32 %v6754, %v6745
        %v6756 = vmul.u32 %v6711, %v6702
        %v6757 = vadd.s32 %v6733, %v6752
        %vm6758 = vc.u32 %v6733, %v6752
        %v6759 = vadd.s32 %v6755, 1
        %v6760 = vsel %vm6758, %v6759, %v6755
        %v6761 = vadd.s32 %v6756, %v6760
        %v6762 = vadd.s32 %v6761, 536870912
        %v6763 = vshrl.u32 %v6762, 30
        %v6764 = vshll.u32 %v6763, 30
        %v6765 = vsub.s32 %v6761, %v6764
        %vm6766 = vcmp.lt.s32.totalorder %v6765, 0
        %v6767 = vsub.s32 0, %v6765
        %v6768 = vsel %vm6766, %v6767, %v6765
        %v6769 = vclz %v6768
        %v6770 = vsub.s32 %v6769, 2
        %vm6771 = vcmp.gt.s32.totalorder 0, %v6770
        %v6772 = vsel %vm6771, 0, %v6770
        %v6773 = vsub.s32 32, %v6772
        %v6774 = vshll.u32 %v6765, %v6772
        %v6775 = vshrl.u32 %v6757, %v6773
        %v6776 = vor.u32 %v6774, %v6775
        %v6777 = vsub.s32 4294967266, %v6772
        %v6778 = vadd.s32 %v6777, 127
        %v6779 = vshll.u32 %v6778, 23
        %v6780 = vor.u32 4788187, %v6779
        %v6781 = vand.u32 2147483647, %v6780
        %v6783 = vcvt.s32.f32 %v6776
        %v6784 = vmul.f32 %v6783, %v6781
        %v6785 = vxor.u32 %v6784, 2147483648
        %v6786 = vsel %vm6665, %v6785, %v6784
        %v6787 = vsub.s32 4, %v6763
        %v6788 = vsel %vm6665, %v6787, %v6763
        %v6789 = vsel %vm6664, %v2138, %v6786
        %v6790 = vsel %vm6664, 0, %v6788
        %v6791 = vmul.f32 %v6789, %v6789
        %v6792 = vmul.f32 %v6791, -0.001358992
        %v6793 = vadd.f32 %v6792, 0.041655596
        %v6794 = vmul.f32 %v6791, %v6793
        %v6795 = vadd.f32 %v6794, -0.4999988
        %v6796 = vmul.f32 %v6791, %v6795
        %v6797 = vadd.f32 1.0, %v6796
        %v6798 = vmul.f32 %v6789, %v6789
        %v6799 = vmul.f32 %v6798, -0.00019511016
        %v6800 = vadd.f32 %v6799, 0.008332121
        %v6801 = vmul.f32 %v6798, %v6800
        %v6802 = vadd.f32 %v6801, -0.16666654
        %v6803 = vmul.f32 %v6798, %v6802
        %v6804 = vadd.f32 %v6803, 1.0
        %v6805 = vmul.f32 %v6804, %v6789
        %vm6806 = vweird.f32 %v2138
        %v6807 = vadd.s32 %v6790, 3
        %v6808 = vand.u32 %v6807, 3
        %vm6809 = vcmp.lt.s32.totalorder %v6808, 2
        %vm6810 = vcmp.eq.s32.totalorder %v6808, 0
        %v6811 = vxor.u32 %v6805, 2147483648
        %v6812 = vsel %vm6810, %v6797, %v6811
        %vm6813 = vcmp.eq.s32.totalorder %v6808, 2
        %v6814 = vxor.u32 %v6797, 2147483648
        %v6815 = vsel %vm6813, %v6814, %v6805
        %v6816 = vsel %vm6809, %v6812, %v6815
        %v6817 = vsel %vm6806, nan, %v6816
        %v6818 = vand.u32 2147483647, %v858
        %vm6819 = vcmp.le.f32.partialorder %v6818, 0.7853982
        %vm6820 = vcmp.lt.s32.totalorder %v858, 0
        %v6821 = vand.u32 %v858, 2139095040
        %v6822 = vshrl.u32 %v6821, 23
        %v6823 = vsub.s32 %v6822, 127
        %v6824 = vand.u32 2147483647, %v858
        %v6825 = vand.u32 %v6824, 8388607
        %v6826 = vor.u32 %v6825, 8388608
        %v6827 = vsub.s32 0, %v6826
        %v6828 = vadd.s32 %v6823, 1
        %vm6829 = vcmp.gt.s32.totalorder %v6828, 0
        %v6830 = vsel %vm6829, %v6828, 0
        %v6831 = vshrl.u32 %v6830, 5
        %v6832 = vand.u32 %v6830, 31
        %v6833 = vsub.s32 32, %v6832
        %v6834 = vshrl.u32 683565275, %v6833
        %v6835 = vshll.u32 683565275, %v6832
        %v6836 = vshrl.u32 2475754826, %v6833
        %v6837 = vor.u32 %v6835, %v6836
        %v6838 = vshll.u32 2475754826, %v6832
        %v6839 = vshrl.u32 2131351028, %v6833
        %v6840 = vor.u32 %v6838, %v6839
        %v6841 = vshll.u32 2131351028, %v6832
        %v6842 = vshrl.u32 2102212464, %v6833
        %v6843 = vor.u32 %v6841, %v6842
        %v6844 = vshll.u32 2102212464, %v6832
        %v6845 = vshrl.u32 920167782, %v6833
        %v6846 = vor.u32 %v6844, %v6845
        %v6847 = vshll.u32 920167782, %v6832
        %v6848 = vshrl.u32 1326507024, %v6833
        %v6849 = vor.u32 %v6847, %v6848
        %vm6850 = vcmp.lt.s32.totalorder %v6831, 1
        %vm6851 = vcmp.lt.s32.totalorder %v6831, 2
        %vm6852 = vcmp.lt.s32.totalorder %v6831, 3
        %vm6853 = vcmp.lt.s32.totalorder %v6831, 4
        %v6854 = vsel %vm6850, %v6834, %v6837
        %v6855 = vsel %vm6853, %v6843, 2102212464
        %v6856 = vsel %vm6852, %v6840, %v6855
        %v6857 = vsel %vm6851, %v6854, %v6856
        %v6858 = vsel %vm6850, %v6837, %v6840
        %v6859 = vsel %vm6853, %v6846, 920167782
        %v6860 = vsel %vm6852, %v6843, %v6859
        %v6861 = vsel %vm6851, %v6858, %v6860
        %v6862 = vsel %vm6850, %v6840, %v6843
        %v6863 = vsel %vm6853, %v6849, 1326507024
        %v6864 = vsel %vm6852, %v6846, %v6863
        %v6865 = vsel %vm6851, %v6862, %v6864
        %v6866 = vshll.u32 %v6826, 8
        %v6867 = vand.u32 %v6866, 65535
        %v6868 = vshrl.u32 %v6866, 16
        %v6869 = vand.u32 %v6865, 65535
        %v6870 = vshrl.u32 %v6865, 16
        %v6871 = vmul.u32 %v6867, %v6869
        %v6872 = vmul.u32 %v6867, %v6870
        %v6873 = vmul.u32 %v6868, %v6869
        %v6874 = vmul.u32 %v6868, %v6870
        %v6875 = vshll.u32 %v6872, 16
        %v6876 = vshrl.u32 %v6872, 16
        %v6877 = vshll.u32 %v6873, 16
        %v6878 = vshrl.u32 %v6873, 16
        %vm6879 = vc.u32 %v6871, %v6875
        %v6880 = vsel %vm6879, 1, 0
        %v6881 = vadd.s32 %v6871, %v6875
        %v6882 = vadd.s32 %v6874, %v6880
        %vm6883 = vc.u32 %v6881, %v6877
        %v6884 = vsel %vm6883, 1, 0
        %v6885 = vadd.s32 %v6881, %v6877
        %v6886 = vadd.s32 %v6882, %v6884
        %v6887 = vadd.s32 %v6886, %v6876
        %v6888 = vadd.s32 %v6887, %v6878
        %v6889 = vand.u32 %v6866, 65535
        %v6890 = vshrl.u32 %v6866, 16
        %v6891 = vand.u32 %v6861, 65535
        %v6892 = vshrl.u32 %v6861, 16
        %v6893 = vmul.u32 %v6889, %v6891
        %v6894 = vmul.u32 %v6889, %v6892
        %v6895 = vmul.u32 %v6890, %v6891
        %v6896 = vmul.u32 %v6890, %v6892
        %v6897 = vshll.u32 %v6894, 16
        %v6898 = vshrl.u32 %v6894, 16
        %v6899 = vshll.u32 %v6895, 16
        %v6900 = vshrl.u32 %v6895, 16
        %vm6901 = vc.u32 %v6893, %v6897
        %v6902 = vsel %vm6901, 1, 0
        %v6903 = vadd.s32 %v6893, %v6897
        %v6904 = vadd.s32 %v6896, %v6902
        %vm6905 = vc.u32 %v6903, %v6899
        %v6906 = vsel %vm6905, 1, 0
        %v6907 = vadd.s32 %v6903, %v6899
        %v6908 = vadd.s32 %v6904, %v6906
        %v6909 = vadd.s32 %v6908, %v6898
        %v6910 = vadd.s32 %v6909, %v6900
        %v6911 = vmul.u32 %v6866, %v6857
        %v6912 = vadd.s32 %v6888, %v6907
        %vm6913 = vc.u32 %v6888, %v6907
        %v6914 = vadd.s32 %v6910, 1
        %v6915 = vsel %vm6913, %v6914, %v6910
        %v6916 = vadd.s32 %v6911, %v6915
        %v6917 = vadd.s32 %v6916, 536870912
        %v6918 = vshrl.u32 %v6917, 30
        %v6919 = vshll.u32 %v6918, 30
        %v6920 = vsub.s32 %v6916, %v6919
        %vm6921 = vcmp.lt.s32.totalorder %v6920, 0
        %v6922 = vsub.s32 0, %v6920
        %v6923 = vsel %vm6921, %v6922, %v6920
        %v6924 = vclz %v6923
        %v6925 = vsub.s32 %v6924, 2
        %vm6926 = vcmp.gt.s32.totalorder 0, %v6925
        %v6927 = vsel %vm6926, 0, %v6925
        %v6928 = vsub.s32 32, %v6927
        %v6929 = vshll.u32 %v6920, %v6927
        %v6930 = vshrl.u32 %v6912, %v6928
        %v6931 = vor.u32 %v6929, %v6930
        %v6932 = vsub.s32 4294967266, %v6927
        %v6933 = vadd.s32 %v6932, 127
        %v6934 = vshll.u32 %v6933, 23
        %v6935 = vor.u32 4788187, %v6934
        %v6936 = vand.u32 2147483647, %v6935
        %v6938 = vcvt.s32.f32 %v6931
        %v6939 = vmul.f32 %v6938, %v6936
        %v6940 = vxor.u32 %v6939, 2147483648
        %v6941 = vsel %vm6820, %v6940, %v6939
        %v6942 = vsub.s32 4, %v6918
        %v6943 = vsel %vm6820, %v6942, %v6918
        %v6944 = vsel %vm6819, %v858, %v6941
        %v6945 = vsel %vm6819, 0, %v6943
        %v6946 = vmul.f32 %v6944, %v6944
        %v6947 = vmul.f32 %v6946, -0.001358992
        %v6948 = vadd.f32 %v6947, 0.041655596
        %v6949 = vmul.f32 %v6946, %v6948
        %v6950 = vadd.f32 %v6949, -0.4999988
        %v6951 = vmul.f32 %v6946, %v6950
        %v6952 = vadd.f32 1.0, %v6951
        %v6953 = vmul.f32 %v6944, %v6944
        %v6954 = vmul.f32 %v6953, -0.00019511016
        %v6955 = vadd.f32 %v6954, 0.008332121
        %v6956 = vmul.f32 %v6953, %v6955
        %v6957 = vadd.f32 %v6956, -0.16666654
        %v6958 = vmul.f32 %v6953, %v6957
        %v6959 = vadd.f32 %v6958, 1.0
        %v6960 = vmul.f32 %v6959, %v6944
        %vm6961 = vweird.f32 %v858
        %v6962 = vadd.s32 %v6945, 3
        %v6963 = vand.u32 %v6962, 3
        %vm6964 = vcmp.lt.s32.totalorder %v6963, 2
        %vm6965 = vcmp.eq.s32.totalorder %v6963, 0
        %v6966 = vxor.u32 %v6960, 2147483648
        %v6967 = vsel %vm6965, %v6952, %v6966
        %vm6968 = vcmp.eq.s32.totalorder %v6963, 2
        %v6969 = vxor.u32 %v6952, 2147483648
        %v6970 = vsel %vm6968, %v6969, %v6960
        %v6971 = vsel %vm6964, %v6967, %v6970
        %v6972 = vsel %vm6961, nan, %v6971
        %v6973 = vand.u32 2147483647, %v1500
        %vm6974 = vcmp.le.f32.partialorder %v6973, 0.7853982
        %vm6975 = vcmp.lt.s32.totalorder %v1500, 0
        %v6976 = vand.u32 %v1500, 2139095040
        %v6977 = vshrl.u32 %v6976, 23
        %v6978 = vsub.s32 %v6977, 127
        %v6979 = vand.u32 2147483647, %v1500
        %v6980 = vand.u32 %v6979, 8388607
        %v6981 = vor.u32 %v6980, 8388608
        %v6982 = vsub.s32 0, %v6981
        %v6983 = vadd.s32 %v6978, 1
        %vm6984 = vcmp.gt.s32.totalorder %v6983, 0
        %v6985 = vsel %vm6984, %v6983, 0
        %v6986 = vshrl.u32 %v6985, 5
        %v6987 = vand.u32 %v6985, 31
        %v6988 = vsub.s32 32, %v6987
        %v6989 = vshrl.u32 683565275, %v6988
        %v6990 = vshll.u32 683565275, %v6987
        %v6991 = vshrl.u32 2475754826, %v6988
        %v6992 = vor.u32 %v6990, %v6991
        %v6993 = vshll.u32 2475754826, %v6987
        %v6994 = vshrl.u32 2131351028, %v6988
        %v6995 = vor.u32 %v6993, %v6994
        %v6996 = vshll.u32 2131351028, %v6987
        %v6997 = vshrl.u32 2102212464, %v6988
        %v6998 = vor.u32 %v6996, %v6997
        %v6999 = vshll.u32 2102212464, %v6987
        %v7000 = vshrl.u32 920167782, %v6988
        %v7001 = vor.u32 %v6999, %v7000
        %v7002 = vshll.u32 920167782, %v6987
        %v7003 = vshrl.u32 1326507024, %v6988
        %v7004 = vor.u32 %v7002, %v7003
        %vm7005 = vcmp.lt.s32.totalorder %v6986, 1
        %vm7006 = vcmp.lt.s32.totalorder %v6986, 2
        %vm7007 = vcmp.lt.s32.totalorder %v6986, 3
        %vm7008 = vcmp.lt.s32.totalorder %v6986, 4
        %v7009 = vsel %vm7005, %v6989, %v6992
        %v7010 = vsel %vm7008, %v6998, 2102212464
        %v7011 = vsel %vm7007, %v6995, %v7010
        %v7012 = vsel %vm7006, %v7009, %v7011
        %v7013 = vsel %vm7005, %v6992, %v6995
        %v7014 = vsel %vm7008, %v7001, 920167782
        %v7015 = vsel %vm7007, %v6998, %v7014
        %v7016 = vsel %vm7006, %v7013, %v7015
        %v7017 = vsel %vm7005, %v6995, %v6998
        %v7018 = vsel %vm7008, %v7004, 1326507024
        %v7019 = vsel %vm7007, %v7001, %v7018
        %v7020 = vsel %vm7006, %v7017, %v7019
        %v7021 = vshll.u32 %v6981, 8
        %v7022 = vand.u32 %v7021, 65535
        %v7023 = vshrl.u32 %v7021, 16
        %v7024 = vand.u32 %v7020, 65535
        %v7025 = vshrl.u32 %v7020, 16
        %v7026 = vmul.u32 %v7022, %v7024
        %v7027 = vmul.u32 %v7022, %v7025
        %v7028 = vmul.u32 %v7023, %v7024
        %v7029 = vmul.u32 %v7023, %v7025
        %v7030 = vshll.u32 %v7027, 16
        %v7031 = vshrl.u32 %v7027, 16
        %v7032 = vshll.u32 %v7028, 16
        %v7033 = vshrl.u32 %v7028, 16
        %vm7034 = vc.u32 %v7026, %v7030
        %v7035 = vsel %vm7034, 1, 0
        %v7036 = vadd.s32 %v7026, %v7030
        %v7037 = vadd.s32 %v7029, %v7035
        %vm7038 = vc.u32 %v7036, %v7032
        %v7039 = vsel %vm7038, 1, 0
        %v7040 = vadd.s32 %v7036, %v7032
        %v7041 = vadd.s32 %v7037, %v7039
        %v7042 = vadd.s32 %v7041, %v7031
        %v7043 = vadd.s32 %v7042, %v7033
        %v7044 = vand.u32 %v7021, 65535
        %v7045 = vshrl.u32 %v7021, 16
        %v7046 = vand.u32 %v7016, 65535
        %v7047 = vshrl.u32 %v7016, 16
        %v7048 = vmul.u32 %v7044, %v7046
        %v7049 = vmul.u32 %v7044, %v7047
        %v7050 = vmul.u32 %v7045, %v7046
        %v7051 = vmul.u32 %v7045, %v7047
        %v7052 = vshll.u32 %v7049, 16
        %v7053 = vshrl.u32 %v7049, 16
        %v7054 = vshll.u32 %v7050, 16
        %v7055 = vshrl.u32 %v7050, 16
        %vm7056 = vc.u32 %v7048, %v7052
        %v7057 = vsel %vm7056, 1, 0
        %v7058 = vadd.s32 %v7048, %v7052
        %v7059 = vadd.s32 %v7051, %v7057
        %vm7060 = vc.u32 %v7058, %v7054
        %v7061 = vsel %vm7060, 1, 0
        %v7062 = vadd.s32 %v7058, %v7054
        %v7063 = vadd.s32 %v7059, %v7061
        %v7064 = vadd.s32 %v7063, %v7053
        %v7065 = vadd.s32 %v7064, %v7055
        %v7066 = vmul.u32 %v7021, %v7012
        %v7067 = vadd.s32 %v7043, %v7062
        %vm7068 = vc.u32 %v7043, %v7062
        %v7069 = vadd.s32 %v7065, 1
        %v7070 = vsel %vm7068, %v7069, %v7065
        %v7071 = vadd.s32 %v7066, %v7070
        %v7072 = vadd.s32 %v7071, 536870912
        %v7073 = vshrl.u32 %v7072, 30
        %v7074 = vshll.u32 %v7073, 30
        %v7075 = vsub.s32 %v7071, %v7074
        %vm7076 = vcmp.lt.s32.totalorder %v7075, 0
        %v7077 = vsub.s32 0, %v7075
        %v7078 = vsel %vm7076, %v7077, %v7075
        %v7079 = vclz %v7078
        %v7080 = vsub.s32 %v7079, 2
        %vm7081 = vcmp.gt.s32.totalorder 0, %v7080
        %v7082 = vsel %vm7081, 0, %v7080
        %v7083 = vsub.s32 32, %v7082
        %v7084 = vshll.u32 %v7075, %v7082
        %v7085 = vshrl.u32 %v7067, %v7083
        %v7086 = vor.u32 %v7084, %v7085
        %v7087 = vsub.s32 4294967266, %v7082
        %v7088 = vadd.s32 %v7087, 127
        %v7089 = vshll.u32 %v7088, 23
        %v7090 = vor.u32 4788187, %v7089
        %v7091 = vand.u32 2147483647, %v7090
        %v7093 = vcvt.s32.f32 %v7086
        %v7094 = vmul.f32 %v7093, %v7091
        %v7095 = vxor.u32 %v7094, 2147483648
        %v7096 = vsel %vm6975, %v7095, %v7094
        %v7097 = vsub.s32 4, %v7073
        %v7098 = vsel %vm6975, %v7097, %v7073
        %v7099 = vsel %vm6974, %v1500, %v7096
        %v7100 = vsel %vm6974, 0, %v7098
        %v7101 = vmul.f32 %v7099, %v7099
        %v7102 = vmul.f32 %v7101, -0.001358992
        %v7103 = vadd.f32 %v7102, 0.041655596
        %v7104 = vmul.f32 %v7101, %v7103
        %v7105 = vadd.f32 %v7104, -0.4999988
        %v7106 = vmul.f32 %v7101, %v7105
        %v7107 = vadd.f32 1.0, %v7106
        %v7108 = vmul.f32 %v7099, %v7099
        %v7109 = vmul.f32 %v7108, -0.00019511016
        %v7110 = vadd.f32 %v7109, 0.008332121
        %v7111 = vmul.f32 %v7108, %v7110
        %v7112 = vadd.f32 %v7111, -0.16666654
        %v7113 = vmul.f32 %v7108, %v7112
        %v7114 = vadd.f32 %v7113, 1.0
        %v7115 = vmul.f32 %v7114, %v7099
        %vm7116 = vweird.f32 %v1500
        %v7117 = vadd.s32 %v7100, 3
        %v7118 = vand.u32 %v7117, 3
        %vm7119 = vcmp.lt.s32.totalorder %v7118, 2
        %vm7120 = vcmp.eq.s32.totalorder %v7118, 0
        %v7121 = vxor.u32 %v7115, 2147483648
        %v7122 = vsel %vm7120, %v7107, %v7121
        %vm7123 = vcmp.eq.s32.totalorder %v7118, 2
        %v7124 = vxor.u32 %v7107, 2147483648
        %v7125 = vsel %vm7123, %v7124, %v7115
        %v7126 = vsel %vm7119, %v7122, %v7125
        %v7127 = vsel %vm7116, nan, %v7126
        %v7128 = vand.u32 2147483647, %v2142
        %vm7129 = vcmp.le.f32.partialorder %v7128, 0.7853982
        %vm7130 = vcmp.lt.s32.totalorder %v2142, 0
        %v7131 = vand.u32 %v2142, 2139095040
        %v7132 = vshrl.u32 %v7131, 23
        %v7133 = vsub.s32 %v7132, 127
        %v7134 = vand.u32 2147483647, %v2142
        %v7135 = vand.u32 %v7134, 8388607
        %v7136 = vor.u32 %v7135, 8388608
        %v7137 = vsub.s32 0, %v7136
        %v7138 = vadd.s32 %v7133, 1
        %vm7139 = vcmp.gt.s32.totalorder %v7138, 0
        %v7140 = vsel %vm7139, %v7138, 0
        %v7141 = vshrl.u32 %v7140, 5
        %v7142 = vand.u32 %v7140, 31
        %v7143 = vsub.s32 32, %v7142
        %v7144 = vshrl.u32 683565275, %v7143
        %v7145 = vshll.u32 683565275, %v7142
        %v7146 = vshrl.u32 2475754826, %v7143
        %v7147 = vor.u32 %v7145, %v7146
        %v7148 = vshll.u32 2475754826, %v7142
        %v7149 = vshrl.u32 2131351028, %v7143
        %v7150 = vor.u32 %v7148, %v7149
        %v7151 = vshll.u32 2131351028, %v7142
        %v7152 = vshrl.u32 2102212464, %v7143
        %v7153 = vor.u32 %v7151, %v7152
        %v7154 = vshll.u32 2102212464, %v7142
        %v7155 = vshrl.u32 920167782, %v7143
        %v7156 = vor.u32 %v7154, %v7155
        %v7157 = vshll.u32 920167782, %v7142
        %v7158 = vshrl.u32 1326507024, %v7143
        %v7159 = vor.u32 %v7157, %v7158
        %vm7160 = vcmp.lt.s32.totalorder %v7141, 1
        %vm7161 = vcmp.lt.s32.totalorder %v7141, 2
        %vm7162 = vcmp.lt.s32.totalorder %v7141, 3
        %vm7163 = vcmp.lt.s32.totalorder %v7141, 4
        %v7164 = vsel %vm7160, %v7144, %v7147
        %v7165 = vsel %vm7163, %v7153, 2102212464
        %v7166 = vsel %vm7162, %v7150, %v7165
        %v7167 = vsel %vm7161, %v7164, %v7166
        %v7168 = vsel %vm7160, %v7147, %v7150
        %v7169 = vsel %vm7163, %v7156, 920167782
        %v7170 = vsel %vm7162, %v7153, %v7169
        %v7171 = vsel %vm7161, %v7168, %v7170
        %v7172 = vsel %vm7160, %v7150, %v7153
        %v7173 = vsel %vm7163, %v7159, 1326507024
        %v7174 = vsel %vm7162, %v7156, %v7173
        %v7175 = vsel %vm7161, %v7172, %v7174
        %v7176 = vshll.u32 %v7136, 8
        %v7177 = vand.u32 %v7176, 65535
        %v7178 = vshrl.u32 %v7176, 16
        %v7179 = vand.u32 %v7175, 65535
        %v7180 = vshrl.u32 %v7175, 16
        %v7181 = vmul.u32 %v7177, %v7179
        %v7182 = vmul.u32 %v7177, %v7180
        %v7183 = vmul.u32 %v7178, %v7179
        %v7184 = vmul.u32 %v7178, %v7180
        %v7185 = vshll.u32 %v7182, 16
        %v7186 = vshrl.u32 %v7182, 16
        %v7187 = vshll.u32 %v7183, 16
        %v7188 = vshrl.u32 %v7183, 16
        %vm7189 = vc.u32 %v7181, %v7185
        %v7190 = vsel %vm7189, 1, 0
        %v7191 = vadd.s32 %v7181, %v7185
        %v7192 = vadd.s32 %v7184, %v7190
        %vm7193 = vc.u32 %v7191, %v7187
        %v7194 = vsel %vm7193, 1, 0
        %v7195 = vadd.s32 %v7191, %v7187
        %v7196 = vadd.s32 %v7192, %v7194
        %v7197 = vadd.s32 %v7196, %v7186
        %v7198 = vadd.s32 %v7197, %v7188
        %v7199 = vand.u32 %v7176, 65535
        %v7200 = vshrl.u32 %v7176, 16
        %v7201 = vand.u32 %v7171, 65535
        %v7202 = vshrl.u32 %v7171, 16
        %v7203 = vmul.u32 %v7199, %v7201
        %v7204 = vmul.u32 %v7199, %v7202
        %v7205 = vmul.u32 %v7200, %v7201
        %v7206 = vmul.u32 %v7200, %v7202
        %v7207 = vshll.u32 %v7204, 16
        %v7208 = vshrl.u32 %v7204, 16
        %v7209 = vshll.u32 %v7205, 16
        %v7210 = vshrl.u32 %v7205, 16
        %vm7211 = vc.u32 %v7203, %v7207
        %v7212 = vsel %vm7211, 1, 0
        %v7213 = vadd.s32 %v7203, %v7207
        %v7214 = vadd.s32 %v7206, %v7212
        %vm7215 = vc.u32 %v7213, %v7209
        %v7216 = vsel %vm7215, 1, 0
        %v7217 = vadd.s32 %v7213, %v7209
        %v7218 = vadd.s32 %v7214, %v7216
        %v7219 = vadd.s32 %v7218, %v7208
        %v7220 = vadd.s32 %v7219, %v7210
        %v7221 = vmul.u32 %v7176, %v7167
        %v7222 = vadd.s32 %v7198, %v7217
        %vm7223 = vc.u32 %v7198, %v7217
        %v7224 = vadd.s32 %v7220, 1
        %v7225 = vsel %vm7223, %v7224, %v7220
        %v7226 = vadd.s32 %v7221, %v7225
        %v7227 = vadd.s32 %v7226, 536870912
        %v7228 = vshrl.u32 %v7227, 30
        %v7229 = vshll.u32 %v7228, 30
        %v7230 = vsub.s32 %v7226, %v7229
        %vm7231 = vcmp.lt.s32.totalorder %v7230, 0
        %v7232 = vsub.s32 0, %v7230
        %v7233 = vsel %vm7231, %v7232, %v7230
        %v7234 = vclz %v7233
        %v7235 = vsub.s32 %v7234, 2
        %vm7236 = vcmp.gt.s32.totalorder 0, %v7235
        %v7237 = vsel %vm7236, 0, %v7235
        %v7238 = vsub.s32 32, %v7237
        %v7239 = vshll.u32 %v7230, %v7237
        %v7240 = vshrl.u32 %v7222, %v7238
        %v7241 = vor.u32 %v7239, %v7240
        %v7242 = vsub.s32 4294967266, %v7237
        %v7243 = vadd.s32 %v7242, 127
        %v7244 = vshll.u32 %v7243, 23
        %v7245 = vor.u32 4788187, %v7244
        %v7246 = vand.u32 2147483647, %v7245
        %v7248 = vcvt.s32.f32 %v7241
        %v7249 = vmul.f32 %v7248, %v7246
        %v7250 = vxor.u32 %v7249, 2147483648
        %v7251 = vsel %vm7130, %v7250, %v7249
        %v7252 = vsub.s32 4, %v7228
        %v7253 = vsel %vm7130, %v7252, %v7228
        %v7254 = vsel %vm7129, %v2142, %v7251
        %v7255 = vsel %vm7129, 0, %v7253
        %v7256 = vmul.f32 %v7254, %v7254
        %v7257 = vmul.f32 %v7256, -0.001358992
        %v7258 = vadd.f32 %v7257, 0.041655596
        %v7259 = vmul.f32 %v7256, %v7258
        %v7260 = vadd.f32 %v7259, -0.4999988
        %v7261 = vmul.f32 %v7256, %v7260
        %v7262 = vadd.f32 1.0, %v7261
        %v7263 = vmul.f32 %v7254, %v7254
        %v7264 = vmul.f32 %v7263, -0.00019511016
        %v7265 = vadd.f32 %v7264, 0.008332121
        %v7266 = vmul.f32 %v7263, %v7265
        %v7267 = vadd.f32 %v7266, -0.16666654
        %v7268 = vmul.f32 %v7263, %v7267
        %v7269 = vadd.f32 %v7268, 1.0
        %v7270 = vmul.f32 %v7269, %v7254
        %vm7271 = vweird.f32 %v2142
        %v7272 = vadd.s32 %v7255, 3
        %v7273 = vand.u32 %v7272, 3
        %vm7274 = vcmp.lt.s32.totalorder %v7273, 2
        %vm7275 = vcmp.eq.s32.totalorder %v7273, 0
        %v7276 = vxor.u32 %v7270, 2147483648
        %v7277 = vsel %vm7275, %v7262, %v7276
        %vm7278 = vcmp.eq.s32.totalorder %v7273, 2
        %v7279 = vxor.u32 %v7262, 2147483648
        %v7280 = vsel %vm7278, %v7279, %v7270
        %v7281 = vsel %vm7274, %v7277, %v7280
        %v7282 = vsel %vm7271, nan, %v7281
        %v7283 = vand.u32 2147483647, %v862
        %vm7284 = vcmp.le.f32.partialorder %v7283, 0.7853982
        %vm7285 = vcmp.lt.s32.totalorder %v862, 0
        %v7286 = vand.u32 %v862, 2139095040
        %v7287 = vshrl.u32 %v7286, 23
        %v7288 = vsub.s32 %v7287, 127
        %v7289 = vand.u32 2147483647, %v862
        %v7290 = vand.u32 %v7289, 8388607
        %v7291 = vor.u32 %v7290, 8388608
        %v7292 = vsub.s32 0, %v7291
        %v7293 = vadd.s32 %v7288, 1
        %vm7294 = vcmp.gt.s32.totalorder %v7293, 0
        %v7295 = vsel %vm7294, %v7293, 0
        %v7296 = vshrl.u32 %v7295, 5
        %v7297 = vand.u32 %v7295, 31
        %v7298 = vsub.s32 32, %v7297
        %v7299 = vshrl.u32 683565275, %v7298
        %v7300 = vshll.u32 683565275, %v7297
        %v7301 = vshrl.u32 2475754826, %v7298
        %v7302 = vor.u32 %v7300, %v7301
        %v7303 = vshll.u32 2475754826, %v7297
        %v7304 = vshrl.u32 2131351028, %v7298
        %v7305 = vor.u32 %v7303, %v7304
        %v7306 = vshll.u32 2131351028, %v7297
        %v7307 = vshrl.u32 2102212464, %v7298
        %v7308 = vor.u32 %v7306, %v7307
        %v7309 = vshll.u32 2102212464, %v7297
        %v7310 = vshrl.u32 920167782, %v7298
        %v7311 = vor.u32 %v7309, %v7310
        %v7312 = vshll.u32 920167782, %v7297
        %v7313 = vshrl.u32 1326507024, %v7298
        %v7314 = vor.u32 %v7312, %v7313
        %vm7315 = vcmp.lt.s32.totalorder %v7296, 1
        %vm7316 = vcmp.lt.s32.totalorder %v7296, 2
        %vm7317 = vcmp.lt.s32.totalorder %v7296, 3
        %vm7318 = vcmp.lt.s32.totalorder %v7296, 4
        %v7319 = vsel %vm7315, %v7299, %v7302
        %v7320 = vsel %vm7318, %v7308, 2102212464
        %v7321 = vsel %vm7317, %v7305, %v7320
        %v7322 = vsel %vm7316, %v7319, %v7321
        %v7323 = vsel %vm7315, %v7302, %v7305
        %v7324 = vsel %vm7318, %v7311, 920167782
        %v7325 = vsel %vm7317, %v7308, %v7324
        %v7326 = vsel %vm7316, %v7323, %v7325
        %v7327 = vsel %vm7315, %v7305, %v7308
        %v7328 = vsel %vm7318, %v7314, 1326507024
        %v7329 = vsel %vm7317, %v7311, %v7328
        %v7330 = vsel %vm7316, %v7327, %v7329
        %v7331 = vshll.u32 %v7291, 8
        %v7332 = vand.u32 %v7331, 65535
        %v7333 = vshrl.u32 %v7331, 16
        %v7334 = vand.u32 %v7330, 65535
        %v7335 = vshrl.u32 %v7330, 16
        %v7336 = vmul.u32 %v7332, %v7334
        %v7337 = vmul.u32 %v7332, %v7335
        %v7338 = vmul.u32 %v7333, %v7334
        %v7339 = vmul.u32 %v7333, %v7335
        %v7340 = vshll.u32 %v7337, 16
        %v7341 = vshrl.u32 %v7337, 16
        %v7342 = vshll.u32 %v7338, 16
        %v7343 = vshrl.u32 %v7338, 16
        %vm7344 = vc.u32 %v7336, %v7340
        %v7345 = vsel %vm7344, 1, 0
        %v7346 = vadd.s32 %v7336, %v7340
        %v7347 = vadd.s32 %v7339, %v7345
        %vm7348 = vc.u32 %v7346, %v7342
        %v7349 = vsel %vm7348, 1, 0
        %v7350 = vadd.s32 %v7346, %v7342
        %v7351 = vadd.s32 %v7347, %v7349
        %v7352 = vadd.s32 %v7351, %v7341
        %v7353 = vadd.s32 %v7352, %v7343
        %v7354 = vand.u32 %v7331, 65535
        %v7355 = vshrl.u32 %v7331, 16
        %v7356 = vand.u32 %v7326, 65535
        %v7357 = vshrl.u32 %v7326, 16
        %v7358 = vmul.u32 %v7354, %v7356
        %v7359 = vmul.u32 %v7354, %v7357
        %v7360 = vmul.u32 %v7355, %v7356
        %v7361 = vmul.u32 %v7355, %v7357
        %v7362 = vshll.u32 %v7359, 16
        %v7363 = vshrl.u32 %v7359, 16
        %v7364 = vshll.u32 %v7360, 16
        %v7365 = vshrl.u32 %v7360, 16
        %vm7366 = vc.u32 %v7358, %v7362
        %v7367 = vsel %vm7366, 1, 0
        %v7368 = vadd.s32 %v7358, %v7362
        %v7369 = vadd.s32 %v7361, %v7367
        %vm7370 = vc.u32 %v7368, %v7364
        %v7371 = vsel %vm7370, 1, 0
        %v7372 = vadd.s32 %v7368, %v7364
        %v7373 = vadd.s32 %v7369, %v7371
        %v7374 = vadd.s32 %v7373, %v7363
        %v7375 = vadd.s32 %v7374, %v7365
        %v7376 = vmul.u32 %v7331, %v7322
        %v7377 = vadd.s32 %v7353, %v7372
        %vm7378 = vc.u32 %v7353, %v7372
        %v7379 = vadd.s32 %v7375, 1
        %v7380 = vsel %vm7378, %v7379, %v7375
        %v7381 = vadd.s32 %v7376, %v7380
        %v7382 = vadd.s32 %v7381, 536870912
        %v7383 = vshrl.u32 %v7382, 30
        %v7384 = vshll.u32 %v7383, 30
        %v7385 = vsub.s32 %v7381, %v7384
        %vm7386 = vcmp.lt.s32.totalorder %v7385, 0
        %v7387 = vsub.s32 0, %v7385
        %v7388 = vsel %vm7386, %v7387, %v7385
        %v7389 = vclz %v7388
        %v7390 = vsub.s32 %v7389, 2
        %vm7391 = vcmp.gt.s32.totalorder 0, %v7390
        %v7392 = vsel %vm7391, 0, %v7390
        %v7393 = vsub.s32 32, %v7392
        %v7394 = vshll.u32 %v7385, %v7392
        %v7395 = vshrl.u32 %v7377, %v7393
        %v7396 = vor.u32 %v7394, %v7395
        %v7397 = vsub.s32 4294967266, %v7392
        %v7398 = vadd.s32 %v7397, 127
        %v7399 = vshll.u32 %v7398, 23
        %v7400 = vor.u32 4788187, %v7399
        %v7401 = vand.u32 2147483647, %v7400
        %v7403 = vcvt.s32.f32 %v7396
        %v7404 = vmul.f32 %v7403, %v7401
        %v7405 = vxor.u32 %v7404, 2147483648
        %v7406 = vsel %vm7285, %v7405, %v7404
        %v7407 = vsub.s32 4, %v7383
        %v7408 = vsel %vm7285, %v7407, %v7383
        %v7409 = vsel %vm7284, %v862, %v7406
        %v7410 = vsel %vm7284, 0, %v7408
        %v7411 = vmul.f32 %v7409, %v7409
        %v7412 = vmul.f32 %v7411, -0.001358992
        %v7413 = vadd.f32 %v7412, 0.041655596
        %v7414 = vmul.f32 %v7411, %v7413
        %v7415 = vadd.f32 %v7414, -0.4999988
        %v7416 = vmul.f32 %v7411, %v7415
        %v7417 = vadd.f32 1.0, %v7416
        %v7418 = vmul.f32 %v7409, %v7409
        %v7419 = vmul.f32 %v7418, -0.00019511016
        %v7420 = vadd.f32 %v7419, 0.008332121
        %v7421 = vmul.f32 %v7418, %v7420
        %v7422 = vadd.f32 %v7421, -0.16666654
        %v7423 = vmul.f32 %v7418, %v7422
        %v7424 = vadd.f32 %v7423, 1.0
        %v7425 = vmul.f32 %v7424, %v7409
        %vm7426 = vweird.f32 %v862
        %v7427 = vadd.s32 %v7410, 3
        %v7428 = vand.u32 %v7427, 3
        %vm7429 = vcmp.lt.s32.totalorder %v7428, 2
        %vm7430 = vcmp.eq.s32.totalorder %v7428, 0
        %v7431 = vxor.u32 %v7425, 2147483648
        %v7432 = vsel %vm7430, %v7417, %v7431
        %vm7433 = vcmp.eq.s32.totalorder %v7428, 2
        %v7434 = vxor.u32 %v7417, 2147483648
        %v7435 = vsel %vm7433, %v7434, %v7425
        %v7436 = vsel %vm7429, %v7432, %v7435
        %v7437 = vsel %vm7426, nan, %v7436
        %v7438 = vand.u32 2147483647, %v1504
        %vm7439 = vcmp.le.f32.partialorder %v7438, 0.7853982
        %vm7440 = vcmp.lt.s32.totalorder %v1504, 0
        %v7441 = vand.u32 %v1504, 2139095040
        %v7442 = vshrl.u32 %v7441, 23
        %v7443 = vsub.s32 %v7442, 127
        %v7444 = vand.u32 2147483647, %v1504
        %v7445 = vand.u32 %v7444, 8388607
        %v7446 = vor.u32 %v7445, 8388608
        %v7447 = vsub.s32 0, %v7446
        %v7448 = vadd.s32 %v7443, 1
        %vm7449 = vcmp.gt.s32.totalorder %v7448, 0
        %v7450 = vsel %vm7449, %v7448, 0
        %v7451 = vshrl.u32 %v7450, 5
        %v7452 = vand.u32 %v7450, 31
        %v7453 = vsub.s32 32, %v7452
        %v7454 = vshrl.u32 683565275, %v7453
        %v7455 = vshll.u32 683565275, %v7452
        %v7456 = vshrl.u32 2475754826, %v7453
        %v7457 = vor.u32 %v7455, %v7456
        %v7458 = vshll.u32 2475754826, %v7452
        %v7459 = vshrl.u32 2131351028, %v7453
        %v7460 = vor.u32 %v7458, %v7459
        %v7461 = vshll.u32 2131351028, %v7452
        %v7462 = vshrl.u32 2102212464, %v7453
        %v7463 = vor.u32 %v7461, %v7462
        %v7464 = vshll.u32 2102212464, %v7452
        %v7465 = vshrl.u32 920167782, %v7453
        %v7466 = vor.u32 %v7464, %v7465
        %v7467 = vshll.u32 920167782, %v7452
        %v7468 = vshrl.u32 1326507024, %v7453
        %v7469 = vor.u32 %v7467, %v7468
        %vm7470 = vcmp.lt.s32.totalorder %v7451, 1
        %vm7471 = vcmp.lt.s32.totalorder %v7451, 2
        %vm7472 = vcmp.lt.s32.totalorder %v7451, 3
        %vm7473 = vcmp.lt.s32.totalorder %v7451, 4
        %v7474 = vsel %vm7470, %v7454, %v7457
        %v7475 = vsel %vm7473, %v7463, 2102212464
        %v7476 = vsel %vm7472, %v7460, %v7475
        %v7477 = vsel %vm7471, %v7474, %v7476
        %v7478 = vsel %vm7470, %v7457, %v7460
        %v7479 = vsel %vm7473, %v7466, 920167782
        %v7480 = vsel %vm7472, %v7463, %v7479
        %v7481 = vsel %vm7471, %v7478, %v7480
        %v7482 = vsel %vm7470, %v7460, %v7463
        %v7483 = vsel %vm7473, %v7469, 1326507024
        %v7484 = vsel %vm7472, %v7466, %v7483
        %v7485 = vsel %vm7471, %v7482, %v7484
        %v7486 = vshll.u32 %v7446, 8
        %v7487 = vand.u32 %v7486, 65535
        %v7488 = vshrl.u32 %v7486, 16
        %v7489 = vand.u32 %v7485, 65535
        %v7490 = vshrl.u32 %v7485, 16
        %v7491 = vmul.u32 %v7487, %v7489
        %v7492 = vmul.u32 %v7487, %v7490
        %v7493 = vmul.u32 %v7488, %v7489
        %v7494 = vmul.u32 %v7488, %v7490
        %v7495 = vshll.u32 %v7492, 16
        %v7496 = vshrl.u32 %v7492, 16
        %v7497 = vshll.u32 %v7493, 16
        %v7498 = vshrl.u32 %v7493, 16
        %vm7499 = vc.u32 %v7491, %v7495
        %v7500 = vsel %vm7499, 1, 0
        %v7501 = vadd.s32 %v7491, %v7495
        %v7502 = vadd.s32 %v7494, %v7500
        %vm7503 = vc.u32 %v7501, %v7497
        %v7504 = vsel %vm7503, 1, 0
        %v7505 = vadd.s32 %v7501, %v7497
        %v7506 = vadd.s32 %v7502, %v7504
        %v7507 = vadd.s32 %v7506, %v7496
        %v7508 = vadd.s32 %v7507, %v7498
        %v7509 = vand.u32 %v7486, 65535
        %v7510 = vshrl.u32 %v7486, 16
        %v7511 = vand.u32 %v7481, 65535
        %v7512 = vshrl.u32 %v7481, 16
        %v7513 = vmul.u32 %v7509, %v7511
        %v7514 = vmul.u32 %v7509, %v7512
        %v7515 = vmul.u32 %v7510, %v7511
        %v7516 = vmul.u32 %v7510, %v7512
        %v7517 = vshll.u32 %v7514, 16
        %v7518 = vshrl.u32 %v7514, 16
        %v7519 = vshll.u32 %v7515, 16
        %v7520 = vshrl.u32 %v7515, 16
        %vm7521 = vc.u32 %v7513, %v7517
        %v7522 = vsel %vm7521, 1, 0
        %v7523 = vadd.s32 %v7513, %v7517
        %v7524 = vadd.s32 %v7516, %v7522
        %vm7525 = vc.u32 %v7523, %v7519
        %v7526 = vsel %vm7525, 1, 0
        %v7527 = vadd.s32 %v7523, %v7519
        %v7528 = vadd.s32 %v7524, %v7526
        %v7529 = vadd.s32 %v7528, %v7518
        %v7530 = vadd.s32 %v7529, %v7520
        %v7531 = vmul.u32 %v7486, %v7477
        %v7532 = vadd.s32 %v7508, %v7527
        %vm7533 = vc.u32 %v7508, %v7527
        %v7534 = vadd.s32 %v7530, 1
        %v7535 = vsel %vm7533, %v7534, %v7530
        %v7536 = vadd.s32 %v7531, %v7535
        %v7537 = vadd.s32 %v7536, 536870912
        %v7538 = vshrl.u32 %v7537, 30
        %v7539 = vshll.u32 %v7538, 30
        %v7540 = vsub.s32 %v7536, %v7539
        %vm7541 = vcmp.lt.s32.totalorder %v7540, 0
        %v7542 = vsub.s32 0, %v7540
        %v7543 = vsel %vm7541, %v7542, %v7540
        %v7544 = vclz %v7543
        %v7545 = vsub.s32 %v7544, 2
        %vm7546 = vcmp.gt.s32.totalorder 0, %v7545
        %v7547 = vsel %vm7546, 0, %v7545
        %v7548 = vsub.s32 32, %v7547
        %v7549 = vshll.u32 %v7540, %v7547
        %v7550 = vshrl.u32 %v7532, %v7548
        %v7551 = vor.u32 %v7549, %v7550
        %v7552 = vsub.s32 4294967266, %v7547
        %v7553 = vadd.s32 %v7552, 127
        %v7554 = vshll.u32 %v7553, 23
        %v7555 = vor.u32 4788187, %v7554
        %v7556 = vand.u32 2147483647, %v7555
        %v7558 = vcvt.s32.f32 %v7551
        %v7559 = vmul.f32 %v7558, %v7556
        %v7560 = vxor.u32 %v7559, 2147483648
        %v7561 = vsel %vm7440, %v7560, %v7559
        %v7562 = vsub.s32 4, %v7538
        %v7563 = vsel %vm7440, %v7562, %v7538
        %v7564 = vsel %vm7439, %v1504, %v7561
        %v7565 = vsel %vm7439, 0, %v7563
        %v7566 = vmul.f32 %v7564, %v7564
        %v7567 = vmul.f32 %v7566, -0.001358992
        %v7568 = vadd.f32 %v7567, 0.041655596
        %v7569 = vmul.f32 %v7566, %v7568
        %v7570 = vadd.f32 %v7569, -0.4999988
        %v7571 = vmul.f32 %v7566, %v7570
        %v7572 = vadd.f32 1.0, %v7571
        %v7573 = vmul.f32 %v7564, %v7564
        %v7574 = vmul.f32 %v7573, -0.00019511016
        %v7575 = vadd.f32 %v7574, 0.008332121
        %v7576 = vmul.f32 %v7573, %v7575
        %v7577 = vadd.f32 %v7576, -0.16666654
        %v7578 = vmul.f32 %v7573, %v7577
        %v7579 = vadd.f32 %v7578, 1.0
        %v7580 = vmul.f32 %v7579, %v7564
        %vm7581 = vweird.f32 %v1504
        %v7582 = vadd.s32 %v7565, 3
        %v7583 = vand.u32 %v7582, 3
        %vm7584 = vcmp.lt.s32.totalorder %v7583, 2
        %vm7585 = vcmp.eq.s32.totalorder %v7583, 0
        %v7586 = vxor.u32 %v7580, 2147483648
        %v7587 = vsel %vm7585, %v7572, %v7586
        %vm7588 = vcmp.eq.s32.totalorder %v7583, 2
        %v7589 = vxor.u32 %v7572, 2147483648
        %v7590 = vsel %vm7588, %v7589, %v7580
        %v7591 = vsel %vm7584, %v7587, %v7590
        %v7592 = vsel %vm7581, nan, %v7591
        %v7593 = vand.u32 2147483647, %v2146
        %vm7594 = vcmp.le.f32.partialorder %v7593, 0.7853982
        %vm7595 = vcmp.lt.s32.totalorder %v2146, 0
        %v7596 = vand.u32 %v2146, 2139095040
        %v7597 = vshrl.u32 %v7596, 23
        %v7598 = vsub.s32 %v7597, 127
        %v7599 = vand.u32 2147483647, %v2146
        %v7600 = vand.u32 %v7599, 8388607
        %v7601 = vor.u32 %v7600, 8388608
        %v7602 = vsub.s32 0, %v7601
        %v7603 = vadd.s32 %v7598, 1
        %vm7604 = vcmp.gt.s32.totalorder %v7603, 0
        %v7605 = vsel %vm7604, %v7603, 0
        %v7606 = vshrl.u32 %v7605, 5
        %v7607 = vand.u32 %v7605, 31
        %v7608 = vsub.s32 32, %v7607
        %v7609 = vshrl.u32 683565275, %v7608
        %v7610 = vshll.u32 683565275, %v7607
        %v7611 = vshrl.u32 2475754826, %v7608
        %v7612 = vor.u32 %v7610, %v7611
        %v7613 = vshll.u32 2475754826, %v7607
        %v7614 = vshrl.u32 2131351028, %v7608
        %v7615 = vor.u32 %v7613, %v7614
        %v7616 = vshll.u32 2131351028, %v7607
        %v7617 = vshrl.u32 2102212464, %v7608
        %v7618 = vor.u32 %v7616, %v7617
        %v7619 = vshll.u32 2102212464, %v7607
        %v7620 = vshrl.u32 920167782, %v7608
        %v7621 = vor.u32 %v7619, %v7620
        %v7622 = vshll.u32 920167782, %v7607
        %v7623 = vshrl.u32 1326507024, %v7608
        %v7624 = vor.u32 %v7622, %v7623
        %vm7625 = vcmp.lt.s32.totalorder %v7606, 1
        %vm7626 = vcmp.lt.s32.totalorder %v7606, 2
        %vm7627 = vcmp.lt.s32.totalorder %v7606, 3
        %vm7628 = vcmp.lt.s32.totalorder %v7606, 4
        %v7629 = vsel %vm7625, %v7609, %v7612
        %v7630 = vsel %vm7628, %v7618, 2102212464
        %v7631 = vsel %vm7627, %v7615, %v7630
        %v7632 = vsel %vm7626, %v7629, %v7631
        %v7633 = vsel %vm7625, %v7612, %v7615
        %v7634 = vsel %vm7628, %v7621, 920167782
        %v7635 = vsel %vm7627, %v7618, %v7634
        %v7636 = vsel %vm7626, %v7633, %v7635
        %v7637 = vsel %vm7625, %v7615, %v7618
        %v7638 = vsel %vm7628, %v7624, 1326507024
        %v7639 = vsel %vm7627, %v7621, %v7638
        %v7640 = vsel %vm7626, %v7637, %v7639
        %v7641 = vshll.u32 %v7601, 8
        %v7642 = vand.u32 %v7641, 65535
        %v7643 = vshrl.u32 %v7641, 16
        %v7644 = vand.u32 %v7640, 65535
        %v7645 = vshrl.u32 %v7640, 16
        %v7646 = vmul.u32 %v7642, %v7644
        %v7647 = vmul.u32 %v7642, %v7645
        %v7648 = vmul.u32 %v7643, %v7644
        %v7649 = vmul.u32 %v7643, %v7645
        %v7650 = vshll.u32 %v7647, 16
        %v7651 = vshrl.u32 %v7647, 16
        %v7652 = vshll.u32 %v7648, 16
        %v7653 = vshrl.u32 %v7648, 16
        %vm7654 = vc.u32 %v7646, %v7650
        %v7655 = vsel %vm7654, 1, 0
        %v7656 = vadd.s32 %v7646, %v7650
        %v7657 = vadd.s32 %v7649, %v7655
        %vm7658 = vc.u32 %v7656, %v7652
        %v7659 = vsel %vm7658, 1, 0
        %v7660 = vadd.s32 %v7656, %v7652
        %v7661 = vadd.s32 %v7657, %v7659
        %v7662 = vadd.s32 %v7661, %v7651
        %v7663 = vadd.s32 %v7662, %v7653
        %v7664 = vand.u32 %v7641, 65535
        %v7665 = vshrl.u32 %v7641, 16
        %v7666 = vand.u32 %v7636, 65535
        %v7667 = vshrl.u32 %v7636, 16
        %v7668 = vmul.u32 %v7664, %v7666
        %v7669 = vmul.u32 %v7664, %v7667
        %v7670 = vmul.u32 %v7665, %v7666
        %v7671 = vmul.u32 %v7665, %v7667
        %v7672 = vshll.u32 %v7669, 16
        %v7673 = vshrl.u32 %v7669, 16
        %v7674 = vshll.u32 %v7670, 16
        %v7675 = vshrl.u32 %v7670, 16
        %vm7676 = vc.u32 %v7668, %v7672
        %v7677 = vsel %vm7676, 1, 0
        %v7678 = vadd.s32 %v7668, %v7672
        %v7679 = vadd.s32 %v7671, %v7677
        %vm7680 = vc.u32 %v7678, %v7674
        %v7681 = vsel %vm7680, 1, 0
        %v7682 = vadd.s32 %v7678, %v7674
        %v7683 = vadd.s32 %v7679, %v7681
        %v7684 = vadd.s32 %v7683, %v7673
        %v7685 = vadd.s32 %v7684, %v7675
        %v7686 = vmul.u32 %v7641, %v7632
        %v7687 = vadd.s32 %v7663, %v7682
        %vm7688 = vc.u32 %v7663, %v7682
        %v7689 = vadd.s32 %v7685, 1
        %v7690 = vsel %vm7688, %v7689, %v7685
        %v7691 = vadd.s32 %v7686, %v7690
        %v7692 = vadd.s32 %v7691, 536870912
        %v7693 = vshrl.u32 %v7692, 30
        %v7694 = vshll.u32 %v7693, 30
        %v7695 = vsub.s32 %v7691, %v7694
        %vm7696 = vcmp.lt.s32.totalorder %v7695, 0
        %v7697 = vsub.s32 0, %v7695
        %v7698 = vsel %vm7696, %v7697, %v7695
        %v7699 = vclz %v7698
        %v7700 = vsub.s32 %v7699, 2
        %vm7701 = vcmp.gt.s32.totalorder 0, %v7700
        %v7702 = vsel %vm7701, 0, %v7700
        %v7703 = vsub.s32 32, %v7702
        %v7704 = vshll.u32 %v7695, %v7702
        %v7705 = vshrl.u32 %v7687, %v7703
        %v7706 = vor.u32 %v7704, %v7705
        %v7707 = vsub.s32 4294967266, %v7702
        %v7708 = vadd.s32 %v7707, 127
        %v7709 = vshll.u32 %v7708, 23
        %v7710 = vor.u32 4788187, %v7709
        %v7711 = vand.u32 2147483647, %v7710
        %v7713 = vcvt.s32.f32 %v7706
        %v7714 = vmul.f32 %v7713, %v7711
        %v7715 = vxor.u32 %v7714, 2147483648
        %v7716 = vsel %vm7595, %v7715, %v7714
        %v7717 = vsub.s32 4, %v7693
        %v7718 = vsel %vm7595, %v7717, %v7693
        %v7719 = vsel %vm7594, %v2146, %v7716
        %v7720 = vsel %vm7594, 0, %v7718
        %v7721 = vmul.f32 %v7719, %v7719
        %v7722 = vmul.f32 %v7721, -0.001358992
        %v7723 = vadd.f32 %v7722, 0.041655596
        %v7724 = vmul.f32 %v7721, %v7723
        %v7725 = vadd.f32 %v7724, -0.4999988
        %v7726 = vmul.f32 %v7721, %v7725
        %v7727 = vadd.f32 1.0, %v7726
        %v7728 = vmul.f32 %v7719, %v7719
        %v7729 = vmul.f32 %v7728, -0.00019511016
        %v7730 = vadd.f32 %v7729, 0.008332121
        %v7731 = vmul.f32 %v7728, %v7730
        %v7732 = vadd.f32 %v7731, -0.16666654
        %v7733 = vmul.f32 %v7728, %v7732
        %v7734 = vadd.f32 %v7733, 1.0
        %v7735 = vmul.f32 %v7734, %v7719
        %vm7736 = vweird.f32 %v2146
        %v7737 = vadd.s32 %v7720, 3
        %v7738 = vand.u32 %v7737, 3
        %vm7739 = vcmp.lt.s32.totalorder %v7738, 2
        %vm7740 = vcmp.eq.s32.totalorder %v7738, 0
        %v7741 = vxor.u32 %v7735, 2147483648
        %v7742 = vsel %vm7740, %v7727, %v7741
        %vm7743 = vcmp.eq.s32.totalorder %v7738, 2
        %v7744 = vxor.u32 %v7727, 2147483648
        %v7745 = vsel %vm7743, %v7744, %v7735
        %v7746 = vsel %vm7739, %v7742, %v7745
        %v7747 = vsel %vm7736, nan, %v7746
        %v7748 = vand.u32 2147483647, %v866
        %vm7749 = vcmp.le.f32.partialorder %v7748, 0.7853982
        %vm7750 = vcmp.lt.s32.totalorder %v866, 0
        %v7751 = vand.u32 %v866, 2139095040
        %v7752 = vshrl.u32 %v7751, 23
        %v7753 = vsub.s32 %v7752, 127
        %v7754 = vand.u32 2147483647, %v866
        %v7755 = vand.u32 %v7754, 8388607
        %v7756 = vor.u32 %v7755, 8388608
        %v7757 = vsub.s32 0, %v7756
        %v7758 = vadd.s32 %v7753, 1
        %vm7759 = vcmp.gt.s32.totalorder %v7758, 0
        %v7760 = vsel %vm7759, %v7758, 0
        %v7761 = vshrl.u32 %v7760, 5
        %v7762 = vand.u32 %v7760, 31
        %v7763 = vsub.s32 32, %v7762
        %v7764 = vshrl.u32 683565275, %v7763
        %v7765 = vshll.u32 683565275, %v7762
        %v7766 = vshrl.u32 2475754826, %v7763
        %v7767 = vor.u32 %v7765, %v7766
        %v7768 = vshll.u32 2475754826, %v7762
        %v7769 = vshrl.u32 2131351028, %v7763
        %v7770 = vor.u32 %v7768, %v7769
        %v7771 = vshll.u32 2131351028, %v7762
        %v7772 = vshrl.u32 2102212464, %v7763
        %v7773 = vor.u32 %v7771, %v7772
        %v7774 = vshll.u32 2102212464, %v7762
        %v7775 = vshrl.u32 920167782, %v7763
        %v7776 = vor.u32 %v7774, %v7775
        %v7777 = vshll.u32 920167782, %v7762
        %v7778 = vshrl.u32 1326507024, %v7763
        %v7779 = vor.u32 %v7777, %v7778
        %vm7780 = vcmp.lt.s32.totalorder %v7761, 1
        %vm7781 = vcmp.lt.s32.totalorder %v7761, 2
        %vm7782 = vcmp.lt.s32.totalorder %v7761, 3
        %vm7783 = vcmp.lt.s32.totalorder %v7761, 4
        %v7784 = vsel %vm7780, %v7764, %v7767
        %v7785 = vsel %vm7783, %v7773, 2102212464
        %v7786 = vsel %vm7782, %v7770, %v7785
        %v7787 = vsel %vm7781, %v7784, %v7786
        %v7788 = vsel %vm7780, %v7767, %v7770
        %v7789 = vsel %vm7783, %v7776, 920167782
        %v7790 = vsel %vm7782, %v7773, %v7789
        %v7791 = vsel %vm7781, %v7788, %v7790
        %v7792 = vsel %vm7780, %v7770, %v7773
        %v7793 = vsel %vm7783, %v7779, 1326507024
        %v7794 = vsel %vm7782, %v7776, %v7793
        %v7795 = vsel %vm7781, %v7792, %v7794
        %v7796 = vshll.u32 %v7756, 8
        %v7797 = vand.u32 %v7796, 65535
        %v7798 = vshrl.u32 %v7796, 16
        %v7799 = vand.u32 %v7795, 65535
        %v7800 = vshrl.u32 %v7795, 16
        %v7801 = vmul.u32 %v7797, %v7799
        %v7802 = vmul.u32 %v7797, %v7800
        %v7803 = vmul.u32 %v7798, %v7799
        %v7804 = vmul.u32 %v7798, %v7800
        %v7805 = vshll.u32 %v7802, 16
        %v7806 = vshrl.u32 %v7802, 16
        %v7807 = vshll.u32 %v7803, 16
        %v7808 = vshrl.u32 %v7803, 16
        %vm7809 = vc.u32 %v7801, %v7805
        %v7810 = vsel %vm7809, 1, 0
        %v7811 = vadd.s32 %v7801, %v7805
        %v7812 = vadd.s32 %v7804, %v7810
        %vm7813 = vc.u32 %v7811, %v7807
        %v7814 = vsel %vm7813, 1, 0
        %v7815 = vadd.s32 %v7811, %v7807
        %v7816 = vadd.s32 %v7812, %v7814
        %v7817 = vadd.s32 %v7816, %v7806
        %v7818 = vadd.s32 %v7817, %v7808
        %v7819 = vand.u32 %v7796, 65535
        %v7820 = vshrl.u32 %v7796, 16
        %v7821 = vand.u32 %v7791, 65535
        %v7822 = vshrl.u32 %v7791, 16
        %v7823 = vmul.u32 %v7819, %v7821
        %v7824 = vmul.u32 %v7819, %v7822
        %v7825 = vmul.u32 %v7820, %v7821
        %v7826 = vmul.u32 %v7820, %v7822
        %v7827 = vshll.u32 %v7824, 16
        %v7828 = vshrl.u32 %v7824, 16
        %v7829 = vshll.u32 %v7825, 16
        %v7830 = vshrl.u32 %v7825, 16
        %vm7831 = vc.u32 %v7823, %v7827
        %v7832 = vsel %vm7831, 1, 0
        %v7833 = vadd.s32 %v7823, %v7827
        %v7834 = vadd.s32 %v7826, %v7832
        %vm7835 = vc.u32 %v7833, %v7829
        %v7836 = vsel %vm7835, 1, 0
        %v7837 = vadd.s32 %v7833, %v7829
        %v7838 = vadd.s32 %v7834, %v7836
        %v7839 = vadd.s32 %v7838, %v7828
        %v7840 = vadd.s32 %v7839, %v7830
        %v7841 = vmul.u32 %v7796, %v7787
        %v7842 = vadd.s32 %v7818, %v7837
        %vm7843 = vc.u32 %v7818, %v7837
        %v7844 = vadd.s32 %v7840, 1
        %v7845 = vsel %vm7843, %v7844, %v7840
        %v7846 = vadd.s32 %v7841, %v7845
        %v7847 = vadd.s32 %v7846, 536870912
        %v7848 = vshrl.u32 %v7847, 30
        %v7849 = vshll.u32 %v7848, 30
        %v7850 = vsub.s32 %v7846, %v7849
        %vm7851 = vcmp.lt.s32.totalorder %v7850, 0
        %v7852 = vsub.s32 0, %v7850
        %v7853 = vsel %vm7851, %v7852, %v7850
        %v7854 = vclz %v7853
        %v7855 = vsub.s32 %v7854, 2
        %vm7856 = vcmp.gt.s32.totalorder 0, %v7855
        %v7857 = vsel %vm7856, 0, %v7855
        %v7858 = vsub.s32 32, %v7857
        %v7859 = vshll.u32 %v7850, %v7857
        %v7860 = vshrl.u32 %v7842, %v7858
        %v7861 = vor.u32 %v7859, %v7860
        %v7862 = vsub.s32 4294967266, %v7857
        %v7863 = vadd.s32 %v7862, 127
        %v7864 = vshll.u32 %v7863, 23
        %v7865 = vor.u32 4788187, %v7864
        %v7866 = vand.u32 2147483647, %v7865
        %v7868 = vcvt.s32.f32 %v7861
        %v7869 = vmul.f32 %v7868, %v7866
        %v7870 = vxor.u32 %v7869, 2147483648
        %v7871 = vsel %vm7750, %v7870, %v7869
        %v7872 = vsub.s32 4, %v7848
        %v7873 = vsel %vm7750, %v7872, %v7848
        %v7874 = vsel %vm7749, %v866, %v7871
        %v7875 = vsel %vm7749, 0, %v7873
        %v7876 = vmul.f32 %v7874, %v7874
        %v7877 = vmul.f32 %v7876, -0.001358992
        %v7878 = vadd.f32 %v7877, 0.041655596
        %v7879 = vmul.f32 %v7876, %v7878
        %v7880 = vadd.f32 %v7879, -0.4999988
        %v7881 = vmul.f32 %v7876, %v7880
        %v7882 = vadd.f32 1.0, %v7881
        %v7883 = vmul.f32 %v7874, %v7874
        %v7884 = vmul.f32 %v7883, -0.00019511016
        %v7885 = vadd.f32 %v7884, 0.008332121
        %v7886 = vmul.f32 %v7883, %v7885
        %v7887 = vadd.f32 %v7886, -0.16666654
        %v7888 = vmul.f32 %v7883, %v7887
        %v7889 = vadd.f32 %v7888, 1.0
        %v7890 = vmul.f32 %v7889, %v7874
        %vm7891 = vweird.f32 %v866
        %v7892 = vadd.s32 %v7875, 3
        %v7893 = vand.u32 %v7892, 3
        %vm7894 = vcmp.lt.s32.totalorder %v7893, 2
        %vm7895 = vcmp.eq.s32.totalorder %v7893, 0
        %v7896 = vxor.u32 %v7890, 2147483648
        %v7897 = vsel %vm7895, %v7882, %v7896
        %vm7898 = vcmp.eq.s32.totalorder %v7893, 2
        %v7899 = vxor.u32 %v7882, 2147483648
        %v7900 = vsel %vm7898, %v7899, %v7890
        %v7901 = vsel %vm7894, %v7897, %v7900
        %v7902 = vsel %vm7891, nan, %v7901
        %v7903 = vand.u32 2147483647, %v1508
        %vm7904 = vcmp.le.f32.partialorder %v7903, 0.7853982
        %vm7905 = vcmp.lt.s32.totalorder %v1508, 0
        %v7906 = vand.u32 %v1508, 2139095040
        %v7907 = vshrl.u32 %v7906, 23
        %v7908 = vsub.s32 %v7907, 127
        %v7909 = vand.u32 2147483647, %v1508
        %v7910 = vand.u32 %v7909, 8388607
        %v7911 = vor.u32 %v7910, 8388608
        %v7912 = vsub.s32 0, %v7911
        %v7913 = vadd.s32 %v7908, 1
        %vm7914 = vcmp.gt.s32.totalorder %v7913, 0
        %v7915 = vsel %vm7914, %v7913, 0
        %v7916 = vshrl.u32 %v7915, 5
        %v7917 = vand.u32 %v7915, 31
        %v7918 = vsub.s32 32, %v7917
        %v7919 = vshrl.u32 683565275, %v7918
        %v7920 = vshll.u32 683565275, %v7917
        %v7921 = vshrl.u32 2475754826, %v7918
        %v7922 = vor.u32 %v7920, %v7921
        %v7923 = vshll.u32 2475754826, %v7917
        %v7924 = vshrl.u32 2131351028, %v7918
        %v7925 = vor.u32 %v7923, %v7924
        %v7926 = vshll.u32 2131351028, %v7917
        %v7927 = vshrl.u32 2102212464, %v7918
        %v7928 = vor.u32 %v7926, %v7927
        %v7929 = vshll.u32 2102212464, %v7917
        %v7930 = vshrl.u32 920167782, %v7918
        %v7931 = vor.u32 %v7929, %v7930
        %v7932 = vshll.u32 920167782, %v7917
        %v7933 = vshrl.u32 1326507024, %v7918
        %v7934 = vor.u32 %v7932, %v7933
        %vm7935 = vcmp.lt.s32.totalorder %v7916, 1
        %vm7936 = vcmp.lt.s32.totalorder %v7916, 2
        %vm7937 = vcmp.lt.s32.totalorder %v7916, 3
        %vm7938 = vcmp.lt.s32.totalorder %v7916, 4
        %v7939 = vsel %vm7935, %v7919, %v7922
        %v7940 = vsel %vm7938, %v7928, 2102212464
        %v7941 = vsel %vm7937, %v7925, %v7940
        %v7942 = vsel %vm7936, %v7939, %v7941
        %v7943 = vsel %vm7935, %v7922, %v7925
        %v7944 = vsel %vm7938, %v7931, 920167782
        %v7945 = vsel %vm7937, %v7928, %v7944
        %v7946 = vsel %vm7936, %v7943, %v7945
        %v7947 = vsel %vm7935, %v7925, %v7928
        %v7948 = vsel %vm7938, %v7934, 1326507024
        %v7949 = vsel %vm7937, %v7931, %v7948
        %v7950 = vsel %vm7936, %v7947, %v7949
        %v7951 = vshll.u32 %v7911, 8
        %v7952 = vand.u32 %v7951, 65535
        %v7953 = vshrl.u32 %v7951, 16
        %v7954 = vand.u32 %v7950, 65535
        %v7955 = vshrl.u32 %v7950, 16
        %v7956 = vmul.u32 %v7952, %v7954
        %v7957 = vmul.u32 %v7952, %v7955
        %v7958 = vmul.u32 %v7953, %v7954
        %v7959 = vmul.u32 %v7953, %v7955
        %v7960 = vshll.u32 %v7957, 16
        %v7961 = vshrl.u32 %v7957, 16
        %v7962 = vshll.u32 %v7958, 16
        %v7963 = vshrl.u32 %v7958, 16
        %vm7964 = vc.u32 %v7956, %v7960
        %v7965 = vsel %vm7964, 1, 0
        %v7966 = vadd.s32 %v7956, %v7960
        %v7967 = vadd.s32 %v7959, %v7965
        %vm7968 = vc.u32 %v7966, %v7962
        %v7969 = vsel %vm7968, 1, 0
        %v7970 = vadd.s32 %v7966, %v7962
        %v7971 = vadd.s32 %v7967, %v7969
        %v7972 = vadd.s32 %v7971, %v7961
        %v7973 = vadd.s32 %v7972, %v7963
        %v7974 = vand.u32 %v7951, 65535
        %v7975 = vshrl.u32 %v7951, 16
        %v7976 = vand.u32 %v7946, 65535
        %v7977 = vshrl.u32 %v7946, 16
        %v7978 = vmul.u32 %v7974, %v7976
        %v7979 = vmul.u32 %v7974, %v7977
        %v7980 = vmul.u32 %v7975, %v7976
        %v7981 = vmul.u32 %v7975, %v7977
        %v7982 = vshll.u32 %v7979, 16
        %v7983 = vshrl.u32 %v7979, 16
        %v7984 = vshll.u32 %v7980, 16
        %v7985 = vshrl.u32 %v7980, 16
        %vm7986 = vc.u32 %v7978, %v7982
        %v7987 = vsel %vm7986, 1, 0
        %v7988 = vadd.s32 %v7978, %v7982
        %v7989 = vadd.s32 %v7981, %v7987
        %vm7990 = vc.u32 %v7988, %v7984
        %v7991 = vsel %vm7990, 1, 0
        %v7992 = vadd.s32 %v7988, %v7984
        %v7993 = vadd.s32 %v7989, %v7991
        %v7994 = vadd.s32 %v7993, %v7983
        %v7995 = vadd.s32 %v7994, %v7985
        %v7996 = vmul.u32 %v7951, %v7942
        %v7997 = vadd.s32 %v7973, %v7992
        %vm7998 = vc.u32 %v7973, %v7992
        %v7999 = vadd.s32 %v7995, 1
        %v8000 = vsel %vm7998, %v7999, %v7995
        %v8001 = vadd.s32 %v7996, %v8000
        %v8002 = vadd.s32 %v8001, 536870912
        %v8003 = vshrl.u32 %v8002, 30
        %v8004 = vshll.u32 %v8003, 30
        %v8005 = vsub.s32 %v8001, %v8004
        %vm8006 = vcmp.lt.s32.totalorder %v8005, 0
        %v8007 = vsub.s32 0, %v8005
        %v8008 = vsel %vm8006, %v8007, %v8005
        %v8009 = vclz %v8008
        %v8010 = vsub.s32 %v8009, 2
        %vm8011 = vcmp.gt.s32.totalorder 0, %v8010
        %v8012 = vsel %vm8011, 0, %v8010
        %v8013 = vsub.s32 32, %v8012
        %v8014 = vshll.u32 %v8005, %v8012
        %v8015 = vshrl.u32 %v7997, %v8013
        %v8016 = vor.u32 %v8014, %v8015
        %v8017 = vsub.s32 4294967266, %v8012
        %v8018 = vadd.s32 %v8017, 127
        %v8019 = vshll.u32 %v8018, 23
        %v8020 = vor.u32 4788187, %v8019
        %v8021 = vand.u32 2147483647, %v8020
        %v8023 = vcvt.s32.f32 %v8016
        %v8024 = vmul.f32 %v8023, %v8021
        %v8025 = vxor.u32 %v8024, 2147483648
        %v8026 = vsel %vm7905, %v8025, %v8024
        %v8027 = vsub.s32 4, %v8003
        %v8028 = vsel %vm7905, %v8027, %v8003
        %v8029 = vsel %vm7904, %v1508, %v8026
        %v8030 = vsel %vm7904, 0, %v8028
        %v8031 = vmul.f32 %v8029, %v8029
        %v8032 = vmul.f32 %v8031, -0.001358992
        %v8033 = vadd.f32 %v8032, 0.041655596
        %v8034 = vmul.f32 %v8031, %v8033
        %v8035 = vadd.f32 %v8034, -0.4999988
        %v8036 = vmul.f32 %v8031, %v8035
        %v8037 = vadd.f32 1.0, %v8036
        %v8038 = vmul.f32 %v8029, %v8029
        %v8039 = vmul.f32 %v8038, -0.00019511016
        %v8040 = vadd.f32 %v8039, 0.008332121
        %v8041 = vmul.f32 %v8038, %v8040
        %v8042 = vadd.f32 %v8041, -0.16666654
        %v8043 = vmul.f32 %v8038, %v8042
        %v8044 = vadd.f32 %v8043, 1.0
        %v8045 = vmul.f32 %v8044, %v8029
        %vm8046 = vweird.f32 %v1508
        %v8047 = vadd.s32 %v8030, 3
        %v8048 = vand.u32 %v8047, 3
        %vm8049 = vcmp.lt.s32.totalorder %v8048, 2
        %vm8050 = vcmp.eq.s32.totalorder %v8048, 0
        %v8051 = vxor.u32 %v8045, 2147483648
        %v8052 = vsel %vm8050, %v8037, %v8051
        %vm8053 = vcmp.eq.s32.totalorder %v8048, 2
        %v8054 = vxor.u32 %v8037, 2147483648
        %v8055 = vsel %vm8053, %v8054, %v8045
        %v8056 = vsel %vm8049, %v8052, %v8055
        %v8057 = vsel %vm8046, nan, %v8056
        %v8058 = vand.u32 2147483647, %v2150
        %vm8059 = vcmp.le.f32.partialorder %v8058, 0.7853982
        %vm8060 = vcmp.lt.s32.totalorder %v2150, 0
        %v8061 = vand.u32 %v2150, 2139095040
        %v8062 = vshrl.u32 %v8061, 23
        %v8063 = vsub.s32 %v8062, 127
        %v8064 = vand.u32 2147483647, %v2150
        %v8065 = vand.u32 %v8064, 8388607
        %v8066 = vor.u32 %v8065, 8388608
        %v8067 = vsub.s32 0, %v8066
        %v8068 = vadd.s32 %v8063, 1
        %vm8069 = vcmp.gt.s32.totalorder %v8068, 0
        %v8070 = vsel %vm8069, %v8068, 0
        %v8071 = vshrl.u32 %v8070, 5
        %v8072 = vand.u32 %v8070, 31
        %v8073 = vsub.s32 32, %v8072
        %v8074 = vshrl.u32 683565275, %v8073
        %v8075 = vshll.u32 683565275, %v8072
        %v8076 = vshrl.u32 2475754826, %v8073
        %v8077 = vor.u32 %v8075, %v8076
        %v8078 = vshll.u32 2475754826, %v8072
        %v8079 = vshrl.u32 2131351028, %v8073
        %v8080 = vor.u32 %v8078, %v8079
        %v8081 = vshll.u32 2131351028, %v8072
        %v8082 = vshrl.u32 2102212464, %v8073
        %v8083 = vor.u32 %v8081, %v8082
        %v8084 = vshll.u32 2102212464, %v8072
        %v8085 = vshrl.u32 920167782, %v8073
        %v8086 = vor.u32 %v8084, %v8085
        %v8087 = vshll.u32 920167782, %v8072
        %v8088 = vshrl.u32 1326507024, %v8073
        %v8089 = vor.u32 %v8087, %v8088
        %vm8090 = vcmp.lt.s32.totalorder %v8071, 1
        %vm8091 = vcmp.lt.s32.totalorder %v8071, 2
        %vm8092 = vcmp.lt.s32.totalorder %v8071, 3
        %vm8093 = vcmp.lt.s32.totalorder %v8071, 4
        %v8094 = vsel %vm8090, %v8074, %v8077
        %v8095 = vsel %vm8093, %v8083, 2102212464
        %v8096 = vsel %vm8092, %v8080, %v8095
        %v8097 = vsel %vm8091, %v8094, %v8096
        %v8098 = vsel %vm8090, %v8077, %v8080
        %v8099 = vsel %vm8093, %v8086, 920167782
        %v8100 = vsel %vm8092, %v8083, %v8099
        %v8101 = vsel %vm8091, %v8098, %v8100
        %v8102 = vsel %vm8090, %v8080, %v8083
        %v8103 = vsel %vm8093, %v8089, 1326507024
        %v8104 = vsel %vm8092, %v8086, %v8103
        %v8105 = vsel %vm8091, %v8102, %v8104
        %v8106 = vshll.u32 %v8066, 8
        %v8107 = vand.u32 %v8106, 65535
        %v8108 = vshrl.u32 %v8106, 16
        %v8109 = vand.u32 %v8105, 65535
        %v8110 = vshrl.u32 %v8105, 16
        %v8111 = vmul.u32 %v8107, %v8109
        %v8112 = vmul.u32 %v8107, %v8110
        %v8113 = vmul.u32 %v8108, %v8109
        %v8114 = vmul.u32 %v8108, %v8110
        %v8115 = vshll.u32 %v8112, 16
        %v8116 = vshrl.u32 %v8112, 16
        %v8117 = vshll.u32 %v8113, 16
        %v8118 = vshrl.u32 %v8113, 16
        %vm8119 = vc.u32 %v8111, %v8115
        %v8120 = vsel %vm8119, 1, 0
        %v8121 = vadd.s32 %v8111, %v8115
        %v8122 = vadd.s32 %v8114, %v8120
        %vm8123 = vc.u32 %v8121, %v8117
        %v8124 = vsel %vm8123, 1, 0
        %v8125 = vadd.s32 %v8121, %v8117
        %v8126 = vadd.s32 %v8122, %v8124
        %v8127 = vadd.s32 %v8126, %v8116
        %v8128 = vadd.s32 %v8127, %v8118
        %v8129 = vand.u32 %v8106, 65535
        %v8130 = vshrl.u32 %v8106, 16
        %v8131 = vand.u32 %v8101, 65535
        %v8132 = vshrl.u32 %v8101, 16
        %v8133 = vmul.u32 %v8129, %v8131
        %v8134 = vmul.u32 %v8129, %v8132
        %v8135 = vmul.u32 %v8130, %v8131
        %v8136 = vmul.u32 %v8130, %v8132
        %v8137 = vshll.u32 %v8134, 16
        %v8138 = vshrl.u32 %v8134, 16
        %v8139 = vshll.u32 %v8135, 16
        %v8140 = vshrl.u32 %v8135, 16
        %vm8141 = vc.u32 %v8133, %v8137
        %v8142 = vsel %vm8141, 1, 0
        %v8143 = vadd.s32 %v8133, %v8137
        %v8144 = vadd.s32 %v8136, %v8142
        %vm8145 = vc.u32 %v8143, %v8139
        %v8146 = vsel %vm8145, 1, 0
        %v8147 = vadd.s32 %v8143, %v8139
        %v8148 = vadd.s32 %v8144, %v8146
        %v8149 = vadd.s32 %v8148, %v8138
        %v8150 = vadd.s32 %v8149, %v8140
        %v8151 = vmul.u32 %v8106, %v8097
        %v8152 = vadd.s32 %v8128, %v8147
        %vm8153 = vc.u32 %v8128, %v8147
        %v8154 = vadd.s32 %v8150, 1
        %v8155 = vsel %vm8153, %v8154, %v8150
        %v8156 = vadd.s32 %v8151, %v8155
        %v8157 = vadd.s32 %v8156, 536870912
        %v8158 = vshrl.u32 %v8157, 30
        %v8159 = vshll.u32 %v8158, 30
        %v8160 = vsub.s32 %v8156, %v8159
        %vm8161 = vcmp.lt.s32.totalorder %v8160, 0
        %v8162 = vsub.s32 0, %v8160
        %v8163 = vsel %vm8161, %v8162, %v8160
        %v8164 = vclz %v8163
        %v8165 = vsub.s32 %v8164, 2
        %vm8166 = vcmp.gt.s32.totalorder 0, %v8165
        %v8167 = vsel %vm8166, 0, %v8165
        %v8168 = vsub.s32 32, %v8167
        %v8169 = vshll.u32 %v8160, %v8167
        %v8170 = vshrl.u32 %v8152, %v8168
        %v8171 = vor.u32 %v8169, %v8170
        %v8172 = vsub.s32 4294967266, %v8167
        %v8173 = vadd.s32 %v8172, 127
        %v8174 = vshll.u32 %v8173, 23
        %v8175 = vor.u32 4788187, %v8174
        %v8176 = vand.u32 2147483647, %v8175
        %v8178 = vcvt.s32.f32 %v8171
        %v8179 = vmul.f32 %v8178, %v8176
        %v8180 = vxor.u32 %v8179, 2147483648
        %v8181 = vsel %vm8060, %v8180, %v8179
        %v8182 = vsub.s32 4, %v8158
        %v8183 = vsel %vm8060, %v8182, %v8158
        %v8184 = vsel %vm8059, %v2150, %v8181
        %v8185 = vsel %vm8059, 0, %v8183
        %v8186 = vmul.f32 %v8184, %v8184
        %v8187 = vmul.f32 %v8186, -0.001358992
        %v8188 = vadd.f32 %v8187, 0.041655596
        %v8189 = vmul.f32 %v8186, %v8188
        %v8190 = vadd.f32 %v8189, -0.4999988
        %v8191 = vmul.f32 %v8186, %v8190
        %v8192 = vadd.f32 1.0, %v8191
        %v8193 = vmul.f32 %v8184, %v8184
        %v8194 = vmul.f32 %v8193, -0.00019511016
        %v8195 = vadd.f32 %v8194, 0.008332121
        %v8196 = vmul.f32 %v8193, %v8195
        %v8197 = vadd.f32 %v8196, -0.16666654
        %v8198 = vmul.f32 %v8193, %v8197
        %v8199 = vadd.f32 %v8198, 1.0
        %v8200 = vmul.f32 %v8199, %v8184
        %vm8201 = vweird.f32 %v2150
        %v8202 = vadd.s32 %v8185, 3
        %v8203 = vand.u32 %v8202, 3
        %vm8204 = vcmp.lt.s32.totalorder %v8203, 2
        %vm8205 = vcmp.eq.s32.totalorder %v8203, 0
        %v8206 = vxor.u32 %v8200, 2147483648
        %v8207 = vsel %vm8205, %v8192, %v8206
        %vm8208 = vcmp.eq.s32.totalorder %v8203, 2
        %v8209 = vxor.u32 %v8192, 2147483648
        %v8210 = vsel %vm8208, %v8209, %v8200
        %v8211 = vsel %vm8204, %v8207, %v8210
        %v8212 = vsel %vm8201, nan, %v8211
        %v8213 = vand.u32 2147483647, %v870
        %vm8214 = vcmp.le.f32.partialorder %v8213, 0.7853982
        %vm8215 = vcmp.lt.s32.totalorder %v870, 0
        %v8216 = vand.u32 %v870, 2139095040
        %v8217 = vshrl.u32 %v8216, 23
        %v8218 = vsub.s32 %v8217, 127
        %v8219 = vand.u32 2147483647, %v870
        %v8220 = vand.u32 %v8219, 8388607
        %v8221 = vor.u32 %v8220, 8388608
        %v8222 = vsub.s32 0, %v8221
        %v8223 = vadd.s32 %v8218, 1
        %vm8224 = vcmp.gt.s32.totalorder %v8223, 0
        %v8225 = vsel %vm8224, %v8223, 0
        %v8226 = vshrl.u32 %v8225, 5
        %v8227 = vand.u32 %v8225, 31
        %v8228 = vsub.s32 32, %v8227
        %v8229 = vshrl.u32 683565275, %v8228
        %v8230 = vshll.u32 683565275, %v8227
        %v8231 = vshrl.u32 2475754826, %v8228
        %v8232 = vor.u32 %v8230, %v8231
        %v8233 = vshll.u32 2475754826, %v8227
        %v8234 = vshrl.u32 2131351028, %v8228
        %v8235 = vor.u32 %v8233, %v8234
        %v8236 = vshll.u32 2131351028, %v8227
        %v8237 = vshrl.u32 2102212464, %v8228
        %v8238 = vor.u32 %v8236, %v8237
        %v8239 = vshll.u32 2102212464, %v8227
        %v8240 = vshrl.u32 920167782, %v8228
        %v8241 = vor.u32 %v8239, %v8240
        %v8242 = vshll.u32 920167782, %v8227
        %v8243 = vshrl.u32 1326507024, %v8228
        %v8244 = vor.u32 %v8242, %v8243
        %vm8245 = vcmp.lt.s32.totalorder %v8226, 1
        %vm8246 = vcmp.lt.s32.totalorder %v8226, 2
        %vm8247 = vcmp.lt.s32.totalorder %v8226, 3
        %vm8248 = vcmp.lt.s32.totalorder %v8226, 4
        %v8249 = vsel %vm8245, %v8229, %v8232
        %v8250 = vsel %vm8248, %v8238, 2102212464
        %v8251 = vsel %vm8247, %v8235, %v8250
        %v8252 = vsel %vm8246, %v8249, %v8251
        %v8253 = vsel %vm8245, %v8232, %v8235
        %v8254 = vsel %vm8248, %v8241, 920167782
        %v8255 = vsel %vm8247, %v8238, %v8254
        %v8256 = vsel %vm8246, %v8253, %v8255
        %v8257 = vsel %vm8245, %v8235, %v8238
        %v8258 = vsel %vm8248, %v8244, 1326507024
        %v8259 = vsel %vm8247, %v8241, %v8258
        %v8260 = vsel %vm8246, %v8257, %v8259
        %v8261 = vshll.u32 %v8221, 8
        %v8262 = vand.u32 %v8261, 65535
        %v8263 = vshrl.u32 %v8261, 16
        %v8264 = vand.u32 %v8260, 65535
        %v8265 = vshrl.u32 %v8260, 16
        %v8266 = vmul.u32 %v8262, %v8264
        %v8267 = vmul.u32 %v8262, %v8265
        %v8268 = vmul.u32 %v8263, %v8264
        %v8269 = vmul.u32 %v8263, %v8265
        %v8270 = vshll.u32 %v8267, 16
        %v8271 = vshrl.u32 %v8267, 16
        %v8272 = vshll.u32 %v8268, 16
        %v8273 = vshrl.u32 %v8268, 16
        %vm8274 = vc.u32 %v8266, %v8270
        %v8275 = vsel %vm8274, 1, 0
        %v8276 = vadd.s32 %v8266, %v8270
        %v8277 = vadd.s32 %v8269, %v8275
        %vm8278 = vc.u32 %v8276, %v8272
        %v8279 = vsel %vm8278, 1, 0
        %v8280 = vadd.s32 %v8276, %v8272
        %v8281 = vadd.s32 %v8277, %v8279
        %v8282 = vadd.s32 %v8281, %v8271
        %v8283 = vadd.s32 %v8282, %v8273
        %v8284 = vand.u32 %v8261, 65535
        %v8285 = vshrl.u32 %v8261, 16
        %v8286 = vand.u32 %v8256, 65535
        %v8287 = vshrl.u32 %v8256, 16
        %v8288 = vmul.u32 %v8284, %v8286
        %v8289 = vmul.u32 %v8284, %v8287
        %v8290 = vmul.u32 %v8285, %v8286
        %v8291 = vmul.u32 %v8285, %v8287
        %v8292 = vshll.u32 %v8289, 16
        %v8293 = vshrl.u32 %v8289, 16
        %v8294 = vshll.u32 %v8290, 16
        %v8295 = vshrl.u32 %v8290, 16
        %vm8296 = vc.u32 %v8288, %v8292
        %v8297 = vsel %vm8296, 1, 0
        %v8298 = vadd.s32 %v8288, %v8292
        %v8299 = vadd.s32 %v8291, %v8297
        %vm8300 = vc.u32 %v8298, %v8294
        %v8301 = vsel %vm8300, 1, 0
        %v8302 = vadd.s32 %v8298, %v8294
        %v8303 = vadd.s32 %v8299, %v8301
        %v8304 = vadd.s32 %v8303, %v8293
        %v8305 = vadd.s32 %v8304, %v8295
        %v8306 = vmul.u32 %v8261, %v8252
        %v8307 = vadd.s32 %v8283, %v8302
        %vm8308 = vc.u32 %v8283, %v8302
        %v8309 = vadd.s32 %v8305, 1
        %v8310 = vsel %vm8308, %v8309, %v8305
        %v8311 = vadd.s32 %v8306, %v8310
        %v8312 = vadd.s32 %v8311, 536870912
        %v8313 = vshrl.u32 %v8312, 30
        %v8314 = vshll.u32 %v8313, 30
        %v8315 = vsub.s32 %v8311, %v8314
        %vm8316 = vcmp.lt.s32.totalorder %v8315, 0
        %v8317 = vsub.s32 0, %v8315
        %v8318 = vsel %vm8316, %v8317, %v8315
        %v8319 = vclz %v8318
        %v8320 = vsub.s32 %v8319, 2
        %vm8321 = vcmp.gt.s32.totalorder 0, %v8320
        %v8322 = vsel %vm8321, 0, %v8320
        %v8323 = vsub.s32 32, %v8322
        %v8324 = vshll.u32 %v8315, %v8322
        %v8325 = vshrl.u32 %v8307, %v8323
        %v8326 = vor.u32 %v8324, %v8325
        %v8327 = vsub.s32 4294967266, %v8322
        %v8328 = vadd.s32 %v8327, 127
        %v8329 = vshll.u32 %v8328, 23
        %v8330 = vor.u32 4788187, %v8329
        %v8331 = vand.u32 2147483647, %v8330
        %v8333 = vcvt.s32.f32 %v8326
        %v8334 = vmul.f32 %v8333, %v8331
        %v8335 = vxor.u32 %v8334, 2147483648
        %v8336 = vsel %vm8215, %v8335, %v8334
        %v8337 = vsub.s32 4, %v8313
        %v8338 = vsel %vm8215, %v8337, %v8313
        %v8339 = vsel %vm8214, %v870, %v8336
        %v8340 = vsel %vm8214, 0, %v8338
        %v8341 = vmul.f32 %v8339, %v8339
        %v8342 = vmul.f32 %v8341, -0.001358992
        %v8343 = vadd.f32 %v8342, 0.041655596
        %v8344 = vmul.f32 %v8341, %v8343
        %v8345 = vadd.f32 %v8344, -0.4999988
        %v8346 = vmul.f32 %v8341, %v8345
        %v8347 = vadd.f32 1.0, %v8346
        %v8348 = vmul.f32 %v8339, %v8339
        %v8349 = vmul.f32 %v8348, -0.00019511016
        %v8350 = vadd.f32 %v8349, 0.008332121
        %v8351 = vmul.f32 %v8348, %v8350
        %v8352 = vadd.f32 %v8351, -0.16666654
        %v8353 = vmul.f32 %v8348, %v8352
        %v8354 = vadd.f32 %v8353, 1.0
        %v8355 = vmul.f32 %v8354, %v8339
        %vm8356 = vweird.f32 %v870
        %v8357 = vadd.s32 %v8340, 3
        %v8358 = vand.u32 %v8357, 3
        %vm8359 = vcmp.lt.s32.totalorder %v8358, 2
        %vm8360 = vcmp.eq.s32.totalorder %v8358, 0
        %v8361 = vxor.u32 %v8355, 2147483648
        %v8362 = vsel %vm8360, %v8347, %v8361
        %vm8363 = vcmp.eq.s32.totalorder %v8358, 2
        %v8364 = vxor.u32 %v8347, 2147483648
        %v8365 = vsel %vm8363, %v8364, %v8355
        %v8366 = vsel %vm8359, %v8362, %v8365
        %v8367 = vsel %vm8356, nan, %v8366
        %v8368 = vand.u32 2147483647, %v1512
        %vm8369 = vcmp.le.f32.partialorder %v8368, 0.7853982
        %vm8370 = vcmp.lt.s32.totalorder %v1512, 0
        %v8371 = vand.u32 %v1512, 2139095040
        %v8372 = vshrl.u32 %v8371, 23
        %v8373 = vsub.s32 %v8372, 127
        %v8374 = vand.u32 2147483647, %v1512
        %v8375 = vand.u32 %v8374, 8388607
        %v8376 = vor.u32 %v8375, 8388608
        %v8377 = vsub.s32 0, %v8376
        %v8378 = vadd.s32 %v8373, 1
        %vm8379 = vcmp.gt.s32.totalorder %v8378, 0
        %v8380 = vsel %vm8379, %v8378, 0
        %v8381 = vshrl.u32 %v8380, 5
        %v8382 = vand.u32 %v8380, 31
        %v8383 = vsub.s32 32, %v8382
        %v8384 = vshrl.u32 683565275, %v8383
        %v8385 = vshll.u32 683565275, %v8382
        %v8386 = vshrl.u32 2475754826, %v8383
        %v8387 = vor.u32 %v8385, %v8386
        %v8388 = vshll.u32 2475754826, %v8382
        %v8389 = vshrl.u32 2131351028, %v8383
        %v8390 = vor.u32 %v8388, %v8389
        %v8391 = vshll.u32 2131351028, %v8382
        %v8392 = vshrl.u32 2102212464, %v8383
        %v8393 = vor.u32 %v8391, %v8392
        %v8394 = vshll.u32 2102212464, %v8382
        %v8395 = vshrl.u32 920167782, %v8383
        %v8396 = vor.u32 %v8394, %v8395
        %v8397 = vshll.u32 920167782, %v8382
        %v8398 = vshrl.u32 1326507024, %v8383
        %v8399 = vor.u32 %v8397, %v8398
        %vm8400 = vcmp.lt.s32.totalorder %v8381, 1
        %vm8401 = vcmp.lt.s32.totalorder %v8381, 2
        %vm8402 = vcmp.lt.s32.totalorder %v8381, 3
        %vm8403 = vcmp.lt.s32.totalorder %v8381, 4
        %v8404 = vsel %vm8400, %v8384, %v8387
        %v8405 = vsel %vm8403, %v8393, 2102212464
        %v8406 = vsel %vm8402, %v8390, %v8405
        %v8407 = vsel %vm8401, %v8404, %v8406
        %v8408 = vsel %vm8400, %v8387, %v8390
        %v8409 = vsel %vm8403, %v8396, 920167782
        %v8410 = vsel %vm8402, %v8393, %v8409
        %v8411 = vsel %vm8401, %v8408, %v8410
        %v8412 = vsel %vm8400, %v8390, %v8393
        %v8413 = vsel %vm8403, %v8399, 1326507024
        %v8414 = vsel %vm8402, %v8396, %v8413
        %v8415 = vsel %vm8401, %v8412, %v8414
        %v8416 = vshll.u32 %v8376, 8
        %v8417 = vand.u32 %v8416, 65535
        %v8418 = vshrl.u32 %v8416, 16
        %v8419 = vand.u32 %v8415, 65535
        %v8420 = vshrl.u32 %v8415, 16
        %v8421 = vmul.u32 %v8417, %v8419
        %v8422 = vmul.u32 %v8417, %v8420
        %v8423 = vmul.u32 %v8418, %v8419
        %v8424 = vmul.u32 %v8418, %v8420
        %v8425 = vshll.u32 %v8422, 16
        %v8426 = vshrl.u32 %v8422, 16
        %v8427 = vshll.u32 %v8423, 16
        %v8428 = vshrl.u32 %v8423, 16
        %vm8429 = vc.u32 %v8421, %v8425
        %v8430 = vsel %vm8429, 1, 0
        %v8431 = vadd.s32 %v8421, %v8425
        %v8432 = vadd.s32 %v8424, %v8430
        %vm8433 = vc.u32 %v8431, %v8427
        %v8434 = vsel %vm8433, 1, 0
        %v8435 = vadd.s32 %v8431, %v8427
        %v8436 = vadd.s32 %v8432, %v8434
        %v8437 = vadd.s32 %v8436, %v8426
        %v8438 = vadd.s32 %v8437, %v8428
        %v8439 = vand.u32 %v8416, 65535
        %v8440 = vshrl.u32 %v8416, 16
        %v8441 = vand.u32 %v8411, 65535
        %v8442 = vshrl.u32 %v8411, 16
        %v8443 = vmul.u32 %v8439, %v8441
        %v8444 = vmul.u32 %v8439, %v8442
        %v8445 = vmul.u32 %v8440, %v8441
        %v8446 = vmul.u32 %v8440, %v8442
        %v8447 = vshll.u32 %v8444, 16
        %v8448 = vshrl.u32 %v8444, 16
        %v8449 = vshll.u32 %v8445, 16
        %v8450 = vshrl.u32 %v8445, 16
        %vm8451 = vc.u32 %v8443, %v8447
        %v8452 = vsel %vm8451, 1, 0
        %v8453 = vadd.s32 %v8443, %v8447
        %v8454 = vadd.s32 %v8446, %v8452
        %vm8455 = vc.u32 %v8453, %v8449
        %v8456 = vsel %vm8455, 1, 0
        %v8457 = vadd.s32 %v8453, %v8449
        %v8458 = vadd.s32 %v8454, %v8456
        %v8459 = vadd.s32 %v8458, %v8448
        %v8460 = vadd.s32 %v8459, %v8450
        %v8461 = vmul.u32 %v8416, %v8407
        %v8462 = vadd.s32 %v8438, %v8457
        %vm8463 = vc.u32 %v8438, %v8457
        %v8464 = vadd.s32 %v8460, 1
        %v8465 = vsel %vm8463, %v8464, %v8460
        %v8466 = vadd.s32 %v8461, %v8465
        %v8467 = vadd.s32 %v8466, 536870912
        %v8468 = vshrl.u32 %v8467, 30
        %v8469 = vshll.u32 %v8468, 30
        %v8470 = vsub.s32 %v8466, %v8469
        %vm8471 = vcmp.lt.s32.totalorder %v8470, 0
        %v8472 = vsub.s32 0, %v8470
        %v8473 = vsel %vm8471, %v8472, %v8470
        %v8474 = vclz %v8473
        %v8475 = vsub.s32 %v8474, 2
        %vm8476 = vcmp.gt.s32.totalorder 0, %v8475
        %v8477 = vsel %vm8476, 0, %v8475
        %v8478 = vsub.s32 32, %v8477
        %v8479 = vshll.u32 %v8470, %v8477
        %v8480 = vshrl.u32 %v8462, %v8478
        %v8481 = vor.u32 %v8479, %v8480
        %v8482 = vsub.s32 4294967266, %v8477
        %v8483 = vadd.s32 %v8482, 127
        %v8484 = vshll.u32 %v8483, 23
        %v8485 = vor.u32 4788187, %v8484
        %v8486 = vand.u32 2147483647, %v8485
        %v8488 = vcvt.s32.f32 %v8481
        %v8489 = vmul.f32 %v8488, %v8486
        %v8490 = vxor.u32 %v8489, 2147483648
        %v8491 = vsel %vm8370, %v8490, %v8489
        %v8492 = vsub.s32 4, %v8468
        %v8493 = vsel %vm8370, %v8492, %v8468
        %v8494 = vsel %vm8369, %v1512, %v8491
        %v8495 = vsel %vm8369, 0, %v8493
        %v8496 = vmul.f32 %v8494, %v8494
        %v8497 = vmul.f32 %v8496, -0.001358992
        %v8498 = vadd.f32 %v8497, 0.041655596
        %v8499 = vmul.f32 %v8496, %v8498
        %v8500 = vadd.f32 %v8499, -0.4999988
        %v8501 = vmul.f32 %v8496, %v8500
        %v8502 = vadd.f32 1.0, %v8501
        %v8503 = vmul.f32 %v8494, %v8494
        %v8504 = vmul.f32 %v8503, -0.00019511016
        %v8505 = vadd.f32 %v8504, 0.008332121
        %v8506 = vmul.f32 %v8503, %v8505
        %v8507 = vadd.f32 %v8506, -0.16666654
        %v8508 = vmul.f32 %v8503, %v8507
        %v8509 = vadd.f32 %v8508, 1.0
        %v8510 = vmul.f32 %v8509, %v8494
        %vm8511 = vweird.f32 %v1512
        %v8512 = vadd.s32 %v8495, 3
        %v8513 = vand.u32 %v8512, 3
        %vm8514 = vcmp.lt.s32.totalorder %v8513, 2
        %vm8515 = vcmp.eq.s32.totalorder %v8513, 0
        %v8516 = vxor.u32 %v8510, 2147483648
        %v8517 = vsel %vm8515, %v8502, %v8516
        %vm8518 = vcmp.eq.s32.totalorder %v8513, 2
        %v8519 = vxor.u32 %v8502, 2147483648
        %v8520 = vsel %vm8518, %v8519, %v8510
        %v8521 = vsel %vm8514, %v8517, %v8520
        %v8522 = vsel %vm8511, nan, %v8521
        %v8523 = vand.u32 2147483647, %v2154
        %vm8524 = vcmp.le.f32.partialorder %v8523, 0.7853982
        %vm8525 = vcmp.lt.s32.totalorder %v2154, 0
        %v8526 = vand.u32 %v2154, 2139095040
        %v8527 = vshrl.u32 %v8526, 23
        %v8528 = vsub.s32 %v8527, 127
        %v8529 = vand.u32 2147483647, %v2154
        %v8530 = vand.u32 %v8529, 8388607
        %v8531 = vor.u32 %v8530, 8388608
        %v8532 = vsub.s32 0, %v8531
        %v8533 = vadd.s32 %v8528, 1
        %vm8534 = vcmp.gt.s32.totalorder %v8533, 0
        %v8535 = vsel %vm8534, %v8533, 0
        %v8536 = vshrl.u32 %v8535, 5
        %v8537 = vand.u32 %v8535, 31
        %v8538 = vsub.s32 32, %v8537
        %v8539 = vshrl.u32 683565275, %v8538
        %v8540 = vshll.u32 683565275, %v8537
        %v8541 = vshrl.u32 2475754826, %v8538
        %v8542 = vor.u32 %v8540, %v8541
        %v8543 = vshll.u32 2475754826, %v8537
        %v8544 = vshrl.u32 2131351028, %v8538
        %v8545 = vor.u32 %v8543, %v8544
        %v8546 = vshll.u32 2131351028, %v8537
        %v8547 = vshrl.u32 2102212464, %v8538
        %v8548 = vor.u32 %v8546, %v8547
        %v8549 = vshll.u32 2102212464, %v8537
        %v8550 = vshrl.u32 920167782, %v8538
        %v8551 = vor.u32 %v8549, %v8550
        %v8552 = vshll.u32 920167782, %v8537
        %v8553 = vshrl.u32 1326507024, %v8538
        %v8554 = vor.u32 %v8552, %v8553
        %vm8555 = vcmp.lt.s32.totalorder %v8536, 1
        %vm8556 = vcmp.lt.s32.totalorder %v8536, 2
        %vm8557 = vcmp.lt.s32.totalorder %v8536, 3
        %vm8558 = vcmp.lt.s32.totalorder %v8536, 4
        %v8559 = vsel %vm8555, %v8539, %v8542
        %v8560 = vsel %vm8558, %v8548, 2102212464
        %v8561 = vsel %vm8557, %v8545, %v8560
        %v8562 = vsel %vm8556, %v8559, %v8561
        %v8563 = vsel %vm8555, %v8542, %v8545
        %v8564 = vsel %vm8558, %v8551, 920167782
        %v8565 = vsel %vm8557, %v8548, %v8564
        %v8566 = vsel %vm8556, %v8563, %v8565
        %v8567 = vsel %vm8555, %v8545, %v8548
        %v8568 = vsel %vm8558, %v8554, 1326507024
        %v8569 = vsel %vm8557, %v8551, %v8568
        %v8570 = vsel %vm8556, %v8567, %v8569
        %v8571 = vshll.u32 %v8531, 8
        %v8572 = vand.u32 %v8571, 65535
        %v8573 = vshrl.u32 %v8571, 16
        %v8574 = vand.u32 %v8570, 65535
        %v8575 = vshrl.u32 %v8570, 16
        %v8576 = vmul.u32 %v8572, %v8574
        %v8577 = vmul.u32 %v8572, %v8575
        %v8578 = vmul.u32 %v8573, %v8574
        %v8579 = vmul.u32 %v8573, %v8575
        %v8580 = vshll.u32 %v8577, 16
        %v8581 = vshrl.u32 %v8577, 16
        %v8582 = vshll.u32 %v8578, 16
        %v8583 = vshrl.u32 %v8578, 16
        %vm8584 = vc.u32 %v8576, %v8580
        %v8585 = vsel %vm8584, 1, 0
        %v8586 = vadd.s32 %v8576, %v8580
        %v8587 = vadd.s32 %v8579, %v8585
        %vm8588 = vc.u32 %v8586, %v8582
        %v8589 = vsel %vm8588, 1, 0
        %v8590 = vadd.s32 %v8586, %v8582
        %v8591 = vadd.s32 %v8587, %v8589
        %v8592 = vadd.s32 %v8591, %v8581
        %v8593 = vadd.s32 %v8592, %v8583
        %v8594 = vand.u32 %v8571, 65535
        %v8595 = vshrl.u32 %v8571, 16
        %v8596 = vand.u32 %v8566, 65535
        %v8597 = vshrl.u32 %v8566, 16
        %v8598 = vmul.u32 %v8594, %v8596
        %v8599 = vmul.u32 %v8594, %v8597
        %v8600 = vmul.u32 %v8595, %v8596
        %v8601 = vmul.u32 %v8595, %v8597
        %v8602 = vshll.u32 %v8599, 16
        %v8603 = vshrl.u32 %v8599, 16
        %v8604 = vshll.u32 %v8600, 16
        %v8605 = vshrl.u32 %v8600, 16
        %vm8606 = vc.u32 %v8598, %v8602
        %v8607 = vsel %vm8606, 1, 0
        %v8608 = vadd.s32 %v8598, %v8602
        %v8609 = vadd.s32 %v8601, %v8607
        %vm8610 = vc.u32 %v8608, %v8604
        %v8611 = vsel %vm8610, 1, 0
        %v8612 = vadd.s32 %v8608, %v8604
        %v8613 = vadd.s32 %v8609, %v8611
        %v8614 = vadd.s32 %v8613, %v8603
        %v8615 = vadd.s32 %v8614, %v8605
        %v8616 = vmul.u32 %v8571, %v8562
        %v8617 = vadd.s32 %v8593, %v8612
        %vm8618 = vc.u32 %v8593, %v8612
        %v8619 = vadd.s32 %v8615, 1
        %v8620 = vsel %vm8618, %v8619, %v8615
        %v8621 = vadd.s32 %v8616, %v8620
        %v8622 = vadd.s32 %v8621, 536870912
        %v8623 = vshrl.u32 %v8622, 30
        %v8624 = vshll.u32 %v8623, 30
        %v8625 = vsub.s32 %v8621, %v8624
        %vm8626 = vcmp.lt.s32.totalorder %v8625, 0
        %v8627 = vsub.s32 0, %v8625
        %v8628 = vsel %vm8626, %v8627, %v8625
        %v8629 = vclz %v8628
        %v8630 = vsub.s32 %v8629, 2
        %vm8631 = vcmp.gt.s32.totalorder 0, %v8630
        %v8632 = vsel %vm8631, 0, %v8630
        %v8633 = vsub.s32 32, %v8632
        %v8634 = vshll.u32 %v8625, %v8632
        %v8635 = vshrl.u32 %v8617, %v8633
        %v8636 = vor.u32 %v8634, %v8635
        %v8637 = vsub.s32 4294967266, %v8632
        %v8638 = vadd.s32 %v8637, 127
        %v8639 = vshll.u32 %v8638, 23
        %v8640 = vor.u32 4788187, %v8639
        %v8641 = vand.u32 2147483647, %v8640
        %v8643 = vcvt.s32.f32 %v8636
        %v8644 = vmul.f32 %v8643, %v8641
        %v8645 = vxor.u32 %v8644, 2147483648
        %v8646 = vsel %vm8525, %v8645, %v8644
        %v8647 = vsub.s32 4, %v8623
        %v8648 = vsel %vm8525, %v8647, %v8623
        %v8649 = vsel %vm8524, %v2154, %v8646
        %v8650 = vsel %vm8524, 0, %v8648
        %v8651 = vmul.f32 %v8649, %v8649
        %v8652 = vmul.f32 %v8651, -0.001358992
        %v8653 = vadd.f32 %v8652, 0.041655596
        %v8654 = vmul.f32 %v8651, %v8653
        %v8655 = vadd.f32 %v8654, -0.4999988
        %v8656 = vmul.f32 %v8651, %v8655
        %v8657 = vadd.f32 1.0, %v8656
        %v8658 = vmul.f32 %v8649, %v8649
        %v8659 = vmul.f32 %v8658, -0.00019511016
        %v8660 = vadd.f32 %v8659, 0.008332121
        %v8661 = vmul.f32 %v8658, %v8660
        %v8662 = vadd.f32 %v8661, -0.16666654
        %v8663 = vmul.f32 %v8658, %v8662
        %v8664 = vadd.f32 %v8663, 1.0
        %v8665 = vmul.f32 %v8664, %v8649
        %vm8666 = vweird.f32 %v2154
        %v8667 = vadd.s32 %v8650, 3
        %v8668 = vand.u32 %v8667, 3
        %vm8669 = vcmp.lt.s32.totalorder %v8668, 2
        %vm8670 = vcmp.eq.s32.totalorder %v8668, 0
        %v8671 = vxor.u32 %v8665, 2147483648
        %v8672 = vsel %vm8670, %v8657, %v8671
        %vm8673 = vcmp.eq.s32.totalorder %v8668, 2
        %v8674 = vxor.u32 %v8657, 2147483648
        %v8675 = vsel %vm8673, %v8674, %v8665
        %v8676 = vsel %vm8669, %v8672, %v8675
        %v8677 = vsel %vm8666, nan, %v8676
        %v8678 = vand.u32 2147483647, %v874
        %vm8679 = vcmp.le.f32.partialorder %v8678, 0.7853982
        %vm8680 = vcmp.lt.s32.totalorder %v874, 0
        %v8681 = vand.u32 %v874, 2139095040
        %v8682 = vshrl.u32 %v8681, 23
        %v8683 = vsub.s32 %v8682, 127
        %v8684 = vand.u32 2147483647, %v874
        %v8685 = vand.u32 %v8684, 8388607
        %v8686 = vor.u32 %v8685, 8388608
        %v8687 = vsub.s32 0, %v8686
        %v8688 = vadd.s32 %v8683, 1
        %vm8689 = vcmp.gt.s32.totalorder %v8688, 0
        %v8690 = vsel %vm8689, %v8688, 0
        %v8691 = vshrl.u32 %v8690, 5
        %v8692 = vand.u32 %v8690, 31
        %v8693 = vsub.s32 32, %v8692
        %v8694 = vshrl.u32 683565275, %v8693
        %v8695 = vshll.u32 683565275, %v8692
        %v8696 = vshrl.u32 2475754826, %v8693
        %v8697 = vor.u32 %v8695, %v8696
        %v8698 = vshll.u32 2475754826, %v8692
        %v8699 = vshrl.u32 2131351028, %v8693
        %v8700 = vor.u32 %v8698, %v8699
        %v8701 = vshll.u32 2131351028, %v8692
        %v8702 = vshrl.u32 2102212464, %v8693
        %v8703 = vor.u32 %v8701, %v8702
        %v8704 = vshll.u32 2102212464, %v8692
        %v8705 = vshrl.u32 920167782, %v8693
        %v8706 = vor.u32 %v8704, %v8705
        %v8707 = vshll.u32 920167782, %v8692
        %v8708 = vshrl.u32 1326507024, %v8693
        %v8709 = vor.u32 %v8707, %v8708
        %vm8710 = vcmp.lt.s32.totalorder %v8691, 1
        %vm8711 = vcmp.lt.s32.totalorder %v8691, 2
        %vm8712 = vcmp.lt.s32.totalorder %v8691, 3
        %vm8713 = vcmp.lt.s32.totalorder %v8691, 4
        %v8714 = vsel %vm8710, %v8694, %v8697
        %v8715 = vsel %vm8713, %v8703, 2102212464
        %v8716 = vsel %vm8712, %v8700, %v8715
        %v8717 = vsel %vm8711, %v8714, %v8716
        %v8718 = vsel %vm8710, %v8697, %v8700
        %v8719 = vsel %vm8713, %v8706, 920167782
        %v8720 = vsel %vm8712, %v8703, %v8719
        %v8721 = vsel %vm8711, %v8718, %v8720
        %v8722 = vsel %vm8710, %v8700, %v8703
        %v8723 = vsel %vm8713, %v8709, 1326507024
        %v8724 = vsel %vm8712, %v8706, %v8723
        %v8725 = vsel %vm8711, %v8722, %v8724
        %v8726 = vshll.u32 %v8686, 8
        %v8727 = vand.u32 %v8726, 65535
        %v8728 = vshrl.u32 %v8726, 16
        %v8729 = vand.u32 %v8725, 65535
        %v8730 = vshrl.u32 %v8725, 16
        %v8731 = vmul.u32 %v8727, %v8729
        %v8732 = vmul.u32 %v8727, %v8730
        %v8733 = vmul.u32 %v8728, %v8729
        %v8734 = vmul.u32 %v8728, %v8730
        %v8735 = vshll.u32 %v8732, 16
        %v8736 = vshrl.u32 %v8732, 16
        %v8737 = vshll.u32 %v8733, 16
        %v8738 = vshrl.u32 %v8733, 16
        %vm8739 = vc.u32 %v8731, %v8735
        %v8740 = vsel %vm8739, 1, 0
        %v8741 = vadd.s32 %v8731, %v8735
        %v8742 = vadd.s32 %v8734, %v8740
        %vm8743 = vc.u32 %v8741, %v8737
        %v8744 = vsel %vm8743, 1, 0
        %v8745 = vadd.s32 %v8741, %v8737
        %v8746 = vadd.s32 %v8742, %v8744
        %v8747 = vadd.s32 %v8746, %v8736
        %v8748 = vadd.s32 %v8747, %v8738
        %v8749 = vand.u32 %v8726, 65535
        %v8750 = vshrl.u32 %v8726, 16
        %v8751 = vand.u32 %v8721, 65535
        %v8752 = vshrl.u32 %v8721, 16
        %v8753 = vmul.u32 %v8749, %v8751
        %v8754 = vmul.u32 %v8749, %v8752
        %v8755 = vmul.u32 %v8750, %v8751
        %v8756 = vmul.u32 %v8750, %v8752
        %v8757 = vshll.u32 %v8754, 16
        %v8758 = vshrl.u32 %v8754, 16
        %v8759 = vshll.u32 %v8755, 16
        %v8760 = vshrl.u32 %v8755, 16
        %vm8761 = vc.u32 %v8753, %v8757
        %v8762 = vsel %vm8761, 1, 0
        %v8763 = vadd.s32 %v8753, %v8757
        %v8764 = vadd.s32 %v8756, %v8762
        %vm8765 = vc.u32 %v8763, %v8759
        %v8766 = vsel %vm8765, 1, 0
        %v8767 = vadd.s32 %v8763, %v8759
        %v8768 = vadd.s32 %v8764, %v8766
        %v8769 = vadd.s32 %v8768, %v8758
        %v8770 = vadd.s32 %v8769, %v8760
        %v8771 = vmul.u32 %v8726, %v8717
        %v8772 = vadd.s32 %v8748, %v8767
        %vm8773 = vc.u32 %v8748, %v8767
        %v8774 = vadd.s32 %v8770, 1
        %v8775 = vsel %vm8773, %v8774, %v8770
        %v8776 = vadd.s32 %v8771, %v8775
        %v8777 = vadd.s32 %v8776, 536870912
        %v8778 = vshrl.u32 %v8777, 30
        %v8779 = vshll.u32 %v8778, 30
        %v8780 = vsub.s32 %v8776, %v8779
        %vm8781 = vcmp.lt.s32.totalorder %v8780, 0
        %v8782 = vsub.s32 0, %v8780
        %v8783 = vsel %vm8781, %v8782, %v8780
        %v8784 = vclz %v8783
        %v8785 = vsub.s32 %v8784, 2
        %vm8786 = vcmp.gt.s32.totalorder 0, %v8785
        %v8787 = vsel %vm8786, 0, %v8785
        %v8788 = vsub.s32 32, %v8787
        %v8789 = vshll.u32 %v8780, %v8787
        %v8790 = vshrl.u32 %v8772, %v8788
        %v8791 = vor.u32 %v8789, %v8790
        %v8792 = vsub.s32 4294967266, %v8787
        %v8793 = vadd.s32 %v8792, 127
        %v8794 = vshll.u32 %v8793, 23
        %v8795 = vor.u32 4788187, %v8794
        %v8796 = vand.u32 2147483647, %v8795
        %v8798 = vcvt.s32.f32 %v8791
        %v8799 = vmul.f32 %v8798, %v8796
        %v8800 = vxor.u32 %v8799, 2147483648
        %v8801 = vsel %vm8680, %v8800, %v8799
        %v8802 = vsub.s32 4, %v8778
        %v8803 = vsel %vm8680, %v8802, %v8778
        %v8804 = vsel %vm8679, %v874, %v8801
        %v8805 = vsel %vm8679, 0, %v8803
        %v8806 = vmul.f32 %v8804, %v8804
        %v8807 = vmul.f32 %v8806, -0.001358992
        %v8808 = vadd.f32 %v8807, 0.041655596
        %v8809 = vmul.f32 %v8806, %v8808
        %v8810 = vadd.f32 %v8809, -0.4999988
        %v8811 = vmul.f32 %v8806, %v8810
        %v8812 = vadd.f32 1.0, %v8811
        %v8813 = vmul.f32 %v8804, %v8804
        %v8814 = vmul.f32 %v8813, -0.00019511016
        %v8815 = vadd.f32 %v8814, 0.008332121
        %v8816 = vmul.f32 %v8813, %v8815
        %v8817 = vadd.f32 %v8816, -0.16666654
        %v8818 = vmul.f32 %v8813, %v8817
        %v8819 = vadd.f32 %v8818, 1.0
        %v8820 = vmul.f32 %v8819, %v8804
        %vm8821 = vweird.f32 %v874
        %v8822 = vadd.s32 %v8805, 3
        %v8823 = vand.u32 %v8822, 3
        %vm8824 = vcmp.lt.s32.totalorder %v8823, 2
        %vm8825 = vcmp.eq.s32.totalorder %v8823, 0
        %v8826 = vxor.u32 %v8820, 2147483648
        %v8827 = vsel %vm8825, %v8812, %v8826
        %vm8828 = vcmp.eq.s32.totalorder %v8823, 2
        %v8829 = vxor.u32 %v8812, 2147483648
        %v8830 = vsel %vm8828, %v8829, %v8820
        %v8831 = vsel %vm8824, %v8827, %v8830
        %v8832 = vsel %vm8821, nan, %v8831
        %v8833 = vand.u32 2147483647, %v1516
        %vm8834 = vcmp.le.f32.partialorder %v8833, 0.7853982
        %vm8835 = vcmp.lt.s32.totalorder %v1516, 0
        %v8836 = vand.u32 %v1516, 2139095040
        %v8837 = vshrl.u32 %v8836, 23
        %v8838 = vsub.s32 %v8837, 127
        %v8839 = vand.u32 2147483647, %v1516
        %v8840 = vand.u32 %v8839, 8388607
        %v8841 = vor.u32 %v8840, 8388608
        %v8842 = vsub.s32 0, %v8841
        %v8843 = vadd.s32 %v8838, 1
        %vm8844 = vcmp.gt.s32.totalorder %v8843, 0
        %v8845 = vsel %vm8844, %v8843, 0
        %v8846 = vshrl.u32 %v8845, 5
        %v8847 = vand.u32 %v8845, 31
        %v8848 = vsub.s32 32, %v8847
        %v8849 = vshrl.u32 683565275, %v8848
        %v8850 = vshll.u32 683565275, %v8847
        %v8851 = vshrl.u32 2475754826, %v8848
        %v8852 = vor.u32 %v8850, %v8851
        %v8853 = vshll.u32 2475754826, %v8847
        %v8854 = vshrl.u32 2131351028, %v8848
        %v8855 = vor.u32 %v8853, %v8854
        %v8856 = vshll.u32 2131351028, %v8847
        %v8857 = vshrl.u32 2102212464, %v8848
        %v8858 = vor.u32 %v8856, %v8857
        %v8859 = vshll.u32 2102212464, %v8847
        %v8860 = vshrl.u32 920167782, %v8848
        %v8861 = vor.u32 %v8859, %v8860
        %v8862 = vshll.u32 920167782, %v8847
        %v8863 = vshrl.u32 1326507024, %v8848
        %v8864 = vor.u32 %v8862, %v8863
        %vm8865 = vcmp.lt.s32.totalorder %v8846, 1
        %vm8866 = vcmp.lt.s32.totalorder %v8846, 2
        %vm8867 = vcmp.lt.s32.totalorder %v8846, 3
        %vm8868 = vcmp.lt.s32.totalorder %v8846, 4
        %v8869 = vsel %vm8865, %v8849, %v8852
        %v8870 = vsel %vm8868, %v8858, 2102212464
        %v8871 = vsel %vm8867, %v8855, %v8870
        %v8872 = vsel %vm8866, %v8869, %v8871
        %v8873 = vsel %vm8865, %v8852, %v8855
        %v8874 = vsel %vm8868, %v8861, 920167782
        %v8875 = vsel %vm8867, %v8858, %v8874
        %v8876 = vsel %vm8866, %v8873, %v8875
        %v8877 = vsel %vm8865, %v8855, %v8858
        %v8878 = vsel %vm8868, %v8864, 1326507024
        %v8879 = vsel %vm8867, %v8861, %v8878
        %v8880 = vsel %vm8866, %v8877, %v8879
        %v8881 = vshll.u32 %v8841, 8
        %v8882 = vand.u32 %v8881, 65535
        %v8883 = vshrl.u32 %v8881, 16
        %v8884 = vand.u32 %v8880, 65535
        %v8885 = vshrl.u32 %v8880, 16
        %v8886 = vmul.u32 %v8882, %v8884
        %v8887 = vmul.u32 %v8882, %v8885
        %v8888 = vmul.u32 %v8883, %v8884
        %v8889 = vmul.u32 %v8883, %v8885
        %v8890 = vshll.u32 %v8887, 16
        %v8891 = vshrl.u32 %v8887, 16
        %v8892 = vshll.u32 %v8888, 16
        %v8893 = vshrl.u32 %v8888, 16
        %vm8894 = vc.u32 %v8886, %v8890
        %v8895 = vsel %vm8894, 1, 0
        %v8896 = vadd.s32 %v8886, %v8890
        %v8897 = vadd.s32 %v8889, %v8895
        %vm8898 = vc.u32 %v8896, %v8892
        %v8899 = vsel %vm8898, 1, 0
        %v8900 = vadd.s32 %v8896, %v8892
        %v8901 = vadd.s32 %v8897, %v8899
        %v8902 = vadd.s32 %v8901, %v8891
        %v8903 = vadd.s32 %v8902, %v8893
        %v8904 = vand.u32 %v8881, 65535
        %v8905 = vshrl.u32 %v8881, 16
        %v8906 = vand.u32 %v8876, 65535
        %v8907 = vshrl.u32 %v8876, 16
        %v8908 = vmul.u32 %v8904, %v8906
        %v8909 = vmul.u32 %v8904, %v8907
        %v8910 = vmul.u32 %v8905, %v8906
        %v8911 = vmul.u32 %v8905, %v8907
        %v8912 = vshll.u32 %v8909, 16
        %v8913 = vshrl.u32 %v8909, 16
        %v8914 = vshll.u32 %v8910, 16
        %v8915 = vshrl.u32 %v8910, 16
        %vm8916 = vc.u32 %v8908, %v8912
        %v8917 = vsel %vm8916, 1, 0
        %v8918 = vadd.s32 %v8908, %v8912
        %v8919 = vadd.s32 %v8911, %v8917
        %vm8920 = vc.u32 %v8918, %v8914
        %v8921 = vsel %vm8920, 1, 0
        %v8922 = vadd.s32 %v8918, %v8914
        %v8923 = vadd.s32 %v8919, %v8921
        %v8924 = vadd.s32 %v8923, %v8913
        %v8925 = vadd.s32 %v8924, %v8915
        %v8926 = vmul.u32 %v8881, %v8872
        %v8927 = vadd.s32 %v8903, %v8922
        %vm8928 = vc.u32 %v8903, %v8922
        %v8929 = vadd.s32 %v8925, 1
        %v8930 = vsel %vm8928, %v8929, %v8925
        %v8931 = vadd.s32 %v8926, %v8930
        %v8932 = vadd.s32 %v8931, 536870912
        %v8933 = vshrl.u32 %v8932, 30
        %v8934 = vshll.u32 %v8933, 30
        %v8935 = vsub.s32 %v8931, %v8934
        %vm8936 = vcmp.lt.s32.totalorder %v8935, 0
        %v8937 = vsub.s32 0, %v8935
        %v8938 = vsel %vm8936, %v8937, %v8935
        %v8939 = vclz %v8938
        %v8940 = vsub.s32 %v8939, 2
        %vm8941 = vcmp.gt.s32.totalorder 0, %v8940
        %v8942 = vsel %vm8941, 0, %v8940
        %v8943 = vsub.s32 32, %v8942
        %v8944 = vshll.u32 %v8935, %v8942
        %v8945 = vshrl.u32 %v8927, %v8943
        %v8946 = vor.u32 %v8944, %v8945
        %v8947 = vsub.s32 4294967266, %v8942
        %v8948 = vadd.s32 %v8947, 127
        %v8949 = vshll.u32 %v8948, 23
        %v8950 = vor.u32 4788187, %v8949
        %v8951 = vand.u32 2147483647, %v8950
        %v8953 = vcvt.s32.f32 %v8946
        %v8954 = vmul.f32 %v8953, %v8951
        %v8955 = vxor.u32 %v8954, 2147483648
        %v8956 = vsel %vm8835, %v8955, %v8954
        %v8957 = vsub.s32 4, %v8933
        %v8958 = vsel %vm8835, %v8957, %v8933
        %v8959 = vsel %vm8834, %v1516, %v8956
        %v8960 = vsel %vm8834, 0, %v8958
        %v8961 = vmul.f32 %v8959, %v8959
        %v8962 = vmul.f32 %v8961, -0.001358992
        %v8963 = vadd.f32 %v8962, 0.041655596
        %v8964 = vmul.f32 %v8961, %v8963
        %v8965 = vadd.f32 %v8964, -0.4999988
        %v8966 = vmul.f32 %v8961, %v8965
        %v8967 = vadd.f32 1.0, %v8966
        %v8968 = vmul.f32 %v8959, %v8959
        %v8969 = vmul.f32 %v8968, -0.00019511016
        %v8970 = vadd.f32 %v8969, 0.008332121
        %v8971 = vmul.f32 %v8968, %v8970
        %v8972 = vadd.f32 %v8971, -0.16666654
        %v8973 = vmul.f32 %v8968, %v8972
        %v8974 = vadd.f32 %v8973, 1.0
        %v8975 = vmul.f32 %v8974, %v8959
        %vm8976 = vweird.f32 %v1516
        %v8977 = vadd.s32 %v8960, 3
        %v8978 = vand.u32 %v8977, 3
        %vm8979 = vcmp.lt.s32.totalorder %v8978, 2
        %vm8980 = vcmp.eq.s32.totalorder %v8978, 0
        %v8981 = vxor.u32 %v8975, 2147483648
        %v8982 = vsel %vm8980, %v8967, %v8981
        %vm8983 = vcmp.eq.s32.totalorder %v8978, 2
        %v8984 = vxor.u32 %v8967, 2147483648
        %v8985 = vsel %vm8983, %v8984, %v8975
        %v8986 = vsel %vm8979, %v8982, %v8985
        %v8987 = vsel %vm8976, nan, %v8986
        %v8988 = vand.u32 2147483647, %v2158
        %vm8989 = vcmp.le.f32.partialorder %v8988, 0.7853982
        %vm8990 = vcmp.lt.s32.totalorder %v2158, 0
        %v8991 = vand.u32 %v2158, 2139095040
        %v8992 = vshrl.u32 %v8991, 23
        %v8993 = vsub.s32 %v8992, 127
        %v8994 = vand.u32 2147483647, %v2158
        %v8995 = vand.u32 %v8994, 8388607
        %v8996 = vor.u32 %v8995, 8388608
        %v8997 = vsub.s32 0, %v8996
        %v8998 = vadd.s32 %v8993, 1
        %vm8999 = vcmp.gt.s32.totalorder %v8998, 0
        %v9000 = vsel %vm8999, %v8998, 0
        %v9001 = vshrl.u32 %v9000, 5
        %v9002 = vand.u32 %v9000, 31
        %v9003 = vsub.s32 32, %v9002
        %v9004 = vshrl.u32 683565275, %v9003
        %v9005 = vshll.u32 683565275, %v9002
        %v9006 = vshrl.u32 2475754826, %v9003
        %v9007 = vor.u32 %v9005, %v9006
        %v9008 = vshll.u32 2475754826, %v9002
        %v9009 = vshrl.u32 2131351028, %v9003
        %v9010 = vor.u32 %v9008, %v9009
        %v9011 = vshll.u32 2131351028, %v9002
        %v9012 = vshrl.u32 2102212464, %v9003
        %v9013 = vor.u32 %v9011, %v9012
        %v9014 = vshll.u32 2102212464, %v9002
        %v9015 = vshrl.u32 920167782, %v9003
        %v9016 = vor.u32 %v9014, %v9015
        %v9017 = vshll.u32 920167782, %v9002
        %v9018 = vshrl.u32 1326507024, %v9003
        %v9019 = vor.u32 %v9017, %v9018
        %vm9020 = vcmp.lt.s32.totalorder %v9001, 1
        %vm9021 = vcmp.lt.s32.totalorder %v9001, 2
        %vm9022 = vcmp.lt.s32.totalorder %v9001, 3
        %vm9023 = vcmp.lt.s32.totalorder %v9001, 4
        %v9024 = vsel %vm9020, %v9004, %v9007
        %v9025 = vsel %vm9023, %v9013, 2102212464
        %v9026 = vsel %vm9022, %v9010, %v9025
        %v9027 = vsel %vm9021, %v9024, %v9026
        %v9028 = vsel %vm9020, %v9007, %v9010
        %v9029 = vsel %vm9023, %v9016, 920167782
        %v9030 = vsel %vm9022, %v9013, %v9029
        %v9031 = vsel %vm9021, %v9028, %v9030
        %v9032 = vsel %vm9020, %v9010, %v9013
        %v9033 = vsel %vm9023, %v9019, 1326507024
        %v9034 = vsel %vm9022, %v9016, %v9033
        %v9035 = vsel %vm9021, %v9032, %v9034
        %v9036 = vshll.u32 %v8996, 8
        %v9037 = vand.u32 %v9036, 65535
        %v9038 = vshrl.u32 %v9036, 16
        %v9039 = vand.u32 %v9035, 65535
        %v9040 = vshrl.u32 %v9035, 16
        %v9041 = vmul.u32 %v9037, %v9039
        %v9042 = vmul.u32 %v9037, %v9040
        %v9043 = vmul.u32 %v9038, %v9039
        %v9044 = vmul.u32 %v9038, %v9040
        %v9045 = vshll.u32 %v9042, 16
        %v9046 = vshrl.u32 %v9042, 16
        %v9047 = vshll.u32 %v9043, 16
        %v9048 = vshrl.u32 %v9043, 16
        %vm9049 = vc.u32 %v9041, %v9045
        %v9050 = vsel %vm9049, 1, 0
        %v9051 = vadd.s32 %v9041, %v9045
        %v9052 = vadd.s32 %v9044, %v9050
        %vm9053 = vc.u32 %v9051, %v9047
        %v9054 = vsel %vm9053, 1, 0
        %v9055 = vadd.s32 %v9051, %v9047
        %v9056 = vadd.s32 %v9052, %v9054
        %v9057 = vadd.s32 %v9056, %v9046
        %v9058 = vadd.s32 %v9057, %v9048
        %v9059 = vand.u32 %v9036, 65535
        %v9060 = vshrl.u32 %v9036, 16
        %v9061 = vand.u32 %v9031, 65535
        %v9062 = vshrl.u32 %v9031, 16
        %v9063 = vmul.u32 %v9059, %v9061
        %v9064 = vmul.u32 %v9059, %v9062
        %v9065 = vmul.u32 %v9060, %v9061
        %v9066 = vmul.u32 %v9060, %v9062
        %v9067 = vshll.u32 %v9064, 16
        %v9068 = vshrl.u32 %v9064, 16
        %v9069 = vshll.u32 %v9065, 16
        %v9070 = vshrl.u32 %v9065, 16
        %vm9071 = vc.u32 %v9063, %v9067
        %v9072 = vsel %vm9071, 1, 0
        %v9073 = vadd.s32 %v9063, %v9067
        %v9074 = vadd.s32 %v9066, %v9072
        %vm9075 = vc.u32 %v9073, %v9069
        %v9076 = vsel %vm9075, 1, 0
        %v9077 = vadd.s32 %v9073, %v9069
        %v9078 = vadd.s32 %v9074, %v9076
        %v9079 = vadd.s32 %v9078, %v9068
        %v9080 = vadd.s32 %v9079, %v9070
        %v9081 = vmul.u32 %v9036, %v9027
        %v9082 = vadd.s32 %v9058, %v9077
        %vm9083 = vc.u32 %v9058, %v9077
        %v9084 = vadd.s32 %v9080, 1
        %v9085 = vsel %vm9083, %v9084, %v9080
        %v9086 = vadd.s32 %v9081, %v9085
        %v9087 = vadd.s32 %v9086, 536870912
        %v9088 = vshrl.u32 %v9087, 30
        %v9089 = vshll.u32 %v9088, 30
        %v9090 = vsub.s32 %v9086, %v9089
        %vm9091 = vcmp.lt.s32.totalorder %v9090, 0
        %v9092 = vsub.s32 0, %v9090
        %v9093 = vsel %vm9091, %v9092, %v9090
        %v9094 = vclz %v9093
        %v9095 = vsub.s32 %v9094, 2
        %vm9096 = vcmp.gt.s32.totalorder 0, %v9095
        %v9097 = vsel %vm9096, 0, %v9095
        %v9098 = vsub.s32 32, %v9097
        %v9099 = vshll.u32 %v9090, %v9097
        %v9100 = vshrl.u32 %v9082, %v9098
        %v9101 = vor.u32 %v9099, %v9100
        %v9102 = vsub.s32 4294967266, %v9097
        %v9103 = vadd.s32 %v9102, 127
        %v9104 = vshll.u32 %v9103, 23
        %v9105 = vor.u32 4788187, %v9104
        %v9106 = vand.u32 2147483647, %v9105
        %v9108 = vcvt.s32.f32 %v9101
        %v9109 = vmul.f32 %v9108, %v9106
        %v9110 = vxor.u32 %v9109, 2147483648
        %v9111 = vsel %vm8990, %v9110, %v9109
        %v9112 = vsub.s32 4, %v9088
        %v9113 = vsel %vm8990, %v9112, %v9088
        %v9114 = vsel %vm8989, %v2158, %v9111
        %v9115 = vsel %vm8989, 0, %v9113
        %v9116 = vmul.f32 %v9114, %v9114
        %v9117 = vmul.f32 %v9116, -0.001358992
        %v9118 = vadd.f32 %v9117, 0.041655596
        %v9119 = vmul.f32 %v9116, %v9118
        %v9120 = vadd.f32 %v9119, -0.4999988
        %v9121 = vmul.f32 %v9116, %v9120
        %v9122 = vadd.f32 1.0, %v9121
        %v9123 = vmul.f32 %v9114, %v9114
        %v9124 = vmul.f32 %v9123, -0.00019511016
        %v9125 = vadd.f32 %v9124, 0.008332121
        %v9126 = vmul.f32 %v9123, %v9125
        %v9127 = vadd.f32 %v9126, -0.16666654
        %v9128 = vmul.f32 %v9123, %v9127
        %v9129 = vadd.f32 %v9128, 1.0
        %v9130 = vmul.f32 %v9129, %v9114
        %vm9131 = vweird.f32 %v2158
        %v9132 = vadd.s32 %v9115, 3
        %v9133 = vand.u32 %v9132, 3
        %vm9134 = vcmp.lt.s32.totalorder %v9133, 2
        %vm9135 = vcmp.eq.s32.totalorder %v9133, 0
        %v9136 = vxor.u32 %v9130, 2147483648
        %v9137 = vsel %vm9135, %v9122, %v9136
        %vm9138 = vcmp.eq.s32.totalorder %v9133, 2
        %v9139 = vxor.u32 %v9122, 2147483648
        %v9140 = vsel %vm9138, %v9139, %v9130
        %v9141 = vsel %vm9134, %v9137, %v9140
        %v9142 = vsel %vm9131, nan, %v9141
        %v9143 = vand.u32 2147483647, %v878
        %vm9144 = vcmp.le.f32.partialorder %v9143, 0.7853982
        %vm9145 = vcmp.lt.s32.totalorder %v878, 0
        %v9146 = vand.u32 %v878, 2139095040
        %v9147 = vshrl.u32 %v9146, 23
        %v9148 = vsub.s32 %v9147, 127
        %v9149 = vand.u32 2147483647, %v878
        %v9150 = vand.u32 %v9149, 8388607
        %v9151 = vor.u32 %v9150, 8388608
        %v9152 = vsub.s32 0, %v9151
        %v9153 = vadd.s32 %v9148, 1
        %vm9154 = vcmp.gt.s32.totalorder %v9153, 0
        %v9155 = vsel %vm9154, %v9153, 0
        %v9156 = vshrl.u32 %v9155, 5
        %v9157 = vand.u32 %v9155, 31
        %v9158 = vsub.s32 32, %v9157
        %v9159 = vshrl.u32 683565275, %v9158
        %v9160 = vshll.u32 683565275, %v9157
        %v9161 = vshrl.u32 2475754826, %v9158
        %v9162 = vor.u32 %v9160, %v9161
        %v9163 = vshll.u32 2475754826, %v9157
        %v9164 = vshrl.u32 2131351028, %v9158
        %v9165 = vor.u32 %v9163, %v9164
        %v9166 = vshll.u32 2131351028, %v9157
        %v9167 = vshrl.u32 2102212464, %v9158
        %v9168 = vor.u32 %v9166, %v9167
        %v9169 = vshll.u32 2102212464, %v9157
        %v9170 = vshrl.u32 920167782, %v9158
        %v9171 = vor.u32 %v9169, %v9170
        %v9172 = vshll.u32 920167782, %v9157
        %v9173 = vshrl.u32 1326507024, %v9158
        %v9174 = vor.u32 %v9172, %v9173
        %vm9175 = vcmp.lt.s32.totalorder %v9156, 1
        %vm9176 = vcmp.lt.s32.totalorder %v9156, 2
        %vm9177 = vcmp.lt.s32.totalorder %v9156, 3
        %vm9178 = vcmp.lt.s32.totalorder %v9156, 4
        %v9179 = vsel %vm9175, %v9159, %v9162
        %v9180 = vsel %vm9178, %v9168, 2102212464
        %v9181 = vsel %vm9177, %v9165, %v9180
        %v9182 = vsel %vm9176, %v9179, %v9181
        %v9183 = vsel %vm9175, %v9162, %v9165
        %v9184 = vsel %vm9178, %v9171, 920167782
        %v9185 = vsel %vm9177, %v9168, %v9184
        %v9186 = vsel %vm9176, %v9183, %v9185
        %v9187 = vsel %vm9175, %v9165, %v9168
        %v9188 = vsel %vm9178, %v9174, 1326507024
        %v9189 = vsel %vm9177, %v9171, %v9188
        %v9190 = vsel %vm9176, %v9187, %v9189
        %v9191 = vshll.u32 %v9151, 8
        %v9192 = vand.u32 %v9191, 65535
        %v9193 = vshrl.u32 %v9191, 16
        %v9194 = vand.u32 %v9190, 65535
        %v9195 = vshrl.u32 %v9190, 16
        %v9196 = vmul.u32 %v9192, %v9194
        %v9197 = vmul.u32 %v9192, %v9195
        %v9198 = vmul.u32 %v9193, %v9194
        %v9199 = vmul.u32 %v9193, %v9195
        %v9200 = vshll.u32 %v9197, 16
        %v9201 = vshrl.u32 %v9197, 16
        %v9202 = vshll.u32 %v9198, 16
        %v9203 = vshrl.u32 %v9198, 16
        %vm9204 = vc.u32 %v9196, %v9200
        %v9205 = vsel %vm9204, 1, 0
        %v9206 = vadd.s32 %v9196, %v9200
        %v9207 = vadd.s32 %v9199, %v9205
        %vm9208 = vc.u32 %v9206, %v9202
        %v9209 = vsel %vm9208, 1, 0
        %v9210 = vadd.s32 %v9206, %v9202
        %v9211 = vadd.s32 %v9207, %v9209
        %v9212 = vadd.s32 %v9211, %v9201
        %v9213 = vadd.s32 %v9212, %v9203
        %v9214 = vand.u32 %v9191, 65535
        %v9215 = vshrl.u32 %v9191, 16
        %v9216 = vand.u32 %v9186, 65535
        %v9217 = vshrl.u32 %v9186, 16
        %v9218 = vmul.u32 %v9214, %v9216
        %v9219 = vmul.u32 %v9214, %v9217
        %v9220 = vmul.u32 %v9215, %v9216
        %v9221 = vmul.u32 %v9215, %v9217
        %v9222 = vshll.u32 %v9219, 16
        %v9223 = vshrl.u32 %v9219, 16
        %v9224 = vshll.u32 %v9220, 16
        %v9225 = vshrl.u32 %v9220, 16
        %vm9226 = vc.u32 %v9218, %v9222
        %v9227 = vsel %vm9226, 1, 0
        %v9228 = vadd.s32 %v9218, %v9222
        %v9229 = vadd.s32 %v9221, %v9227
        %vm9230 = vc.u32 %v9228, %v9224
        %v9231 = vsel %vm9230, 1, 0
        %v9232 = vadd.s32 %v9228, %v9224
        %v9233 = vadd.s32 %v9229, %v9231
        %v9234 = vadd.s32 %v9233, %v9223
        %v9235 = vadd.s32 %v9234, %v9225
        %v9236 = vmul.u32 %v9191, %v9182
        %v9237 = vadd.s32 %v9213, %v9232
        %vm9238 = vc.u32 %v9213, %v9232
        %v9239 = vadd.s32 %v9235, 1
        %v9240 = vsel %vm9238, %v9239, %v9235
        %v9241 = vadd.s32 %v9236, %v9240
        %v9242 = vadd.s32 %v9241, 536870912
        %v9243 = vshrl.u32 %v9242, 30
        %v9244 = vshll.u32 %v9243, 30
        %v9245 = vsub.s32 %v9241, %v9244
        %vm9246 = vcmp.lt.s32.totalorder %v9245, 0
        %v9247 = vsub.s32 0, %v9245
        %v9248 = vsel %vm9246, %v9247, %v9245
        %v9249 = vclz %v9248
        %v9250 = vsub.s32 %v9249, 2
        %vm9251 = vcmp.gt.s32.totalorder 0, %v9250
        %v9252 = vsel %vm9251, 0, %v9250
        %v9253 = vsub.s32 32, %v9252
        %v9254 = vshll.u32 %v9245, %v9252
        %v9255 = vshrl.u32 %v9237, %v9253
        %v9256 = vor.u32 %v9254, %v9255
        %v9257 = vsub.s32 4294967266, %v9252
        %v9258 = vadd.s32 %v9257, 127
        %v9259 = vshll.u32 %v9258, 23
        %v9260 = vor.u32 4788187, %v9259
        %v9261 = vand.u32 2147483647, %v9260
        %v9263 = vcvt.s32.f32 %v9256
        %v9264 = vmul.f32 %v9263, %v9261
        %v9265 = vxor.u32 %v9264, 2147483648
        %v9266 = vsel %vm9145, %v9265, %v9264
        %v9267 = vsub.s32 4, %v9243
        %v9268 = vsel %vm9145, %v9267, %v9243
        %v9269 = vsel %vm9144, %v878, %v9266
        %v9270 = vsel %vm9144, 0, %v9268
        %v9271 = vmul.f32 %v9269, %v9269
        %v9272 = vmul.f32 %v9271, -0.001358992
        %v9273 = vadd.f32 %v9272, 0.041655596
        %v9274 = vmul.f32 %v9271, %v9273
        %v9275 = vadd.f32 %v9274, -0.4999988
        %v9276 = vmul.f32 %v9271, %v9275
        %v9277 = vadd.f32 1.0, %v9276
        %v9278 = vmul.f32 %v9269, %v9269
        %v9279 = vmul.f32 %v9278, -0.00019511016
        %v9280 = vadd.f32 %v9279, 0.008332121
        %v9281 = vmul.f32 %v9278, %v9280
        %v9282 = vadd.f32 %v9281, -0.16666654
        %v9283 = vmul.f32 %v9278, %v9282
        %v9284 = vadd.f32 %v9283, 1.0
        %v9285 = vmul.f32 %v9284, %v9269
        %vm9286 = vweird.f32 %v878
        %v9287 = vadd.s32 %v9270, 3
        %v9288 = vand.u32 %v9287, 3
        %vm9289 = vcmp.lt.s32.totalorder %v9288, 2
        %vm9290 = vcmp.eq.s32.totalorder %v9288, 0
        %v9291 = vxor.u32 %v9285, 2147483648
        %v9292 = vsel %vm9290, %v9277, %v9291
        %vm9293 = vcmp.eq.s32.totalorder %v9288, 2
        %v9294 = vxor.u32 %v9277, 2147483648
        %v9295 = vsel %vm9293, %v9294, %v9285
        %v9296 = vsel %vm9289, %v9292, %v9295
        %v9297 = vsel %vm9286, nan, %v9296
        %v9298 = vand.u32 2147483647, %v1520
        %vm9299 = vcmp.le.f32.partialorder %v9298, 0.7853982
        %vm9300 = vcmp.lt.s32.totalorder %v1520, 0
        %v9301 = vand.u32 %v1520, 2139095040
        %v9302 = vshrl.u32 %v9301, 23
        %v9303 = vsub.s32 %v9302, 127
        %v9304 = vand.u32 2147483647, %v1520
        %v9305 = vand.u32 %v9304, 8388607
        %v9306 = vor.u32 %v9305, 8388608
        %v9307 = vsub.s32 0, %v9306
        %v9308 = vadd.s32 %v9303, 1
        %vm9309 = vcmp.gt.s32.totalorder %v9308, 0
        %v9310 = vsel %vm9309, %v9308, 0
        %v9311 = vshrl.u32 %v9310, 5
        %v9312 = vand.u32 %v9310, 31
        %v9313 = vsub.s32 32, %v9312
        %v9314 = vshrl.u32 683565275, %v9313
        %v9315 = vshll.u32 683565275, %v9312
        %v9316 = vshrl.u32 2475754826, %v9313
        %v9317 = vor.u32 %v9315, %v9316
        %v9318 = vshll.u32 2475754826, %v9312
        %v9319 = vshrl.u32 2131351028, %v9313
        %v9320 = vor.u32 %v9318, %v9319
        %v9321 = vshll.u32 2131351028, %v9312
        %v9322 = vshrl.u32 2102212464, %v9313
        %v9323 = vor.u32 %v9321, %v9322
        %v9324 = vshll.u32 2102212464, %v9312
        %v9325 = vshrl.u32 920167782, %v9313
        %v9326 = vor.u32 %v9324, %v9325
        %v9327 = vshll.u32 920167782, %v9312
        %v9328 = vshrl.u32 1326507024, %v9313
        %v9329 = vor.u32 %v9327, %v9328
        %vm9330 = vcmp.lt.s32.totalorder %v9311, 1
        %vm9331 = vcmp.lt.s32.totalorder %v9311, 2
        %vm9332 = vcmp.lt.s32.totalorder %v9311, 3
        %vm9333 = vcmp.lt.s32.totalorder %v9311, 4
        %v9334 = vsel %vm9330, %v9314, %v9317
        %v9335 = vsel %vm9333, %v9323, 2102212464
        %v9336 = vsel %vm9332, %v9320, %v9335
        %v9337 = vsel %vm9331, %v9334, %v9336
        %v9338 = vsel %vm9330, %v9317, %v9320
        %v9339 = vsel %vm9333, %v9326, 920167782
        %v9340 = vsel %vm9332, %v9323, %v9339
        %v9341 = vsel %vm9331, %v9338, %v9340
        %v9342 = vsel %vm9330, %v9320, %v9323
        %v9343 = vsel %vm9333, %v9329, 1326507024
        %v9344 = vsel %vm9332, %v9326, %v9343
        %v9345 = vsel %vm9331, %v9342, %v9344
        %v9346 = vshll.u32 %v9306, 8
        %v9347 = vand.u32 %v9346, 65535
        %v9348 = vshrl.u32 %v9346, 16
        %v9349 = vand.u32 %v9345, 65535
        %v9350 = vshrl.u32 %v9345, 16
        %v9351 = vmul.u32 %v9347, %v9349
        %v9352 = vmul.u32 %v9347, %v9350
        %v9353 = vmul.u32 %v9348, %v9349
        %v9354 = vmul.u32 %v9348, %v9350
        %v9355 = vshll.u32 %v9352, 16
        %v9356 = vshrl.u32 %v9352, 16
        %v9357 = vshll.u32 %v9353, 16
        %v9358 = vshrl.u32 %v9353, 16
        %vm9359 = vc.u32 %v9351, %v9355
        %v9360 = vsel %vm9359, 1, 0
        %v9361 = vadd.s32 %v9351, %v9355
        %v9362 = vadd.s32 %v9354, %v9360
        %vm9363 = vc.u32 %v9361, %v9357
        %v9364 = vsel %vm9363, 1, 0
        %v9365 = vadd.s32 %v9361, %v9357
        %v9366 = vadd.s32 %v9362, %v9364
        %v9367 = vadd.s32 %v9366, %v9356
        %v9368 = vadd.s32 %v9367, %v9358
        %v9369 = vand.u32 %v9346, 65535
        %v9370 = vshrl.u32 %v9346, 16
        %v9371 = vand.u32 %v9341, 65535
        %v9372 = vshrl.u32 %v9341, 16
        %v9373 = vmul.u32 %v9369, %v9371
        %v9374 = vmul.u32 %v9369, %v9372
        %v9375 = vmul.u32 %v9370, %v9371
        %v9376 = vmul.u32 %v9370, %v9372
        %v9377 = vshll.u32 %v9374, 16
        %v9378 = vshrl.u32 %v9374, 16
        %v9379 = vshll.u32 %v9375, 16
        %v9380 = vshrl.u32 %v9375, 16
        %vm9381 = vc.u32 %v9373, %v9377
        %v9382 = vsel %vm9381, 1, 0
        %v9383 = vadd.s32 %v9373, %v9377
        %v9384 = vadd.s32 %v9376, %v9382
        %vm9385 = vc.u32 %v9383, %v9379
        %v9386 = vsel %vm9385, 1, 0
        %v9387 = vadd.s32 %v9383, %v9379
        %v9388 = vadd.s32 %v9384, %v9386
        %v9389 = vadd.s32 %v9388, %v9378
        %v9390 = vadd.s32 %v9389, %v9380
        %v9391 = vmul.u32 %v9346, %v9337
        %v9392 = vadd.s32 %v9368, %v9387
        %vm9393 = vc.u32 %v9368, %v9387
        %v9394 = vadd.s32 %v9390, 1
        %v9395 = vsel %vm9393, %v9394, %v9390
        %v9396 = vadd.s32 %v9391, %v9395
        %v9397 = vadd.s32 %v9396, 536870912
        %v9398 = vshrl.u32 %v9397, 30
        %v9399 = vshll.u32 %v9398, 30
        %v9400 = vsub.s32 %v9396, %v9399
        %vm9401 = vcmp.lt.s32.totalorder %v9400, 0
        %v9402 = vsub.s32 0, %v9400
        %v9403 = vsel %vm9401, %v9402, %v9400
        %v9404 = vclz %v9403
        %v9405 = vsub.s32 %v9404, 2
        %vm9406 = vcmp.gt.s32.totalorder 0, %v9405
        %v9407 = vsel %vm9406, 0, %v9405
        %v9408 = vsub.s32 32, %v9407
        %v9409 = vshll.u32 %v9400, %v9407
        %v9410 = vshrl.u32 %v9392, %v9408
        %v9411 = vor.u32 %v9409, %v9410
        %v9412 = vsub.s32 4294967266, %v9407
        %v9413 = vadd.s32 %v9412, 127
        %v9414 = vshll.u32 %v9413, 23
        %v9415 = vor.u32 4788187, %v9414
        %v9416 = vand.u32 2147483647, %v9415
        %v9418 = vcvt.s32.f32 %v9411
        %v9419 = vmul.f32 %v9418, %v9416
        %v9420 = vxor.u32 %v9419, 2147483648
        %v9421 = vsel %vm9300, %v9420, %v9419
        %v9422 = vsub.s32 4, %v9398
        %v9423 = vsel %vm9300, %v9422, %v9398
        %v9424 = vsel %vm9299, %v1520, %v9421
        %v9425 = vsel %vm9299, 0, %v9423
        %v9426 = vmul.f32 %v9424, %v9424
        %v9427 = vmul.f32 %v9426, -0.001358992
        %v9428 = vadd.f32 %v9427, 0.041655596
        %v9429 = vmul.f32 %v9426, %v9428
        %v9430 = vadd.f32 %v9429, -0.4999988
        %v9431 = vmul.f32 %v9426, %v9430
        %v9432 = vadd.f32 1.0, %v9431
        %v9433 = vmul.f32 %v9424, %v9424
        %v9434 = vmul.f32 %v9433, -0.00019511016
        %v9435 = vadd.f32 %v9434, 0.008332121
        %v9436 = vmul.f32 %v9433, %v9435
        %v9437 = vadd.f32 %v9436, -0.16666654
        %v9438 = vmul.f32 %v9433, %v9437
        %v9439 = vadd.f32 %v9438, 1.0
        %v9440 = vmul.f32 %v9439, %v9424
        %vm9441 = vweird.f32 %v1520
        %v9442 = vadd.s32 %v9425, 3
        %v9443 = vand.u32 %v9442, 3
        %vm9444 = vcmp.lt.s32.totalorder %v9443, 2
        %vm9445 = vcmp.eq.s32.totalorder %v9443, 0
        %v9446 = vxor.u32 %v9440, 2147483648
        %v9447 = vsel %vm9445, %v9432, %v9446
        %vm9448 = vcmp.eq.s32.totalorder %v9443, 2
        %v9449 = vxor.u32 %v9432, 2147483648
        %v9450 = vsel %vm9448, %v9449, %v9440
        %v9451 = vsel %vm9444, %v9447, %v9450
        %v9452 = vsel %vm9441, nan, %v9451
        %v9453 = vand.u32 2147483647, %v2162
        %vm9454 = vcmp.le.f32.partialorder %v9453, 0.7853982
        %vm9455 = vcmp.lt.s32.totalorder %v2162, 0
        %v9456 = vand.u32 %v2162, 2139095040
        %v9457 = vshrl.u32 %v9456, 23
        %v9458 = vsub.s32 %v9457, 127
        %v9459 = vand.u32 2147483647, %v2162
        %v9460 = vand.u32 %v9459, 8388607
        %v9461 = vor.u32 %v9460, 8388608
        %v9462 = vsub.s32 0, %v9461
        %v9463 = vadd.s32 %v9458, 1
        %vm9464 = vcmp.gt.s32.totalorder %v9463, 0
        %v9465 = vsel %vm9464, %v9463, 0
        %v9466 = vshrl.u32 %v9465, 5
        %v9467 = vand.u32 %v9465, 31
        %v9468 = vsub.s32 32, %v9467
        %v9469 = vshrl.u32 683565275, %v9468
        %v9470 = vshll.u32 683565275, %v9467
        %v9471 = vshrl.u32 2475754826, %v9468
        %v9472 = vor.u32 %v9470, %v9471
        %v9473 = vshll.u32 2475754826, %v9467
        %v9474 = vshrl.u32 2131351028, %v9468
        %v9475 = vor.u32 %v9473, %v9474
        %v9476 = vshll.u32 2131351028, %v9467
        %v9477 = vshrl.u32 2102212464, %v9468
        %v9478 = vor.u32 %v9476, %v9477
        %v9479 = vshll.u32 2102212464, %v9467
        %v9480 = vshrl.u32 920167782, %v9468
        %v9481 = vor.u32 %v9479, %v9480
        %v9482 = vshll.u32 920167782, %v9467
        %v9483 = vshrl.u32 1326507024, %v9468
        %v9484 = vor.u32 %v9482, %v9483
        %vm9485 = vcmp.lt.s32.totalorder %v9466, 1
        %vm9486 = vcmp.lt.s32.totalorder %v9466, 2
        %vm9487 = vcmp.lt.s32.totalorder %v9466, 3
        %vm9488 = vcmp.lt.s32.totalorder %v9466, 4
        %v9489 = vsel %vm9485, %v9469, %v9472
        %v9490 = vsel %vm9488, %v9478, 2102212464
        %v9491 = vsel %vm9487, %v9475, %v9490
        %v9492 = vsel %vm9486, %v9489, %v9491
        %v9493 = vsel %vm9485, %v9472, %v9475
        %v9494 = vsel %vm9488, %v9481, 920167782
        %v9495 = vsel %vm9487, %v9478, %v9494
        %v9496 = vsel %vm9486, %v9493, %v9495
        %v9497 = vsel %vm9485, %v9475, %v9478
        %v9498 = vsel %vm9488, %v9484, 1326507024
        %v9499 = vsel %vm9487, %v9481, %v9498
        %v9500 = vsel %vm9486, %v9497, %v9499
        %v9501 = vshll.u32 %v9461, 8
        %v9502 = vand.u32 %v9501, 65535
        %v9503 = vshrl.u32 %v9501, 16
        %v9504 = vand.u32 %v9500, 65535
        %v9505 = vshrl.u32 %v9500, 16
        %v9506 = vmul.u32 %v9502, %v9504
        %v9507 = vmul.u32 %v9502, %v9505
        %v9508 = vmul.u32 %v9503, %v9504
        %v9509 = vmul.u32 %v9503, %v9505
        %v9510 = vshll.u32 %v9507, 16
        %v9511 = vshrl.u32 %v9507, 16
        %v9512 = vshll.u32 %v9508, 16
        %v9513 = vshrl.u32 %v9508, 16
        %vm9514 = vc.u32 %v9506, %v9510
        %v9515 = vsel %vm9514, 1, 0
        %v9516 = vadd.s32 %v9506, %v9510
        %v9517 = vadd.s32 %v9509, %v9515
        %vm9518 = vc.u32 %v9516, %v9512
        %v9519 = vsel %vm9518, 1, 0
        %v9520 = vadd.s32 %v9516, %v9512
        %v9521 = vadd.s32 %v9517, %v9519
        %v9522 = vadd.s32 %v9521, %v9511
        %v9523 = vadd.s32 %v9522, %v9513
        %v9524 = vand.u32 %v9501, 65535
        %v9525 = vshrl.u32 %v9501, 16
        %v9526 = vand.u32 %v9496, 65535
        %v9527 = vshrl.u32 %v9496, 16
        %v9528 = vmul.u32 %v9524, %v9526
        %v9529 = vmul.u32 %v9524, %v9527
        %v9530 = vmul.u32 %v9525, %v9526
        %v9531 = vmul.u32 %v9525, %v9527
        %v9532 = vshll.u32 %v9529, 16
        %v9533 = vshrl.u32 %v9529, 16
        %v9534 = vshll.u32 %v9530, 16
        %v9535 = vshrl.u32 %v9530, 16
        %vm9536 = vc.u32 %v9528, %v9532
        %v9537 = vsel %vm9536, 1, 0
        %v9538 = vadd.s32 %v9528, %v9532
        %v9539 = vadd.s32 %v9531, %v9537
        %vm9540 = vc.u32 %v9538, %v9534
        %v9541 = vsel %vm9540, 1, 0
        %v9542 = vadd.s32 %v9538, %v9534
        %v9543 = vadd.s32 %v9539, %v9541
        %v9544 = vadd.s32 %v9543, %v9533
        %v9545 = vadd.s32 %v9544, %v9535
        %v9546 = vmul.u32 %v9501, %v9492
        %v9547 = vadd.s32 %v9523, %v9542
        %vm9548 = vc.u32 %v9523, %v9542
        %v9549 = vadd.s32 %v9545, 1
        %v9550 = vsel %vm9548, %v9549, %v9545
        %v9551 = vadd.s32 %v9546, %v9550
        %v9552 = vadd.s32 %v9551, 536870912
        %v9553 = vshrl.u32 %v9552, 30
        %v9554 = vshll.u32 %v9553, 30
        %v9555 = vsub.s32 %v9551, %v9554
        %vm9556 = vcmp.lt.s32.totalorder %v9555, 0
        %v9557 = vsub.s32 0, %v9555
        %v9558 = vsel %vm9556, %v9557, %v9555
        %v9559 = vclz %v9558
        %v9560 = vsub.s32 %v9559, 2
        %vm9561 = vcmp.gt.s32.totalorder 0, %v9560
        %v9562 = vsel %vm9561, 0, %v9560
        %v9563 = vsub.s32 32, %v9562
        %v9564 = vshll.u32 %v9555, %v9562
        %v9565 = vshrl.u32 %v9547, %v9563
        %v9566 = vor.u32 %v9564, %v9565
        %v9567 = vsub.s32 4294967266, %v9562
        %v9568 = vadd.s32 %v9567, 127
        %v9569 = vshll.u32 %v9568, 23
        %v9570 = vor.u32 4788187, %v9569
        %v9571 = vand.u32 2147483647, %v9570
        %v9573 = vcvt.s32.f32 %v9566
        %v9574 = vmul.f32 %v9573, %v9571
        %v9575 = vxor.u32 %v9574, 2147483648
        %v9576 = vsel %vm9455, %v9575, %v9574
        %v9577 = vsub.s32 4, %v9553
        %v9578 = vsel %vm9455, %v9577, %v9553
        %v9579 = vsel %vm9454, %v2162, %v9576
        %v9580 = vsel %vm9454, 0, %v9578
        %v9581 = vmul.f32 %v9579, %v9579
        %v9582 = vmul.f32 %v9581, -0.001358992
        %v9583 = vadd.f32 %v9582, 0.041655596
        %v9584 = vmul.f32 %v9581, %v9583
        %v9585 = vadd.f32 %v9584, -0.4999988
        %v9586 = vmul.f32 %v9581, %v9585
        %v9587 = vadd.f32 1.0, %v9586
        %v9588 = vmul.f32 %v9579, %v9579
        %v9589 = vmul.f32 %v9588, -0.00019511016
        %v9590 = vadd.f32 %v9589, 0.008332121
        %v9591 = vmul.f32 %v9588, %v9590
        %v9592 = vadd.f32 %v9591, -0.16666654
        %v9593 = vmul.f32 %v9588, %v9592
        %v9594 = vadd.f32 %v9593, 1.0
        %v9595 = vmul.f32 %v9594, %v9579
        %vm9596 = vweird.f32 %v2162
        %v9597 = vadd.s32 %v9580, 3
        %v9598 = vand.u32 %v9597, 3
        %vm9599 = vcmp.lt.s32.totalorder %v9598, 2
        %vm9600 = vcmp.eq.s32.totalorder %v9598, 0
        %v9601 = vxor.u32 %v9595, 2147483648
        %v9602 = vsel %vm9600, %v9587, %v9601
        %vm9603 = vcmp.eq.s32.totalorder %v9598, 2
        %v9604 = vxor.u32 %v9587, 2147483648
        %v9605 = vsel %vm9603, %v9604, %v9595
        %v9606 = vsel %vm9599, %v9602, %v9605
        %v9607 = vsel %vm9596, nan, %v9606
        %v9608 = vand.u32 2147483647, %v882
        %vm9609 = vcmp.le.f32.partialorder %v9608, 0.7853982
        %vm9610 = vcmp.lt.s32.totalorder %v882, 0
        %v9611 = vand.u32 %v882, 2139095040
        %v9612 = vshrl.u32 %v9611, 23
        %v9613 = vsub.s32 %v9612, 127
        %v9614 = vand.u32 2147483647, %v882
        %v9615 = vand.u32 %v9614, 8388607
        %v9616 = vor.u32 %v9615, 8388608
        %v9617 = vsub.s32 0, %v9616
        %v9618 = vadd.s32 %v9613, 1
        %vm9619 = vcmp.gt.s32.totalorder %v9618, 0
        %v9620 = vsel %vm9619, %v9618, 0
        %v9621 = vshrl.u32 %v9620, 5
        %v9622 = vand.u32 %v9620, 31
        %v9623 = vsub.s32 32, %v9622
        %v9624 = vshrl.u32 683565275, %v9623
        %v9625 = vshll.u32 683565275, %v9622
        %v9626 = vshrl.u32 2475754826, %v9623
        %v9627 = vor.u32 %v9625, %v9626
        %v9628 = vshll.u32 2475754826, %v9622
        %v9629 = vshrl.u32 2131351028, %v9623
        %v9630 = vor.u32 %v9628, %v9629
        %v9631 = vshll.u32 2131351028, %v9622
        %v9632 = vshrl.u32 2102212464, %v9623
        %v9633 = vor.u32 %v9631, %v9632
        %v9634 = vshll.u32 2102212464, %v9622
        %v9635 = vshrl.u32 920167782, %v9623
        %v9636 = vor.u32 %v9634, %v9635
        %v9637 = vshll.u32 920167782, %v9622
        %v9638 = vshrl.u32 1326507024, %v9623
        %v9639 = vor.u32 %v9637, %v9638
        %vm9640 = vcmp.lt.s32.totalorder %v9621, 1
        %vm9641 = vcmp.lt.s32.totalorder %v9621, 2
        %vm9642 = vcmp.lt.s32.totalorder %v9621, 3
        %vm9643 = vcmp.lt.s32.totalorder %v9621, 4
        %v9644 = vsel %vm9640, %v9624, %v9627
        %v9645 = vsel %vm9643, %v9633, 2102212464
        %v9646 = vsel %vm9642, %v9630, %v9645
        %v9647 = vsel %vm9641, %v9644, %v9646
        %v9648 = vsel %vm9640, %v9627, %v9630
        %v9649 = vsel %vm9643, %v9636, 920167782
        %v9650 = vsel %vm9642, %v9633, %v9649
        %v9651 = vsel %vm9641, %v9648, %v9650
        %v9652 = vsel %vm9640, %v9630, %v9633
        %v9653 = vsel %vm9643, %v9639, 1326507024
        %v9654 = vsel %vm9642, %v9636, %v9653
        %v9655 = vsel %vm9641, %v9652, %v9654
        %v9656 = vshll.u32 %v9616, 8
        %v9657 = vand.u32 %v9656, 65535
        %v9658 = vshrl.u32 %v9656, 16
        %v9659 = vand.u32 %v9655, 65535
        %v9660 = vshrl.u32 %v9655, 16
        %v9661 = vmul.u32 %v9657, %v9659
        %v9662 = vmul.u32 %v9657, %v9660
        %v9663 = vmul.u32 %v9658, %v9659
        %v9664 = vmul.u32 %v9658, %v9660
        %v9665 = vshll.u32 %v9662, 16
        %v9666 = vshrl.u32 %v9662, 16
        %v9667 = vshll.u32 %v9663, 16
        %v9668 = vshrl.u32 %v9663, 16
        %vm9669 = vc.u32 %v9661, %v9665
        %v9670 = vsel %vm9669, 1, 0
        %v9671 = vadd.s32 %v9661, %v9665
        %v9672 = vadd.s32 %v9664, %v9670
        %vm9673 = vc.u32 %v9671, %v9667
        %v9674 = vsel %vm9673, 1, 0
        %v9675 = vadd.s32 %v9671, %v9667
        %v9676 = vadd.s32 %v9672, %v9674
        %v9677 = vadd.s32 %v9676, %v9666
        %v9678 = vadd.s32 %v9677, %v9668
        %v9679 = vand.u32 %v9656, 65535
        %v9680 = vshrl.u32 %v9656, 16
        %v9681 = vand.u32 %v9651, 65535
        %v9682 = vshrl.u32 %v9651, 16
        %v9683 = vmul.u32 %v9679, %v9681
        %v9684 = vmul.u32 %v9679, %v9682
        %v9685 = vmul.u32 %v9680, %v9681
        %v9686 = vmul.u32 %v9680, %v9682
        %v9687 = vshll.u32 %v9684, 16
        %v9688 = vshrl.u32 %v9684, 16
        %v9689 = vshll.u32 %v9685, 16
        %v9690 = vshrl.u32 %v9685, 16
        %vm9691 = vc.u32 %v9683, %v9687
        %v9692 = vsel %vm9691, 1, 0
        %v9693 = vadd.s32 %v9683, %v9687
        %v9694 = vadd.s32 %v9686, %v9692
        %vm9695 = vc.u32 %v9693, %v9689
        %v9696 = vsel %vm9695, 1, 0
        %v9697 = vadd.s32 %v9693, %v9689
        %v9698 = vadd.s32 %v9694, %v9696
        %v9699 = vadd.s32 %v9698, %v9688
        %v9700 = vadd.s32 %v9699, %v9690
        %v9701 = vmul.u32 %v9656, %v9647
        %v9702 = vadd.s32 %v9678, %v9697
        %vm9703 = vc.u32 %v9678, %v9697
        %v9704 = vadd.s32 %v9700, 1
        %v9705 = vsel %vm9703, %v9704, %v9700
        %v9706 = vadd.s32 %v9701, %v9705
        %v9707 = vadd.s32 %v9706, 536870912
        %v9708 = vshrl.u32 %v9707, 30
        %v9709 = vshll.u32 %v9708, 30
        %v9710 = vsub.s32 %v9706, %v9709
        %vm9711 = vcmp.lt.s32.totalorder %v9710, 0
        %v9712 = vsub.s32 0, %v9710
        %v9713 = vsel %vm9711, %v9712, %v9710
        %v9714 = vclz %v9713
        %v9715 = vsub.s32 %v9714, 2
        %vm9716 = vcmp.gt.s32.totalorder 0, %v9715
        %v9717 = vsel %vm9716, 0, %v9715
        %v9718 = vsub.s32 32, %v9717
        %v9719 = vshll.u32 %v9710, %v9717
        %v9720 = vshrl.u32 %v9702, %v9718
        %v9721 = vor.u32 %v9719, %v9720
        %v9722 = vsub.s32 4294967266, %v9717
        %v9723 = vadd.s32 %v9722, 127
        %v9724 = vshll.u32 %v9723, 23
        %v9725 = vor.u32 4788187, %v9724
        %v9726 = vand.u32 2147483647, %v9725
        %v9728 = vcvt.s32.f32 %v9721
        %v9729 = vmul.f32 %v9728, %v9726
        %v9730 = vxor.u32 %v9729, 2147483648
        %v9731 = vsel %vm9610, %v9730, %v9729
        %v9732 = vsub.s32 4, %v9708
        %v9733 = vsel %vm9610, %v9732, %v9708
        %v9734 = vsel %vm9609, %v882, %v9731
        %v9735 = vsel %vm9609, 0, %v9733
        %v9736 = vmul.f32 %v9734, %v9734
        %v9737 = vmul.f32 %v9736, -0.001358992
        %v9738 = vadd.f32 %v9737, 0.041655596
        %v9739 = vmul.f32 %v9736, %v9738
        %v9740 = vadd.f32 %v9739, -0.4999988
        %v9741 = vmul.f32 %v9736, %v9740
        %v9742 = vadd.f32 1.0, %v9741
        %v9743 = vmul.f32 %v9734, %v9734
        %v9744 = vmul.f32 %v9743, -0.00019511016
        %v9745 = vadd.f32 %v9744, 0.008332121
        %v9746 = vmul.f32 %v9743, %v9745
        %v9747 = vadd.f32 %v9746, -0.16666654
        %v9748 = vmul.f32 %v9743, %v9747
        %v9749 = vadd.f32 %v9748, 1.0
        %v9750 = vmul.f32 %v9749, %v9734
        %vm9751 = vweird.f32 %v882
        %v9752 = vadd.s32 %v9735, 3
        %v9753 = vand.u32 %v9752, 3
        %vm9754 = vcmp.lt.s32.totalorder %v9753, 2
        %vm9755 = vcmp.eq.s32.totalorder %v9753, 0
        %v9756 = vxor.u32 %v9750, 2147483648
        %v9757 = vsel %vm9755, %v9742, %v9756
        %vm9758 = vcmp.eq.s32.totalorder %v9753, 2
        %v9759 = vxor.u32 %v9742, 2147483648
        %v9760 = vsel %vm9758, %v9759, %v9750
        %v9761 = vsel %vm9754, %v9757, %v9760
        %v9762 = vsel %vm9751, nan, %v9761
        %v9763 = vand.u32 2147483647, %v1524
        %vm9764 = vcmp.le.f32.partialorder %v9763, 0.7853982
        %vm9765 = vcmp.lt.s32.totalorder %v1524, 0
        %v9766 = vand.u32 %v1524, 2139095040
        %v9767 = vshrl.u32 %v9766, 23
        %v9768 = vsub.s32 %v9767, 127
        %v9769 = vand.u32 2147483647, %v1524
        %v9770 = vand.u32 %v9769, 8388607
        %v9771 = vor.u32 %v9770, 8388608
        %v9772 = vsub.s32 0, %v9771
        %v9773 = vadd.s32 %v9768, 1
        %vm9774 = vcmp.gt.s32.totalorder %v9773, 0
        %v9775 = vsel %vm9774, %v9773, 0
        %v9776 = vshrl.u32 %v9775, 5
        %v9777 = vand.u32 %v9775, 31
        %v9778 = vsub.s32 32, %v9777
        %v9779 = vshrl.u32 683565275, %v9778
        %v9780 = vshll.u32 683565275, %v9777
        %v9781 = vshrl.u32 2475754826, %v9778
        %v9782 = vor.u32 %v9780, %v9781
        %v9783 = vshll.u32 2475754826, %v9777
        %v9784 = vshrl.u32 2131351028, %v9778
        %v9785 = vor.u32 %v9783, %v9784
        %v9786 = vshll.u32 2131351028, %v9777
        %v9787 = vshrl.u32 2102212464, %v9778
        %v9788 = vor.u32 %v9786, %v9787
        %v9789 = vshll.u32 2102212464, %v9777
        %v9790 = vshrl.u32 920167782, %v9778
        %v9791 = vor.u32 %v9789, %v9790
        %v9792 = vshll.u32 920167782, %v9777
        %v9793 = vshrl.u32 1326507024, %v9778
        %v9794 = vor.u32 %v9792, %v9793
        %vm9795 = vcmp.lt.s32.totalorder %v9776, 1
        %vm9796 = vcmp.lt.s32.totalorder %v9776, 2
        %vm9797 = vcmp.lt.s32.totalorder %v9776, 3
        %vm9798 = vcmp.lt.s32.totalorder %v9776, 4
        %v9799 = vsel %vm9795, %v9779, %v9782
        %v9800 = vsel %vm9798, %v9788, 2102212464
        %v9801 = vsel %vm9797, %v9785, %v9800
        %v9802 = vsel %vm9796, %v9799, %v9801
        %v9803 = vsel %vm9795, %v9782, %v9785
        %v9804 = vsel %vm9798, %v9791, 920167782
        %v9805 = vsel %vm9797, %v9788, %v9804
        %v9806 = vsel %vm9796, %v9803, %v9805
        %v9807 = vsel %vm9795, %v9785, %v9788
        %v9808 = vsel %vm9798, %v9794, 1326507024
        %v9809 = vsel %vm9797, %v9791, %v9808
        %v9810 = vsel %vm9796, %v9807, %v9809
        %v9811 = vshll.u32 %v9771, 8
        %v9812 = vand.u32 %v9811, 65535
        %v9813 = vshrl.u32 %v9811, 16
        %v9814 = vand.u32 %v9810, 65535
        %v9815 = vshrl.u32 %v9810, 16
        %v9816 = vmul.u32 %v9812, %v9814
        %v9817 = vmul.u32 %v9812, %v9815
        %v9818 = vmul.u32 %v9813, %v9814
        %v9819 = vmul.u32 %v9813, %v9815
        %v9820 = vshll.u32 %v9817, 16
        %v9821 = vshrl.u32 %v9817, 16
        %v9822 = vshll.u32 %v9818, 16
        %v9823 = vshrl.u32 %v9818, 16
        %vm9824 = vc.u32 %v9816, %v9820
        %v9825 = vsel %vm9824, 1, 0
        %v9826 = vadd.s32 %v9816, %v9820
        %v9827 = vadd.s32 %v9819, %v9825
        %vm9828 = vc.u32 %v9826, %v9822
        %v9829 = vsel %vm9828, 1, 0
        %v9830 = vadd.s32 %v9826, %v9822
        %v9831 = vadd.s32 %v9827, %v9829
        %v9832 = vadd.s32 %v9831, %v9821
        %v9833 = vadd.s32 %v9832, %v9823
        %v9834 = vand.u32 %v9811, 65535
        %v9835 = vshrl.u32 %v9811, 16
        %v9836 = vand.u32 %v9806, 65535
        %v9837 = vshrl.u32 %v9806, 16
        %v9838 = vmul.u32 %v9834, %v9836
        %v9839 = vmul.u32 %v9834, %v9837
        %v9840 = vmul.u32 %v9835, %v9836
        %v9841 = vmul.u32 %v9835, %v9837
        %v9842 = vshll.u32 %v9839, 16
        %v9843 = vshrl.u32 %v9839, 16
        %v9844 = vshll.u32 %v9840, 16
        %v9845 = vshrl.u32 %v9840, 16
        %vm9846 = vc.u32 %v9838, %v9842
        %v9847 = vsel %vm9846, 1, 0
        %v9848 = vadd.s32 %v9838, %v9842
        %v9849 = vadd.s32 %v9841, %v9847
        %vm9850 = vc.u32 %v9848, %v9844
        %v9851 = vsel %vm9850, 1, 0
        %v9852 = vadd.s32 %v9848, %v9844
        %v9853 = vadd.s32 %v9849, %v9851
        %v9854 = vadd.s32 %v9853, %v9843
        %v9855 = vadd.s32 %v9854, %v9845
        %v9856 = vmul.u32 %v9811, %v9802
        %v9857 = vadd.s32 %v9833, %v9852
        %vm9858 = vc.u32 %v9833, %v9852
        %v9859 = vadd.s32 %v9855, 1
        %v9860 = vsel %vm9858, %v9859, %v9855
        %v9861 = vadd.s32 %v9856, %v9860
        %v9862 = vadd.s32 %v9861, 536870912
        %v9863 = vshrl.u32 %v9862, 30
        %v9864 = vshll.u32 %v9863, 30
        %v9865 = vsub.s32 %v9861, %v9864
        %vm9866 = vcmp.lt.s32.totalorder %v9865, 0
        %v9867 = vsub.s32 0, %v9865
        %v9868 = vsel %vm9866, %v9867, %v9865
        %v9869 = vclz %v9868
        %v9870 = vsub.s32 %v9869, 2
        %vm9871 = vcmp.gt.s32.totalorder 0, %v9870
        %v9872 = vsel %vm9871, 0, %v9870
        %v9873 = vsub.s32 32, %v9872
        %v9874 = vshll.u32 %v9865, %v9872
        %v9875 = vshrl.u32 %v9857, %v9873
        %v9876 = vor.u32 %v9874, %v9875
        %v9877 = vsub.s32 4294967266, %v9872
        %v9878 = vadd.s32 %v9877, 127
        %v9879 = vshll.u32 %v9878, 23
        %v9880 = vor.u32 4788187, %v9879
        %v9881 = vand.u32 2147483647, %v9880
        %v9883 = vcvt.s32.f32 %v9876
        %v9884 = vmul.f32 %v9883, %v9881
        %v9885 = vxor.u32 %v9884, 2147483648
        %v9886 = vsel %vm9765, %v9885, %v9884
        %v9887 = vsub.s32 4, %v9863
        %v9888 = vsel %vm9765, %v9887, %v9863
        %v9889 = vsel %vm9764, %v1524, %v9886
        %v9890 = vsel %vm9764, 0, %v9888
        %v9891 = vmul.f32 %v9889, %v9889
        %v9892 = vmul.f32 %v9891, -0.001358992
        %v9893 = vadd.f32 %v9892, 0.041655596
        %v9894 = vmul.f32 %v9891, %v9893
        %v9895 = vadd.f32 %v9894, -0.4999988
        %v9896 = vmul.f32 %v9891, %v9895
        %v9897 = vadd.f32 1.0, %v9896
        %v9898 = vmul.f32 %v9889, %v9889
        %v9899 = vmul.f32 %v9898, -0.00019511016
        %v9900 = vadd.f32 %v9899, 0.008332121
        %v9901 = vmul.f32 %v9898, %v9900
        %v9902 = vadd.f32 %v9901, -0.16666654
        %v9903 = vmul.f32 %v9898, %v9902
        %v9904 = vadd.f32 %v9903, 1.0
        %v9905 = vmul.f32 %v9904, %v9889
        %vm9906 = vweird.f32 %v1524
        %v9907 = vadd.s32 %v9890, 3
        %v9908 = vand.u32 %v9907, 3
        %vm9909 = vcmp.lt.s32.totalorder %v9908, 2
        %vm9910 = vcmp.eq.s32.totalorder %v9908, 0
        %v9911 = vxor.u32 %v9905, 2147483648
        %v9912 = vsel %vm9910, %v9897, %v9911
        %vm9913 = vcmp.eq.s32.totalorder %v9908, 2
        %v9914 = vxor.u32 %v9897, 2147483648
        %v9915 = vsel %vm9913, %v9914, %v9905
        %v9916 = vsel %vm9909, %v9912, %v9915
        %v9917 = vsel %vm9906, nan, %v9916
        %v9918 = vand.u32 2147483647, %v2166
        %vm9919 = vcmp.le.f32.partialorder %v9918, 0.7853982
        %vm9920 = vcmp.lt.s32.totalorder %v2166, 0
        %v9921 = vand.u32 %v2166, 2139095040
        %v9922 = vshrl.u32 %v9921, 23
        %v9923 = vsub.s32 %v9922, 127
        %v9924 = vand.u32 2147483647, %v2166
        %v9925 = vand.u32 %v9924, 8388607
        %v9926 = vor.u32 %v9925, 8388608
        %v9927 = vsub.s32 0, %v9926
        %v9928 = vadd.s32 %v9923, 1
        %vm9929 = vcmp.gt.s32.totalorder %v9928, 0
        %v9930 = vsel %vm9929, %v9928, 0
        %v9931 = vshrl.u32 %v9930, 5
        %v9932 = vand.u32 %v9930, 31
        %v9933 = vsub.s32 32, %v9932
        %v9934 = vshrl.u32 683565275, %v9933
        %v9935 = vshll.u32 683565275, %v9932
        %v9936 = vshrl.u32 2475754826, %v9933
        %v9937 = vor.u32 %v9935, %v9936
        %v9938 = vshll.u32 2475754826, %v9932
        %v9939 = vshrl.u32 2131351028, %v9933
        %v9940 = vor.u32 %v9938, %v9939
        %v9941 = vshll.u32 2131351028, %v9932
        %v9942 = vshrl.u32 2102212464, %v9933
        %v9943 = vor.u32 %v9941, %v9942
        %v9944 = vshll.u32 2102212464, %v9932
        %v9945 = vshrl.u32 920167782, %v9933
        %v9946 = vor.u32 %v9944, %v9945
        %v9947 = vshll.u32 920167782, %v9932
        %v9948 = vshrl.u32 1326507024, %v9933
        %v9949 = vor.u32 %v9947, %v9948
        %vm9950 = vcmp.lt.s32.totalorder %v9931, 1
        %vm9951 = vcmp.lt.s32.totalorder %v9931, 2
        %vm9952 = vcmp.lt.s32.totalorder %v9931, 3
        %vm9953 = vcmp.lt.s32.totalorder %v9931, 4
        %v9954 = vsel %vm9950, %v9934, %v9937
        %v9955 = vsel %vm9953, %v9943, 2102212464
        %v9956 = vsel %vm9952, %v9940, %v9955
        %v9957 = vsel %vm9951, %v9954, %v9956
        %v9958 = vsel %vm9950, %v9937, %v9940
        %v9959 = vsel %vm9953, %v9946, 920167782
        %v9960 = vsel %vm9952, %v9943, %v9959
        %v9961 = vsel %vm9951, %v9958, %v9960
        %v9962 = vsel %vm9950, %v9940, %v9943
        %v9963 = vsel %vm9953, %v9949, 1326507024
        %v9964 = vsel %vm9952, %v9946, %v9963
        %v9965 = vsel %vm9951, %v9962, %v9964
        %v9966 = vshll.u32 %v9926, 8
        %v9967 = vand.u32 %v9966, 65535
        %v9968 = vshrl.u32 %v9966, 16
        %v9969 = vand.u32 %v9965, 65535
        %v9970 = vshrl.u32 %v9965, 16
        %v9971 = vmul.u32 %v9967, %v9969
        %v9972 = vmul.u32 %v9967, %v9970
        %v9973 = vmul.u32 %v9968, %v9969
        %v9974 = vmul.u32 %v9968, %v9970
        %v9975 = vshll.u32 %v9972, 16
        %v9976 = vshrl.u32 %v9972, 16
        %v9977 = vshll.u32 %v9973, 16
        %v9978 = vshrl.u32 %v9973, 16
        %vm9979 = vc.u32 %v9971, %v9975
        %v9980 = vsel %vm9979, 1, 0
        %v9981 = vadd.s32 %v9971, %v9975
        %v9982 = vadd.s32 %v9974, %v9980
        %vm9983 = vc.u32 %v9981, %v9977
        %v9984 = vsel %vm9983, 1, 0
        %v9985 = vadd.s32 %v9981, %v9977
        %v9986 = vadd.s32 %v9982, %v9984
        %v9987 = vadd.s32 %v9986, %v9976
        %v9988 = vadd.s32 %v9987, %v9978
        %v9989 = vand.u32 %v9966, 65535
        %v9990 = vshrl.u32 %v9966, 16
        %v9991 = vand.u32 %v9961, 65535
        %v9992 = vshrl.u32 %v9961, 16
        %v9993 = vmul.u32 %v9989, %v9991
        %v9994 = vmul.u32 %v9989, %v9992
        %v9995 = vmul.u32 %v9990, %v9991
        %v9996 = vmul.u32 %v9990, %v9992
        %v9997 = vshll.u32 %v9994, 16
        %v9998 = vshrl.u32 %v9994, 16
        %v9999 = vshll.u32 %v9995, 16
        %v10000 = vshrl.u32 %v9995, 16
        %vm10001 = vc.u32 %v9993, %v9997
        %v10002 = vsel %vm10001, 1, 0
        %v10003 = vadd.s32 %v9993, %v9997
        %v10004 = vadd.s32 %v9996, %v10002
        %vm10005 = vc.u32 %v10003, %v9999
        %v10006 = vsel %vm10005, 1, 0
        %v10007 = vadd.s32 %v10003, %v9999
        %v10008 = vadd.s32 %v10004, %v10006
        %v10009 = vadd.s32 %v10008, %v9998
        %v10010 = vadd.s32 %v10009, %v10000
        %v10011 = vmul.u32 %v9966, %v9957
        %v10012 = vadd.s32 %v9988, %v10007
        %vm10013 = vc.u32 %v9988, %v10007
        %v10014 = vadd.s32 %v10010, 1
        %v10015 = vsel %vm10013, %v10014, %v10010
        %v10016 = vadd.s32 %v10011, %v10015
        %v10017 = vadd.s32 %v10016, 536870912
        %v10018 = vshrl.u32 %v10017, 30
        %v10019 = vshll.u32 %v10018, 30
        %v10020 = vsub.s32 %v10016, %v10019
        %vm10021 = vcmp.lt.s32.totalorder %v10020, 0
        %v10022 = vsub.s32 0, %v10020
        %v10023 = vsel %vm10021, %v10022, %v10020
        %v10024 = vclz %v10023
        %v10025 = vsub.s32 %v10024, 2
        %vm10026 = vcmp.gt.s32.totalorder 0, %v10025
        %v10027 = vsel %vm10026, 0, %v10025
        %v10028 = vsub.s32 32, %v10027
        %v10029 = vshll.u32 %v10020, %v10027
        %v10030 = vshrl.u32 %v10012, %v10028
        %v10031 = vor.u32 %v10029, %v10030
        %v10032 = vsub.s32 4294967266, %v10027
        %v10033 = vadd.s32 %v10032, 127
        %v10034 = vshll.u32 %v10033, 23
        %v10035 = vor.u32 4788187, %v10034
        %v10036 = vand.u32 2147483647, %v10035
        %v10038 = vcvt.s32.f32 %v10031
        %v10039 = vmul.f32 %v10038, %v10036
        %v10040 = vxor.u32 %v10039, 2147483648
        %v10041 = vsel %vm9920, %v10040, %v10039
        %v10042 = vsub.s32 4, %v10018
        %v10043 = vsel %vm9920, %v10042, %v10018
        %v10044 = vsel %vm9919, %v2166, %v10041
        %v10045 = vsel %vm9919, 0, %v10043
        %v10046 = vmul.f32 %v10044, %v10044
        %v10047 = vmul.f32 %v10046, -0.001358992
        %v10048 = vadd.f32 %v10047, 0.041655596
        %v10049 = vmul.f32 %v10046, %v10048
        %v10050 = vadd.f32 %v10049, -0.4999988
        %v10051 = vmul.f32 %v10046, %v10050
        %v10052 = vadd.f32 1.0, %v10051
        %v10053 = vmul.f32 %v10044, %v10044
        %v10054 = vmul.f32 %v10053, -0.00019511016
        %v10055 = vadd.f32 %v10054, 0.008332121
        %v10056 = vmul.f32 %v10053, %v10055
        %v10057 = vadd.f32 %v10056, -0.16666654
        %v10058 = vmul.f32 %v10053, %v10057
        %v10059 = vadd.f32 %v10058, 1.0
        %v10060 = vmul.f32 %v10059, %v10044
        %vm10061 = vweird.f32 %v2166
        %v10062 = vadd.s32 %v10045, 3
        %v10063 = vand.u32 %v10062, 3
        %vm10064 = vcmp.lt.s32.totalorder %v10063, 2
        %vm10065 = vcmp.eq.s32.totalorder %v10063, 0
        %v10066 = vxor.u32 %v10060, 2147483648
        %v10067 = vsel %vm10065, %v10052, %v10066
        %vm10068 = vcmp.eq.s32.totalorder %v10063, 2
        %v10069 = vxor.u32 %v10052, 2147483648
        %v10070 = vsel %vm10068, %v10069, %v10060
        %v10071 = vsel %vm10064, %v10067, %v10070
        %v10072 = vsel %vm10061, nan, %v10071
        %10073 = vst [vmem:[%s149] sm:$0xff] %v2322
        %10074 = vst [vmem:[%s149 + $0x8] sm:$0xff] %v2477
        %10075 = vst [vmem:[%s149 + $0x10] sm:$0xff] %v2632
        %10076 = vst [vmem:[%s149 + $0x18] sm:$0xff] %v2787
        %10077 = vst [vmem:[%s149 + $0x20] sm:$0xff] %v2942
        %10078 = vst [vmem:[%s149 + $0x28] sm:$0xff] %v3097
        %10079 = vst [vmem:[%s149 + $0x30] sm:$0xff] %v3252
        %10080 = vst [vmem:[%s149 + $0x38] sm:$0xff] %v3407
        %10081 = vst [vmem:[%s149 + $0x40] sm:$0xff] %v3562
        %10082 = vst [vmem:[%s149 + $0x48] sm:$0xff] %v3717
        %10083 = vst [vmem:[%s149 + $0x50] sm:$0xff] %v3872
        %10084 = vst [vmem:[%s149 + $0x58] sm:$0xff] %v4027
        %10085 = vst [vmem:[%s149 + $0x60] sm:$0xff] %v4182
        %10086 = vst [vmem:[%s149 + $0x68] sm:$0xff] %v4337
        %10087 = vst [vmem:[%s149 + $0x70] sm:$0xff] %v4492
        %10088 = vst [vmem:[%s149 + $0x78] sm:$0xff] %v4647
        %10089 = vst [vmem:[%s149 + $0x80] sm:$0xff] %v4802
        %10090 = vst [vmem:[%s149 + $0x88] sm:$0xff] %v4957
        %10091 = vst [vmem:[%s149 + $0x90] sm:$0xff] %v5112
        %10092 = vst [vmem:[%s149 + $0x98] sm:$0xff] %v5267
        %10093 = vst [vmem:[%s149 + $0xa0] sm:$0xff] %v5422
        %10094 = vst [vmem:[%s149 + $0xa8] sm:$0xff] %v5577
        %10095 = vst [vmem:[%s149 + $0xb0] sm:$0xff] %v5732
        %10096 = vst [vmem:[%s149 + $0xb8] sm:$0xff] %v5887
        %10097 = vst [vmem:[%s149 + $0xc0] sm:$0xff] %v6042
        %10098 = vst [vmem:[%s149 + $0xc8] sm:$0xff] %v6197
        %10099 = vst [vmem:[%s149 + $0xd0] sm:$0xff] %v6352
        %10100 = vst [vmem:[%s149 + $0xd8] sm:$0xff] %v6507
        %10101 = vst [vmem:[%s149 + $0xe0] sm:$0xff] %v6662
        %10102 = vst [vmem:[%s149 + $0xe8] sm:$0xff] %v6817
        %10103 = vst [vmem:[%s149 + $0xf0] sm:$0xff] %v6972
        %10104 = vst [vmem:[%s149 + $0xf8] sm:$0xff] %v7127
        %10105 = vst [vmem:[%s149 + $0x100] sm:$0xff] %v7282
        %10106 = vst [vmem:[%s149 + $0x108] sm:$0xff] %v7437
        %10107 = vst [vmem:[%s149 + $0x110] sm:$0xff] %v7592
        %10108 = vst [vmem:[%s149 + $0x118] sm:$0xff] %v7747
        %10109 = vst [vmem:[%s149 + $0x120] sm:$0xff] %v7902
        %10110 = vst [vmem:[%s149 + $0x128] sm:$0xff] %v8057
        %10111 = vst [vmem:[%s149 + $0x130] sm:$0xff] %v8212
        %10112 = vst [vmem:[%s149 + $0x138] sm:$0xff] %v8367
        %10113 = vst [vmem:[%s149 + $0x140] sm:$0xff] %v8522
        %10114 = vst [vmem:[%s149 + $0x148] sm:$0xff] %v8677
        %10115 = vst [vmem:[%s149 + $0x150] sm:$0xff] %v8832
        %10116 = vst [vmem:[%s149 + $0x158] sm:$0xff] %v8987
        %10117 = vst [vmem:[%s149 + $0x160] sm:$0xff] %v9142
        %10118 = vst [vmem:[%s149 + $0x168] sm:$0xff] %v9297
        %10119 = vst [vmem:[%s149 + $0x170] sm:$0xff] %v9452
        %10120 = vst [vmem:[%s149 + $0x178] sm:$0xff] %v9607
        %10121 = vst [vmem:[%s149 + $0x180] sm:$0xff] %v9762
        %10122 = vst [vmem:[%s149 + $0x188] sm:$0xff] %v9917
        %10123 = vst [vmem:[%s149 + $0x190] sm:$0xff] %v10072
        %s10124 = sand.u32 %s71, 1
        %s10125 = scalar_lea.sflag [#allocation3], %s10124
        %s10126 = sand.u32 %s71, 1
        %s10127 = smul.addr %s10126, 408
        %s10128 = scalar_lea.vmem [#allocation2], %s10127
        // Predicated region
        $region29: #{tpu_custom_call.1} parent=27 // pred_check
          %p10129 = pneg %p81
        $region30: #{tpu_custom_call.1} parent=27 // pred_check_branch
          %10131 = sbr.rel (%p10129) target = $region32
        $region31: #{tpu_custom_call.1} parent=27 // pred_region
          %s10132 = smul.u32 17, %s16
          %s10133 = ssub.s32 65, %s10132
          %p10134 = scmp.lt.s32.totalorder %s10133, 17
          %s10135 = scalar_select %p10134, %s10133, 17
          %s10136 = smul.u32 8, %s10135
          %s10137 = smul.u32 %s10136, 3
          %s10138 = ssub.s32 408, %s10137
          %s10139 = sshll.u32 %s10138, 4
          %10140 = vsyncadd %s10125, %s10139
          %p10141 = scmp.ne.s32.totalorder 0, %s10137
          %s10142 = smul.addr %s10132, 3
          %s10143 = smul.addr %s10142, 8
          %s10144 = scalar_lea.hbm %s2, %s10143
          %s10145 = smul.u32 24, %s10135
          %s10146 = sshll.u32 %s10128, 4
          %s10147 = int_to_ptr.vmem [resolvable:$true] %s10146
          %s10148 = sshll.u32 %s10144, 4
          %s10149 = int_to_ptr.hbm [resolvable:$true] %s10148
          %s10150 = sshll.u32 %s10145, 4
          %10154 = dma.vmem_to_hbm [thread:$0]  (%p10141), %s10147, %s10150, %s10149, %s10125, 384, 384, 24
        $region32: #{tpu_custom_call.1} parent=27 // pred_fallthru
          _
      $region28: #{tpu_custom_call.1} parent=5 // pred_fallthru
        _
      %p10155 = scmp.le.s32.totalorder 2, %s11
      // Predicated region
      $region33: #{tpu_custom_call.1} parent=5 // pred_check
        %p10156 = pneg %p10155
      $region34: #{tpu_custom_call.1} parent=5 // pred_check_branch
        %10158 = sbr.rel (%p10156) target = $region36
      $region35: #{tpu_custom_call.1} parent=5 // pred_region
        %s10159 = ssub.s32 %s11, 2
        // Predicated region
        $region37: #{tpu_custom_call.1} parent=35 // pred_check
          %p10160 = pneg %p87
        $region38: #{tpu_custom_call.1} parent=35 // pred_check_branch
          %10162 = sbr.rel (%p10160) target = $region40
        $region39: #{tpu_custom_call.1} parent=35 // pred_region
          %s10163 = sand.u32 %s72, 1
          %s10164 = scalar_lea.sflag [#allocation3], %s10163
          %s10165 = sand.u32 %s72, 1
          %s10166 = smul.addr %s10165, 408
          %s10167 = scalar_lea.vmem [#allocation2], %s10166
          %10169 = dma.done %s10164, 6528
        $region40: #{tpu_custom_call.1} parent=35 // pred_fallthru
          _
      $region36: #{tpu_custom_call.1} parent=5 // pred_fallthru
        _
    $region6: #{tpu_custom_call.1} parent=1 // loop_footer
      %s15 = sadd.s32 1, %s11
    $region7: #{tpu_custom_call.1} parent=1 // loop_footer_branch
      %10 = sbr.rel target = $region3
    $region8: #{tpu_custom_call.1} parent=1 // loop_exit
      _
    %10170 = vsyncpa [#allocation3], 1
    %s10171 = scalar_lea.sflag [#allocation3], 1
    %10172 = vsyncpa %s10171, 1

</llo_original>
